<compile_context>
chip_gen: v7x
topology: tpu7x:2x2x1
jax: 0.10.0
libtpu: 0.0.40
codegen_flags: <defaults>
</compile_context>

<pallas_src>
import numpy as np
import jax
import jax.numpy as jnp
from jax.experimental import pallas as pl
from jax.experimental.pallas import tpu as pltpu

G = 128  # lane stride per GRU gate: r / z / n each own a full 128-lane block


def _sigmoid(x):
    # sigmoid(x) == 0.5 * (tanh(x/2) + 1): guaranteed single EUP op (no exp+div).
    return 0.5 * (jnp.tanh(0.5 * x) + 1.0)


# ----------------------------------------------------------------------------
# Kernel factory (all sizes static / closed over)
# ----------------------------------------------------------------------------
def make_social_kernel(*, S, BP, H, E, IP, P):
    """Packed parameter layouts (see pack_params):

      w_ref   (5H, 3*3G) bf16:
        rows [0H,1H): encoder whh  -- layer l at cols [l*3G, (l+1)*3G), gate g
                      of that block at lane offset g*G (H valid lanes each)
        rows [1H,2H): decoder whh   (same layout)
        rows [2H,3H): encoder wih   (layer 0 only uses its first E rows)
        rows [3H,4H): decoder wih
        rows [4H,5H): wemb^T at cols [0,E), wdec^T at cols [G, G+E)
      wfin_ref (3H + P*E, 128) bf16: block-diag [gender|income|edu | out_proj xP]
      b_ref   (10, 3G) f32: rows 0-2 enc gx bias (b_i* + b_h{r,z} folded),
        rows 3-5 dec gx bias, rows 6/7 enc/dec b_hn, row 8 = [b_emb | b_dec],
        row 9 = final bias (head biases ++ tiled b_out).
    """
    G3 = 3 * G

    def kernel(x_ref, w_ref, wfin_ref, b_ref, out_ref, gx0_scr):
        f32, bf16 = jnp.float32, jnp.bfloat16

        # ---- lazy static ref slices: weights re-read from VMEM at each use so
        #      no big weight values stay live across the unrolled recurrence ----
        def whh(g, l):                       # (H, 3G) bf16
            return w_ref[g * H:(g + 1) * H, l * G3:(l + 1) * G3]

        def wih(g, l, in_dim):               # (in_dim, 3G) bf16
            r0 = (2 + g) * H
            return w_ref[r0:r0 + in_dim, l * G3:(l + 1) * G3]

        def bx(g, l):                        # (1, 3G) f32
            return b_ref[3 * g + l:3 * g + l + 1, :]

        def bhn(g, l):                       # (1, H) f32
            return b_ref[6 + g:7 + g, l * G:l * G + H]

        def gru_cell(gx, gh, h, b_hn):
            # gx/gh: (BP, 3G) gate pre-activations, gates r/z/n at lane offsets
            # 0/G/2G -> every gate slice sits at lane offset 0 of its own vreg,
            # so no cross-lane realignment inside the cell.  gx already holds
            # b_i{r,z,n} (+ b_h{r,z}); b_hn is applied inside the r-product.
            rz = _sigmoid(gx[:, 0:2 * G] + gh[:, 0:2 * G])   # merged r/z sigmoid
            r = rz[:, 0:H]
            z = rz[:, G:G + H]
            n = jnp.tanh(gx[:, 2 * G:2 * G + H]
                         + r * (gh[:, 2 * G:2 * G + H] + b_hn))
            return (1.0 - z) * n + z * h

        # ---- hoisted: input embedding + encoder layer-0 gate pre-activations --
        x2d = x_ref[...]                                           # (S*BP, IP)
        wembT = w_ref[4 * H:4 * H + IP, 0:E]                       # (IP, E)
        emb = jnp.maximum(
            jnp.dot(x2d.astype(bf16), wembT, preferred_element_type=f32)
            + b_ref[8:9, 0:E], 0.0)                                # (S*BP, E)
        # TODO(synk): nn.Dropout treated as identity (eval-mode / p = 0).
        dec_in = emb[(S - 1) * BP:S * BP, :]   # relu(embed(x[:, -1])) -> decoder
        gx0_scr[...] = (jnp.dot(emb.astype(bf16), wih(0, 0, E),
                                preferred_element_type=f32) + bx(0, 0))

        # ---- encoder recurrence (static unroll) -------------------------------
        h0 = jnp.zeros((BP, H), f32)
        h1 = jnp.zeros((BP, H), f32)
        h2 = jnp.zeros((BP, H), f32)
        for t in range(S):
            # hidden-side gate matmuls only need step t-1 hiddens -> issued at
            # the top of the step, off the serial cell chain.
            gh0 = jnp.dot(h0.astype(bf16), whh(0, 0), preferred_element_type=f32)
            gh1 = jnp.dot(h1.astype(bf16), whh(0, 1), preferred_element_type=f32)
            gh2 = jnp.dot(h2.astype(bf16), whh(0, 2), preferred_element_type=f32)
            h0 = gru_cell(gx0_scr[t * BP:(t + 1) * BP, :], gh0, h0, bhn(0, 0))
            gx1 = jnp.dot(h0.astype(bf16), wih(0, 1, H),
                          preferred_element_type=f32) + bx(0, 1)
            h1 = gru_cell(gx1, gh1, h1, bhn(0, 1))
            gx2 = jnp.dot(h1.astype(bf16), wih(0, 2, H),
                          preferred_element_type=f32) + bx(0, 2)
            h2 = gru_cell(gx2, gh2, h2, bhn(0, 2))
        h0e, h1e, h2e = h0, h1, h2             # encoder-final hiddens (for heads)

        # ---- autoregressive decoder (pred_length steps, static unroll) --------
        d0, d1, d2 = h0e, h1e, h2e
        b_dec = b_ref[8:9, G:G + E]
        dec_outs = []
        for _ in range(P):
            gh0 = jnp.dot(d0.astype(bf16), whh(1, 0), preferred_element_type=f32)
            gh1 = jnp.dot(d1.astype(bf16), whh(1, 1), preferred_element_type=f32)
            gh2 = jnp.dot(d2.astype(bf16), whh(1, 2), preferred_element_type=f32)
            gx0 = jnp.dot(dec_in.astype(bf16), wih(1, 0, E),
                          preferred_element_type=f32) + bx(1, 0)
            d0 = gru_cell(gx0, gh0, d0, bhn(1, 0))
            gx1 = jnp.dot(d0.astype(bf16), wih(1, 1, H),
                          preferred_element_type=f32) + bx(1, 1)
            d1 = gru_cell(gx1, gh1, d1, bhn(1, 1))
            gx2 = jnp.dot(d1.astype(bf16), wih(1, 2, H),
                          preferred_element_type=f32) + bx(1, 2)
            d2 = gru_cell(gx2, gh2, d2, bhn(1, 2))
            # decoder_input = Decode_linear(relu(GRU top output)); this value
            # (before the output projection) feeds the next step.
            dec_in = (jnp.dot(jnp.maximum(d2, 0.0).astype(bf16),
                              w_ref[4 * H:5 * H, G:G + E],
                              preferred_element_type=f32) + b_dec)
            dec_outs.append(dec_in)

        # ---- heads + deferred output projection fused: one block-diag matmul
        #      and a single unmasked lane-dense (BP,128) store ------------------
        fin_in = jnp.concatenate([h0e, h1e, h2e] + dec_outs, axis=1)  # (BP,3H+P*E)
        out_ref[...] = (jnp.dot(fin_in.astype(bf16), wfin_ref[...],
                                preferred_element_type=f32)
                        + b_ref[9:10, 0:out_ref.shape[1]])

    return kernel


# ----------------------------------------------------------------------------
# Deterministic PyTorch-style parameter init (numpy host side)
# ----------------------------------------------------------------------------
def init_linear(key, fan_in, fan_out):
    k1, k2 = jax.random.split(key)
    bound = 1.0 / np.sqrt(fan_in)
    w = jax.random.uniform(k1, (fan_out, fan_in), jnp.float32, -bound, bound)
    b = jax.random.uniform(k2, (fan_out,), jnp.float32, -bound, bound)
    return np.asarray(w), np.asarray(b)


def init_gru(key, input_size, hidden, num_layers=3):
    layers = []
    bound = 1.0 / np.sqrt(hidden)
    for l in range(num_layers):
        in_sz = input_size if l == 0 else hidden
        key, k1, k2, k3, k4 = jax.random.split(key, 5)
        wih = jax.random.uniform(k1, (3 * hidden, in_sz), jnp.float32, -bound, bound)
        whh = jax.random.uniform(k2, (3 * hidden, hidden), jnp.float32, -bound, bound)
        bih = jax.random.uniform(k3, (3 * hidden,), jnp.float32, -bound, bound)
        bhh = jax.random.uniform(k4, (3 * hidden,), jnp.float32, -bound, bound)
        layers.append(tuple(np.asarray(a) for a in (wih, whh, bih, bhh)))
    return layers


# ----------------------------------------------------------------------------
# Host-side packing into the fused kernel layouts
# ----------------------------------------------------------------------------
def _per_gate(mat_t, H):
    """(in, 3H) with column groups [r|z|n] -> (in, 3G), gate g at cols [g*G, g*G+H)."""
    out = np.zeros((mat_t.shape[0], 3 * G), np.float32)
    for g in range(3):
        out[:, g * G:g * G + H] = mat_t[:, g * H:(g + 1) * H]
    return out


def pack_params(enc, dec, w_emb, b_emb, w_dec, b_dec, w_out, b_out, heads,
                H, E, I, P):
    """heads = [(w_gender, b_gender), (w_income, b_income), (w_edu, b_edu)]."""
    G3 = 3 * G
    Wg = np.zeros((5 * H, 3 * G3), np.float32)
    Bf = np.zeros((10, G3), np.float32)
    for gi, layers in enumerate((enc, dec)):
        for l, (wih, whh, bih, bhh) in enumerate(layers):
            Wg[gi * H:(gi + 1) * H, l * G3:(l + 1) * G3] = _per_gate(whh.T, H)
            in_dim = wih.shape[1]
            Wg[(2 + gi) * H:(2 + gi) * H + in_dim,
               l * G3:(l + 1) * G3] = _per_gate(wih.T, H)
            for g in range(3):
                gb = bih[g * H:(g + 1) * H].copy()
                if g < 2:                       # fold b_hr / b_hz into gx bias
                    gb = gb + bhh[g * H:(g + 1) * H]
                Bf[3 * gi + l, g * G:g * G + H] = gb
            Bf[6 + gi, l * G:l * G + H] = bhh[2 * H:3 * H]   # b_hn
    Wg[4 * H:4 * H + I, 0:E] = w_emb.T          # (I, E); remaining rows stay 0
    Wg[4 * H:5 * H, G:G + E] = w_dec.T          # (H, E)
    Bf[8, 0:E] = b_emb
    Bf[8, G:G + E] = b_dec

    Wf = np.zeros((3 * H + P * E, 128), np.float32)
    for hidx, (w_h, b_h) in enumerate(heads):
        Wf[hidx * H:(hidx + 1) * H, 2 * hidx:2 * hidx + 2] = w_h.T
        Bf[9, 2 * hidx:2 * hidx + 2] = b_h
    for p in range(P):
        Wf[3 * H + p * E:3 * H + (p + 1) * E,
           6 + p * I:6 + (p + 1) * I] = w_out.T
        Bf[9, 6 + p * I:6 + (p + 1) * I] = b_out

    return (jnp.asarray(Wg, jnp.bfloat16),
            jnp.asarray(Wf, jnp.bfloat16),
            jnp.asarray(Bf, jnp.float32))


# ----------------------------------------------------------------------------
# Wrapper
# ----------------------------------------------------------------------------
def social_model_forward(x, packed, *, pred_length, rnn_size, embedding_size):
    B, S, I = x.shape
    H, E, P = rnn_size, embedding_size, pred_length
    BP = ((B + 7) // 8) * 8     # pad batch to a full sublane group
    IP = 16                     # pad tiny feature dim so all bf16 row slices are tile-aligned
    assert I <= IP

    # Time-major, batch-padded, flattened 2D input: every in-kernel slice is a
    # static, sublane-aligned window (no in-kernel reshapes / transposes).
    x_pad = jnp.zeros((BP, S, IP), jnp.float32).at[:B, :, :I].set(
        x.astype(jnp.float32))
    x_tb = jnp.transpose(x_pad, (1, 0, 2)).reshape(S * BP, IP)

    kernel = make_social_kernel(S=S, BP=BP, H=H, E=E, IP=IP, P=P)
    out = pl.pallas_call(
        kernel,
        out_shape=jax.ShapeDtypeStruct((BP, 128), jnp.float32),
        in_specs=[pl.BlockSpec(memory_space=pltpu.MemorySpace.VMEM)] * 4,
        out_specs=pl.BlockSpec(memory_space=pltpu.MemorySpace.VMEM),
        scratch_shapes=[pltpu.VMEM((S * BP, 3 * G), jnp.float32)],
    )(x_tb, *packed)

    y = out[:B, 0:6].reshape(B, 3, 2)
    x_outputs = out[:B, 6:6 + P * I].reshape(B, P, I)
    return y, x_outputs


if __name__ == "__main__":
    class Args:
        use_cuda = False
        seq_length = 8
        pred_length = 4
        rnn_size = 32
        grid_size = 4
        embedding_size = 16
        input_size = 4
        output_size = 4
        maxNumPeds = 8
        gru = True
        return_embedding = False
        dropout = 0.0

    args = Args()
    B = 2
    S, I = args.seq_length, args.input_size
    E, H, P = args.embedding_size, args.rnn_size, args.pred_length

    key = jax.random.PRNGKey(0)
    (k_x, k_emb, k_out, k_g, k_i, k_e, k_dec, k_rnn, k_dernn) = jax.random.split(key, 9)

    w_emb, b_emb = init_linear(k_emb, I, E)      # input_embedding_layer
    w_out, b_out = init_linear(k_out, E, I)      # output_embedding_layer
    w_g, b_g = init_linear(k_g, H, 2)            # gender_output_layer
    w_i, b_i = init_linear(k_i, H, 2)            # income_output_layer
    w_e, b_e = init_linear(k_e, H, 2)            # edu_output_layer
    w_dec, b_dec = init_linear(k_dec, H, E)      # Decode_linear
    enc_layers = init_gru(k_rnn, E, H, num_layers=3)     # self.RNN
    dec_layers = init_gru(k_dernn, E, H, num_layers=3)   # self.DeRNN

    packed = pack_params(enc_layers, dec_layers, w_emb, b_emb, w_dec, b_dec,
                         w_out, b_out,
                         [(w_g, b_g), (w_i, b_i), (w_e, b_e)], H, E, I, P)

    x = jax.random.normal(k_x, (B, S, I), jnp.float32)

    y, x_outputs = social_model_forward(
        x, packed, pred_length=P, rnn_size=H, embedding_size=E)
    jax.block_until_ready((y, x_outputs))
    assert y.shape == (B, 3, 2)
    assert x_outputs.shape == (B, P, I)
    print("KERNEL_OK")
</pallas_src>

<mosaic_0001>
module attributes {stable_mosaic.version = 11 : i64} {
  func.func @kernel(%arg0: memref<64x16xf32, #tpu.memory_space<vmem>>, %arg1: memref<160x1152xbf16, #tpu.memory_space<vmem>>, %arg2: memref<160x128xbf16, #tpu.memory_space<vmem>>, %arg3: memref<10x384xf32, #tpu.memory_space<vmem>>, %arg4: memref<8x128xf32, #tpu.memory_space<vmem>>, %arg5: memref<64x384xf32, #tpu.memory_space<vmem>>) attributes {dimension_semantics = [], scalar_prefetch = 0 : i64, scratch_operands = 1 : i64, tpu.core_type = #tpu.core_type<tc>} {
    %c0 = arith.constant 0 : index
    %c0_0 = arith.constant 0 : index
    %0 = vector.load %arg0[%c0, %c0_0] : memref<64x16xf32, #tpu.memory_space<vmem>>, vector<64x16xf32>
    %c128 = arith.constant 128 : index
    %c0_1 = arith.constant 0 : index
    %1 = vector.load %arg1[%c128, %c0_1] : memref<160x1152xbf16, #tpu.memory_space<vmem>>, vector<16x16xbf16>
    %2 = arith.truncf %0 : vector<64x16xf32> to vector<64x16xbf16>
    %cst = arith.constant dense<0.000000e+00> : vector<64x16xf32>
    %3 = tpu.matmul %2, %1, %cst {dimension_numbers = #tpu.dot_dimension_numbers<[1], [0], [0], [1], [0, 0, 1, 1], [], []>} : vector<64x16xbf16>, vector<16x16xbf16>, vector<64x16xf32> -> vector<64x16xf32>
    %c8 = arith.constant 8 : index
    %c0_2 = arith.constant 0 : index
    %4 = vector.load %arg3[%c8, %c0_2] : memref<10x384xf32, #tpu.memory_space<vmem>>, vector<1x16xf32>
    %5 = vector.broadcast %4 : vector<1x16xf32> to vector<64x16xf32>
    %6 = arith.addf %3, %5 : vector<64x16xf32>
    %cst_3 = arith.constant 0.000000e+00 : f32
    %7 = vector.broadcast %cst_3 : f32 to vector<64x16xf32>
    %8 = arith.maximumf %6, %7 : vector<64x16xf32>
    %9 = vector.extract_strided_slice %8 {offsets = [56, 0], sizes = [8, 16], strides = [1, 1]} : vector<64x16xf32> to vector<8x16xf32>
    %10 = arith.truncf %8 : vector<64x16xf32> to vector<64x16xbf16>
    %c64 = arith.constant 64 : index
    %c0_4 = arith.constant 0 : index
    %11 = vector.load %arg1[%c64, %c0_4] : memref<160x1152xbf16, #tpu.memory_space<vmem>>, vector<16x384xbf16>
    %cst_5 = arith.constant dense<0.000000e+00> : vector<64x384xf32>
    %12 = tpu.matmul %10, %11, %cst_5 {dimension_numbers = #tpu.dot_dimension_numbers<[1], [0], [0], [1], [0, 0, 1, 1], [], []>} : vector<64x16xbf16>, vector<16x384xbf16>, vector<64x384xf32> -> vector<64x384xf32>
    %c0_6 = arith.constant 0 : index
    %c0_7 = arith.constant 0 : index
    %13 = vector.load %arg3[%c0_6, %c0_7] : memref<10x384xf32, #tpu.memory_space<vmem>>, vector<1x384xf32>
    %14 = vector.broadcast %13 : vector<1x384xf32> to vector<64x384xf32>
    %15 = arith.addf %12, %14 : vector<64x384xf32>
    %c0_8 = arith.constant 0 : index
    %c0_9 = arith.constant 0 : index
    %16 = vector.load %arg5[%c0_8, %c0_9] : memref<64x384xf32, #tpu.memory_space<vmem>>, vector<64x384xf32>
    tpu.vector_store %arg5[%c0_8, %c0_9], %15 {strides = array<i32>} : memref<64x384xf32, #tpu.memory_space<vmem>>, vector<64x384xf32>,
    %cst_10 = arith.constant 0.000000e+00 : f32
    %17 = vector.broadcast %cst_10 : f32 to vector<8x32xf32>
    %cst_11 = arith.constant 0.000000e+00 : f32
    %18 = vector.broadcast %cst_11 : f32 to vector<8x32xf32>
    %cst_12 = arith.constant 0.000000e+00 : f32
    %19 = vector.broadcast %cst_12 : f32 to vector<8x32xf32>
    %20 = arith.truncf %17 : vector<8x32xf32> to vector<8x32xbf16>
    %c0_13 = arith.constant 0 : index
    %c0_14 = arith.constant 0 : index
    %21 = vector.load %arg1[%c0_13, %c0_14] : memref<160x1152xbf16, #tpu.memory_space<vmem>>, vector<32x384xbf16>
    %cst_15 = arith.constant dense<0.000000e+00> : vector<8x384xf32>
    %22 = tpu.matmul %20, %21, %cst_15 {dimension_numbers = #tpu.dot_dimension_numbers<[1], [0], [0], [1], [0, 0, 1, 1], [], []>} : vector<8x32xbf16>, vector<32x384xbf16>, vector<8x384xf32> -> vector<8x384xf32>
    %23 = arith.truncf %18 : vector<8x32xf32> to vector<8x32xbf16>
    %c0_16 = arith.constant 0 : index
    %c384 = arith.constant 384 : index
    %24 = vector.load %arg1[%c0_16, %c384] : memref<160x1152xbf16, #tpu.memory_space<vmem>>, vector<32x384xbf16>
    %cst_17 = arith.constant dense<0.000000e+00> : vector<8x384xf32>
    %25 = tpu.matmul %23, %24, %cst_17 {dimension_numbers = #tpu.dot_dimension_numbers<[1], [0], [0], [1], [0, 0, 1, 1], [], []>} : vector<8x32xbf16>, vector<32x384xbf16>, vector<8x384xf32> -> vector<8x384xf32>
    %26 = arith.truncf %19 : vector<8x32xf32> to vector<8x32xbf16>
    %c0_18 = arith.constant 0 : index
    %c768 = arith.constant 768 : index
    %27 = vector.load %arg1[%c0_18, %c768] : memref<160x1152xbf16, #tpu.memory_space<vmem>>, vector<32x384xbf16>
    %cst_19 = arith.constant dense<0.000000e+00> : vector<8x384xf32>
    %28 = tpu.matmul %26, %27, %cst_19 {dimension_numbers = #tpu.dot_dimension_numbers<[1], [0], [0], [1], [0, 0, 1, 1], [], []>} : vector<8x32xbf16>, vector<32x384xbf16>, vector<8x384xf32> -> vector<8x384xf32>
    %c0_20 = arith.constant 0 : index
    %c0_21 = arith.constant 0 : index
    %29 = vector.load %arg5[%c0_20, %c0_21] : memref<64x384xf32, #tpu.memory_space<vmem>>, vector<8x384xf32>
    %c6 = arith.constant 6 : index
    %c0_22 = arith.constant 0 : index
    %30 = vector.load %arg3[%c6, %c0_22] : memref<10x384xf32, #tpu.memory_space<vmem>>, vector<1x32xf32>
    %31 = vector.extract_strided_slice %29 {offsets = [0, 0], sizes = [8, 256], strides = [1, 1]} : vector<8x384xf32> to vector<8x256xf32>
    %32 = vector.extract_strided_slice %22 {offsets = [0, 0], sizes = [8, 256], strides = [1, 1]} : vector<8x384xf32> to vector<8x256xf32>
    %33 = arith.addf %31, %32 : vector<8x256xf32>
    %cst_23 = arith.constant 5.000000e-01 : f32
    %34 = vector.broadcast %cst_23 : f32 to vector<8x256xf32>
    %35 = arith.mulf %34, %33 : vector<8x256xf32>
    %36 = math.tanh %35 : vector<8x256xf32>
    %cst_24 = arith.constant 1.000000e+00 : f32
    %37 = vector.broadcast %cst_24 : f32 to vector<8x256xf32>
    %38 = arith.addf %36, %37 : vector<8x256xf32>
    %cst_25 = arith.constant 5.000000e-01 : f32
    %39 = vector.broadcast %cst_25 : f32 to vector<8x256xf32>
    %40 = arith.mulf %39, %38 : vector<8x256xf32>
    %41 = vector.extract_strided_slice %40 {offsets = [0, 0], sizes = [8, 32], strides = [1, 1]} : vector<8x256xf32> to vector<8x32xf32>
    %42 = vector.extract_strided_slice %40 {offsets = [0, 128], sizes = [8, 32], strides = [1, 1]} : vector<8x256xf32> to vector<8x32xf32>
    %43 = vector.extract_strided_slice %29 {offsets = [0, 256], sizes = [8, 32], strides = [1, 1]} : vector<8x384xf32> to vector<8x32xf32>
    %44 = vector.extract_strided_slice %22 {offsets = [0, 256], sizes = [8, 32], strides = [1, 1]} : vector<8x384xf32> to vector<8x32xf32>
    %45 = vector.broadcast %30 : vector<1x32xf32> to vector<8x32xf32>
    %46 = arith.addf %44, %45 : vector<8x32xf32>
    %47 = arith.mulf %41, %46 : vector<8x32xf32>
    %48 = arith.addf %43, %47 : vector<8x32xf32>
    %49 = math.tanh %48 : vector<8x32xf32>
    %cst_26 = arith.constant 1.000000e+00 : f32
    %50 = vector.broadcast %cst_26 : f32 to vector<8x32xf32>
    %51 = arith.subf %50, %42 : vector<8x32xf32>
    %52 = arith.mulf %51, %49 : vector<8x32xf32>
    %53 = arith.mulf %42, %17 : vector<8x32xf32>
    %54 = arith.addf %52, %53 : vector<8x32xf32>
    %55 = arith.truncf %54 : vector<8x32xf32> to vector<8x32xbf16>
    %c64_27 = arith.constant 64 : index
    %c384_28 = arith.constant 384 : index
    %56 = vector.load %arg1[%c64_27, %c384_28] : memref<160x1152xbf16, #tpu.memory_space<vmem>>, vector<32x384xbf16>
    %cst_29 = arith.constant dense<0.000000e+00> : vector<8x384xf32>
    %57 = tpu.matmul %55, %56, %cst_29 {dimension_numbers = #tpu.dot_dimension_numbers<[1], [0], [0], [1], [0, 0, 1, 1], [], []>} : vector<8x32xbf16>, vector<32x384xbf16>, vector<8x384xf32> -> vector<8x384xf32>
    %c1 = arith.constant 1 : index
    %c0_30 = arith.constant 0 : index
    %58 = vector.load %arg3[%c1, %c0_30] : memref<10x384xf32, #tpu.memory_space<vmem>>, vector<1x384xf32>
    %59 = vector.broadcast %58 : vector<1x384xf32> to vector<8x384xf32>
    %60 = arith.addf %57, %59 : vector<8x384xf32>
    %c6_31 = arith.constant 6 : index
    %c128_32 = arith.constant 128 : index
    %61 = vector.load %arg3[%c6_31, %c128_32] : memref<10x384xf32, #tpu.memory_space<vmem>>, vector<1x32xf32>
    %62 = vector.extract_strided_slice %60 {offsets = [0, 0], sizes = [8, 256], strides = [1, 1]} : vector<8x384xf32> to vector<8x256xf32>
    %63 = vector.extract_strided_slice %25 {offsets = [0, 0], sizes = [8, 256], strides = [1, 1]} : vector<8x384xf32> to vector<8x256xf32>
    %64 = arith.addf %62, %63 : vector<8x256xf32>
    %cst_33 = arith.constant 5.000000e-01 : f32
    %65 = vector.broadcast %cst_33 : f32 to vector<8x256xf32>
    %66 = arith.mulf %65, %64 : vector<8x256xf32>
    %67 = math.tanh %66 : vector<8x256xf32>
    %cst_34 = arith.constant 1.000000e+00 : f32
    %68 = vector.broadcast %cst_34 : f32 to vector<8x256xf32>
    %69 = arith.addf %67, %68 : vector<8x256xf32>
    %cst_35 = arith.constant 5.000000e-01 : f32
    %70 = vector.broadcast %cst_35 : f32 to vector<8x256xf32>
    %71 = arith.mulf %70, %69 : vector<8x256xf32>
    %72 = vector.extract_strided_slice %71 {offsets = [0, 0], sizes = [8, 32], strides = [1, 1]} : vector<8x256xf32> to vector<8x32xf32>
    %73 = vector.extract_strided_slice %71 {offsets = [0, 128], sizes = [8, 32], strides = [1, 1]} : vector<8x256xf32> to vector<8x32xf32>
    %74 = vector.extract_strided_slice %60 {offsets = [0, 256], sizes = [8, 32], strides = [1, 1]} : vector<8x384xf32> to vector<8x32xf32>
    %75 = vector.extract_strided_slice %25 {offsets = [0, 256], sizes = [8, 32], strides = [1, 1]} : vector<8x384xf32> to vector<8x32xf32>
    %76 = vector.broadcast %61 : vector<1x32xf32> to vector<8x32xf32>
    %77 = arith.addf %75, %76 : vector<8x32xf32>
    %78 = arith.mulf %72, %77 : vector<8x32xf32>
    %79 = arith.addf %74, %78 : vector<8x32xf32>
    %80 = math.tanh %79 : vector<8x32xf32>
    %cst_36 = arith.constant 1.000000e+00 : f32
    %81 = vector.broadcast %cst_36 : f32 to vector<8x32xf32>
    %82 = arith.subf %81, %73 : vector<8x32xf32>
    %83 = arith.mulf %82, %80 : vector<8x32xf32>
    %84 = arith.mulf %73, %18 : vector<8x32xf32>
    %85 = arith.addf %83, %84 : vector<8x32xf32>
    %86 = arith.truncf %85 : vector<8x32xf32> to vector<8x32xbf16>
    %c64_37 = arith.constant 64 : index
    %c768_38 = arith.constant 768 : index
    %87 = vector.load %arg1[%c64_37, %c768_38] : memref<160x1152xbf16, #tpu.memory_space<vmem>>, vector<32x384xbf16>
    %cst_39 = arith.constant dense<0.000000e+00> : vector<8x384xf32>
    %88 = tpu.matmul %86, %87, %cst_39 {dimension_numbers = #tpu.dot_dimension_numbers<[1], [0], [0], [1], [0, 0, 1, 1], [], []>} : vector<8x32xbf16>, vector<32x384xbf16>, vector<8x384xf32> -> vector<8x384xf32>
    %c2 = arith.constant 2 : index
    %c0_40 = arith.constant 0 : index
    %89 = vector.load %arg3[%c2, %c0_40] : memref<10x384xf32, #tpu.memory_space<vmem>>, vector<1x384xf32>
    %90 = vector.broadcast %89 : vector<1x384xf32> to vector<8x384xf32>
    %91 = arith.addf %88, %90 : vector<8x384xf32>
    %c6_41 = arith.constant 6 : index
    %c256 = arith.constant 256 : index
    %92 = vector.load %arg3[%c6_41, %c256] : memref<10x384xf32, #tpu.memory_space<vmem>>, vector<1x32xf32>
    %93 = vector.extract_strided_slice %91 {offsets = [0, 0], sizes = [8, 256], strides = [1, 1]} : vector<8x384xf32> to vector<8x256xf32>
    %94 = vector.extract_strided_slice %28 {offsets = [0, 0], sizes = [8, 256], strides = [1, 1]} : vector<8x384xf32> to vector<8x256xf32>
    %95 = arith.addf %93, %94 : vector<8x256xf32>
    %cst_42 = arith.constant 5.000000e-01 : f32
    %96 = vector.broadcast %cst_42 : f32 to vector<8x256xf32>
    %97 = arith.mulf %96, %95 : vector<8x256xf32>
    %98 = math.tanh %97 : vector<8x256xf32>
    %cst_43 = arith.constant 1.000000e+00 : f32
    %99 = vector.broadcast %cst_43 : f32 to vector<8x256xf32>
    %100 = arith.addf %98, %99 : vector<8x256xf32>
    %cst_44 = arith.constant 5.000000e-01 : f32
    %101 = vector.broadcast %cst_44 : f32 to vector<8x256xf32>
    %102 = arith.mulf %101, %100 : vector<8x256xf32>
    %103 = vector.extract_strided_slice %102 {offsets = [0, 0], sizes = [8, 32], strides = [1, 1]} : vector<8x256xf32> to vector<8x32xf32>
    %104 = vector.extract_strided_slice %102 {offsets = [0, 128], sizes = [8, 32], strides = [1, 1]} : vector<8x256xf32> to vector<8x32xf32>
    %105 = vector.extract_strided_slice %91 {offsets = [0, 256], sizes = [8, 32], strides = [1, 1]} : vector<8x384xf32> to vector<8x32xf32>
    %106 = vector.extract_strided_slice %28 {offsets = [0, 256], sizes = [8, 32], strides = [1, 1]} : vector<8x384xf32> to vector<8x32xf32>
    %107 = vector.broadcast %92 : vector<1x32xf32> to vector<8x32xf32>
    %108 = arith.addf %106, %107 : vector<8x32xf32>
    %109 = arith.mulf %103, %108 : vector<8x32xf32>
    %110 = arith.addf %105, %109 : vector<8x32xf32>
    %111 = math.tanh %110 : vector<8x32xf32>
    %cst_45 = arith.constant 1.000000e+00 : f32
    %112 = vector.broadcast %cst_45 : f32 to vector<8x32xf32>
    %113 = arith.subf %112, %104 : vector<8x32xf32>
    %114 = arith.mulf %113, %111 : vector<8x32xf32>
    %115 = arith.mulf %104, %19 : vector<8x32xf32>
    %116 = arith.addf %114, %115 : vector<8x32xf32>
    %117 = arith.truncf %54 : vector<8x32xf32> to vector<8x32xbf16>
    %c0_46 = arith.constant 0 : index
    %c0_47 = arith.constant 0 : index
    %118 = vector.load %arg1[%c0_46, %c0_47] : memref<160x1152xbf16, #tpu.memory_space<vmem>>, vector<32x384xbf16>
    %cst_48 = arith.constant dense<0.000000e+00> : vector<8x384xf32>
    %119 = tpu.matmul %117, %118, %cst_48 {dimension_numbers = #tpu.dot_dimension_numbers<[1], [0], [0], [1], [0, 0, 1, 1], [], []>} : vector<8x32xbf16>, vector<32x384xbf16>, vector<8x384xf32> -> vector<8x384xf32>
    %120 = arith.truncf %85 : vector<8x32xf32> to vector<8x32xbf16>
    %c0_49 = arith.constant 0 : index
    %c384_50 = arith.constant 384 : index
    %121 = vector.load %arg1[%c0_49, %c384_50] : memref<160x1152xbf16, #tpu.memory_space<vmem>>, vector<32x384xbf16>
    %cst_51 = arith.constant dense<0.000000e+00> : vector<8x384xf32>
    %122 = tpu.matmul %120, %121, %cst_51 {dimension_numbers = #tpu.dot_dimension_numbers<[1], [0], [0], [1], [0, 0, 1, 1], [], []>} : vector<8x32xbf16>, vector<32x384xbf16>, vector<8x384xf32> -> vector<8x384xf32>
    %123 = arith.truncf %116 : vector<8x32xf32> to vector<8x32xbf16>
    %c0_52 = arith.constant 0 : index
    %c768_53 = arith.constant 768 : index
    %124 = vector.load %arg1[%c0_52, %c768_53] : memref<160x1152xbf16, #tpu.memory_space<vmem>>, vector<32x384xbf16>
    %cst_54 = arith.constant dense<0.000000e+00> : vector<8x384xf32>
    %125 = tpu.matmul %123, %124, %cst_54 {dimension_numbers = #tpu.dot_dimension_numbers<[1], [0], [0], [1], [0, 0, 1, 1], [], []>} : vector<8x32xbf16>, vector<32x384xbf16>, vector<8x384xf32> -> vector<8x384xf32>
    %c8_55 = arith.constant 8 : index
    %c0_56 = arith.constant 0 : index
    %126 = vector.load %arg5[%c8_55, %c0_56] : memref<64x384xf32, #tpu.memory_space<vmem>>, vector<8x384xf32>
    %c6_57 = arith.constant 6 : index
    %c0_58 = arith.constant 0 : index
    %127 = vector.load %arg3[%c6_57, %c0_58] : memref<10x384xf32, #tpu.memory_space<vmem>>, vector<1x32xf32>
    %128 = vector.extract_strided_slice %126 {offsets = [0, 0], sizes = [8, 256], strides = [1, 1]} : vector<8x384xf32> to vector<8x256xf32>
    %129 = vector.extract_strided_slice %119 {offsets = [0, 0], sizes = [8, 256], strides = [1, 1]} : vector<8x384xf32> to vector<8x256xf32>
    %130 = arith.addf %128, %129 : vector<8x256xf32>
    %cst_59 = arith.constant 5.000000e-01 : f32
    %131 = vector.broadcast %cst_59 : f32 to vector<8x256xf32>
    %132 = arith.mulf %131, %130 : vector<8x256xf32>
    %133 = math.tanh %132 : vector<8x256xf32>
    %cst_60 = arith.constant 1.000000e+00 : f32
    %134 = vector.broadcast %cst_60 : f32 to vector<8x256xf32>
    %135 = arith.addf %133, %134 : vector<8x256xf32>
    %cst_61 = arith.constant 5.000000e-01 : f32
    %136 = vector.broadcast %cst_61 : f32 to vector<8x256xf32>
    %137 = arith.mulf %136, %135 : vector<8x256xf32>
    %138 = vector.extract_strided_slice %137 {offsets = [0, 0], sizes = [8, 32], strides = [1, 1]} : vector<8x256xf32> to vector<8x32xf32>
    %139 = vector.extract_strided_slice %137 {offsets = [0, 128], sizes = [8, 32], strides = [1, 1]} : vector<8x256xf32> to vector<8x32xf32>
    %140 = vector.extract_strided_slice %126 {offsets = [0, 256], sizes = [8, 32], strides = [1, 1]} : vector<8x384xf32> to vector<8x32xf32>
    %141 = vector.extract_strided_slice %119 {offsets = [0, 256], sizes = [8, 32], strides = [1, 1]} : vector<8x384xf32> to vector<8x32xf32>
    %142 = vector.broadcast %127 : vector<1x32xf32> to vector<8x32xf32>
    %143 = arith.addf %141, %142 : vector<8x32xf32>
    %144 = arith.mulf %138, %143 : vector<8x32xf32>
    %145 = arith.addf %140, %144 : vector<8x32xf32>
    %146 = math.tanh %145 : vector<8x32xf32>
    %cst_62 = arith.constant 1.000000e+00 : f32
    %147 = vector.broadcast %cst_62 : f32 to vector<8x32xf32>
    %148 = arith.subf %147, %139 : vector<8x32xf32>
    %149 = arith.mulf %148, %146 : vector<8x32xf32>
    %150 = arith.mulf %139, %54 : vector<8x32xf32>
    %151 = arith.addf %149, %150 : vector<8x32xf32>
    %152 = arith.truncf %151 : vector<8x32xf32> to vector<8x32xbf16>
    %c64_63 = arith.constant 64 : index
    %c384_64 = arith.constant 384 : index
    %153 = vector.load %arg1[%c64_63, %c384_64] : memref<160x1152xbf16, #tpu.memory_space<vmem>>, vector<32x384xbf16>
    %cst_65 = arith.constant dense<0.000000e+00> : vector<8x384xf32>
    %154 = tpu.matmul %152, %153, %cst_65 {dimension_numbers = #tpu.dot_dimension_numbers<[1], [0], [0], [1], [0, 0, 1, 1], [], []>} : vector<8x32xbf16>, vector<32x384xbf16>, vector<8x384xf32> -> vector<8x384xf32>
    %c1_66 = arith.constant 1 : index
    %c0_67 = arith.constant 0 : index
    %155 = vector.load %arg3[%c1_66, %c0_67] : memref<10x384xf32, #tpu.memory_space<vmem>>, vector<1x384xf32>
    %156 = vector.broadcast %155 : vector<1x384xf32> to vector<8x384xf32>
    %157 = arith.addf %154, %156 : vector<8x384xf32>
    %c6_68 = arith.constant 6 : index
    %c128_69 = arith.constant 128 : index
    %158 = vector.load %arg3[%c6_68, %c128_69] : memref<10x384xf32, #tpu.memory_space<vmem>>, vector<1x32xf32>
    %159 = vector.extract_strided_slice %157 {offsets = [0, 0], sizes = [8, 256], strides = [1, 1]} : vector<8x384xf32> to vector<8x256xf32>
    %160 = vector.extract_strided_slice %122 {offsets = [0, 0], sizes = [8, 256], strides = [1, 1]} : vector<8x384xf32> to vector<8x256xf32>
    %161 = arith.addf %159, %160 : vector<8x256xf32>
    %cst_70 = arith.constant 5.000000e-01 : f32
    %162 = vector.broadcast %cst_70 : f32 to vector<8x256xf32>
    %163 = arith.mulf %162, %161 : vector<8x256xf32>
    %164 = math.tanh %163 : vector<8x256xf32>
    %cst_71 = arith.constant 1.000000e+00 : f32
    %165 = vector.broadcast %cst_71 : f32 to vector<8x256xf32>
    %166 = arith.addf %164, %165 : vector<8x256xf32>
    %cst_72 = arith.constant 5.000000e-01 : f32
    %167 = vector.broadcast %cst_72 : f32 to vector<8x256xf32>
    %168 = arith.mulf %167, %166 : vector<8x256xf32>
    %169 = vector.extract_strided_slice %168 {offsets = [0, 0], sizes = [8, 32], strides = [1, 1]} : vector<8x256xf32> to vector<8x32xf32>
    %170 = vector.extract_strided_slice %168 {offsets = [0, 128], sizes = [8, 32], strides = [1, 1]} : vector<8x256xf32> to vector<8x32xf32>
    %171 = vector.extract_strided_slice %157 {offsets = [0, 256], sizes = [8, 32], strides = [1, 1]} : vector<8x384xf32> to vector<8x32xf32>
    %172 = vector.extract_strided_slice %122 {offsets = [0, 256], sizes = [8, 32], strides = [1, 1]} : vector<8x384xf32> to vector<8x32xf32>
    %173 = vector.broadcast %158 : vector<1x32xf32> to vector<8x32xf32>
    %174 = arith.addf %172, %173 : vector<8x32xf32>
    %175 = arith.mulf %169, %174 : vector<8x32xf32>
    %176 = arith.addf %171, %175 : vector<8x32xf32>
    %177 = math.tanh %176 : vector<8x32xf32>
    %cst_73 = arith.constant 1.000000e+00 : f32
    %178 = vector.broadcast %cst_73 : f32 to vector<8x32xf32>
    %179 = arith.subf %178, %170 : vector<8x32xf32>
    %180 = arith.mulf %179, %177 : vector<8x32xf32>
    %181 = arith.mulf %170, %85 : vector<8x32xf32>
    %182 = arith.addf %180, %181 : vector<8x32xf32>
    %183 = arith.truncf %182 : vector<8x32xf32> to vector<8x32xbf16>
    %c64_74 = arith.constant 64 : index
    %c768_75 = arith.constant 768 : index
    %184 = vector.load %arg1[%c64_74, %c768_75] : memref<160x1152xbf16, #tpu.memory_space<vmem>>, vector<32x384xbf16>
    %cst_76 = arith.constant dense<0.000000e+00> : vector<8x384xf32>
    %185 = tpu.matmul %183, %184, %cst_76 {dimension_numbers = #tpu.dot_dimension_numbers<[1], [0], [0], [1], [0, 0, 1, 1], [], []>} : vector<8x32xbf16>, vector<32x384xbf16>, vector<8x384xf32> -> vector<8x384xf32>
    %c2_77 = arith.constant 2 : index
    %c0_78 = arith.constant 0 : index
    %186 = vector.load %arg3[%c2_77, %c0_78] : memref<10x384xf32, #tpu.memory_space<vmem>>, vector<1x384xf32>
    %187 = vector.broadcast %186 : vector<1x384xf32> to vector<8x384xf32>
    %188 = arith.addf %185, %187 : vector<8x384xf32>
    %c6_79 = arith.constant 6 : index
    %c256_80 = arith.constant 256 : index
    %189 = vector.load %arg3[%c6_79, %c256_80] : memref<10x384xf32, #tpu.memory_space<vmem>>, vector<1x32xf32>
    %190 = vector.extract_strided_slice %188 {offsets = [0, 0], sizes = [8, 256], strides = [1, 1]} : vector<8x384xf32> to vector<8x256xf32>
    %191 = vector.extract_strided_slice %125 {offsets = [0, 0], sizes = [8, 256], strides = [1, 1]} : vector<8x384xf32> to vector<8x256xf32>
    %192 = arith.addf %190, %191 : vector<8x256xf32>
    %cst_81 = arith.constant 5.000000e-01 : f32
    %193 = vector.broadcast %cst_81 : f32 to vector<8x256xf32>
    %194 = arith.mulf %193, %192 : vector<8x256xf32>
    %195 = math.tanh %194 : vector<8x256xf32>
    %cst_82 = arith.constant 1.000000e+00 : f32
    %196 = vector.broadcast %cst_82 : f32 to vector<8x256xf32>
    %197 = arith.addf %195, %196 : vector<8x256xf32>
    %cst_83 = arith.constant 5.000000e-01 : f32
    %198 = vector.broadcast %cst_83 : f32 to vector<8x256xf32>
    %199 = arith.mulf %198, %197 : vector<8x256xf32>
    %200 = vector.extract_strided_slice %199 {offsets = [0, 0], sizes = [8, 32], strides = [1, 1]} : vector<8x256xf32> to vector<8x32xf32>
    %201 = vector.extract_strided_slice %199 {offsets = [0, 128], sizes = [8, 32], strides = [1, 1]} : vector<8x256xf32> to vector<8x32xf32>
    %202 = vector.extract_strided_slice %188 {offsets = [0, 256], sizes = [8, 32], strides = [1, 1]} : vector<8x384xf32> to vector<8x32xf32>
    %203 = vector.extract_strided_slice %125 {offsets = [0, 256], sizes = [8, 32], strides = [1, 1]} : vector<8x384xf32> to vector<8x32xf32>
    %204 = vector.broadcast %189 : vector<1x32xf32> to vector<8x32xf32>
    %205 = arith.addf %203, %204 : vector<8x32xf32>
    %206 = arith.mulf %200, %205 : vector<8x32xf32>
    %207 = arith.addf %202, %206 : vector<8x32xf32>
    %208 = math.tanh %207 : vector<8x32xf32>
    %cst_84 = arith.constant 1.000000e+00 : f32
    %209 = vector.broadcast %cst_84 : f32 to vector<8x32xf32>
    %210 = arith.subf %209, %201 : vector<8x32xf32>
    %211 = arith.mulf %210, %208 : vector<8x32xf32>
    %212 = arith.mulf %201, %116 : vector<8x32xf32>
    %213 = arith.addf %211, %212 : vector<8x32xf32>
    %214 = arith.truncf %151 : vector<8x32xf32> to vector<8x32xbf16>
    %c0_85 = arith.constant 0 : index
    %c0_86 = arith.constant 0 : index
    %215 = vector.load %arg1[%c0_85, %c0_86] : memref<160x1152xbf16, #tpu.memory_space<vmem>>, vector<32x384xbf16>
    %cst_87 = arith.constant dense<0.000000e+00> : vector<8x384xf32>
    %216 = tpu.matmul %214, %215, %cst_87 {dimension_numbers = #tpu.dot_dimension_numbers<[1], [0], [0], [1], [0, 0, 1, 1], [], []>} : vector<8x32xbf16>, vector<32x384xbf16>, vector<8x384xf32> -> vector<8x384xf32>
    %217 = arith.truncf %182 : vector<8x32xf32> to vector<8x32xbf16>
    %c0_88 = arith.constant 0 : index
    %c384_89 = arith.constant 384 : index
    %218 = vector.load %arg1[%c0_88, %c384_89] : memref<160x1152xbf16, #tpu.memory_space<vmem>>, vector<32x384xbf16>
    %cst_90 = arith.constant dense<0.000000e+00> : vector<8x384xf32>
    %219 = tpu.matmul %217, %218, %cst_90 {dimension_numbers = #tpu.dot_dimension_numbers<[1], [0], [0], [1], [0, 0, 1, 1], [], []>} : vector<8x32xbf16>, vector<32x384xbf16>, vector<8x384xf32> -> vector<8x384xf32>
    %220 = arith.truncf %213 : vector<8x32xf32> to vector<8x32xbf16>
    %c0_91 = arith.constant 0 : index
    %c768_92 = arith.constant 768 : index
    %221 = vector.load %arg1[%c0_91, %c768_92] : memref<160x1152xbf16, #tpu.memory_space<vmem>>, vector<32x384xbf16>
    %cst_93 = arith.constant dense<0.000000e+00> : vector<8x384xf32>
    %222 = tpu.matmul %220, %221, %cst_93 {dimension_numbers = #tpu.dot_dimension_numbers<[1], [0], [0], [1], [0, 0, 1, 1], [], []>} : vector<8x32xbf16>, vector<32x384xbf16>, vector<8x384xf32> -> vector<8x384xf32>
    %c16 = arith.constant 16 : index
    %c0_94 = arith.constant 0 : index
    %223 = vector.load %arg5[%c16, %c0_94] : memref<64x384xf32, #tpu.memory_space<vmem>>, vector<8x384xf32>
    %c6_95 = arith.constant 6 : index
    %c0_96 = arith.constant 0 : index
    %224 = vector.load %arg3[%c6_95, %c0_96] : memref<10x384xf32, #tpu.memory_space<vmem>>, vector<1x32xf32>
    %225 = vector.extract_strided_slice %223 {offsets = [0, 0], sizes = [8, 256], strides = [1, 1]} : vector<8x384xf32> to vector<8x256xf32>
    %226 = vector.extract_strided_slice %216 {offsets = [0, 0], sizes = [8, 256], strides = [1, 1]} : vector<8x384xf32> to vector<8x256xf32>
    %227 = arith.addf %225, %226 : vector<8x256xf32>
    %cst_97 = arith.constant 5.000000e-01 : f32
    %228 = vector.broadcast %cst_97 : f32 to vector<8x256xf32>
    %229 = arith.mulf %228, %227 : vector<8x256xf32>
    %230 = math.tanh %229 : vector<8x256xf32>
    %cst_98 = arith.constant 1.000000e+00 : f32
    %231 = vector.broadcast %cst_98 : f32 to vector<8x256xf32>
    %232 = arith.addf %230, %231 : vector<8x256xf32>
    %cst_99 = arith.constant 5.000000e-01 : f32
    %233 = vector.broadcast %cst_99 : f32 to vector<8x256xf32>
    %234 = arith.mulf %233, %232 : vector<8x256xf32>
    %235 = vector.extract_strided_slice %234 {offsets = [0, 0], sizes = [8, 32], strides = [1, 1]} : vector<8x256xf32> to vector<8x32xf32>
    %236 = vector.extract_strided_slice %234 {offsets = [0, 128], sizes = [8, 32], strides = [1, 1]} : vector<8x256xf32> to vector<8x32xf32>
    %237 = vector.extract_strided_slice %223 {offsets = [0, 256], sizes = [8, 32], strides = [1, 1]} : vector<8x384xf32> to vector<8x32xf32>
    %238 = vector.extract_strided_slice %216 {offsets = [0, 256], sizes = [8, 32], strides = [1, 1]} : vector<8x384xf32> to vector<8x32xf32>
    %239 = vector.broadcast %224 : vector<1x32xf32> to vector<8x32xf32>
    %240 = arith.addf %238, %239 : vector<8x32xf32>
    %241 = arith.mulf %235, %240 : vector<8x32xf32>
    %242 = arith.addf %237, %241 : vector<8x32xf32>
    %243 = math.tanh %242 : vector<8x32xf32>
    %cst_100 = arith.constant 1.000000e+00 : f32
    %244 = vector.broadcast %cst_100 : f32 to vector<8x32xf32>
    %245 = arith.subf %244, %236 : vector<8x32xf32>
    %246 = arith.mulf %245, %243 : vector<8x32xf32>
    %247 = arith.mulf %236, %151 : vector<8x32xf32>
    %248 = arith.addf %246, %247 : vector<8x32xf32>
    %249 = arith.truncf %248 : vector<8x32xf32> to vector<8x32xbf16>
    %c64_101 = arith.constant 64 : index
    %c384_102 = arith.constant 384 : index
    %250 = vector.load %arg1[%c64_101, %c384_102] : memref<160x1152xbf16, #tpu.memory_space<vmem>>, vector<32x384xbf16>
    %cst_103 = arith.constant dense<0.000000e+00> : vector<8x384xf32>
    %251 = tpu.matmul %249, %250, %cst_103 {dimension_numbers = #tpu.dot_dimension_numbers<[1], [0], [0], [1], [0, 0, 1, 1], [], []>} : vector<8x32xbf16>, vector<32x384xbf16>, vector<8x384xf32> -> vector<8x384xf32>
    %c1_104 = arith.constant 1 : index
    %c0_105 = arith.constant 0 : index
    %252 = vector.load %arg3[%c1_104, %c0_105] : memref<10x384xf32, #tpu.memory_space<vmem>>, vector<1x384xf32>
    %253 = vector.broadcast %252 : vector<1x384xf32> to vector<8x384xf32>
    %254 = arith.addf %251, %253 : vector<8x384xf32>
    %c6_106 = arith.constant 6 : index
    %c128_107 = arith.constant 128 : index
    %255 = vector.load %arg3[%c6_106, %c128_107] : memref<10x384xf32, #tpu.memory_space<vmem>>, vector<1x32xf32>
    %256 = vector.extract_strided_slice %254 {offsets = [0, 0], sizes = [8, 256], strides = [1, 1]} : vector<8x384xf32> to vector<8x256xf32>
    %257 = vector.extract_strided_slice %219 {offsets = [0, 0], sizes = [8, 256], strides = [1, 1]} : vector<8x384xf32> to vector<8x256xf32>
    %258 = arith.addf %256, %257 : vector<8x256xf32>
    %cst_108 = arith.constant 5.000000e-01 : f32
    %259 = vector.broadcast %cst_108 : f32 to vector<8x256xf32>
    %260 = arith.mulf %259, %258 : vector<8x256xf32>
    %261 = math.tanh %260 : vector<8x256xf32>
    %cst_109 = arith.constant 1.000000e+00 : f32
    %262 = vector.broadcast %cst_109 : f32 to vector<8x256xf32>
    %263 = arith.addf %261, %262 : vector<8x256xf32>
    %cst_110 = arith.constant 5.000000e-01 : f32
    %264 = vector.broadcast %cst_110 : f32 to vector<8x256xf32>
    %265 = arith.mulf %264, %263 : vector<8x256xf32>
    %266 = vector.extract_strided_slice %265 {offsets = [0, 0], sizes = [8, 32], strides = [1, 1]} : vector<8x256xf32> to vector<8x32xf32>
    %267 = vector.extract_strided_slice %265 {offsets = [0, 128], sizes = [8, 32], strides = [1, 1]} : vector<8x256xf32> to vector<8x32xf32>
    %268 = vector.extract_strided_slice %254 {offsets = [0, 256], sizes = [8, 32], strides = [1, 1]} : vector<8x384xf32> to vector<8x32xf32>
    %269 = vector.extract_strided_slice %219 {offsets = [0, 256], sizes = [8, 32], strides = [1, 1]} : vector<8x384xf32> to vector<8x32xf32>
    %270 = vector.broadcast %255 : vector<1x32xf32> to vector<8x32xf32>
    %271 = arith.addf %269, %270 : vector<8x32xf32>
    %272 = arith.mulf %266, %271 : vector<8x32xf32>
    %273 = arith.addf %268, %272 : vector<8x32xf32>
    %274 = math.tanh %273 : vector<8x32xf32>
    %cst_111 = arith.constant 1.000000e+00 : f32
    %275 = vector.broadcast %cst_111 : f32 to vector<8x32xf32>
    %276 = arith.subf %275, %267 : vector<8x32xf32>
    %277 = arith.mulf %276, %274 : vector<8x32xf32>
    %278 = arith.mulf %267, %182 : vector<8x32xf32>
    %279 = arith.addf %277, %278 : vector<8x32xf32>
    %280 = arith.truncf %279 : vector<8x32xf32> to vector<8x32xbf16>
    %c64_112 = arith.constant 64 : index
    %c768_113 = arith.constant 768 : index
    %281 = vector.load %arg1[%c64_112, %c768_113] : memref<160x1152xbf16, #tpu.memory_space<vmem>>, vector<32x384xbf16>
    %cst_114 = arith.constant dense<0.000000e+00> : vector<8x384xf32>
    %282 = tpu.matmul %280, %281, %cst_114 {dimension_numbers = #tpu.dot_dimension_numbers<[1], [0], [0], [1], [0, 0, 1, 1], [], []>} : vector<8x32xbf16>, vector<32x384xbf16>, vector<8x384xf32> -> vector<8x384xf32>
    %c2_115 = arith.constant 2 : index
    %c0_116 = arith.constant 0 : index
    %283 = vector.load %arg3[%c2_115, %c0_116] : memref<10x384xf32, #tpu.memory_space<vmem>>, vector<1x384xf32>
    %284 = vector.broadcast %283 : vector<1x384xf32> to vector<8x384xf32>
    %285 = arith.addf %282, %284 : vector<8x384xf32>
    %c6_117 = arith.constant 6 : index
    %c256_118 = arith.constant 256 : index
    %286 = vector.load %arg3[%c6_117, %c256_118] : memref<10x384xf32, #tpu.memory_space<vmem>>, vector<1x32xf32>
    %287 = vector.extract_strided_slice %285 {offsets = [0, 0], sizes = [8, 256], strides = [1, 1]} : vector<8x384xf32> to vector<8x256xf32>
    %288 = vector.extract_strided_slice %222 {offsets = [0, 0], sizes = [8, 256], strides = [1, 1]} : vector<8x384xf32> to vector<8x256xf32>
    %289 = arith.addf %287, %288 : vector<8x256xf32>
    %cst_119 = arith.constant 5.000000e-01 : f32
    %290 = vector.broadcast %cst_119 : f32 to vector<8x256xf32>
    %291 = arith.mulf %290, %289 : vector<8x256xf32>
    %292 = math.tanh %291 : vector<8x256xf32>
    %cst_120 = arith.constant 1.000000e+00 : f32
    %293 = vector.broadcast %cst_120 : f32 to vector<8x256xf32>
    %294 = arith.addf %292, %293 : vector<8x256xf32>
    %cst_121 = arith.constant 5.000000e-01 : f32
    %295 = vector.broadcast %cst_121 : f32 to vector<8x256xf32>
    %296 = arith.mulf %295, %294 : vector<8x256xf32>
    %297 = vector.extract_strided_slice %296 {offsets = [0, 0], sizes = [8, 32], strides = [1, 1]} : vector<8x256xf32> to vector<8x32xf32>
    %298 = vector.extract_strided_slice %296 {offsets = [0, 128], sizes = [8, 32], strides = [1, 1]} : vector<8x256xf32> to vector<8x32xf32>
    %299 = vector.extract_strided_slice %285 {offsets = [0, 256], sizes = [8, 32], strides = [1, 1]} : vector<8x384xf32> to vector<8x32xf32>
    %300 = vector.extract_strided_slice %222 {offsets = [0, 256], sizes = [8, 32], strides = [1, 1]} : vector<8x384xf32> to vector<8x32xf32>
    %301 = vector.broadcast %286 : vector<1x32xf32> to vector<8x32xf32>
    %302 = arith.addf %300, %301 : vector<8x32xf32>
    %303 = arith.mulf %297, %302 : vector<8x32xf32>
    %304 = arith.addf %299, %303 : vector<8x32xf32>
    %305 = math.tanh %304 : vector<8x32xf32>
    %cst_122 = arith.constant 1.000000e+00 : f32
    %306 = vector.broadcast %cst_122 : f32 to vector<8x32xf32>
    %307 = arith.subf %306, %298 : vector<8x32xf32>
    %308 = arith.mulf %307, %305 : vector<8x32xf32>
    %309 = arith.mulf %298, %213 : vector<8x32xf32>
    %310 = arith.addf %308, %309 : vector<8x32xf32>
    %311 = arith.truncf %248 : vector<8x32xf32> to vector<8x32xbf16>
    %c0_123 = arith.constant 0 : index
    %c0_124 = arith.constant 0 : index
    %312 = vector.load %arg1[%c0_123, %c0_124] : memref<160x1152xbf16, #tpu.memory_space<vmem>>, vector<32x384xbf16>
    %cst_125 = arith.constant dense<0.000000e+00> : vector<8x384xf32>
    %313 = tpu.matmul %311, %312, %cst_125 {dimension_numbers = #tpu.dot_dimension_numbers<[1], [0], [0], [1], [0, 0, 1, 1], [], []>} : vector<8x32xbf16>, vector<32x384xbf16>, vector<8x384xf32> -> vector<8x384xf32>
    %314 = arith.truncf %279 : vector<8x32xf32> to vector<8x32xbf16>
    %c0_126 = arith.constant 0 : index
    %c384_127 = arith.constant 384 : index
    %315 = vector.load %arg1[%c0_126, %c384_127] : memref<160x1152xbf16, #tpu.memory_space<vmem>>, vector<32x384xbf16>
    %cst_128 = arith.constant dense<0.000000e+00> : vector<8x384xf32>
    %316 = tpu.matmul %314, %315, %cst_128 {dimension_numbers = #tpu.dot_dimension_numbers<[1], [0], [0], [1], [0, 0, 1, 1], [], []>} : vector<8x32xbf16>, vector<32x384xbf16>, vector<8x384xf32> -> vector<8x384xf32>
    %317 = arith.truncf %310 : vector<8x32xf32> to vector<8x32xbf16>
    %c0_129 = arith.constant 0 : index
    %c768_130 = arith.constant 768 : index
    %318 = vector.load %arg1[%c0_129, %c768_130] : memref<160x1152xbf16, #tpu.memory_space<vmem>>, vector<32x384xbf16>
    %cst_131 = arith.constant dense<0.000000e+00> : vector<8x384xf32>
    %319 = tpu.matmul %317, %318, %cst_131 {dimension_numbers = #tpu.dot_dimension_numbers<[1], [0], [0], [1], [0, 0, 1, 1], [], []>} : vector<8x32xbf16>, vector<32x384xbf16>, vector<8x384xf32> -> vector<8x384xf32>
    %c24 = arith.constant 24 : index
    %c0_132 = arith.constant 0 : index
    %320 = vector.load %arg5[%c24, %c0_132] : memref<64x384xf32, #tpu.memory_space<vmem>>, vector<8x384xf32>
    %c6_133 = arith.constant 6 : index
    %c0_134 = arith.constant 0 : index
    %321 = vector.load %arg3[%c6_133, %c0_134] : memref<10x384xf32, #tpu.memory_space<vmem>>, vector<1x32xf32>
    %322 = vector.extract_strided_slice %320 {offsets = [0, 0], sizes = [8, 256], strides = [1, 1]} : vector<8x384xf32> to vector<8x256xf32>
    %323 = vector.extract_strided_slice %313 {offsets = [0, 0], sizes = [8, 256], strides = [1, 1]} : vector<8x384xf32> to vector<8x256xf32>
    %324 = arith.addf %322, %323 : vector<8x256xf32>
    %cst_135 = arith.constant 5.000000e-01 : f32
    %325 = vector.broadcast %cst_135 : f32 to vector<8x256xf32>
    %326 = arith.mulf %325, %324 : vector<8x256xf32>
    %327 = math.tanh %326 : vector<8x256xf32>
    %cst_136 = arith.constant 1.000000e+00 : f32
    %328 = vector.broadcast %cst_136 : f32 to vector<8x256xf32>
    %329 = arith.addf %327, %328 : vector<8x256xf32>
    %cst_137 = arith.constant 5.000000e-01 : f32
    %330 = vector.broadcast %cst_137 : f32 to vector<8x256xf32>
    %331 = arith.mulf %330, %329 : vector<8x256xf32>
    %332 = vector.extract_strided_slice %331 {offsets = [0, 0], sizes = [8, 32], strides = [1, 1]} : vector<8x256xf32> to vector<8x32xf32>
    %333 = vector.extract_strided_slice %331 {offsets = [0, 128], sizes = [8, 32], strides = [1, 1]} : vector<8x256xf32> to vector<8x32xf32>
    %334 = vector.extract_strided_slice %320 {offsets = [0, 256], sizes = [8, 32], strides = [1, 1]} : vector<8x384xf32> to vector<8x32xf32>
    %335 = vector.extract_strided_slice %313 {offsets = [0, 256], sizes = [8, 32], strides = [1, 1]} : vector<8x384xf32> to vector<8x32xf32>
    %336 = vector.broadcast %321 : vector<1x32xf32> to vector<8x32xf32>
    %337 = arith.addf %335, %336 : vector<8x32xf32>
    %338 = arith.mulf %332, %337 : vector<8x32xf32>
    %339 = arith.addf %334, %338 : vector<8x32xf32>
    %340 = math.tanh %339 : vector<8x32xf32>
    %cst_138 = arith.constant 1.000000e+00 : f32
    %341 = vector.broadcast %cst_138 : f32 to vector<8x32xf32>
    %342 = arith.subf %341, %333 : vector<8x32xf32>
    %343 = arith.mulf %342, %340 : vector<8x32xf32>
    %344 = arith.mulf %333, %248 : vector<8x32xf32>
    %345 = arith.addf %343, %344 : vector<8x32xf32>
    %346 = arith.truncf %345 : vector<8x32xf32> to vector<8x32xbf16>
    %c64_139 = arith.constant 64 : index
    %c384_140 = arith.constant 384 : index
    %347 = vector.load %arg1[%c64_139, %c384_140] : memref<160x1152xbf16, #tpu.memory_space<vmem>>, vector<32x384xbf16>
    %cst_141 = arith.constant dense<0.000000e+00> : vector<8x384xf32>
    %348 = tpu.matmul %346, %347, %cst_141 {dimension_numbers = #tpu.dot_dimension_numbers<[1], [0], [0], [1], [0, 0, 1, 1], [], []>} : vector<8x32xbf16>, vector<32x384xbf16>, vector<8x384xf32> -> vector<8x384xf32>
    %c1_142 = arith.constant 1 : index
    %c0_143 = arith.constant 0 : index
    %349 = vector.load %arg3[%c1_142, %c0_143] : memref<10x384xf32, #tpu.memory_space<vmem>>, vector<1x384xf32>
    %350 = vector.broadcast %349 : vector<1x384xf32> to vector<8x384xf32>
    %351 = arith.addf %348, %350 : vector<8x384xf32>
    %c6_144 = arith.constant 6 : index
    %c128_145 = arith.constant 128 : index
    %352 = vector.load %arg3[%c6_144, %c128_145] : memref<10x384xf32, #tpu.memory_space<vmem>>, vector<1x32xf32>
    %353 = vector.extract_strided_slice %351 {offsets = [0, 0], sizes = [8, 256], strides = [1, 1]} : vector<8x384xf32> to vector<8x256xf32>
    %354 = vector.extract_strided_slice %316 {offsets = [0, 0], sizes = [8, 256], strides = [1, 1]} : vector<8x384xf32> to vector<8x256xf32>
    %355 = arith.addf %353, %354 : vector<8x256xf32>
    %cst_146 = arith.constant 5.000000e-01 : f32
    %356 = vector.broadcast %cst_146 : f32 to vector<8x256xf32>
    %357 = arith.mulf %356, %355 : vector<8x256xf32>
    %358 = math.tanh %357 : vector<8x256xf32>
    %cst_147 = arith.constant 1.000000e+00 : f32
    %359 = vector.broadcast %cst_147 : f32 to vector<8x256xf32>
    %360 = arith.addf %358, %359 : vector<8x256xf32>
    %cst_148 = arith.constant 5.000000e-01 : f32
    %361 = vector.broadcast %cst_148 : f32 to vector<8x256xf32>
    %362 = arith.mulf %361, %360 : vector<8x256xf32>
    %363 = vector.extract_strided_slice %362 {offsets = [0, 0], sizes = [8, 32], strides = [1, 1]} : vector<8x256xf32> to vector<8x32xf32>
    %364 = vector.extract_strided_slice %362 {offsets = [0, 128], sizes = [8, 32], strides = [1, 1]} : vector<8x256xf32> to vector<8x32xf32>
    %365 = vector.extract_strided_slice %351 {offsets = [0, 256], sizes = [8, 32], strides = [1, 1]} : vector<8x384xf32> to vector<8x32xf32>
    %366 = vector.extract_strided_slice %316 {offsets = [0, 256], sizes = [8, 32], strides = [1, 1]} : vector<8x384xf32> to vector<8x32xf32>
    %367 = vector.broadcast %352 : vector<1x32xf32> to vector<8x32xf32>
    %368 = arith.addf %366, %367 : vector<8x32xf32>
    %369 = arith.mulf %363, %368 : vector<8x32xf32>
    %370 = arith.addf %365, %369 : vector<8x32xf32>
    %371 = math.tanh %370 : vector<8x32xf32>
    %cst_149 = arith.constant 1.000000e+00 : f32
    %372 = vector.broadcast %cst_149 : f32 to vector<8x32xf32>
    %373 = arith.subf %372, %364 : vector<8x32xf32>
    %374 = arith.mulf %373, %371 : vector<8x32xf32>
    %375 = arith.mulf %364, %279 : vector<8x32xf32>
    %376 = arith.addf %374, %375 : vector<8x32xf32>
    %377 = arith.truncf %376 : vector<8x32xf32> to vector<8x32xbf16>
    %c64_150 = arith.constant 64 : index
    %c768_151 = arith.constant 768 : index
    %378 = vector.load %arg1[%c64_150, %c768_151] : memref<160x1152xbf16, #tpu.memory_space<vmem>>, vector<32x384xbf16>
    %cst_152 = arith.constant dense<0.000000e+00> : vector<8x384xf32>
    %379 = tpu.matmul %377, %378, %cst_152 {dimension_numbers = #tpu.dot_dimension_numbers<[1], [0], [0], [1], [0, 0, 1, 1], [], []>} : vector<8x32xbf16>, vector<32x384xbf16>, vector<8x384xf32> -> vector<8x384xf32>
    %c2_153 = arith.constant 2 : index
    %c0_154 = arith.constant 0 : index
    %380 = vector.load %arg3[%c2_153, %c0_154] : memref<10x384xf32, #tpu.memory_space<vmem>>, vector<1x384xf32>
    %381 = vector.broadcast %380 : vector<1x384xf32> to vector<8x384xf32>
    %382 = arith.addf %379, %381 : vector<8x384xf32>
    %c6_155 = arith.constant 6 : index
    %c256_156 = arith.constant 256 : index
    %383 = vector.load %arg3[%c6_155, %c256_156] : memref<10x384xf32, #tpu.memory_space<vmem>>, vector<1x32xf32>
    %384 = vector.extract_strided_slice %382 {offsets = [0, 0], sizes = [8, 256], strides = [1, 1]} : vector<8x384xf32> to vector<8x256xf32>
    %385 = vector.extract_strided_slice %319 {offsets = [0, 0], sizes = [8, 256], strides = [1, 1]} : vector<8x384xf32> to vector<8x256xf32>
    %386 = arith.addf %384, %385 : vector<8x256xf32>
    %cst_157 = arith.constant 5.000000e-01 : f32
    %387 = vector.broadcast %cst_157 : f32 to vector<8x256xf32>
    %388 = arith.mulf %387, %386 : vector<8x256xf32>
    %389 = math.tanh %388 : vector<8x256xf32>
    %cst_158 = arith.constant 1.000000e+00 : f32
    %390 = vector.broadcast %cst_158 : f32 to vector<8x256xf32>
    %391 = arith.addf %389, %390 : vector<8x256xf32>
    %cst_159 = arith.constant 5.000000e-01 : f32
    %392 = vector.broadcast %cst_159 : f32 to vector<8x256xf32>
    %393 = arith.mulf %392, %391 : vector<8x256xf32>
    %394 = vector.extract_strided_slice %393 {offsets = [0, 0], sizes = [8, 32], strides = [1, 1]} : vector<8x256xf32> to vector<8x32xf32>
    %395 = vector.extract_strided_slice %393 {offsets = [0, 128], sizes = [8, 32], strides = [1, 1]} : vector<8x256xf32> to vector<8x32xf32>
    %396 = vector.extract_strided_slice %382 {offsets = [0, 256], sizes = [8, 32], strides = [1, 1]} : vector<8x384xf32> to vector<8x32xf32>
    %397 = vector.extract_strided_slice %319 {offsets = [0, 256], sizes = [8, 32], strides = [1, 1]} : vector<8x384xf32> to vector<8x32xf32>
    %398 = vector.broadcast %383 : vector<1x32xf32> to vector<8x32xf32>
    %399 = arith.addf %397, %398 : vector<8x32xf32>
    %400 = arith.mulf %394, %399 : vector<8x32xf32>
    %401 = arith.addf %396, %400 : vector<8x32xf32>
    %402 = math.tanh %401 : vector<8x32xf32>
    %cst_160 = arith.constant 1.000000e+00 : f32
    %403 = vector.broadcast %cst_160 : f32 to vector<8x32xf32>
    %404 = arith.subf %403, %395 : vector<8x32xf32>
    %405 = arith.mulf %404, %402 : vector<8x32xf32>
    %406 = arith.mulf %395, %310 : vector<8x32xf32>
    %407 = arith.addf %405, %406 : vector<8x32xf32>
    %408 = arith.truncf %345 : vector<8x32xf32> to vector<8x32xbf16>
    %c0_161 = arith.constant 0 : index
    %c0_162 = arith.constant 0 : index
    %409 = vector.load %arg1[%c0_161, %c0_162] : memref<160x1152xbf16, #tpu.memory_space<vmem>>, vector<32x384xbf16>
    %cst_163 = arith.constant dense<0.000000e+00> : vector<8x384xf32>
    %410 = tpu.matmul %408, %409, %cst_163 {dimension_numbers = #tpu.dot_dimension_numbers<[1], [0], [0], [1], [0, 0, 1, 1], [], []>} : vector<8x32xbf16>, vector<32x384xbf16>, vector<8x384xf32> -> vector<8x384xf32>
    %411 = arith.truncf %376 : vector<8x32xf32> to vector<8x32xbf16>
    %c0_164 = arith.constant 0 : index
    %c384_165 = arith.constant 384 : index
    %412 = vector.load %arg1[%c0_164, %c384_165] : memref<160x1152xbf16, #tpu.memory_space<vmem>>, vector<32x384xbf16>
    %cst_166 = arith.constant dense<0.000000e+00> : vector<8x384xf32>
    %413 = tpu.matmul %411, %412, %cst_166 {dimension_numbers = #tpu.dot_dimension_numbers<[1], [0], [0], [1], [0, 0, 1, 1], [], []>} : vector<8x32xbf16>, vector<32x384xbf16>, vector<8x384xf32> -> vector<8x384xf32>
    %414 = arith.truncf %407 : vector<8x32xf32> to vector<8x32xbf16>
    %c0_167 = arith.constant 0 : index
    %c768_168 = arith.constant 768 : index
    %415 = vector.load %arg1[%c0_167, %c768_168] : memref<160x1152xbf16, #tpu.memory_space<vmem>>, vector<32x384xbf16>
    %cst_169 = arith.constant dense<0.000000e+00> : vector<8x384xf32>
    %416 = tpu.matmul %414, %415, %cst_169 {dimension_numbers = #tpu.dot_dimension_numbers<[1], [0], [0], [1], [0, 0, 1, 1], [], []>} : vector<8x32xbf16>, vector<32x384xbf16>, vector<8x384xf32> -> vector<8x384xf32>
    %c32 = arith.constant 32 : index
    %c0_170 = arith.constant 0 : index
    %417 = vector.load %arg5[%c32, %c0_170] : memref<64x384xf32, #tpu.memory_space<vmem>>, vector<8x384xf32>
    %c6_171 = arith.constant 6 : index
    %c0_172 = arith.constant 0 : index
    %418 = vector.load %arg3[%c6_171, %c0_172] : memref<10x384xf32, #tpu.memory_space<vmem>>, vector<1x32xf32>
    %419 = vector.extract_strided_slice %417 {offsets = [0, 0], sizes = [8, 256], strides = [1, 1]} : vector<8x384xf32> to vector<8x256xf32>
    %420 = vector.extract_strided_slice %410 {offsets = [0, 0], sizes = [8, 256], strides = [1, 1]} : vector<8x384xf32> to vector<8x256xf32>
    %421 = arith.addf %419, %420 : vector<8x256xf32>
    %cst_173 = arith.constant 5.000000e-01 : f32
    %422 = vector.broadcast %cst_173 : f32 to vector<8x256xf32>
    %423 = arith.mulf %422, %421 : vector<8x256xf32>
    %424 = math.tanh %423 : vector<8x256xf32>
    %cst_174 = arith.constant 1.000000e+00 : f32
    %425 = vector.broadcast %cst_174 : f32 to vector<8x256xf32>
    %426 = arith.addf %424, %425 : vector<8x256xf32>
    %cst_175 = arith.constant 5.000000e-01 : f32
    %427 = vector.broadcast %cst_175 : f32 to vector<8x256xf32>
    %428 = arith.mulf %427, %426 : vector<8x256xf32>
    %429 = vector.extract_strided_slice %428 {offsets = [0, 0], sizes = [8, 32], strides = [1, 1]} : vector<8x256xf32> to vector<8x32xf32>
    %430 = vector.extract_strided_slice %428 {offsets = [0, 128], sizes = [8, 32], strides = [1, 1]} : vector<8x256xf32> to vector<8x32xf32>
    %431 = vector.extract_strided_slice %417 {offsets = [0, 256], sizes = [8, 32], strides = [1, 1]} : vector<8x384xf32> to vector<8x32xf32>
    %432 = vector.extract_strided_slice %410 {offsets = [0, 256], sizes = [8, 32], strides = [1, 1]} : vector<8x384xf32> to vector<8x32xf32>
    %433 = vector.broadcast %418 : vector<1x32xf32> to vector<8x32xf32>
    %434 = arith.addf %432, %433 : vector<8x32xf32>
    %435 = arith.mulf %429, %434 : vector<8x32xf32>
    %436 = arith.addf %431, %435 : vector<8x32xf32>
    %437 = math.tanh %436 : vector<8x32xf32>
    %cst_176 = arith.constant 1.000000e+00 : f32
    %438 = vector.broadcast %cst_176 : f32 to vector<8x32xf32>
    %439 = arith.subf %438, %430 : vector<8x32xf32>
    %440 = arith.mulf %439, %437 : vector<8x32xf32>
    %441 = arith.mulf %430, %345 : vector<8x32xf32>
    %442 = arith.addf %440, %441 : vector<8x32xf32>
    %443 = arith.truncf %442 : vector<8x32xf32> to vector<8x32xbf16>
    %c64_177 = arith.constant 64 : index
    %c384_178 = arith.constant 384 : index
    %444 = vector.load %arg1[%c64_177, %c384_178] : memref<160x1152xbf16, #tpu.memory_space<vmem>>, vector<32x384xbf16>
    %cst_179 = arith.constant dense<0.000000e+00> : vector<8x384xf32>
    %445 = tpu.matmul %443, %444, %cst_179 {dimension_numbers = #tpu.dot_dimension_numbers<[1], [0], [0], [1], [0, 0, 1, 1], [], []>} : vector<8x32xbf16>, vector<32x384xbf16>, vector<8x384xf32> -> vector<8x384xf32>
    %c1_180 = arith.constant 1 : index
    %c0_181 = arith.constant 0 : index
    %446 = vector.load %arg3[%c1_180, %c0_181] : memref<10x384xf32, #tpu.memory_space<vmem>>, vector<1x384xf32>
    %447 = vector.broadcast %446 : vector<1x384xf32> to vector<8x384xf32>
    %448 = arith.addf %445, %447 : vector<8x384xf32>
    %c6_182 = arith.constant 6 : index
    %c128_183 = arith.constant 128 : index
    %449 = vector.load %arg3[%c6_182, %c128_183] : memref<10x384xf32, #tpu.memory_space<vmem>>, vector<1x32xf32>
    %450 = vector.extract_strided_slice %448 {offsets = [0, 0], sizes = [8, 256], strides = [1, 1]} : vector<8x384xf32> to vector<8x256xf32>
    %451 = vector.extract_strided_slice %413 {offsets = [0, 0], sizes = [8, 256], strides = [1, 1]} : vector<8x384xf32> to vector<8x256xf32>
    %452 = arith.addf %450, %451 : vector<8x256xf32>
    %cst_184 = arith.constant 5.000000e-01 : f32
    %453 = vector.broadcast %cst_184 : f32 to vector<8x256xf32>
    %454 = arith.mulf %453, %452 : vector<8x256xf32>
    %455 = math.tanh %454 : vector<8x256xf32>
    %cst_185 = arith.constant 1.000000e+00 : f32
    %456 = vector.broadcast %cst_185 : f32 to vector<8x256xf32>
    %457 = arith.addf %455, %456 : vector<8x256xf32>
    %cst_186 = arith.constant 5.000000e-01 : f32
    %458 = vector.broadcast %cst_186 : f32 to vector<8x256xf32>
    %459 = arith.mulf %458, %457 : vector<8x256xf32>
    %460 = vector.extract_strided_slice %459 {offsets = [0, 0], sizes = [8, 32], strides = [1, 1]} : vector<8x256xf32> to vector<8x32xf32>
    %461 = vector.extract_strided_slice %459 {offsets = [0, 128], sizes = [8, 32], strides = [1, 1]} : vector<8x256xf32> to vector<8x32xf32>
    %462 = vector.extract_strided_slice %448 {offsets = [0, 256], sizes = [8, 32], strides = [1, 1]} : vector<8x384xf32> to vector<8x32xf32>
    %463 = vector.extract_strided_slice %413 {offsets = [0, 256], sizes = [8, 32], strides = [1, 1]} : vector<8x384xf32> to vector<8x32xf32>
    %464 = vector.broadcast %449 : vector<1x32xf32> to vector<8x32xf32>
    %465 = arith.addf %463, %464 : vector<8x32xf32>
    %466 = arith.mulf %460, %465 : vector<8x32xf32>
    %467 = arith.addf %462, %466 : vector<8x32xf32>
    %468 = math.tanh %467 : vector<8x32xf32>
    %cst_187 = arith.constant 1.000000e+00 : f32
    %469 = vector.broadcast %cst_187 : f32 to vector<8x32xf32>
    %470 = arith.subf %469, %461 : vector<8x32xf32>
    %471 = arith.mulf %470, %468 : vector<8x32xf32>
    %472 = arith.mulf %461, %376 : vector<8x32xf32>
    %473 = arith.addf %471, %472 : vector<8x32xf32>
    %474 = arith.truncf %473 : vector<8x32xf32> to vector<8x32xbf16>
    %c64_188 = arith.constant 64 : index
    %c768_189 = arith.constant 768 : index
    %475 = vector.load %arg1[%c64_188, %c768_189] : memref<160x1152xbf16, #tpu.memory_space<vmem>>, vector<32x384xbf16>
    %cst_190 = arith.constant dense<0.000000e+00> : vector<8x384xf32>
    %476 = tpu.matmul %474, %475, %cst_190 {dimension_numbers = #tpu.dot_dimension_numbers<[1], [0], [0], [1], [0, 0, 1, 1], [], []>} : vector<8x32xbf16>, vector<32x384xbf16>, vector<8x384xf32> -> vector<8x384xf32>
    %c2_191 = arith.constant 2 : index
    %c0_192 = arith.constant 0 : index
    %477 = vector.load %arg3[%c2_191, %c0_192] : memref<10x384xf32, #tpu.memory_space<vmem>>, vector<1x384xf32>
    %478 = vector.broadcast %477 : vector<1x384xf32> to vector<8x384xf32>
    %479 = arith.addf %476, %478 : vector<8x384xf32>
    %c6_193 = arith.constant 6 : index
    %c256_194 = arith.constant 256 : index
    %480 = vector.load %arg3[%c6_193, %c256_194] : memref<10x384xf32, #tpu.memory_space<vmem>>, vector<1x32xf32>
    %481 = vector.extract_strided_slice %479 {offsets = [0, 0], sizes = [8, 256], strides = [1, 1]} : vector<8x384xf32> to vector<8x256xf32>
    %482 = vector.extract_strided_slice %416 {offsets = [0, 0], sizes = [8, 256], strides = [1, 1]} : vector<8x384xf32> to vector<8x256xf32>
    %483 = arith.addf %481, %482 : vector<8x256xf32>
    %cst_195 = arith.constant 5.000000e-01 : f32
    %484 = vector.broadcast %cst_195 : f32 to vector<8x256xf32>
    %485 = arith.mulf %484, %483 : vector<8x256xf32>
    %486 = math.tanh %485 : vector<8x256xf32>
    %cst_196 = arith.constant 1.000000e+00 : f32
    %487 = vector.broadcast %cst_196 : f32 to vector<8x256xf32>
    %488 = arith.addf %486, %487 : vector<8x256xf32>
    %cst_197 = arith.constant 5.000000e-01 : f32
    %489 = vector.broadcast %cst_197 : f32 to vector<8x256xf32>
    %490 = arith.mulf %489, %488 : vector<8x256xf32>
    %491 = vector.extract_strided_slice %490 {offsets = [0, 0], sizes = [8, 32], strides = [1, 1]} : vector<8x256xf32> to vector<8x32xf32>
    %492 = vector.extract_strided_slice %490 {offsets = [0, 128], sizes = [8, 32], strides = [1, 1]} : vector<8x256xf32> to vector<8x32xf32>
    %493 = vector.extract_strided_slice %479 {offsets = [0, 256], sizes = [8, 32], strides = [1, 1]} : vector<8x384xf32> to vector<8x32xf32>
    %494 = vector.extract_strided_slice %416 {offsets = [0, 256], sizes = [8, 32], strides = [1, 1]} : vector<8x384xf32> to vector<8x32xf32>
    %495 = vector.broadcast %480 : vector<1x32xf32> to vector<8x32xf32>
    %496 = arith.addf %494, %495 : vector<8x32xf32>
    %497 = arith.mulf %491, %496 : vector<8x32xf32>
    %498 = arith.addf %493, %497 : vector<8x32xf32>
    %499 = math.tanh %498 : vector<8x32xf32>
    %cst_198 = arith.constant 1.000000e+00 : f32
    %500 = vector.broadcast %cst_198 : f32 to vector<8x32xf32>
    %501 = arith.subf %500, %492 : vector<8x32xf32>
    %502 = arith.mulf %501, %499 : vector<8x32xf32>
    %503 = arith.mulf %492, %407 : vector<8x32xf32>
    %504 = arith.addf %502, %503 : vector<8x32xf32>
    %505 = arith.truncf %442 : vector<8x32xf32> to vector<8x32xbf16>
    %c0_199 = arith.constant 0 : index
    %c0_200 = arith.constant 0 : index
    %506 = vector.load %arg1[%c0_199, %c0_200] : memref<160x1152xbf16, #tpu.memory_space<vmem>>, vector<32x384xbf16>
    %cst_201 = arith.constant dense<0.000000e+00> : vector<8x384xf32>
    %507 = tpu.matmul %505, %506, %cst_201 {dimension_numbers = #tpu.dot_dimension_numbers<[1], [0], [0], [1], [0, 0, 1, 1], [], []>} : vector<8x32xbf16>, vector<32x384xbf16>, vector<8x384xf32> -> vector<8x384xf32>
    %508 = arith.truncf %473 : vector<8x32xf32> to vector<8x32xbf16>
    %c0_202 = arith.constant 0 : index
    %c384_203 = arith.constant 384 : index
    %509 = vector.load %arg1[%c0_202, %c384_203] : memref<160x1152xbf16, #tpu.memory_space<vmem>>, vector<32x384xbf16>
    %cst_204 = arith.constant dense<0.000000e+00> : vector<8x384xf32>
    %510 = tpu.matmul %508, %509, %cst_204 {dimension_numbers = #tpu.dot_dimension_numbers<[1], [0], [0], [1], [0, 0, 1, 1], [], []>} : vector<8x32xbf16>, vector<32x384xbf16>, vector<8x384xf32> -> vector<8x384xf32>
    %511 = arith.truncf %504 : vector<8x32xf32> to vector<8x32xbf16>
    %c0_205 = arith.constant 0 : index
    %c768_206 = arith.constant 768 : index
    %512 = vector.load %arg1[%c0_205, %c768_206] : memref<160x1152xbf16, #tpu.memory_space<vmem>>, vector<32x384xbf16>
    %cst_207 = arith.constant dense<0.000000e+00> : vector<8x384xf32>
    %513 = tpu.matmul %511, %512, %cst_207 {dimension_numbers = #tpu.dot_dimension_numbers<[1], [0], [0], [1], [0, 0, 1, 1], [], []>} : vector<8x32xbf16>, vector<32x384xbf16>, vector<8x384xf32> -> vector<8x384xf32>
    %c40 = arith.constant 40 : index
    %c0_208 = arith.constant 0 : index
    %514 = vector.load %arg5[%c40, %c0_208] : memref<64x384xf32, #tpu.memory_space<vmem>>, vector<8x384xf32>
    %c6_209 = arith.constant 6 : index
    %c0_210 = arith.constant 0 : index
    %515 = vector.load %arg3[%c6_209, %c0_210] : memref<10x384xf32, #tpu.memory_space<vmem>>, vector<1x32xf32>
    %516 = vector.extract_strided_slice %514 {offsets = [0, 0], sizes = [8, 256], strides = [1, 1]} : vector<8x384xf32> to vector<8x256xf32>
    %517 = vector.extract_strided_slice %507 {offsets = [0, 0], sizes = [8, 256], strides = [1, 1]} : vector<8x384xf32> to vector<8x256xf32>
    %518 = arith.addf %516, %517 : vector<8x256xf32>
    %cst_211 = arith.constant 5.000000e-01 : f32
    %519 = vector.broadcast %cst_211 : f32 to vector<8x256xf32>
    %520 = arith.mulf %519, %518 : vector<8x256xf32>
    %521 = math.tanh %520 : vector<8x256xf32>
    %cst_212 = arith.constant 1.000000e+00 : f32
    %522 = vector.broadcast %cst_212 : f32 to vector<8x256xf32>
    %523 = arith.addf %521, %522 : vector<8x256xf32>
    %cst_213 = arith.constant 5.000000e-01 : f32
    %524 = vector.broadcast %cst_213 : f32 to vector<8x256xf32>
    %525 = arith.mulf %524, %523 : vector<8x256xf32>
    %526 = vector.extract_strided_slice %525 {offsets = [0, 0], sizes = [8, 32], strides = [1, 1]} : vector<8x256xf32> to vector<8x32xf32>
    %527 = vector.extract_strided_slice %525 {offsets = [0, 128], sizes = [8, 32], strides = [1, 1]} : vector<8x256xf32> to vector<8x32xf32>
    %528 = vector.extract_strided_slice %514 {offsets = [0, 256], sizes = [8, 32], strides = [1, 1]} : vector<8x384xf32> to vector<8x32xf32>
    %529 = vector.extract_strided_slice %507 {offsets = [0, 256], sizes = [8, 32], strides = [1, 1]} : vector<8x384xf32> to vector<8x32xf32>
    %530 = vector.broadcast %515 : vector<1x32xf32> to vector<8x32xf32>
    %531 = arith.addf %529, %530 : vector<8x32xf32>
    %532 = arith.mulf %526, %531 : vector<8x32xf32>
    %533 = arith.addf %528, %532 : vector<8x32xf32>
    %534 = math.tanh %533 : vector<8x32xf32>
    %cst_214 = arith.constant 1.000000e+00 : f32
    %535 = vector.broadcast %cst_214 : f32 to vector<8x32xf32>
    %536 = arith.subf %535, %527 : vector<8x32xf32>
    %537 = arith.mulf %536, %534 : vector<8x32xf32>
    %538 = arith.mulf %527, %442 : vector<8x32xf32>
    %539 = arith.addf %537, %538 : vector<8x32xf32>
    %540 = arith.truncf %539 : vector<8x32xf32> to vector<8x32xbf16>
    %c64_215 = arith.constant 64 : index
    %c384_216 = arith.constant 384 : index
    %541 = vector.load %arg1[%c64_215, %c384_216] : memref<160x1152xbf16, #tpu.memory_space<vmem>>, vector<32x384xbf16>
    %cst_217 = arith.constant dense<0.000000e+00> : vector<8x384xf32>
    %542 = tpu.matmul %540, %541, %cst_217 {dimension_numbers = #tpu.dot_dimension_numbers<[1], [0], [0], [1], [0, 0, 1, 1], [], []>} : vector<8x32xbf16>, vector<32x384xbf16>, vector<8x384xf32> -> vector<8x384xf32>
    %c1_218 = arith.constant 1 : index
    %c0_219 = arith.constant 0 : index
    %543 = vector.load %arg3[%c1_218, %c0_219] : memref<10x384xf32, #tpu.memory_space<vmem>>, vector<1x384xf32>
    %544 = vector.broadcast %543 : vector<1x384xf32> to vector<8x384xf32>
    %545 = arith.addf %542, %544 : vector<8x384xf32>
    %c6_220 = arith.constant 6 : index
    %c128_221 = arith.constant 128 : index
    %546 = vector.load %arg3[%c6_220, %c128_221] : memref<10x384xf32, #tpu.memory_space<vmem>>, vector<1x32xf32>
    %547 = vector.extract_strided_slice %545 {offsets = [0, 0], sizes = [8, 256], strides = [1, 1]} : vector<8x384xf32> to vector<8x256xf32>
    %548 = vector.extract_strided_slice %510 {offsets = [0, 0], sizes = [8, 256], strides = [1, 1]} : vector<8x384xf32> to vector<8x256xf32>
    %549 = arith.addf %547, %548 : vector<8x256xf32>
    %cst_222 = arith.constant 5.000000e-01 : f32
    %550 = vector.broadcast %cst_222 : f32 to vector<8x256xf32>
    %551 = arith.mulf %550, %549 : vector<8x256xf32>
    %552 = math.tanh %551 : vector<8x256xf32>
    %cst_223 = arith.constant 1.000000e+00 : f32
    %553 = vector.broadcast %cst_223 : f32 to vector<8x256xf32>
    %554 = arith.addf %552, %553 : vector<8x256xf32>
    %cst_224 = arith.constant 5.000000e-01 : f32
    %555 = vector.broadcast %cst_224 : f32 to vector<8x256xf32>
    %556 = arith.mulf %555, %554 : vector<8x256xf32>
    %557 = vector.extract_strided_slice %556 {offsets = [0, 0], sizes = [8, 32], strides = [1, 1]} : vector<8x256xf32> to vector<8x32xf32>
    %558 = vector.extract_strided_slice %556 {offsets = [0, 128], sizes = [8, 32], strides = [1, 1]} : vector<8x256xf32> to vector<8x32xf32>
    %559 = vector.extract_strided_slice %545 {offsets = [0, 256], sizes = [8, 32], strides = [1, 1]} : vector<8x384xf32> to vector<8x32xf32>
    %560 = vector.extract_strided_slice %510 {offsets = [0, 256], sizes = [8, 32], strides = [1, 1]} : vector<8x384xf32> to vector<8x32xf32>
    %561 = vector.broadcast %546 : vector<1x32xf32> to vector<8x32xf32>
    %562 = arith.addf %560, %561 : vector<8x32xf32>
    %563 = arith.mulf %557, %562 : vector<8x32xf32>
    %564 = arith.addf %559, %563 : vector<8x32xf32>
    %565 = math.tanh %564 : vector<8x32xf32>
    %cst_225 = arith.constant 1.000000e+00 : f32
    %566 = vector.broadcast %cst_225 : f32 to vector<8x32xf32>
    %567 = arith.subf %566, %558 : vector<8x32xf32>
    %568 = arith.mulf %567, %565 : vector<8x32xf32>
    %569 = arith.mulf %558, %473 : vector<8x32xf32>
    %570 = arith.addf %568, %569 : vector<8x32xf32>
    %571 = arith.truncf %570 : vector<8x32xf32> to vector<8x32xbf16>
    %c64_226 = arith.constant 64 : index
    %c768_227 = arith.constant 768 : index
    %572 = vector.load %arg1[%c64_226, %c768_227] : memref<160x1152xbf16, #tpu.memory_space<vmem>>, vector<32x384xbf16>
    %cst_228 = arith.constant dense<0.000000e+00> : vector<8x384xf32>
    %573 = tpu.matmul %571, %572, %cst_228 {dimension_numbers = #tpu.dot_dimension_numbers<[1], [0], [0], [1], [0, 0, 1, 1], [], []>} : vector<8x32xbf16>, vector<32x384xbf16>, vector<8x384xf32> -> vector<8x384xf32>
    %c2_229 = arith.constant 2 : index
    %c0_230 = arith.constant 0 : index
    %574 = vector.load %arg3[%c2_229, %c0_230] : memref<10x384xf32, #tpu.memory_space<vmem>>, vector<1x384xf32>
    %575 = vector.broadcast %574 : vector<1x384xf32> to vector<8x384xf32>
    %576 = arith.addf %573, %575 : vector<8x384xf32>
    %c6_231 = arith.constant 6 : index
    %c256_232 = arith.constant 256 : index
    %577 = vector.load %arg3[%c6_231, %c256_232] : memref<10x384xf32, #tpu.memory_space<vmem>>, vector<1x32xf32>
    %578 = vector.extract_strided_slice %576 {offsets = [0, 0], sizes = [8, 256], strides = [1, 1]} : vector<8x384xf32> to vector<8x256xf32>
    %579 = vector.extract_strided_slice %513 {offsets = [0, 0], sizes = [8, 256], strides = [1, 1]} : vector<8x384xf32> to vector<8x256xf32>
    %580 = arith.addf %578, %579 : vector<8x256xf32>
    %cst_233 = arith.constant 5.000000e-01 : f32
    %581 = vector.broadcast %cst_233 : f32 to vector<8x256xf32>
    %582 = arith.mulf %581, %580 : vector<8x256xf32>
    %583 = math.tanh %582 : vector<8x256xf32>
    %cst_234 = arith.constant 1.000000e+00 : f32
    %584 = vector.broadcast %cst_234 : f32 to vector<8x256xf32>
    %585 = arith.addf %583, %584 : vector<8x256xf32>
    %cst_235 = arith.constant 5.000000e-01 : f32
    %586 = vector.broadcast %cst_235 : f32 to vector<8x256xf32>
    %587 = arith.mulf %586, %585 : vector<8x256xf32>
    %588 = vector.extract_strided_slice %587 {offsets = [0, 0], sizes = [8, 32], strides = [1, 1]} : vector<8x256xf32> to vector<8x32xf32>
    %589 = vector.extract_strided_slice %587 {offsets = [0, 128], sizes = [8, 32], strides = [1, 1]} : vector<8x256xf32> to vector<8x32xf32>
    %590 = vector.extract_strided_slice %576 {offsets = [0, 256], sizes = [8, 32], strides = [1, 1]} : vector<8x384xf32> to vector<8x32xf32>
    %591 = vector.extract_strided_slice %513 {offsets = [0, 256], sizes = [8, 32], strides = [1, 1]} : vector<8x384xf32> to vector<8x32xf32>
    %592 = vector.broadcast %577 : vector<1x32xf32> to vector<8x32xf32>
    %593 = arith.addf %591, %592 : vector<8x32xf32>
    %594 = arith.mulf %588, %593 : vector<8x32xf32>
    %595 = arith.addf %590, %594 : vector<8x32xf32>
    %596 = math.tanh %595 : vector<8x32xf32>
    %cst_236 = arith.constant 1.000000e+00 : f32
    %597 = vector.broadcast %cst_236 : f32 to vector<8x32xf32>
    %598 = arith.subf %597, %589 : vector<8x32xf32>
    %599 = arith.mulf %598, %596 : vector<8x32xf32>
    %600 = arith.mulf %589, %504 : vector<8x32xf32>
    %601 = arith.addf %599, %600 : vector<8x32xf32>
    %602 = arith.truncf %539 : vector<8x32xf32> to vector<8x32xbf16>
    %c0_237 = arith.constant 0 : index
    %c0_238 = arith.constant 0 : index
    %603 = vector.load %arg1[%c0_237, %c0_238] : memref<160x1152xbf16, #tpu.memory_space<vmem>>, vector<32x384xbf16>
    %cst_239 = arith.constant dense<0.000000e+00> : vector<8x384xf32>
    %604 = tpu.matmul %602, %603, %cst_239 {dimension_numbers = #tpu.dot_dimension_numbers<[1], [0], [0], [1], [0, 0, 1, 1], [], []>} : vector<8x32xbf16>, vector<32x384xbf16>, vector<8x384xf32> -> vector<8x384xf32>
    %605 = arith.truncf %570 : vector<8x32xf32> to vector<8x32xbf16>
    %c0_240 = arith.constant 0 : index
    %c384_241 = arith.constant 384 : index
    %606 = vector.load %arg1[%c0_240, %c384_241] : memref<160x1152xbf16, #tpu.memory_space<vmem>>, vector<32x384xbf16>
    %cst_242 = arith.constant dense<0.000000e+00> : vector<8x384xf32>
    %607 = tpu.matmul %605, %606, %cst_242 {dimension_numbers = #tpu.dot_dimension_numbers<[1], [0], [0], [1], [0, 0, 1, 1], [], []>} : vector<8x32xbf16>, vector<32x384xbf16>, vector<8x384xf32> -> vector<8x384xf32>
    %608 = arith.truncf %601 : vector<8x32xf32> to vector<8x32xbf16>
    %c0_243 = arith.constant 0 : index
    %c768_244 = arith.constant 768 : index
    %609 = vector.load %arg1[%c0_243, %c768_244] : memref<160x1152xbf16, #tpu.memory_space<vmem>>, vector<32x384xbf16>
    %cst_245 = arith.constant dense<0.000000e+00> : vector<8x384xf32>
    %610 = tpu.matmul %608, %609, %cst_245 {dimension_numbers = #tpu.dot_dimension_numbers<[1], [0], [0], [1], [0, 0, 1, 1], [], []>} : vector<8x32xbf16>, vector<32x384xbf16>, vector<8x384xf32> -> vector<8x384xf32>
    %c48 = arith.constant 48 : index
    %c0_246 = arith.constant 0 : index
    %611 = vector.load %arg5[%c48, %c0_246] : memref<64x384xf32, #tpu.memory_space<vmem>>, vector<8x384xf32>
    %c6_247 = arith.constant 6 : index
    %c0_248 = arith.constant 0 : index
    %612 = vector.load %arg3[%c6_247, %c0_248] : memref<10x384xf32, #tpu.memory_space<vmem>>, vector<1x32xf32>
    %613 = vector.extract_strided_slice %611 {offsets = [0, 0], sizes = [8, 256], strides = [1, 1]} : vector<8x384xf32> to vector<8x256xf32>
    %614 = vector.extract_strided_slice %604 {offsets = [0, 0], sizes = [8, 256], strides = [1, 1]} : vector<8x384xf32> to vector<8x256xf32>
    %615 = arith.addf %613, %614 : vector<8x256xf32>
    %cst_249 = arith.constant 5.000000e-01 : f32
    %616 = vector.broadcast %cst_249 : f32 to vector<8x256xf32>
    %617 = arith.mulf %616, %615 : vector<8x256xf32>
    %618 = math.tanh %617 : vector<8x256xf32>
    %cst_250 = arith.constant 1.000000e+00 : f32
    %619 = vector.broadcast %cst_250 : f32 to vector<8x256xf32>
    %620 = arith.addf %618, %619 : vector<8x256xf32>
    %cst_251 = arith.constant 5.000000e-01 : f32
    %621 = vector.broadcast %cst_251 : f32 to vector<8x256xf32>
    %622 = arith.mulf %621, %620 : vector<8x256xf32>
    %623 = vector.extract_strided_slice %622 {offsets = [0, 0], sizes = [8, 32], strides = [1, 1]} : vector<8x256xf32> to vector<8x32xf32>
    %624 = vector.extract_strided_slice %622 {offsets = [0, 128], sizes = [8, 32], strides = [1, 1]} : vector<8x256xf32> to vector<8x32xf32>
    %625 = vector.extract_strided_slice %611 {offsets = [0, 256], sizes = [8, 32], strides = [1, 1]} : vector<8x384xf32> to vector<8x32xf32>
    %626 = vector.extract_strided_slice %604 {offsets = [0, 256], sizes = [8, 32], strides = [1, 1]} : vector<8x384xf32> to vector<8x32xf32>
    %627 = vector.broadcast %612 : vector<1x32xf32> to vector<8x32xf32>
    %628 = arith.addf %626, %627 : vector<8x32xf32>
    %629 = arith.mulf %623, %628 : vector<8x32xf32>
    %630 = arith.addf %625, %629 : vector<8x32xf32>
    %631 = math.tanh %630 : vector<8x32xf32>
    %cst_252 = arith.constant 1.000000e+00 : f32
    %632 = vector.broadcast %cst_252 : f32 to vector<8x32xf32>
    %633 = arith.subf %632, %624 : vector<8x32xf32>
    %634 = arith.mulf %633, %631 : vector<8x32xf32>
    %635 = arith.mulf %624, %539 : vector<8x32xf32>
    %636 = arith.addf %634, %635 : vector<8x32xf32>
    %637 = arith.truncf %636 : vector<8x32xf32> to vector<8x32xbf16>
    %c64_253 = arith.constant 64 : index
    %c384_254 = arith.constant 384 : index
    %638 = vector.load %arg1[%c64_253, %c384_254] : memref<160x1152xbf16, #tpu.memory_space<vmem>>, vector<32x384xbf16>
    %cst_255 = arith.constant dense<0.000000e+00> : vector<8x384xf32>
    %639 = tpu.matmul %637, %638, %cst_255 {dimension_numbers = #tpu.dot_dimension_numbers<[1], [0], [0], [1], [0, 0, 1, 1], [], []>} : vector<8x32xbf16>, vector<32x384xbf16>, vector<8x384xf32> -> vector<8x384xf32>
    %c1_256 = arith.constant 1 : index
    %c0_257 = arith.constant 0 : index
    %640 = vector.load %arg3[%c1_256, %c0_257] : memref<10x384xf32, #tpu.memory_space<vmem>>, vector<1x384xf32>
    %641 = vector.broadcast %640 : vector<1x384xf32> to vector<8x384xf32>
    %642 = arith.addf %639, %641 : vector<8x384xf32>
    %c6_258 = arith.constant 6 : index
    %c128_259 = arith.constant 128 : index
    %643 = vector.load %arg3[%c6_258, %c128_259] : memref<10x384xf32, #tpu.memory_space<vmem>>, vector<1x32xf32>
    %644 = vector.extract_strided_slice %642 {offsets = [0, 0], sizes = [8, 256], strides = [1, 1]} : vector<8x384xf32> to vector<8x256xf32>
    %645 = vector.extract_strided_slice %607 {offsets = [0, 0], sizes = [8, 256], strides = [1, 1]} : vector<8x384xf32> to vector<8x256xf32>
    %646 = arith.addf %644, %645 : vector<8x256xf32>
    %cst_260 = arith.constant 5.000000e-01 : f32
    %647 = vector.broadcast %cst_260 : f32 to vector<8x256xf32>
    %648 = arith.mulf %647, %646 : vector<8x256xf32>
    %649 = math.tanh %648 : vector<8x256xf32>
    %cst_261 = arith.constant 1.000000e+00 : f32
    %650 = vector.broadcast %cst_261 : f32 to vector<8x256xf32>
    %651 = arith.addf %649, %650 : vector<8x256xf32>
    %cst_262 = arith.constant 5.000000e-01 : f32
    %652 = vector.broadcast %cst_262 : f32 to vector<8x256xf32>
    %653 = arith.mulf %652, %651 : vector<8x256xf32>
    %654 = vector.extract_strided_slice %653 {offsets = [0, 0], sizes = [8, 32], strides = [1, 1]} : vector<8x256xf32> to vector<8x32xf32>
    %655 = vector.extract_strided_slice %653 {offsets = [0, 128], sizes = [8, 32], strides = [1, 1]} : vector<8x256xf32> to vector<8x32xf32>
    %656 = vector.extract_strided_slice %642 {offsets = [0, 256], sizes = [8, 32], strides = [1, 1]} : vector<8x384xf32> to vector<8x32xf32>
    %657 = vector.extract_strided_slice %607 {offsets = [0, 256], sizes = [8, 32], strides = [1, 1]} : vector<8x384xf32> to vector<8x32xf32>
    %658 = vector.broadcast %643 : vector<1x32xf32> to vector<8x32xf32>
    %659 = arith.addf %657, %658 : vector<8x32xf32>
    %660 = arith.mulf %654, %659 : vector<8x32xf32>
    %661 = arith.addf %656, %660 : vector<8x32xf32>
    %662 = math.tanh %661 : vector<8x32xf32>
    %cst_263 = arith.constant 1.000000e+00 : f32
    %663 = vector.broadcast %cst_263 : f32 to vector<8x32xf32>
    %664 = arith.subf %663, %655 : vector<8x32xf32>
    %665 = arith.mulf %664, %662 : vector<8x32xf32>
    %666 = arith.mulf %655, %570 : vector<8x32xf32>
    %667 = arith.addf %665, %666 : vector<8x32xf32>
    %668 = arith.truncf %667 : vector<8x32xf32> to vector<8x32xbf16>
    %c64_264 = arith.constant 64 : index
    %c768_265 = arith.constant 768 : index
    %669 = vector.load %arg1[%c64_264, %c768_265] : memref<160x1152xbf16, #tpu.memory_space<vmem>>, vector<32x384xbf16>
    %cst_266 = arith.constant dense<0.000000e+00> : vector<8x384xf32>
    %670 = tpu.matmul %668, %669, %cst_266 {dimension_numbers = #tpu.dot_dimension_numbers<[1], [0], [0], [1], [0, 0, 1, 1], [], []>} : vector<8x32xbf16>, vector<32x384xbf16>, vector<8x384xf32> -> vector<8x384xf32>
    %c2_267 = arith.constant 2 : index
    %c0_268 = arith.constant 0 : index
    %671 = vector.load %arg3[%c2_267, %c0_268] : memref<10x384xf32, #tpu.memory_space<vmem>>, vector<1x384xf32>
    %672 = vector.broadcast %671 : vector<1x384xf32> to vector<8x384xf32>
    %673 = arith.addf %670, %672 : vector<8x384xf32>
    %c6_269 = arith.constant 6 : index
    %c256_270 = arith.constant 256 : index
    %674 = vector.load %arg3[%c6_269, %c256_270] : memref<10x384xf32, #tpu.memory_space<vmem>>, vector<1x32xf32>
    %675 = vector.extract_strided_slice %673 {offsets = [0, 0], sizes = [8, 256], strides = [1, 1]} : vector<8x384xf32> to vector<8x256xf32>
    %676 = vector.extract_strided_slice %610 {offsets = [0, 0], sizes = [8, 256], strides = [1, 1]} : vector<8x384xf32> to vector<8x256xf32>
    %677 = arith.addf %675, %676 : vector<8x256xf32>
    %cst_271 = arith.constant 5.000000e-01 : f32
    %678 = vector.broadcast %cst_271 : f32 to vector<8x256xf32>
    %679 = arith.mulf %678, %677 : vector<8x256xf32>
    %680 = math.tanh %679 : vector<8x256xf32>
    %cst_272 = arith.constant 1.000000e+00 : f32
    %681 = vector.broadcast %cst_272 : f32 to vector<8x256xf32>
    %682 = arith.addf %680, %681 : vector<8x256xf32>
    %cst_273 = arith.constant 5.000000e-01 : f32
    %683 = vector.broadcast %cst_273 : f32 to vector<8x256xf32>
    %684 = arith.mulf %683, %682 : vector<8x256xf32>
    %685 = vector.extract_strided_slice %684 {offsets = [0, 0], sizes = [8, 32], strides = [1, 1]} : vector<8x256xf32> to vector<8x32xf32>
    %686 = vector.extract_strided_slice %684 {offsets = [0, 128], sizes = [8, 32], strides = [1, 1]} : vector<8x256xf32> to vector<8x32xf32>
    %687 = vector.extract_strided_slice %673 {offsets = [0, 256], sizes = [8, 32], strides = [1, 1]} : vector<8x384xf32> to vector<8x32xf32>
    %688 = vector.extract_strided_slice %610 {offsets = [0, 256], sizes = [8, 32], strides = [1, 1]} : vector<8x384xf32> to vector<8x32xf32>
    %689 = vector.broadcast %674 : vector<1x32xf32> to vector<8x32xf32>
    %690 = arith.addf %688, %689 : vector<8x32xf32>
    %691 = arith.mulf %685, %690 : vector<8x32xf32>
    %692 = arith.addf %687, %691 : vector<8x32xf32>
    %693 = math.tanh %692 : vector<8x32xf32>
    %cst_274 = arith.constant 1.000000e+00 : f32
    %694 = vector.broadcast %cst_274 : f32 to vector<8x32xf32>
    %695 = arith.subf %694, %686 : vector<8x32xf32>
    %696 = arith.mulf %695, %693 : vector<8x32xf32>
    %697 = arith.mulf %686, %601 : vector<8x32xf32>
    %698 = arith.addf %696, %697 : vector<8x32xf32>
    %699 = arith.truncf %636 : vector<8x32xf32> to vector<8x32xbf16>
    %c0_275 = arith.constant 0 : index
    %c0_276 = arith.constant 0 : index
    %700 = vector.load %arg1[%c0_275, %c0_276] : memref<160x1152xbf16, #tpu.memory_space<vmem>>, vector<32x384xbf16>
    %cst_277 = arith.constant dense<0.000000e+00> : vector<8x384xf32>
    %701 = tpu.matmul %699, %700, %cst_277 {dimension_numbers = #tpu.dot_dimension_numbers<[1], [0], [0], [1], [0, 0, 1, 1], [], []>} : vector<8x32xbf16>, vector<32x384xbf16>, vector<8x384xf32> -> vector<8x384xf32>
    %702 = arith.truncf %667 : vector<8x32xf32> to vector<8x32xbf16>
    %c0_278 = arith.constant 0 : index
    %c384_279 = arith.constant 384 : index
    %703 = vector.load %arg1[%c0_278, %c384_279] : memref<160x1152xbf16, #tpu.memory_space<vmem>>, vector<32x384xbf16>
    %cst_280 = arith.constant dense<0.000000e+00> : vector<8x384xf32>
    %704 = tpu.matmul %702, %703, %cst_280 {dimension_numbers = #tpu.dot_dimension_numbers<[1], [0], [0], [1], [0, 0, 1, 1], [], []>} : vector<8x32xbf16>, vector<32x384xbf16>, vector<8x384xf32> -> vector<8x384xf32>
    %705 = arith.truncf %698 : vector<8x32xf32> to vector<8x32xbf16>
    %c0_281 = arith.constant 0 : index
    %c768_282 = arith.constant 768 : index
    %706 = vector.load %arg1[%c0_281, %c768_282] : memref<160x1152xbf16, #tpu.memory_space<vmem>>, vector<32x384xbf16>
    %cst_283 = arith.constant dense<0.000000e+00> : vector<8x384xf32>
    %707 = tpu.matmul %705, %706, %cst_283 {dimension_numbers = #tpu.dot_dimension_numbers<[1], [0], [0], [1], [0, 0, 1, 1], [], []>} : vector<8x32xbf16>, vector<32x384xbf16>, vector<8x384xf32> -> vector<8x384xf32>
    %c56 = arith.constant 56 : index
    %c0_284 = arith.constant 0 : index
    %708 = vector.load %arg5[%c56, %c0_284] : memref<64x384xf32, #tpu.memory_space<vmem>>, vector<8x384xf32>
    %c6_285 = arith.constant 6 : index
    %c0_286 = arith.constant 0 : index
    %709 = vector.load %arg3[%c6_285, %c0_286] : memref<10x384xf32, #tpu.memory_space<vmem>>, vector<1x32xf32>
    %710 = vector.extract_strided_slice %708 {offsets = [0, 0], sizes = [8, 256], strides = [1, 1]} : vector<8x384xf32> to vector<8x256xf32>
    %711 = vector.extract_strided_slice %701 {offsets = [0, 0], sizes = [8, 256], strides = [1, 1]} : vector<8x384xf32> to vector<8x256xf32>
    %712 = arith.addf %710, %711 : vector<8x256xf32>
    %cst_287 = arith.constant 5.000000e-01 : f32
    %713 = vector.broadcast %cst_287 : f32 to vector<8x256xf32>
    %714 = arith.mulf %713, %712 : vector<8x256xf32>
    %715 = math.tanh %714 : vector<8x256xf32>
    %cst_288 = arith.constant 1.000000e+00 : f32
    %716 = vector.broadcast %cst_288 : f32 to vector<8x256xf32>
    %717 = arith.addf %715, %716 : vector<8x256xf32>
    %cst_289 = arith.constant 5.000000e-01 : f32
    %718 = vector.broadcast %cst_289 : f32 to vector<8x256xf32>
    %719 = arith.mulf %718, %717 : vector<8x256xf32>
    %720 = vector.extract_strided_slice %719 {offsets = [0, 0], sizes = [8, 32], strides = [1, 1]} : vector<8x256xf32> to vector<8x32xf32>
    %721 = vector.extract_strided_slice %719 {offsets = [0, 128], sizes = [8, 32], strides = [1, 1]} : vector<8x256xf32> to vector<8x32xf32>
    %722 = vector.extract_strided_slice %708 {offsets = [0, 256], sizes = [8, 32], strides = [1, 1]} : vector<8x384xf32> to vector<8x32xf32>
    %723 = vector.extract_strided_slice %701 {offsets = [0, 256], sizes = [8, 32], strides = [1, 1]} : vector<8x384xf32> to vector<8x32xf32>
    %724 = vector.broadcast %709 : vector<1x32xf32> to vector<8x32xf32>
    %725 = arith.addf %723, %724 : vector<8x32xf32>
    %726 = arith.mulf %720, %725 : vector<8x32xf32>
    %727 = arith.addf %722, %726 : vector<8x32xf32>
    %728 = math.tanh %727 : vector<8x32xf32>
    %cst_290 = arith.constant 1.000000e+00 : f32
    %729 = vector.broadcast %cst_290 : f32 to vector<8x32xf32>
    %730 = arith.subf %729, %721 : vector<8x32xf32>
    %731 = arith.mulf %730, %728 : vector<8x32xf32>
    %732 = arith.mulf %721, %636 : vector<8x32xf32>
    %733 = arith.addf %731, %732 : vector<8x32xf32>
    %734 = arith.truncf %733 : vector<8x32xf32> to vector<8x32xbf16>
    %c64_291 = arith.constant 64 : index
    %c384_292 = arith.constant 384 : index
    %735 = vector.load %arg1[%c64_291, %c384_292] : memref<160x1152xbf16, #tpu.memory_space<vmem>>, vector<32x384xbf16>
    %cst_293 = arith.constant dense<0.000000e+00> : vector<8x384xf32>
    %736 = tpu.matmul %734, %735, %cst_293 {dimension_numbers = #tpu.dot_dimension_numbers<[1], [0], [0], [1], [0, 0, 1, 1], [], []>} : vector<8x32xbf16>, vector<32x384xbf16>, vector<8x384xf32> -> vector<8x384xf32>
    %c1_294 = arith.constant 1 : index
    %c0_295 = arith.constant 0 : index
    %737 = vector.load %arg3[%c1_294, %c0_295] : memref<10x384xf32, #tpu.memory_space<vmem>>, vector<1x384xf32>
    %738 = vector.broadcast %737 : vector<1x384xf32> to vector<8x384xf32>
    %739 = arith.addf %736, %738 : vector<8x384xf32>
    %c6_296 = arith.constant 6 : index
    %c128_297 = arith.constant 128 : index
    %740 = vector.load %arg3[%c6_296, %c128_297] : memref<10x384xf32, #tpu.memory_space<vmem>>, vector<1x32xf32>
    %741 = vector.extract_strided_slice %739 {offsets = [0, 0], sizes = [8, 256], strides = [1, 1]} : vector<8x384xf32> to vector<8x256xf32>
    %742 = vector.extract_strided_slice %704 {offsets = [0, 0], sizes = [8, 256], strides = [1, 1]} : vector<8x384xf32> to vector<8x256xf32>
    %743 = arith.addf %741, %742 : vector<8x256xf32>
    %cst_298 = arith.constant 5.000000e-01 : f32
    %744 = vector.broadcast %cst_298 : f32 to vector<8x256xf32>
    %745 = arith.mulf %744, %743 : vector<8x256xf32>
    %746 = math.tanh %745 : vector<8x256xf32>
    %cst_299 = arith.constant 1.000000e+00 : f32
    %747 = vector.broadcast %cst_299 : f32 to vector<8x256xf32>
    %748 = arith.addf %746, %747 : vector<8x256xf32>
    %cst_300 = arith.constant 5.000000e-01 : f32
    %749 = vector.broadcast %cst_300 : f32 to vector<8x256xf32>
    %750 = arith.mulf %749, %748 : vector<8x256xf32>
    %751 = vector.extract_strided_slice %750 {offsets = [0, 0], sizes = [8, 32], strides = [1, 1]} : vector<8x256xf32> to vector<8x32xf32>
    %752 = vector.extract_strided_slice %750 {offsets = [0, 128], sizes = [8, 32], strides = [1, 1]} : vector<8x256xf32> to vector<8x32xf32>
    %753 = vector.extract_strided_slice %739 {offsets = [0, 256], sizes = [8, 32], strides = [1, 1]} : vector<8x384xf32> to vector<8x32xf32>
    %754 = vector.extract_strided_slice %704 {offsets = [0, 256], sizes = [8, 32], strides = [1, 1]} : vector<8x384xf32> to vector<8x32xf32>
    %755 = vector.broadcast %740 : vector<1x32xf32> to vector<8x32xf32>
    %756 = arith.addf %754, %755 : vector<8x32xf32>
    %757 = arith.mulf %751, %756 : vector<8x32xf32>
    %758 = arith.addf %753, %757 : vector<8x32xf32>
    %759 = math.tanh %758 : vector<8x32xf32>
    %cst_301 = arith.constant 1.000000e+00 : f32
    %760 = vector.broadcast %cst_301 : f32 to vector<8x32xf32>
    %761 = arith.subf %760, %752 : vector<8x32xf32>
    %762 = arith.mulf %761, %759 : vector<8x32xf32>
    %763 = arith.mulf %752, %667 : vector<8x32xf32>
    %764 = arith.addf %762, %763 : vector<8x32xf32>
    %765 = arith.truncf %764 : vector<8x32xf32> to vector<8x32xbf16>
    %c64_302 = arith.constant 64 : index
    %c768_303 = arith.constant 768 : index
    %766 = vector.load %arg1[%c64_302, %c768_303] : memref<160x1152xbf16, #tpu.memory_space<vmem>>, vector<32x384xbf16>
    %cst_304 = arith.constant dense<0.000000e+00> : vector<8x384xf32>
    %767 = tpu.matmul %765, %766, %cst_304 {dimension_numbers = #tpu.dot_dimension_numbers<[1], [0], [0], [1], [0, 0, 1, 1], [], []>} : vector<8x32xbf16>, vector<32x384xbf16>, vector<8x384xf32> -> vector<8x384xf32>
    %c2_305 = arith.constant 2 : index
    %c0_306 = arith.constant 0 : index
    %768 = vector.load %arg3[%c2_305, %c0_306] : memref<10x384xf32, #tpu.memory_space<vmem>>, vector<1x384xf32>
    %769 = vector.broadcast %768 : vector<1x384xf32> to vector<8x384xf32>
    %770 = arith.addf %767, %769 : vector<8x384xf32>
    %c6_307 = arith.constant 6 : index
    %c256_308 = arith.constant 256 : index
    %771 = vector.load %arg3[%c6_307, %c256_308] : memref<10x384xf32, #tpu.memory_space<vmem>>, vector<1x32xf32>
    %772 = vector.extract_strided_slice %770 {offsets = [0, 0], sizes = [8, 256], strides = [1, 1]} : vector<8x384xf32> to vector<8x256xf32>
    %773 = vector.extract_strided_slice %707 {offsets = [0, 0], sizes = [8, 256], strides = [1, 1]} : vector<8x384xf32> to vector<8x256xf32>
    %774 = arith.addf %772, %773 : vector<8x256xf32>
    %cst_309 = arith.constant 5.000000e-01 : f32
    %775 = vector.broadcast %cst_309 : f32 to vector<8x256xf32>
    %776 = arith.mulf %775, %774 : vector<8x256xf32>
    %777 = math.tanh %776 : vector<8x256xf32>
    %cst_310 = arith.constant 1.000000e+00 : f32
    %778 = vector.broadcast %cst_310 : f32 to vector<8x256xf32>
    %779 = arith.addf %777, %778 : vector<8x256xf32>
    %cst_311 = arith.constant 5.000000e-01 : f32
    %780 = vector.broadcast %cst_311 : f32 to vector<8x256xf32>
    %781 = arith.mulf %780, %779 : vector<8x256xf32>
    %782 = vector.extract_strided_slice %781 {offsets = [0, 0], sizes = [8, 32], strides = [1, 1]} : vector<8x256xf32> to vector<8x32xf32>
    %783 = vector.extract_strided_slice %781 {offsets = [0, 128], sizes = [8, 32], strides = [1, 1]} : vector<8x256xf32> to vector<8x32xf32>
    %784 = vector.extract_strided_slice %770 {offsets = [0, 256], sizes = [8, 32], strides = [1, 1]} : vector<8x384xf32> to vector<8x32xf32>
    %785 = vector.extract_strided_slice %707 {offsets = [0, 256], sizes = [8, 32], strides = [1, 1]} : vector<8x384xf32> to vector<8x32xf32>
    %786 = vector.broadcast %771 : vector<1x32xf32> to vector<8x32xf32>
    %787 = arith.addf %785, %786 : vector<8x32xf32>
    %788 = arith.mulf %782, %787 : vector<8x32xf32>
    %789 = arith.addf %784, %788 : vector<8x32xf32>
    %790 = math.tanh %789 : vector<8x32xf32>
    %cst_312 = arith.constant 1.000000e+00 : f32
    %791 = vector.broadcast %cst_312 : f32 to vector<8x32xf32>
    %792 = arith.subf %791, %783 : vector<8x32xf32>
    %793 = arith.mulf %792, %790 : vector<8x32xf32>
    %794 = arith.mulf %783, %698 : vector<8x32xf32>
    %795 = arith.addf %793, %794 : vector<8x32xf32>
    %c8_313 = arith.constant 8 : index
    %c128_314 = arith.constant 128 : index
    %796 = vector.load %arg3[%c8_313, %c128_314] : memref<10x384xf32, #tpu.memory_space<vmem>>, vector<1x16xf32>
    %797 = arith.truncf %733 : vector<8x32xf32> to vector<8x32xbf16>
    %c32_315 = arith.constant 32 : index
    %c0_316 = arith.constant 0 : index
    %798 = vector.load %arg1[%c32_315, %c0_316] : memref<160x1152xbf16, #tpu.memory_space<vmem>>, vector<32x384xbf16>
    %cst_317 = arith.constant dense<0.000000e+00> : vector<8x384xf32>
    %799 = tpu.matmul %797, %798, %cst_317 {dimension_numbers = #tpu.dot_dimension_numbers<[1], [0], [0], [1], [0, 0, 1, 1], [], []>} : vector<8x32xbf16>, vector<32x384xbf16>, vector<8x384xf32> -> vector<8x384xf32>
    %800 = arith.truncf %764 : vector<8x32xf32> to vector<8x32xbf16>
    %c32_318 = arith.constant 32 : index
    %c384_319 = arith.constant 384 : index
    %801 = vector.load %arg1[%c32_318, %c384_319] : memref<160x1152xbf16, #tpu.memory_space<vmem>>, vector<32x384xbf16>
    %cst_320 = arith.constant dense<0.000000e+00> : vector<8x384xf32>
    %802 = tpu.matmul %800, %801, %cst_320 {dimension_numbers = #tpu.dot_dimension_numbers<[1], [0], [0], [1], [0, 0, 1, 1], [], []>} : vector<8x32xbf16>, vector<32x384xbf16>, vector<8x384xf32> -> vector<8x384xf32>
    %803 = arith.truncf %795 : vector<8x32xf32> to vector<8x32xbf16>
    %c32_321 = arith.constant 32 : index
    %c768_322 = arith.constant 768 : index
    %804 = vector.load %arg1[%c32_321, %c768_322] : memref<160x1152xbf16, #tpu.memory_space<vmem>>, vector<32x384xbf16>
    %cst_323 = arith.constant dense<0.000000e+00> : vector<8x384xf32>
    %805 = tpu.matmul %803, %804, %cst_323 {dimension_numbers = #tpu.dot_dimension_numbers<[1], [0], [0], [1], [0, 0, 1, 1], [], []>} : vector<8x32xbf16>, vector<32x384xbf16>, vector<8x384xf32> -> vector<8x384xf32>
    %806 = arith.truncf %9 : vector<8x16xf32> to vector<8x16xbf16>
    %c96 = arith.constant 96 : index
    %c0_324 = arith.constant 0 : index
    %807 = vector.load %arg1[%c96, %c0_324] : memref<160x1152xbf16, #tpu.memory_space<vmem>>, vector<16x384xbf16>
    %cst_325 = arith.constant dense<0.000000e+00> : vector<8x384xf32>
    %808 = tpu.matmul %806, %807, %cst_325 {dimension_numbers = #tpu.dot_dimension_numbers<[1], [0], [0], [1], [0, 0, 1, 1], [], []>} : vector<8x16xbf16>, vector<16x384xbf16>, vector<8x384xf32> -> vector<8x384xf32>
    %c3 = arith.constant 3 : index
    %c0_326 = arith.constant 0 : index
    %809 = vector.load %arg3[%c3, %c0_326] : memref<10x384xf32, #tpu.memory_space<vmem>>, vector<1x384xf32>
    %810 = vector.broadcast %809 : vector<1x384xf32> to vector<8x384xf32>
    %811 = arith.addf %808, %810 : vector<8x384xf32>
    %c7 = arith.constant 7 : index
    %c0_327 = arith.constant 0 : index
    %812 = vector.load %arg3[%c7, %c0_327] : memref<10x384xf32, #tpu.memory_space<vmem>>, vector<1x32xf32>
    %813 = vector.extract_strided_slice %811 {offsets = [0, 0], sizes = [8, 256], strides = [1, 1]} : vector<8x384xf32> to vector<8x256xf32>
    %814 = vector.extract_strided_slice %799 {offsets = [0, 0], sizes = [8, 256], strides = [1, 1]} : vector<8x384xf32> to vector<8x256xf32>
    %815 = arith.addf %813, %814 : vector<8x256xf32>
    %cst_328 = arith.constant 5.000000e-01 : f32
    %816 = vector.broadcast %cst_328 : f32 to vector<8x256xf32>
    %817 = arith.mulf %816, %815 : vector<8x256xf32>
    %818 = math.tanh %817 : vector<8x256xf32>
    %cst_329 = arith.constant 1.000000e+00 : f32
    %819 = vector.broadcast %cst_329 : f32 to vector<8x256xf32>
    %820 = arith.addf %818, %819 : vector<8x256xf32>
    %cst_330 = arith.constant 5.000000e-01 : f32
    %821 = vector.broadcast %cst_330 : f32 to vector<8x256xf32>
    %822 = arith.mulf %821, %820 : vector<8x256xf32>
    %823 = vector.extract_strided_slice %822 {offsets = [0, 0], sizes = [8, 32], strides = [1, 1]} : vector<8x256xf32> to vector<8x32xf32>
    %824 = vector.extract_strided_slice %822 {offsets = [0, 128], sizes = [8, 32], strides = [1, 1]} : vector<8x256xf32> to vector<8x32xf32>
    %825 = vector.extract_strided_slice %811 {offsets = [0, 256], sizes = [8, 32], strides = [1, 1]} : vector<8x384xf32> to vector<8x32xf32>
    %826 = vector.extract_strided_slice %799 {offsets = [0, 256], sizes = [8, 32], strides = [1, 1]} : vector<8x384xf32> to vector<8x32xf32>
    %827 = vector.broadcast %812 : vector<1x32xf32> to vector<8x32xf32>
    %828 = arith.addf %826, %827 : vector<8x32xf32>
    %829 = arith.mulf %823, %828 : vector<8x32xf32>
    %830 = arith.addf %825, %829 : vector<8x32xf32>
    %831 = math.tanh %830 : vector<8x32xf32>
    %cst_331 = arith.constant 1.000000e+00 : f32
    %832 = vector.broadcast %cst_331 : f32 to vector<8x32xf32>
    %833 = arith.subf %832, %824 : vector<8x32xf32>
    %834 = arith.mulf %833, %831 : vector<8x32xf32>
    %835 = arith.mulf %824, %733 : vector<8x32xf32>
    %836 = arith.addf %834, %835 : vector<8x32xf32>
    %837 = arith.truncf %836 : vector<8x32xf32> to vector<8x32xbf16>
    %c96_332 = arith.constant 96 : index
    %c384_333 = arith.constant 384 : index
    %838 = vector.load %arg1[%c96_332, %c384_333] : memref<160x1152xbf16, #tpu.memory_space<vmem>>, vector<32x384xbf16>
    %cst_334 = arith.constant dense<0.000000e+00> : vector<8x384xf32>
    %839 = tpu.matmul %837, %838, %cst_334 {dimension_numbers = #tpu.dot_dimension_numbers<[1], [0], [0], [1], [0, 0, 1, 1], [], []>} : vector<8x32xbf16>, vector<32x384xbf16>, vector<8x384xf32> -> vector<8x384xf32>
    %c4 = arith.constant 4 : index
    %c0_335 = arith.constant 0 : index
    %840 = vector.load %arg3[%c4, %c0_335] : memref<10x384xf32, #tpu.memory_space<vmem>>, vector<1x384xf32>
    %841 = vector.broadcast %840 : vector<1x384xf32> to vector<8x384xf32>
    %842 = arith.addf %839, %841 : vector<8x384xf32>
    %c7_336 = arith.constant 7 : index
    %c128_337 = arith.constant 128 : index
    %843 = vector.load %arg3[%c7_336, %c128_337] : memref<10x384xf32, #tpu.memory_space<vmem>>, vector<1x32xf32>
    %844 = vector.extract_strided_slice %842 {offsets = [0, 0], sizes = [8, 256], strides = [1, 1]} : vector<8x384xf32> to vector<8x256xf32>
    %845 = vector.extract_strided_slice %802 {offsets = [0, 0], sizes = [8, 256], strides = [1, 1]} : vector<8x384xf32> to vector<8x256xf32>
    %846 = arith.addf %844, %845 : vector<8x256xf32>
    %cst_338 = arith.constant 5.000000e-01 : f32
    %847 = vector.broadcast %cst_338 : f32 to vector<8x256xf32>
    %848 = arith.mulf %847, %846 : vector<8x256xf32>
    %849 = math.tanh %848 : vector<8x256xf32>
    %cst_339 = arith.constant 1.000000e+00 : f32
    %850 = vector.broadcast %cst_339 : f32 to vector<8x256xf32>
    %851 = arith.addf %849, %850 : vector<8x256xf32>
    %cst_340 = arith.constant 5.000000e-01 : f32
    %852 = vector.broadcast %cst_340 : f32 to vector<8x256xf32>
    %853 = arith.mulf %852, %851 : vector<8x256xf32>
    %854 = vector.extract_strided_slice %853 {offsets = [0, 0], sizes = [8, 32], strides = [1, 1]} : vector<8x256xf32> to vector<8x32xf32>
    %855 = vector.extract_strided_slice %853 {offsets = [0, 128], sizes = [8, 32], strides = [1, 1]} : vector<8x256xf32> to vector<8x32xf32>
    %856 = vector.extract_strided_slice %842 {offsets = [0, 256], sizes = [8, 32], strides = [1, 1]} : vector<8x384xf32> to vector<8x32xf32>
    %857 = vector.extract_strided_slice %802 {offsets = [0, 256], sizes = [8, 32], strides = [1, 1]} : vector<8x384xf32> to vector<8x32xf32>
    %858 = vector.broadcast %843 : vector<1x32xf32> to vector<8x32xf32>
    %859 = arith.addf %857, %858 : vector<8x32xf32>
    %860 = arith.mulf %854, %859 : vector<8x32xf32>
    %861 = arith.addf %856, %860 : vector<8x32xf32>
    %862 = math.tanh %861 : vector<8x32xf32>
    %cst_341 = arith.constant 1.000000e+00 : f32
    %863 = vector.broadcast %cst_341 : f32 to vector<8x32xf32>
    %864 = arith.subf %863, %855 : vector<8x32xf32>
    %865 = arith.mulf %864, %862 : vector<8x32xf32>
    %866 = arith.mulf %855, %764 : vector<8x32xf32>
    %867 = arith.addf %865, %866 : vector<8x32xf32>
    %868 = arith.truncf %867 : vector<8x32xf32> to vector<8x32xbf16>
    %c96_342 = arith.constant 96 : index
    %c768_343 = arith.constant 768 : index
    %869 = vector.load %arg1[%c96_342, %c768_343] : memref<160x1152xbf16, #tpu.memory_space<vmem>>, vector<32x384xbf16>
    %cst_344 = arith.constant dense<0.000000e+00> : vector<8x384xf32>
    %870 = tpu.matmul %868, %869, %cst_344 {dimension_numbers = #tpu.dot_dimension_numbers<[1], [0], [0], [1], [0, 0, 1, 1], [], []>} : vector<8x32xbf16>, vector<32x384xbf16>, vector<8x384xf32> -> vector<8x384xf32>
    %c5 = arith.constant 5 : index
    %c0_345 = arith.constant 0 : index
    %871 = vector.load %arg3[%c5, %c0_345] : memref<10x384xf32, #tpu.memory_space<vmem>>, vector<1x384xf32>
    %872 = vector.broadcast %871 : vector<1x384xf32> to vector<8x384xf32>
    %873 = arith.addf %870, %872 : vector<8x384xf32>
    %c7_346 = arith.constant 7 : index
    %c256_347 = arith.constant 256 : index
    %874 = vector.load %arg3[%c7_346, %c256_347] : memref<10x384xf32, #tpu.memory_space<vmem>>, vector<1x32xf32>
    %875 = vector.extract_strided_slice %873 {offsets = [0, 0], sizes = [8, 256], strides = [1, 1]} : vector<8x384xf32> to vector<8x256xf32>
    %876 = vector.extract_strided_slice %805 {offsets = [0, 0], sizes = [8, 256], strides = [1, 1]} : vector<8x384xf32> to vector<8x256xf32>
    %877 = arith.addf %875, %876 : vector<8x256xf32>
    %cst_348 = arith.constant 5.000000e-01 : f32
    %878 = vector.broadcast %cst_348 : f32 to vector<8x256xf32>
    %879 = arith.mulf %878, %877 : vector<8x256xf32>
    %880 = math.tanh %879 : vector<8x256xf32>
    %cst_349 = arith.constant 1.000000e+00 : f32
    %881 = vector.broadcast %cst_349 : f32 to vector<8x256xf32>
    %882 = arith.addf %880, %881 : vector<8x256xf32>
    %cst_350 = arith.constant 5.000000e-01 : f32
    %883 = vector.broadcast %cst_350 : f32 to vector<8x256xf32>
    %884 = arith.mulf %883, %882 : vector<8x256xf32>
    %885 = vector.extract_strided_slice %884 {offsets = [0, 0], sizes = [8, 32], strides = [1, 1]} : vector<8x256xf32> to vector<8x32xf32>
    %886 = vector.extract_strided_slice %884 {offsets = [0, 128], sizes = [8, 32], strides = [1, 1]} : vector<8x256xf32> to vector<8x32xf32>
    %887 = vector.extract_strided_slice %873 {offsets = [0, 256], sizes = [8, 32], strides = [1, 1]} : vector<8x384xf32> to vector<8x32xf32>
    %888 = vector.extract_strided_slice %805 {offsets = [0, 256], sizes = [8, 32], strides = [1, 1]} : vector<8x384xf32> to vector<8x32xf32>
    %889 = vector.broadcast %874 : vector<1x32xf32> to vector<8x32xf32>
    %890 = arith.addf %888, %889 : vector<8x32xf32>
    %891 = arith.mulf %885, %890 : vector<8x32xf32>
    %892 = arith.addf %887, %891 : vector<8x32xf32>
    %893 = math.tanh %892 : vector<8x32xf32>
    %cst_351 = arith.constant 1.000000e+00 : f32
    %894 = vector.broadcast %cst_351 : f32 to vector<8x32xf32>
    %895 = arith.subf %894, %886 : vector<8x32xf32>
    %896 = arith.mulf %895, %893 : vector<8x32xf32>
    %897 = arith.mulf %886, %795 : vector<8x32xf32>
    %898 = arith.addf %896, %897 : vector<8x32xf32>
    %cst_352 = arith.constant 0.000000e+00 : f32
    %899 = vector.broadcast %cst_352 : f32 to vector<8x32xf32>
    %900 = arith.maximumf %898, %899 : vector<8x32xf32>
    %901 = arith.truncf %900 : vector<8x32xf32> to vector<8x32xbf16>
    %c128_353 = arith.constant 128 : index
    %c128_354 = arith.constant 128 : index
    %902 = vector.load %arg1[%c128_353, %c128_354] : memref<160x1152xbf16, #tpu.memory_space<vmem>>, vector<32x16xbf16>
    %cst_355 = arith.constant dense<0.000000e+00> : vector<8x16xf32>
    %903 = tpu.matmul %901, %902, %cst_355 {dimension_numbers = #tpu.dot_dimension_numbers<[1], [0], [0], [1], [0, 0, 1, 1], [], []>} : vector<8x32xbf16>, vector<32x16xbf16>, vector<8x16xf32> -> vector<8x16xf32>
    %904 = vector.broadcast %796 : vector<1x16xf32> to vector<8x16xf32>
    %905 = arith.addf %903, %904 : vector<8x16xf32>
    %906 = arith.truncf %836 : vector<8x32xf32> to vector<8x32xbf16>
    %c32_356 = arith.constant 32 : index
    %c0_357 = arith.constant 0 : index
    %907 = vector.load %arg1[%c32_356, %c0_357] : memref<160x1152xbf16, #tpu.memory_space<vmem>>, vector<32x384xbf16>
    %cst_358 = arith.constant dense<0.000000e+00> : vector<8x384xf32>
    %908 = tpu.matmul %906, %907, %cst_358 {dimension_numbers = #tpu.dot_dimension_numbers<[1], [0], [0], [1], [0, 0, 1, 1], [], []>} : vector<8x32xbf16>, vector<32x384xbf16>, vector<8x384xf32> -> vector<8x384xf32>
    %909 = arith.truncf %867 : vector<8x32xf32> to vector<8x32xbf16>
    %c32_359 = arith.constant 32 : index
    %c384_360 = arith.constant 384 : index
    %910 = vector.load %arg1[%c32_359, %c384_360] : memref<160x1152xbf16, #tpu.memory_space<vmem>>, vector<32x384xbf16>
    %cst_361 = arith.constant dense<0.000000e+00> : vector<8x384xf32>
    %911 = tpu.matmul %909, %910, %cst_361 {dimension_numbers = #tpu.dot_dimension_numbers<[1], [0], [0], [1], [0, 0, 1, 1], [], []>} : vector<8x32xbf16>, vector<32x384xbf16>, vector<8x384xf32> -> vector<8x384xf32>
    %912 = arith.truncf %898 : vector<8x32xf32> to vector<8x32xbf16>
    %c32_362 = arith.constant 32 : index
    %c768_363 = arith.constant 768 : index
    %913 = vector.load %arg1[%c32_362, %c768_363] : memref<160x1152xbf16, #tpu.memory_space<vmem>>, vector<32x384xbf16>
    %cst_364 = arith.constant dense<0.000000e+00> : vector<8x384xf32>
    %914 = tpu.matmul %912, %913, %cst_364 {dimension_numbers = #tpu.dot_dimension_numbers<[1], [0], [0], [1], [0, 0, 1, 1], [], []>} : vector<8x32xbf16>, vector<32x384xbf16>, vector<8x384xf32> -> vector<8x384xf32>
    %915 = arith.truncf %905 : vector<8x16xf32> to vector<8x16xbf16>
    %c96_365 = arith.constant 96 : index
    %c0_366 = arith.constant 0 : index
    %916 = vector.load %arg1[%c96_365, %c0_366] : memref<160x1152xbf16, #tpu.memory_space<vmem>>, vector<16x384xbf16>
    %cst_367 = arith.constant dense<0.000000e+00> : vector<8x384xf32>
    %917 = tpu.matmul %915, %916, %cst_367 {dimension_numbers = #tpu.dot_dimension_numbers<[1], [0], [0], [1], [0, 0, 1, 1], [], []>} : vector<8x16xbf16>, vector<16x384xbf16>, vector<8x384xf32> -> vector<8x384xf32>
    %c3_368 = arith.constant 3 : index
    %c0_369 = arith.constant 0 : index
    %918 = vector.load %arg3[%c3_368, %c0_369] : memref<10x384xf32, #tpu.memory_space<vmem>>, vector<1x384xf32>
    %919 = vector.broadcast %918 : vector<1x384xf32> to vector<8x384xf32>
    %920 = arith.addf %917, %919 : vector<8x384xf32>
    %c7_370 = arith.constant 7 : index
    %c0_371 = arith.constant 0 : index
    %921 = vector.load %arg3[%c7_370, %c0_371] : memref<10x384xf32, #tpu.memory_space<vmem>>, vector<1x32xf32>
    %922 = vector.extract_strided_slice %920 {offsets = [0, 0], sizes = [8, 256], strides = [1, 1]} : vector<8x384xf32> to vector<8x256xf32>
    %923 = vector.extract_strided_slice %908 {offsets = [0, 0], sizes = [8, 256], strides = [1, 1]} : vector<8x384xf32> to vector<8x256xf32>
    %924 = arith.addf %922, %923 : vector<8x256xf32>
    %cst_372 = arith.constant 5.000000e-01 : f32
    %925 = vector.broadcast %cst_372 : f32 to vector<8x256xf32>
    %926 = arith.mulf %925, %924 : vector<8x256xf32>
    %927 = math.tanh %926 : vector<8x256xf32>
    %cst_373 = arith.constant 1.000000e+00 : f32
    %928 = vector.broadcast %cst_373 : f32 to vector<8x256xf32>
    %929 = arith.addf %927, %928 : vector<8x256xf32>
    %cst_374 = arith.constant 5.000000e-01 : f32
    %930 = vector.broadcast %cst_374 : f32 to vector<8x256xf32>
    %931 = arith.mulf %930, %929 : vector<8x256xf32>
    %932 = vector.extract_strided_slice %931 {offsets = [0, 0], sizes = [8, 32], strides = [1, 1]} : vector<8x256xf32> to vector<8x32xf32>
    %933 = vector.extract_strided_slice %931 {offsets = [0, 128], sizes = [8, 32], strides = [1, 1]} : vector<8x256xf32> to vector<8x32xf32>
    %934 = vector.extract_strided_slice %920 {offsets = [0, 256], sizes = [8, 32], strides = [1, 1]} : vector<8x384xf32> to vector<8x32xf32>
    %935 = vector.extract_strided_slice %908 {offsets = [0, 256], sizes = [8, 32], strides = [1, 1]} : vector<8x384xf32> to vector<8x32xf32>
    %936 = vector.broadcast %921 : vector<1x32xf32> to vector<8x32xf32>
    %937 = arith.addf %935, %936 : vector<8x32xf32>
    %938 = arith.mulf %932, %937 : vector<8x32xf32>
    %939 = arith.addf %934, %938 : vector<8x32xf32>
    %940 = math.tanh %939 : vector<8x32xf32>
    %cst_375 = arith.constant 1.000000e+00 : f32
    %941 = vector.broadcast %cst_375 : f32 to vector<8x32xf32>
    %942 = arith.subf %941, %933 : vector<8x32xf32>
    %943 = arith.mulf %942, %940 : vector<8x32xf32>
    %944 = arith.mulf %933, %836 : vector<8x32xf32>
    %945 = arith.addf %943, %944 : vector<8x32xf32>
    %946 = arith.truncf %945 : vector<8x32xf32> to vector<8x32xbf16>
    %c96_376 = arith.constant 96 : index
    %c384_377 = arith.constant 384 : index
    %947 = vector.load %arg1[%c96_376, %c384_377] : memref<160x1152xbf16, #tpu.memory_space<vmem>>, vector<32x384xbf16>
    %cst_378 = arith.constant dense<0.000000e+00> : vector<8x384xf32>
    %948 = tpu.matmul %946, %947, %cst_378 {dimension_numbers = #tpu.dot_dimension_numbers<[1], [0], [0], [1], [0, 0, 1, 1], [], []>} : vector<8x32xbf16>, vector<32x384xbf16>, vector<8x384xf32> -> vector<8x384xf32>
    %c4_379 = arith.constant 4 : index
    %c0_380 = arith.constant 0 : index
    %949 = vector.load %arg3[%c4_379, %c0_380] : memref<10x384xf32, #tpu.memory_space<vmem>>, vector<1x384xf32>
    %950 = vector.broadcast %949 : vector<1x384xf32> to vector<8x384xf32>
    %951 = arith.addf %948, %950 : vector<8x384xf32>
    %c7_381 = arith.constant 7 : index
    %c128_382 = arith.constant 128 : index
    %952 = vector.load %arg3[%c7_381, %c128_382] : memref<10x384xf32, #tpu.memory_space<vmem>>, vector<1x32xf32>
    %953 = vector.extract_strided_slice %951 {offsets = [0, 0], sizes = [8, 256], strides = [1, 1]} : vector<8x384xf32> to vector<8x256xf32>
    %954 = vector.extract_strided_slice %911 {offsets = [0, 0], sizes = [8, 256], strides = [1, 1]} : vector<8x384xf32> to vector<8x256xf32>
    %955 = arith.addf %953, %954 : vector<8x256xf32>
    %cst_383 = arith.constant 5.000000e-01 : f32
    %956 = vector.broadcast %cst_383 : f32 to vector<8x256xf32>
    %957 = arith.mulf %956, %955 : vector<8x256xf32>
    %958 = math.tanh %957 : vector<8x256xf32>
    %cst_384 = arith.constant 1.000000e+00 : f32
    %959 = vector.broadcast %cst_384 : f32 to vector<8x256xf32>
    %960 = arith.addf %958, %959 : vector<8x256xf32>
    %cst_385 = arith.constant 5.000000e-01 : f32
    %961 = vector.broadcast %cst_385 : f32 to vector<8x256xf32>
    %962 = arith.mulf %961, %960 : vector<8x256xf32>
    %963 = vector.extract_strided_slice %962 {offsets = [0, 0], sizes = [8, 32], strides = [1, 1]} : vector<8x256xf32> to vector<8x32xf32>
    %964 = vector.extract_strided_slice %962 {offsets = [0, 128], sizes = [8, 32], strides = [1, 1]} : vector<8x256xf32> to vector<8x32xf32>
    %965 = vector.extract_strided_slice %951 {offsets = [0, 256], sizes = [8, 32], strides = [1, 1]} : vector<8x384xf32> to vector<8x32xf32>
    %966 = vector.extract_strided_slice %911 {offsets = [0, 256], sizes = [8, 32], strides = [1, 1]} : vector<8x384xf32> to vector<8x32xf32>
    %967 = vector.broadcast %952 : vector<1x32xf32> to vector<8x32xf32>
    %968 = arith.addf %966, %967 : vector<8x32xf32>
    %969 = arith.mulf %963, %968 : vector<8x32xf32>
    %970 = arith.addf %965, %969 : vector<8x32xf32>
    %971 = math.tanh %970 : vector<8x32xf32>
    %cst_386 = arith.constant 1.000000e+00 : f32
    %972 = vector.broadcast %cst_386 : f32 to vector<8x32xf32>
    %973 = arith.subf %972, %964 : vector<8x32xf32>
    %974 = arith.mulf %973, %971 : vector<8x32xf32>
    %975 = arith.mulf %964, %867 : vector<8x32xf32>
    %976 = arith.addf %974, %975 : vector<8x32xf32>
    %977 = arith.truncf %976 : vector<8x32xf32> to vector<8x32xbf16>
    %c96_387 = arith.constant 96 : index
    %c768_388 = arith.constant 768 : index
    %978 = vector.load %arg1[%c96_387, %c768_388] : memref<160x1152xbf16, #tpu.memory_space<vmem>>, vector<32x384xbf16>
    %cst_389 = arith.constant dense<0.000000e+00> : vector<8x384xf32>
    %979 = tpu.matmul %977, %978, %cst_389 {dimension_numbers = #tpu.dot_dimension_numbers<[1], [0], [0], [1], [0, 0, 1, 1], [], []>} : vector<8x32xbf16>, vector<32x384xbf16>, vector<8x384xf32> -> vector<8x384xf32>
    %c5_390 = arith.constant 5 : index
    %c0_391 = arith.constant 0 : index
    %980 = vector.load %arg3[%c5_390, %c0_391] : memref<10x384xf32, #tpu.memory_space<vmem>>, vector<1x384xf32>
    %981 = vector.broadcast %980 : vector<1x384xf32> to vector<8x384xf32>
    %982 = arith.addf %979, %981 : vector<8x384xf32>
    %c7_392 = arith.constant 7 : index
    %c256_393 = arith.constant 256 : index
    %983 = vector.load %arg3[%c7_392, %c256_393] : memref<10x384xf32, #tpu.memory_space<vmem>>, vector<1x32xf32>
    %984 = vector.extract_strided_slice %982 {offsets = [0, 0], sizes = [8, 256], strides = [1, 1]} : vector<8x384xf32> to vector<8x256xf32>
    %985 = vector.extract_strided_slice %914 {offsets = [0, 0], sizes = [8, 256], strides = [1, 1]} : vector<8x384xf32> to vector<8x256xf32>
    %986 = arith.addf %984, %985 : vector<8x256xf32>
    %cst_394 = arith.constant 5.000000e-01 : f32
    %987 = vector.broadcast %cst_394 : f32 to vector<8x256xf32>
    %988 = arith.mulf %987, %986 : vector<8x256xf32>
    %989 = math.tanh %988 : vector<8x256xf32>
    %cst_395 = arith.constant 1.000000e+00 : f32
    %990 = vector.broadcast %cst_395 : f32 to vector<8x256xf32>
    %991 = arith.addf %989, %990 : vector<8x256xf32>
    %cst_396 = arith.constant 5.000000e-01 : f32
    %992 = vector.broadcast %cst_396 : f32 to vector<8x256xf32>
    %993 = arith.mulf %992, %991 : vector<8x256xf32>
    %994 = vector.extract_strided_slice %993 {offsets = [0, 0], sizes = [8, 32], strides = [1, 1]} : vector<8x256xf32> to vector<8x32xf32>
    %995 = vector.extract_strided_slice %993 {offsets = [0, 128], sizes = [8, 32], strides = [1, 1]} : vector<8x256xf32> to vector<8x32xf32>
    %996 = vector.extract_strided_slice %982 {offsets = [0, 256], sizes = [8, 32], strides = [1, 1]} : vector<8x384xf32> to vector<8x32xf32>
    %997 = vector.extract_strided_slice %914 {offsets = [0, 256], sizes = [8, 32], strides = [1, 1]} : vector<8x384xf32> to vector<8x32xf32>
    %998 = vector.broadcast %983 : vector<1x32xf32> to vector<8x32xf32>
    %999 = arith.addf %997, %998 : vector<8x32xf32>
    %1000 = arith.mulf %994, %999 : vector<8x32xf32>
    %1001 = arith.addf %996, %1000 : vector<8x32xf32>
    %1002 = math.tanh %1001 : vector<8x32xf32>
    %cst_397 = arith.constant 1.000000e+00 : f32
    %1003 = vector.broadcast %cst_397 : f32 to vector<8x32xf32>
    %1004 = arith.subf %1003, %995 : vector<8x32xf32>
    %1005 = arith.mulf %1004, %1002 : vector<8x32xf32>
    %1006 = arith.mulf %995, %898 : vector<8x32xf32>
    %1007 = arith.addf %1005, %1006 : vector<8x32xf32>
    %cst_398 = arith.constant 0.000000e+00 : f32
    %1008 = vector.broadcast %cst_398 : f32 to vector<8x32xf32>
    %1009 = arith.maximumf %1007, %1008 : vector<8x32xf32>
    %1010 = arith.truncf %1009 : vector<8x32xf32> to vector<8x32xbf16>
    %c128_399 = arith.constant 128 : index
    %c128_400 = arith.constant 128 : index
    %1011 = vector.load %arg1[%c128_399, %c128_400] : memref<160x1152xbf16, #tpu.memory_space<vmem>>, vector<32x16xbf16>
    %cst_401 = arith.constant dense<0.000000e+00> : vector<8x16xf32>
    %1012 = tpu.matmul %1010, %1011, %cst_401 {dimension_numbers = #tpu.dot_dimension_numbers<[1], [0], [0], [1], [0, 0, 1, 1], [], []>} : vector<8x32xbf16>, vector<32x16xbf16>, vector<8x16xf32> -> vector<8x16xf32>
    %1013 = vector.broadcast %796 : vector<1x16xf32> to vector<8x16xf32>
    %1014 = arith.addf %1012, %1013 : vector<8x16xf32>
    %1015 = arith.truncf %945 : vector<8x32xf32> to vector<8x32xbf16>
    %c32_402 = arith.constant 32 : index
    %c0_403 = arith.constant 0 : index
    %1016 = vector.load %arg1[%c32_402, %c0_403] : memref<160x1152xbf16, #tpu.memory_space<vmem>>, vector<32x384xbf16>
    %cst_404 = arith.constant dense<0.000000e+00> : vector<8x384xf32>
    %1017 = tpu.matmul %1015, %1016, %cst_404 {dimension_numbers = #tpu.dot_dimension_numbers<[1], [0], [0], [1], [0, 0, 1, 1], [], []>} : vector<8x32xbf16>, vector<32x384xbf16>, vector<8x384xf32> -> vector<8x384xf32>
    %1018 = arith.truncf %976 : vector<8x32xf32> to vector<8x32xbf16>
    %c32_405 = arith.constant 32 : index
    %c384_406 = arith.constant 384 : index
    %1019 = vector.load %arg1[%c32_405, %c384_406] : memref<160x1152xbf16, #tpu.memory_space<vmem>>, vector<32x384xbf16>
    %cst_407 = arith.constant dense<0.000000e+00> : vector<8x384xf32>
    %1020 = tpu.matmul %1018, %1019, %cst_407 {dimension_numbers = #tpu.dot_dimension_numbers<[1], [0], [0], [1], [0, 0, 1, 1], [], []>} : vector<8x32xbf16>, vector<32x384xbf16>, vector<8x384xf32> -> vector<8x384xf32>
    %1021 = arith.truncf %1007 : vector<8x32xf32> to vector<8x32xbf16>
    %c32_408 = arith.constant 32 : index
    %c768_409 = arith.constant 768 : index
    %1022 = vector.load %arg1[%c32_408, %c768_409] : memref<160x1152xbf16, #tpu.memory_space<vmem>>, vector<32x384xbf16>
    %cst_410 = arith.constant dense<0.000000e+00> : vector<8x384xf32>
    %1023 = tpu.matmul %1021, %1022, %cst_410 {dimension_numbers = #tpu.dot_dimension_numbers<[1], [0], [0], [1], [0, 0, 1, 1], [], []>} : vector<8x32xbf16>, vector<32x384xbf16>, vector<8x384xf32> -> vector<8x384xf32>
    %1024 = arith.truncf %1014 : vector<8x16xf32> to vector<8x16xbf16>
    %c96_411 = arith.constant 96 : index
    %c0_412 = arith.constant 0 : index
    %1025 = vector.load %arg1[%c96_411, %c0_412] : memref<160x1152xbf16, #tpu.memory_space<vmem>>, vector<16x384xbf16>
    %cst_413 = arith.constant dense<0.000000e+00> : vector<8x384xf32>
    %1026 = tpu.matmul %1024, %1025, %cst_413 {dimension_numbers = #tpu.dot_dimension_numbers<[1], [0], [0], [1], [0, 0, 1, 1], [], []>} : vector<8x16xbf16>, vector<16x384xbf16>, vector<8x384xf32> -> vector<8x384xf32>
    %c3_414 = arith.constant 3 : index
    %c0_415 = arith.constant 0 : index
    %1027 = vector.load %arg3[%c3_414, %c0_415] : memref<10x384xf32, #tpu.memory_space<vmem>>, vector<1x384xf32>
    %1028 = vector.broadcast %1027 : vector<1x384xf32> to vector<8x384xf32>
    %1029 = arith.addf %1026, %1028 : vector<8x384xf32>
    %c7_416 = arith.constant 7 : index
    %c0_417 = arith.constant 0 : index
    %1030 = vector.load %arg3[%c7_416, %c0_417] : memref<10x384xf32, #tpu.memory_space<vmem>>, vector<1x32xf32>
    %1031 = vector.extract_strided_slice %1029 {offsets = [0, 0], sizes = [8, 256], strides = [1, 1]} : vector<8x384xf32> to vector<8x256xf32>
    %1032 = vector.extract_strided_slice %1017 {offsets = [0, 0], sizes = [8, 256], strides = [1, 1]} : vector<8x384xf32> to vector<8x256xf32>
    %1033 = arith.addf %1031, %1032 : vector<8x256xf32>
    %cst_418 = arith.constant 5.000000e-01 : f32
    %1034 = vector.broadcast %cst_418 : f32 to vector<8x256xf32>
    %1035 = arith.mulf %1034, %1033 : vector<8x256xf32>
    %1036 = math.tanh %1035 : vector<8x256xf32>
    %cst_419 = arith.constant 1.000000e+00 : f32
    %1037 = vector.broadcast %cst_419 : f32 to vector<8x256xf32>
    %1038 = arith.addf %1036, %1037 : vector<8x256xf32>
    %cst_420 = arith.constant 5.000000e-01 : f32
    %1039 = vector.broadcast %cst_420 : f32 to vector<8x256xf32>
    %1040 = arith.mulf %1039, %1038 : vector<8x256xf32>
    %1041 = vector.extract_strided_slice %1040 {offsets = [0, 0], sizes = [8, 32], strides = [1, 1]} : vector<8x256xf32> to vector<8x32xf32>
    %1042 = vector.extract_strided_slice %1040 {offsets = [0, 128], sizes = [8, 32], strides = [1, 1]} : vector<8x256xf32> to vector<8x32xf32>
    %1043 = vector.extract_strided_slice %1029 {offsets = [0, 256], sizes = [8, 32], strides = [1, 1]} : vector<8x384xf32> to vector<8x32xf32>
    %1044 = vector.extract_strided_slice %1017 {offsets = [0, 256], sizes = [8, 32], strides = [1, 1]} : vector<8x384xf32> to vector<8x32xf32>
    %1045 = vector.broadcast %1030 : vector<1x32xf32> to vector<8x32xf32>
    %1046 = arith.addf %1044, %1045 : vector<8x32xf32>
    %1047 = arith.mulf %1041, %1046 : vector<8x32xf32>
    %1048 = arith.addf %1043, %1047 : vector<8x32xf32>
    %1049 = math.tanh %1048 : vector<8x32xf32>
    %cst_421 = arith.constant 1.000000e+00 : f32
    %1050 = vector.broadcast %cst_421 : f32 to vector<8x32xf32>
    %1051 = arith.subf %1050, %1042 : vector<8x32xf32>
    %1052 = arith.mulf %1051, %1049 : vector<8x32xf32>
    %1053 = arith.mulf %1042, %945 : vector<8x32xf32>
    %1054 = arith.addf %1052, %1053 : vector<8x32xf32>
    %1055 = arith.truncf %1054 : vector<8x32xf32> to vector<8x32xbf16>
    %c96_422 = arith.constant 96 : index
    %c384_423 = arith.constant 384 : index
    %1056 = vector.load %arg1[%c96_422, %c384_423] : memref<160x1152xbf16, #tpu.memory_space<vmem>>, vector<32x384xbf16>
    %cst_424 = arith.constant dense<0.000000e+00> : vector<8x384xf32>
    %1057 = tpu.matmul %1055, %1056, %cst_424 {dimension_numbers = #tpu.dot_dimension_numbers<[1], [0], [0], [1], [0, 0, 1, 1], [], []>} : vector<8x32xbf16>, vector<32x384xbf16>, vector<8x384xf32> -> vector<8x384xf32>
    %c4_425 = arith.constant 4 : index
    %c0_426 = arith.constant 0 : index
    %1058 = vector.load %arg3[%c4_425, %c0_426] : memref<10x384xf32, #tpu.memory_space<vmem>>, vector<1x384xf32>
    %1059 = vector.broadcast %1058 : vector<1x384xf32> to vector<8x384xf32>
    %1060 = arith.addf %1057, %1059 : vector<8x384xf32>
    %c7_427 = arith.constant 7 : index
    %c128_428 = arith.constant 128 : index
    %1061 = vector.load %arg3[%c7_427, %c128_428] : memref<10x384xf32, #tpu.memory_space<vmem>>, vector<1x32xf32>
    %1062 = vector.extract_strided_slice %1060 {offsets = [0, 0], sizes = [8, 256], strides = [1, 1]} : vector<8x384xf32> to vector<8x256xf32>
    %1063 = vector.extract_strided_slice %1020 {offsets = [0, 0], sizes = [8, 256], strides = [1, 1]} : vector<8x384xf32> to vector<8x256xf32>
    %1064 = arith.addf %1062, %1063 : vector<8x256xf32>
    %cst_429 = arith.constant 5.000000e-01 : f32
    %1065 = vector.broadcast %cst_429 : f32 to vector<8x256xf32>
    %1066 = arith.mulf %1065, %1064 : vector<8x256xf32>
    %1067 = math.tanh %1066 : vector<8x256xf32>
    %cst_430 = arith.constant 1.000000e+00 : f32
    %1068 = vector.broadcast %cst_430 : f32 to vector<8x256xf32>
    %1069 = arith.addf %1067, %1068 : vector<8x256xf32>
    %cst_431 = arith.constant 5.000000e-01 : f32
    %1070 = vector.broadcast %cst_431 : f32 to vector<8x256xf32>
    %1071 = arith.mulf %1070, %1069 : vector<8x256xf32>
    %1072 = vector.extract_strided_slice %1071 {offsets = [0, 0], sizes = [8, 32], strides = [1, 1]} : vector<8x256xf32> to vector<8x32xf32>
    %1073 = vector.extract_strided_slice %1071 {offsets = [0, 128], sizes = [8, 32], strides = [1, 1]} : vector<8x256xf32> to vector<8x32xf32>
    %1074 = vector.extract_strided_slice %1060 {offsets = [0, 256], sizes = [8, 32], strides = [1, 1]} : vector<8x384xf32> to vector<8x32xf32>
    %1075 = vector.extract_strided_slice %1020 {offsets = [0, 256], sizes = [8, 32], strides = [1, 1]} : vector<8x384xf32> to vector<8x32xf32>
    %1076 = vector.broadcast %1061 : vector<1x32xf32> to vector<8x32xf32>
    %1077 = arith.addf %1075, %1076 : vector<8x32xf32>
    %1078 = arith.mulf %1072, %1077 : vector<8x32xf32>
    %1079 = arith.addf %1074, %1078 : vector<8x32xf32>
    %1080 = math.tanh %1079 : vector<8x32xf32>
    %cst_432 = arith.constant 1.000000e+00 : f32
    %1081 = vector.broadcast %cst_432 : f32 to vector<8x32xf32>
    %1082 = arith.subf %1081, %1073 : vector<8x32xf32>
    %1083 = arith.mulf %1082, %1080 : vector<8x32xf32>
    %1084 = arith.mulf %1073, %976 : vector<8x32xf32>
    %1085 = arith.addf %1083, %1084 : vector<8x32xf32>
    %1086 = arith.truncf %1085 : vector<8x32xf32> to vector<8x32xbf16>
    %c96_433 = arith.constant 96 : index
    %c768_434 = arith.constant 768 : index
    %1087 = vector.load %arg1[%c96_433, %c768_434] : memref<160x1152xbf16, #tpu.memory_space<vmem>>, vector<32x384xbf16>
    %cst_435 = arith.constant dense<0.000000e+00> : vector<8x384xf32>
    %1088 = tpu.matmul %1086, %1087, %cst_435 {dimension_numbers = #tpu.dot_dimension_numbers<[1], [0], [0], [1], [0, 0, 1, 1], [], []>} : vector<8x32xbf16>, vector<32x384xbf16>, vector<8x384xf32> -> vector<8x384xf32>
    %c5_436 = arith.constant 5 : index
    %c0_437 = arith.constant 0 : index
    %1089 = vector.load %arg3[%c5_436, %c0_437] : memref<10x384xf32, #tpu.memory_space<vmem>>, vector<1x384xf32>
    %1090 = vector.broadcast %1089 : vector<1x384xf32> to vector<8x384xf32>
    %1091 = arith.addf %1088, %1090 : vector<8x384xf32>
    %c7_438 = arith.constant 7 : index
    %c256_439 = arith.constant 256 : index
    %1092 = vector.load %arg3[%c7_438, %c256_439] : memref<10x384xf32, #tpu.memory_space<vmem>>, vector<1x32xf32>
    %1093 = vector.extract_strided_slice %1091 {offsets = [0, 0], sizes = [8, 256], strides = [1, 1]} : vector<8x384xf32> to vector<8x256xf32>
    %1094 = vector.extract_strided_slice %1023 {offsets = [0, 0], sizes = [8, 256], strides = [1, 1]} : vector<8x384xf32> to vector<8x256xf32>
    %1095 = arith.addf %1093, %1094 : vector<8x256xf32>
    %cst_440 = arith.constant 5.000000e-01 : f32
    %1096 = vector.broadcast %cst_440 : f32 to vector<8x256xf32>
    %1097 = arith.mulf %1096, %1095 : vector<8x256xf32>
    %1098 = math.tanh %1097 : vector<8x256xf32>
    %cst_441 = arith.constant 1.000000e+00 : f32
    %1099 = vector.broadcast %cst_441 : f32 to vector<8x256xf32>
    %1100 = arith.addf %1098, %1099 : vector<8x256xf32>
    %cst_442 = arith.constant 5.000000e-01 : f32
    %1101 = vector.broadcast %cst_442 : f32 to vector<8x256xf32>
    %1102 = arith.mulf %1101, %1100 : vector<8x256xf32>
    %1103 = vector.extract_strided_slice %1102 {offsets = [0, 0], sizes = [8, 32], strides = [1, 1]} : vector<8x256xf32> to vector<8x32xf32>
    %1104 = vector.extract_strided_slice %1102 {offsets = [0, 128], sizes = [8, 32], strides = [1, 1]} : vector<8x256xf32> to vector<8x32xf32>
    %1105 = vector.extract_strided_slice %1091 {offsets = [0, 256], sizes = [8, 32], strides = [1, 1]} : vector<8x384xf32> to vector<8x32xf32>
    %1106 = vector.extract_strided_slice %1023 {offsets = [0, 256], sizes = [8, 32], strides = [1, 1]} : vector<8x384xf32> to vector<8x32xf32>
    %1107 = vector.broadcast %1092 : vector<1x32xf32> to vector<8x32xf32>
    %1108 = arith.addf %1106, %1107 : vector<8x32xf32>
    %1109 = arith.mulf %1103, %1108 : vector<8x32xf32>
    %1110 = arith.addf %1105, %1109 : vector<8x32xf32>
    %1111 = math.tanh %1110 : vector<8x32xf32>
    %cst_443 = arith.constant 1.000000e+00 : f32
    %1112 = vector.broadcast %cst_443 : f32 to vector<8x32xf32>
    %1113 = arith.subf %1112, %1104 : vector<8x32xf32>
    %1114 = arith.mulf %1113, %1111 : vector<8x32xf32>
    %1115 = arith.mulf %1104, %1007 : vector<8x32xf32>
    %1116 = arith.addf %1114, %1115 : vector<8x32xf32>
    %cst_444 = arith.constant 0.000000e+00 : f32
    %1117 = vector.broadcast %cst_444 : f32 to vector<8x32xf32>
    %1118 = arith.maximumf %1116, %1117 : vector<8x32xf32>
    %1119 = arith.truncf %1118 : vector<8x32xf32> to vector<8x32xbf16>
    %c128_445 = arith.constant 128 : index
    %c128_446 = arith.constant 128 : index
    %1120 = vector.load %arg1[%c128_445, %c128_446] : memref<160x1152xbf16, #tpu.memory_space<vmem>>, vector<32x16xbf16>
    %cst_447 = arith.constant dense<0.000000e+00> : vector<8x16xf32>
    %1121 = tpu.matmul %1119, %1120, %cst_447 {dimension_numbers = #tpu.dot_dimension_numbers<[1], [0], [0], [1], [0, 0, 1, 1], [], []>} : vector<8x32xbf16>, vector<32x16xbf16>, vector<8x16xf32> -> vector<8x16xf32>
    %1122 = vector.broadcast %796 : vector<1x16xf32> to vector<8x16xf32>
    %1123 = arith.addf %1121, %1122 : vector<8x16xf32>
    %1124 = arith.truncf %1054 : vector<8x32xf32> to vector<8x32xbf16>
    %c32_448 = arith.constant 32 : index
    %c0_449 = arith.constant 0 : index
    %1125 = vector.load %arg1[%c32_448, %c0_449] : memref<160x1152xbf16, #tpu.memory_space<vmem>>, vector<32x384xbf16>
    %cst_450 = arith.constant dense<0.000000e+00> : vector<8x384xf32>
    %1126 = tpu.matmul %1124, %1125, %cst_450 {dimension_numbers = #tpu.dot_dimension_numbers<[1], [0], [0], [1], [0, 0, 1, 1], [], []>} : vector<8x32xbf16>, vector<32x384xbf16>, vector<8x384xf32> -> vector<8x384xf32>
    %1127 = arith.truncf %1085 : vector<8x32xf32> to vector<8x32xbf16>
    %c32_451 = arith.constant 32 : index
    %c384_452 = arith.constant 384 : index
    %1128 = vector.load %arg1[%c32_451, %c384_452] : memref<160x1152xbf16, #tpu.memory_space<vmem>>, vector<32x384xbf16>
    %cst_453 = arith.constant dense<0.000000e+00> : vector<8x384xf32>
    %1129 = tpu.matmul %1127, %1128, %cst_453 {dimension_numbers = #tpu.dot_dimension_numbers<[1], [0], [0], [1], [0, 0, 1, 1], [], []>} : vector<8x32xbf16>, vector<32x384xbf16>, vector<8x384xf32> -> vector<8x384xf32>
    %1130 = arith.truncf %1116 : vector<8x32xf32> to vector<8x32xbf16>
    %c32_454 = arith.constant 32 : index
    %c768_455 = arith.constant 768 : index
    %1131 = vector.load %arg1[%c32_454, %c768_455] : memref<160x1152xbf16, #tpu.memory_space<vmem>>, vector<32x384xbf16>
    %cst_456 = arith.constant dense<0.000000e+00> : vector<8x384xf32>
    %1132 = tpu.matmul %1130, %1131, %cst_456 {dimension_numbers = #tpu.dot_dimension_numbers<[1], [0], [0], [1], [0, 0, 1, 1], [], []>} : vector<8x32xbf16>, vector<32x384xbf16>, vector<8x384xf32> -> vector<8x384xf32>
    %1133 = arith.truncf %1123 : vector<8x16xf32> to vector<8x16xbf16>
    %c96_457 = arith.constant 96 : index
    %c0_458 = arith.constant 0 : index
    %1134 = vector.load %arg1[%c96_457, %c0_458] : memref<160x1152xbf16, #tpu.memory_space<vmem>>, vector<16x384xbf16>
    %cst_459 = arith.constant dense<0.000000e+00> : vector<8x384xf32>
    %1135 = tpu.matmul %1133, %1134, %cst_459 {dimension_numbers = #tpu.dot_dimension_numbers<[1], [0], [0], [1], [0, 0, 1, 1], [], []>} : vector<8x16xbf16>, vector<16x384xbf16>, vector<8x384xf32> -> vector<8x384xf32>
    %c3_460 = arith.constant 3 : index
    %c0_461 = arith.constant 0 : index
    %1136 = vector.load %arg3[%c3_460, %c0_461] : memref<10x384xf32, #tpu.memory_space<vmem>>, vector<1x384xf32>
    %1137 = vector.broadcast %1136 : vector<1x384xf32> to vector<8x384xf32>
    %1138 = arith.addf %1135, %1137 : vector<8x384xf32>
    %c7_462 = arith.constant 7 : index
    %c0_463 = arith.constant 0 : index
    %1139 = vector.load %arg3[%c7_462, %c0_463] : memref<10x384xf32, #tpu.memory_space<vmem>>, vector<1x32xf32>
    %1140 = vector.extract_strided_slice %1138 {offsets = [0, 0], sizes = [8, 256], strides = [1, 1]} : vector<8x384xf32> to vector<8x256xf32>
    %1141 = vector.extract_strided_slice %1126 {offsets = [0, 0], sizes = [8, 256], strides = [1, 1]} : vector<8x384xf32> to vector<8x256xf32>
    %1142 = arith.addf %1140, %1141 : vector<8x256xf32>
    %cst_464 = arith.constant 5.000000e-01 : f32
    %1143 = vector.broadcast %cst_464 : f32 to vector<8x256xf32>
    %1144 = arith.mulf %1143, %1142 : vector<8x256xf32>
    %1145 = math.tanh %1144 : vector<8x256xf32>
    %cst_465 = arith.constant 1.000000e+00 : f32
    %1146 = vector.broadcast %cst_465 : f32 to vector<8x256xf32>
    %1147 = arith.addf %1145, %1146 : vector<8x256xf32>
    %cst_466 = arith.constant 5.000000e-01 : f32
    %1148 = vector.broadcast %cst_466 : f32 to vector<8x256xf32>
    %1149 = arith.mulf %1148, %1147 : vector<8x256xf32>
    %1150 = vector.extract_strided_slice %1149 {offsets = [0, 0], sizes = [8, 32], strides = [1, 1]} : vector<8x256xf32> to vector<8x32xf32>
    %1151 = vector.extract_strided_slice %1149 {offsets = [0, 128], sizes = [8, 32], strides = [1, 1]} : vector<8x256xf32> to vector<8x32xf32>
    %1152 = vector.extract_strided_slice %1138 {offsets = [0, 256], sizes = [8, 32], strides = [1, 1]} : vector<8x384xf32> to vector<8x32xf32>
    %1153 = vector.extract_strided_slice %1126 {offsets = [0, 256], sizes = [8, 32], strides = [1, 1]} : vector<8x384xf32> to vector<8x32xf32>
    %1154 = vector.broadcast %1139 : vector<1x32xf32> to vector<8x32xf32>
    %1155 = arith.addf %1153, %1154 : vector<8x32xf32>
    %1156 = arith.mulf %1150, %1155 : vector<8x32xf32>
    %1157 = arith.addf %1152, %1156 : vector<8x32xf32>
    %1158 = math.tanh %1157 : vector<8x32xf32>
    %cst_467 = arith.constant 1.000000e+00 : f32
    %1159 = vector.broadcast %cst_467 : f32 to vector<8x32xf32>
    %1160 = arith.subf %1159, %1151 : vector<8x32xf32>
    %1161 = arith.mulf %1160, %1158 : vector<8x32xf32>
    %1162 = arith.mulf %1151, %1054 : vector<8x32xf32>
    %1163 = arith.addf %1161, %1162 : vector<8x32xf32>
    %1164 = arith.truncf %1163 : vector<8x32xf32> to vector<8x32xbf16>
    %c96_468 = arith.constant 96 : index
    %c384_469 = arith.constant 384 : index
    %1165 = vector.load %arg1[%c96_468, %c384_469] : memref<160x1152xbf16, #tpu.memory_space<vmem>>, vector<32x384xbf16>
    %cst_470 = arith.constant dense<0.000000e+00> : vector<8x384xf32>
    %1166 = tpu.matmul %1164, %1165, %cst_470 {dimension_numbers = #tpu.dot_dimension_numbers<[1], [0], [0], [1], [0, 0, 1, 1], [], []>} : vector<8x32xbf16>, vector<32x384xbf16>, vector<8x384xf32> -> vector<8x384xf32>
    %c4_471 = arith.constant 4 : index
    %c0_472 = arith.constant 0 : index
    %1167 = vector.load %arg3[%c4_471, %c0_472] : memref<10x384xf32, #tpu.memory_space<vmem>>, vector<1x384xf32>
    %1168 = vector.broadcast %1167 : vector<1x384xf32> to vector<8x384xf32>
    %1169 = arith.addf %1166, %1168 : vector<8x384xf32>
    %c7_473 = arith.constant 7 : index
    %c128_474 = arith.constant 128 : index
    %1170 = vector.load %arg3[%c7_473, %c128_474] : memref<10x384xf32, #tpu.memory_space<vmem>>, vector<1x32xf32>
    %1171 = vector.extract_strided_slice %1169 {offsets = [0, 0], sizes = [8, 256], strides = [1, 1]} : vector<8x384xf32> to vector<8x256xf32>
    %1172 = vector.extract_strided_slice %1129 {offsets = [0, 0], sizes = [8, 256], strides = [1, 1]} : vector<8x384xf32> to vector<8x256xf32>
    %1173 = arith.addf %1171, %1172 : vector<8x256xf32>
    %cst_475 = arith.constant 5.000000e-01 : f32
    %1174 = vector.broadcast %cst_475 : f32 to vector<8x256xf32>
    %1175 = arith.mulf %1174, %1173 : vector<8x256xf32>
    %1176 = math.tanh %1175 : vector<8x256xf32>
    %cst_476 = arith.constant 1.000000e+00 : f32
    %1177 = vector.broadcast %cst_476 : f32 to vector<8x256xf32>
    %1178 = arith.addf %1176, %1177 : vector<8x256xf32>
    %cst_477 = arith.constant 5.000000e-01 : f32
    %1179 = vector.broadcast %cst_477 : f32 to vector<8x256xf32>
    %1180 = arith.mulf %1179, %1178 : vector<8x256xf32>
    %1181 = vector.extract_strided_slice %1180 {offsets = [0, 0], sizes = [8, 32], strides = [1, 1]} : vector<8x256xf32> to vector<8x32xf32>
    %1182 = vector.extract_strided_slice %1180 {offsets = [0, 128], sizes = [8, 32], strides = [1, 1]} : vector<8x256xf32> to vector<8x32xf32>
    %1183 = vector.extract_strided_slice %1169 {offsets = [0, 256], sizes = [8, 32], strides = [1, 1]} : vector<8x384xf32> to vector<8x32xf32>
    %1184 = vector.extract_strided_slice %1129 {offsets = [0, 256], sizes = [8, 32], strides = [1, 1]} : vector<8x384xf32> to vector<8x32xf32>
    %1185 = vector.broadcast %1170 : vector<1x32xf32> to vector<8x32xf32>
    %1186 = arith.addf %1184, %1185 : vector<8x32xf32>
    %1187 = arith.mulf %1181, %1186 : vector<8x32xf32>
    %1188 = arith.addf %1183, %1187 : vector<8x32xf32>
    %1189 = math.tanh %1188 : vector<8x32xf32>
    %cst_478 = arith.constant 1.000000e+00 : f32
    %1190 = vector.broadcast %cst_478 : f32 to vector<8x32xf32>
    %1191 = arith.subf %1190, %1182 : vector<8x32xf32>
    %1192 = arith.mulf %1191, %1189 : vector<8x32xf32>
    %1193 = arith.mulf %1182, %1085 : vector<8x32xf32>
    %1194 = arith.addf %1192, %1193 : vector<8x32xf32>
    %1195 = arith.truncf %1194 : vector<8x32xf32> to vector<8x32xbf16>
    %c96_479 = arith.constant 96 : index
    %c768_480 = arith.constant 768 : index
    %1196 = vector.load %arg1[%c96_479, %c768_480] : memref<160x1152xbf16, #tpu.memory_space<vmem>>, vector<32x384xbf16>
    %cst_481 = arith.constant dense<0.000000e+00> : vector<8x384xf32>
    %1197 = tpu.matmul %1195, %1196, %cst_481 {dimension_numbers = #tpu.dot_dimension_numbers<[1], [0], [0], [1], [0, 0, 1, 1], [], []>} : vector<8x32xbf16>, vector<32x384xbf16>, vector<8x384xf32> -> vector<8x384xf32>
    %c5_482 = arith.constant 5 : index
    %c0_483 = arith.constant 0 : index
    %1198 = vector.load %arg3[%c5_482, %c0_483] : memref<10x384xf32, #tpu.memory_space<vmem>>, vector<1x384xf32>
    %1199 = vector.broadcast %1198 : vector<1x384xf32> to vector<8x384xf32>
    %1200 = arith.addf %1197, %1199 : vector<8x384xf32>
    %c7_484 = arith.constant 7 : index
    %c256_485 = arith.constant 256 : index
    %1201 = vector.load %arg3[%c7_484, %c256_485] : memref<10x384xf32, #tpu.memory_space<vmem>>, vector<1x32xf32>
    %1202 = vector.extract_strided_slice %1200 {offsets = [0, 0], sizes = [8, 256], strides = [1, 1]} : vector<8x384xf32> to vector<8x256xf32>
    %1203 = vector.extract_strided_slice %1132 {offsets = [0, 0], sizes = [8, 256], strides = [1, 1]} : vector<8x384xf32> to vector<8x256xf32>
    %1204 = arith.addf %1202, %1203 : vector<8x256xf32>
    %cst_486 = arith.constant 5.000000e-01 : f32
    %1205 = vector.broadcast %cst_486 : f32 to vector<8x256xf32>
    %1206 = arith.mulf %1205, %1204 : vector<8x256xf32>
    %1207 = math.tanh %1206 : vector<8x256xf32>
    %cst_487 = arith.constant 1.000000e+00 : f32
    %1208 = vector.broadcast %cst_487 : f32 to vector<8x256xf32>
    %1209 = arith.addf %1207, %1208 : vector<8x256xf32>
    %cst_488 = arith.constant 5.000000e-01 : f32
    %1210 = vector.broadcast %cst_488 : f32 to vector<8x256xf32>
    %1211 = arith.mulf %1210, %1209 : vector<8x256xf32>
    %1212 = vector.extract_strided_slice %1211 {offsets = [0, 0], sizes = [8, 32], strides = [1, 1]} : vector<8x256xf32> to vector<8x32xf32>
    %1213 = vector.extract_strided_slice %1211 {offsets = [0, 128], sizes = [8, 32], strides = [1, 1]} : vector<8x256xf32> to vector<8x32xf32>
    %1214 = vector.extract_strided_slice %1200 {offsets = [0, 256], sizes = [8, 32], strides = [1, 1]} : vector<8x384xf32> to vector<8x32xf32>
    %1215 = vector.extract_strided_slice %1132 {offsets = [0, 256], sizes = [8, 32], strides = [1, 1]} : vector<8x384xf32> to vector<8x32xf32>
    %1216 = vector.broadcast %1201 : vector<1x32xf32> to vector<8x32xf32>
    %1217 = arith.addf %1215, %1216 : vector<8x32xf32>
    %1218 = arith.mulf %1212, %1217 : vector<8x32xf32>
    %1219 = arith.addf %1214, %1218 : vector<8x32xf32>
    %1220 = math.tanh %1219 : vector<8x32xf32>
    %cst_489 = arith.constant 1.000000e+00 : f32
    %1221 = vector.broadcast %cst_489 : f32 to vector<8x32xf32>
    %1222 = arith.subf %1221, %1213 : vector<8x32xf32>
    %1223 = arith.mulf %1222, %1220 : vector<8x32xf32>
    %1224 = arith.mulf %1213, %1116 : vector<8x32xf32>
    %1225 = arith.addf %1223, %1224 : vector<8x32xf32>
    %cst_490 = arith.constant 0.000000e+00 : f32
    %1226 = vector.broadcast %cst_490 : f32 to vector<8x32xf32>
    %1227 = arith.maximumf %1225, %1226 : vector<8x32xf32>
    %1228 = arith.truncf %1227 : vector<8x32xf32> to vector<8x32xbf16>
    %c128_491 = arith.constant 128 : index
    %c128_492 = arith.constant 128 : index
    %1229 = vector.load %arg1[%c128_491, %c128_492] : memref<160x1152xbf16, #tpu.memory_space<vmem>>, vector<32x16xbf16>
    %cst_493 = arith.constant dense<0.000000e+00> : vector<8x16xf32>
    %1230 = tpu.matmul %1228, %1229, %cst_493 {dimension_numbers = #tpu.dot_dimension_numbers<[1], [0], [0], [1], [0, 0, 1, 1], [], []>} : vector<8x32xbf16>, vector<32x16xbf16>, vector<8x16xf32> -> vector<8x16xf32>
    %1231 = vector.broadcast %796 : vector<1x16xf32> to vector<8x16xf32>
    %1232 = arith.addf %1230, %1231 : vector<8x16xf32>
    %1233 = tpu.concatenate %733, %764, %795, %905, %1014, %1123, %1232 in 1 : vector<8x32xf32>, vector<8x32xf32>, vector<8x32xf32>, vector<8x16xf32>, vector<8x16xf32>, vector<8x16xf32>, vector<8x16xf32> -> vector<8x160xf32>
    %1234 = arith.truncf %1233 : vector<8x160xf32> to vector<8x160xbf16>
    %c0_494 = arith.constant 0 : index
    %c0_495 = arith.constant 0 : index
    %1235 = vector.load %arg2[%c0_494, %c0_495] : memref<160x128xbf16, #tpu.memory_space<vmem>>, vector<160x128xbf16>
    %cst_496 = arith.constant dense<0.000000e+00> : vector<8x128xf32>
    %1236 = tpu.matmul %1234, %1235, %cst_496 {dimension_numbers = #tpu.dot_dimension_numbers<[1], [0], [0], [1], [0, 0, 1, 1], [], []>} : vector<8x160xbf16>, vector<160x128xbf16>, vector<8x128xf32> -> vector<8x128xf32>
    %c9 = arith.constant 9 : index
    %c0_497 = arith.constant 0 : index
    %1237 = vector.load %arg3[%c9, %c0_497] : memref<10x384xf32, #tpu.memory_space<vmem>>, vector<1x128xf32>
    %1238 = vector.broadcast %1237 : vector<1x128xf32> to vector<8x128xf32>
    %1239 = arith.addf %1236, %1238 : vector<8x128xf32>
    %c0_498 = arith.constant 0 : index
    %c0_499 = arith.constant 0 : index
    %1240 = vector.load %arg4[%c0_498, %c0_499] : memref<8x128xf32, #tpu.memory_space<vmem>>, vector<8x128xf32>
    tpu.vector_store %arg4[%c0_498, %c0_499], %1239 {strides = array<i32>} : memref<8x128xf32, #tpu.memory_space<vmem>>, vector<8x128xf32>,
    return
  }
}

</mosaic_0001>

<llo_original>
// kernel: tpu_custom_call.1
$region0: #{tpu_custom_call.1}
  #allocation0 [shape = 'u32[]', space=smem, size = 0x4, offset = 0x4, fixed_abs, tag = 'smem constant byte address 0x4 - core index']
  #allocation1 [shape = 'u32[144,128]{1,0:T(1,128)}', space=vmem, size = 0x12000, scoped, tag = 'internal scratch']
  #allocation2 [shape = 'f32[64,384]{1,0:T(8,128)}', space=vmem, size = 0x18000, scoped, tag = 'scratch operand']
  %s0 = inlined_call_operand.vmem [shape: f32[64,16], index: 0, kind: input, shape index: {}]
  %s1 = inlined_call_operand.hbm [shape: bf16[160,1152], index: 1, kind: input, shape index: {}]
  %s2 = inlined_call_operand.vmem [shape: bf16[160,128], index: 2, kind: input, shape index: {}]
  %s3 = inlined_call_operand.hbm [shape: f32[10,384], index: 3, kind: input, shape index: {}]
  %s4 = inlined_call_operand.hbm [shape: f32[8,128], index: 4, kind: output, shape index: {}]
  %s5 = sld [smem:[#allocation0]]
  $region34: #{tpu_custom_call.1} parent=0
    _
  %s7 = ssub.s32 1, %s5
  %s8 = scalar_select 0, %s7, %s5
  $region1: #{tpu_custom_call.1} parent=0
    #allocation3 [shape = 'u8[368640]{0}', space=vmem, size = 0x5a000, scoped, tag = 'input window, operand 1, single buffered']
    #allocation4 [shape = 's32[1]{0}', space=sflag, size = 0x4, scoped, tag = 'scoped memory for tpu_custom_call.1']
    #allocation5 [shape = 's32[1]{0}', space=sflag, size = 0x4, scoped, tag = 'scoped memory for tpu_custom_call.1']
    #allocation6 [shape = 'u8[24576]{0}', space=vmem, size = 0x6000, scoped, tag = 'input window, operand 3, single buffered']
    #allocation7 [shape = 's32[1]{0}', space=sflag, size = 0x4, scoped, tag = 'scoped memory for tpu_custom_call.1']
    #allocation8 [shape = 'u8[4096]{0}', space=vmem, size = 0x1000, scoped, tag = 'output window, operand 0, single buffered']
    %9 = vsyncpa [#allocation4], 0
    %10 = vsyncpa [#allocation7], 0
    %11 = vsyncpa [#allocation5], 0
    // Predicated region
    $region2: #{tpu_custom_call.1} parent=1 // pred_check
      _
    $region3: #{tpu_custom_call.1} parent=1 // pred_check_branch
      %13 = sbr.rel (0) target = $region5
    $region4: #{tpu_custom_call.1} parent=1 // pred_region
      _
    $region5: #{tpu_custom_call.1} parent=1 // pred_fallthru
      _
    // Predicated region
    $region6: #{tpu_custom_call.1} parent=1 // pred_check
      _
    $region7: #{tpu_custom_call.1} parent=1 // pred_check_branch
      %15 = sbr.rel (0) target = $region9
    $region8: #{tpu_custom_call.1} parent=1 // pred_region
      %s17 = ssub.s32 11520, 11520
      %18 = vsyncadd [#allocation4], %s17
      %s19 = sshll.u32 [#allocation3], 4
      %s20 = int_to_ptr.vmem [resolvable:$true] %s19
      %25 = dma.hbm_to_vmem [thread:$0]  %s1, 11520, %s20, [#allocation4], 576, 576, 36
    $region9: #{tpu_custom_call.1} parent=1 // pred_fallthru
      _
    // Predicated region
    $region10: #{tpu_custom_call.1} parent=1 // pred_check
      _
    $region11: #{tpu_custom_call.1} parent=1 // pred_check_branch
      %27 = sbr.rel (0) target = $region13
    $region12: #{tpu_custom_call.1} parent=1 // pred_region
      _
    $region13: #{tpu_custom_call.1} parent=1 // pred_fallthru
      _
    // Predicated region
    $region14: #{tpu_custom_call.1} parent=1 // pred_check
      _
    $region15: #{tpu_custom_call.1} parent=1 // pred_check_branch
      %29 = sbr.rel (0) target = $region17
    $region16: #{tpu_custom_call.1} parent=1 // pred_region
      %s31 = ssub.s32 768, 768
      %32 = vsyncadd [#allocation7], %s31
      %s33 = sshll.u32 [#allocation6], 4
      %s34 = int_to_ptr.vmem [resolvable:$true] %s33
      %39 = dma.hbm_to_vmem [thread:$0]  %s3, 768, %s34, [#allocation7], 384, 384, 24
    $region17: #{tpu_custom_call.1} parent=1 // pred_fallthru
      _
    // Predicated region
    $region18: #{tpu_custom_call.1} parent=1 // pred_check
      _
    $region19: #{tpu_custom_call.1} parent=1 // pred_check_branch
      %41 = sbr.rel (0) target = $region21
    $region20: #{tpu_custom_call.1} parent=1 // pred_region
      %42 = dma.done [#allocation4], 11520
    $region21: #{tpu_custom_call.1} parent=1 // pred_fallthru
      _
    // Predicated region
    $region22: #{tpu_custom_call.1} parent=1 // pred_check
      _
    $region23: #{tpu_custom_call.1} parent=1 // pred_check_branch
      %44 = sbr.rel (0) target = $region25
    $region24: #{tpu_custom_call.1} parent=1 // pred_region
      %45 = dma.done [#allocation7], 768
    $region25: #{tpu_custom_call.1} parent=1 // pred_fallthru
      _
    %v47 = vld [vmem:[%s0] sm:$0xff]
    %v48 = vld [vmem:[%s0 + $0x8] sm:$0xff]
    %v49 = vld [vmem:[%s0 + $0x10] sm:$0xff]
    %v50 = vld [vmem:[%s0 + $0x18] sm:$0xff]
    %v51 = vld [vmem:[%s0 + $0x20] sm:$0xff]
    %v52 = vld [vmem:[%s0 + $0x28] sm:$0xff]
    %v53 = vld [vmem:[%s0 + $0x30] sm:$0xff]
    %v54 = vld [vmem:[%s0 + $0x38] sm:$0xff]
    %v55 = vld [vmem:[#allocation3 + $0x240] sm:$0xf]
    %v56 = vld [vmem:[#allocation3 + $0x264] sm:$0xf]
    %v57 = vpack.c.bf16 %v48, %v47
    %v58 = vpack.c.bf16 %v50, %v49
    %v59 = vpack.c.bf16 %v52, %v51
    %v60 = vpack.c.bf16 %v54, %v53
    %v61 = vld [vmem:[#allocation6 + $0x18] ss:$0 sm:$0xff]
    %v64 = vunpack.c.l.b16 %v55
    %v65 = vunpack.c.l.b16 %v56
    %v66 = vpack.c.b16 %v65, %v64
    %vm68 = vcmask 130048
    %v70 = vsel %vm68, %v57, 0
    %v73 = vsel %vm68, %v58, 0
    %v76 = vsel %vm68, %v59, 0
    %v79 = vsel %vm68, %v60, 0
    %81 = vmatprep.subr.bf16.mxu0 0
    %82 = vmatpush1.bf16.msra.mxu0 %v66
    %83 = vmatprep.subr.bf16.mxu0 0
    %84 = vmatpush1.bf16.msra.mxu0 0
    %85 = vmatprep.subr.bf16.mxu0 0
    %86 = vmatpush1.bf16.msra.mxu0 0
    %87 = vmatprep.subr.bf16.mxu0 0
    %88 = vmatpush1.bf16.msra.mxu0 0
    %89 = vmatprep.subr.bf16.mxu0 0
    %90 = vmatpush1.bf16.msra.mxu0 0
    %91 = vmatprep.subr.bf16.mxu0 0
    %92 = vmatpush1.bf16.msra.mxu0 0
    %93 = vmatprep.subr.bf16.mxu0 0
    %94 = vmatpush1.bf16.msra.mxu0 0
    %95 = vmatprep.subr.bf16.mxu0 0
    %96 = vmatpush1.bf16.msra.mxu0 0
    %97 = vmatprep.subr.bf16.mxu0 0
    %98 = vmatpush1.bf16.msra.mxu0 0
    %99 = vmatprep.subr.bf16.mxu0 0
    %100 = vmatpush1.bf16.msra.mxu0 0
    %101 = vmatprep.subr.bf16.mxu0 0
    %102 = vmatpush1.bf16.msra.mxu0 0
    %103 = vmatprep.subr.bf16.mxu0 0
    %104 = vmatpush1.bf16.msra.mxu0 0
    %105 = vmatprep.subr.bf16.mxu0 0
    %106 = vmatpush1.bf16.msra.mxu0 0
    %107 = vmatprep.subr.bf16.mxu0 0
    %108 = vmatpush1.bf16.msra.mxu0 0
    %109 = vmatprep.subr.bf16.mxu0 0
    %110 = vmatpush1.bf16.msra.mxu0 0
    %111 = vmatprep.subr.bf16.mxu0 0
    %112 = vmatpush1.bf16.msra.mxu0 0
    %113 = vmatprep.mubr.bf16.mxu0 0
    %114 = vmatmul.mubr.bf16.gmra.mrb[0].mxu0 %v70
    %v115 = vpop.f32.mrb[0].mxu0
    %v116 = vadd.f32 %v61, %v115
    %v117 = vpop.f32.mrb[0].mxu0
    %v118 = vpop.f32.mrb[0].mxu0
    %v119 = vadd.f32 %v61, %v118
    %v120 = vpop.f32.mrb[0].mxu0
    %121 = vmatprep.mubr.bf16.mxu0 0
    %122 = vmatmul.mubr.bf16.gmra.mrb[0].mxu0 %v73
    %v123 = vpop.f32.mrb[0].mxu0
    %v124 = vadd.f32 %v61, %v123
    %v125 = vpop.f32.mrb[0].mxu0
    %v126 = vpop.f32.mrb[0].mxu0
    %v127 = vadd.f32 %v61, %v126
    %v128 = vpop.f32.mrb[0].mxu0
    %129 = vmatprep.mubr.bf16.mxu0 0
    %130 = vmatmul.mubr.bf16.gmra.mrb[0].mxu0 %v76
    %v131 = vpop.f32.mrb[0].mxu0
    %v132 = vadd.f32 %v61, %v131
    %v133 = vpop.f32.mrb[0].mxu0
    %v134 = vpop.f32.mrb[0].mxu0
    %v135 = vadd.f32 %v61, %v134
    %v136 = vpop.f32.mrb[0].mxu0
    %137 = vmatprep.mubr.bf16.mxu0 0
    %138 = vmatmul.mubr.bf16.gmra.mrb[0].mxu0 %v79
    %v139 = vpop.f32.mrb[0].mxu0
    %v140 = vadd.f32 %v61, %v139
    %v141 = vpop.f32.mrb[0].mxu0
    %v142 = vpop.f32.mrb[0].mxu0
    %v143 = vadd.f32 %v61, %v142
    %v144 = vpop.f32.mrb[0].mxu0
    %145 = vdwg.mxu0
    %v146 = vmax.f32 %v116, 0.0
    %v147 = vmax.f32 %v119, 0.0
    %v148 = vmax.f32 %v124, 0.0
    %v149 = vmax.f32 %v127, 0.0
    %v150 = vmax.f32 %v132, 0.0
    %v151 = vmax.f32 %v135, 0.0
    %v152 = vmax.f32 %v140, 0.0
    %v153 = vmax.f32 %v143, 0.0
    %v154 = vpack.c.bf16 %v147, %v146
    %v155 = vpack.c.bf16 %v149, %v148
    %v156 = vpack.c.bf16 %v151, %v150
    %v157 = vpack.c.bf16 %v153, %v152
    %v158 = vld [vmem:[#allocation3 + $0x120] sm:$0xff]
    %v159 = vld [vmem:[#allocation3 + $0x128] sm:$0xf]
    %v160 = vld [vmem:[#allocation3 + $0x144] sm:$0xff]
    %v161 = vld [vmem:[#allocation3 + $0x14c] sm:$0xf]
    %v162 = vld [vmem:[#allocation6] ss:$8 sm:$0x7]
    %v164 = vlaneseq
    %v165 = vshrl.u32 %v164, 7
    %v166 = vsub.s32 0, %v165
    %v167 = vrot.slane %v162, %v166
    %v168 = vlaneseq
    %v169 = vshrl.u32 %v168, 7
    %v170 = vsub.s32 1, %v169
    %v171 = vrot.slane %v162, %v170
    %v172 = vlaneseq
    %v173 = vshrl.u32 %v172, 7
    %v174 = vsub.s32 2, %v173
    %v175 = vrot.slane %v162, %v174
    %v183 = vunpack.c.l.b16 %v158
    %v184 = vunpack.c.h.b16 %v158
    %v185 = vunpack.c.l.b16 %v159
    %v186 = vunpack.c.l.b16 %v160
    %v187 = vunpack.c.h.b16 %v160
    %v188 = vunpack.c.l.b16 %v161
    %v189 = vpack.c.b16 %v186, %v183
    %v190 = vpack.c.b16 %v187, %v184
    %v191 = vpack.c.b16 %v188, %v185
    %v196 = vsel %vm68, %v154, 0
    %v199 = vsel %vm68, %v155, 0
    %v202 = vsel %vm68, %v156, 0
    %v205 = vsel %vm68, %v157, 0
    %207 = vmatprep.subr.bf16.mxu0 %v190
    %208 = vmatpush1.bf16.msra.mxu0 %v189
    %209 = vmatprep.subr.bf16.mxu0 0
    %210 = vmatpush1.bf16.msra.mxu0 0
    %211 = vmatprep.subr.bf16.mxu0 0
    %212 = vmatpush1.bf16.msra.mxu0 0
    %213 = vmatprep.subr.bf16.mxu0 0
    %214 = vmatpush1.bf16.msra.mxu0 0
    %215 = vmatprep.subr.bf16.mxu0 0
    %216 = vmatpush1.bf16.msra.mxu0 0
    %217 = vmatprep.subr.bf16.mxu0 0
    %218 = vmatpush1.bf16.msra.mxu0 0
    %219 = vmatprep.subr.bf16.mxu0 0
    %220 = vmatpush1.bf16.msra.mxu0 0
    %221 = vmatprep.subr.bf16.mxu0 0
    %222 = vmatpush1.bf16.msra.mxu0 0
    %223 = vmatprep.subr.bf16.mxu0 0
    %224 = vmatpush1.bf16.msra.mxu0 0
    %225 = vmatprep.subr.bf16.mxu0 0
    %226 = vmatpush1.bf16.msra.mxu0 0
    %227 = vmatprep.subr.bf16.mxu0 0
    %228 = vmatpush1.bf16.msra.mxu0 0
    %229 = vmatprep.subr.bf16.mxu0 0
    %230 = vmatpush1.bf16.msra.mxu0 0
    %231 = vmatprep.subr.bf16.mxu0 0
    %232 = vmatpush1.bf16.msra.mxu0 0
    %233 = vmatprep.subr.bf16.mxu0 0
    %234 = vmatpush1.bf16.msra.mxu0 0
    %235 = vmatprep.subr.bf16.mxu0 0
    %236 = vmatpush1.bf16.msra.mxu0 0
    %237 = vmatprep.subr.bf16.mxu0 0
    %238 = vmatpush1.bf16.msra.mxu0 0
    %239 = vmatprep.mubr.bf16.mxu0 0
    %240 = vmatmul.mubr.bf16.gmra.mrb[0].mxu0 %v196
    %v241 = vpop.f32.mrb[0].mxu0
    %v242 = vadd.f32 %v167, %v241
    %v243 = vpop.f32.mrb[0].mxu0
    %v244 = vadd.f32 %v171, %v243
    %v245 = vpop.f32.mrb[0].mxu0
    %v246 = vadd.f32 %v167, %v245
    %v247 = vpop.f32.mrb[0].mxu0
    %v248 = vadd.f32 %v171, %v247
    %249 = vmatprep.mubr.bf16.mxu0 0
    %250 = vmatmul.mubr.bf16.gmra.mrb[0].mxu0 %v199
    %v251 = vpop.f32.mrb[0].mxu0
    %v252 = vadd.f32 %v167, %v251
    %v253 = vpop.f32.mrb[0].mxu0
    %v254 = vadd.f32 %v171, %v253
    %v255 = vpop.f32.mrb[0].mxu0
    %v256 = vadd.f32 %v167, %v255
    %v257 = vpop.f32.mrb[0].mxu0
    %v258 = vadd.f32 %v171, %v257
    %259 = vmatprep.mubr.bf16.mxu0 0
    %260 = vmatmul.mubr.bf16.gmra.mrb[0].mxu0 %v202
    %v261 = vpop.f32.mrb[0].mxu0
    %v262 = vadd.f32 %v167, %v261
    %v263 = vpop.f32.mrb[0].mxu0
    %v264 = vadd.f32 %v171, %v263
    %v265 = vpop.f32.mrb[0].mxu0
    %v266 = vadd.f32 %v167, %v265
    %v267 = vpop.f32.mrb[0].mxu0
    %v268 = vadd.f32 %v171, %v267
    %269 = vmatprep.mubr.bf16.mxu0 0
    %270 = vmatmul.mubr.bf16.gmra.mrb[0].mxu0 %v205
    %v271 = vpop.f32.mrb[0].mxu0
    %v272 = vadd.f32 %v167, %v271
    %v273 = vpop.f32.mrb[0].mxu0
    %v274 = vadd.f32 %v171, %v273
    %v275 = vpop.f32.mrb[0].mxu0
    %v276 = vadd.f32 %v167, %v275
    %v277 = vpop.f32.mrb[0].mxu0
    %v278 = vadd.f32 %v171, %v277
    %279 = vdwg.mxu0
    %280 = vmatprep.subr.bf16.mxu0 0
    %281 = vmatpush1.bf16.msra.mxu0 %v191
    %282 = vmatprep.subr.bf16.mxu0 0
    %283 = vmatpush1.bf16.msra.mxu0 0
    %284 = vmatprep.subr.bf16.mxu0 0
    %285 = vmatpush1.bf16.msra.mxu0 0
    %286 = vmatprep.subr.bf16.mxu0 0
    %287 = vmatpush1.bf16.msra.mxu0 0
    %288 = vmatprep.subr.bf16.mxu0 0
    %289 = vmatpush1.bf16.msra.mxu0 0
    %290 = vmatprep.subr.bf16.mxu0 0
    %291 = vmatpush1.bf16.msra.mxu0 0
    %292 = vmatprep.subr.bf16.mxu0 0
    %293 = vmatpush1.bf16.msra.mxu0 0
    %294 = vmatprep.subr.bf16.mxu0 0
    %295 = vmatpush1.bf16.msra.mxu0 0
    %296 = vmatprep.subr.bf16.mxu0 0
    %297 = vmatpush1.bf16.msra.mxu0 0
    %298 = vmatprep.subr.bf16.mxu0 0
    %299 = vmatpush1.bf16.msra.mxu0 0
    %300 = vmatprep.subr.bf16.mxu0 0
    %301 = vmatpush1.bf16.msra.mxu0 0
    %302 = vmatprep.subr.bf16.mxu0 0
    %303 = vmatpush1.bf16.msra.mxu0 0
    %304 = vmatprep.subr.bf16.mxu0 0
    %305 = vmatpush1.bf16.msra.mxu0 0
    %306 = vmatprep.subr.bf16.mxu0 0
    %307 = vmatpush1.bf16.msra.mxu0 0
    %308 = vmatprep.subr.bf16.mxu0 0
    %309 = vmatpush1.bf16.msra.mxu0 0
    %310 = vmatprep.subr.bf16.mxu0 0
    %311 = vmatpush1.bf16.msra.mxu0 0
    %312 = vmatprep.mubr.bf16.mxu0 0
    %313 = vmatmul.mubr.bf16.gmra.mrb[0].mxu0 %v196
    %v314 = vpop.f32.mrb[0].mxu0
    %v315 = vadd.f32 %v175, %v314
    %v316 = vpop.f32.mrb[0].mxu0
    %v317 = vpop.f32.mrb[0].mxu0
    %v318 = vadd.f32 %v175, %v317
    %v319 = vpop.f32.mrb[0].mxu0
    %320 = vmatprep.mubr.bf16.mxu0 0
    %321 = vmatmul.mubr.bf16.gmra.mrb[0].mxu0 %v199
    %v322 = vpop.f32.mrb[0].mxu0
    %v323 = vadd.f32 %v175, %v322
    %v324 = vpop.f32.mrb[0].mxu0
    %v325 = vpop.f32.mrb[0].mxu0
    %v326 = vadd.f32 %v175, %v325
    %v327 = vpop.f32.mrb[0].mxu0
    %328 = vmatprep.mubr.bf16.mxu0 0
    %329 = vmatmul.mubr.bf16.gmra.mrb[0].mxu0 %v202
    %v330 = vpop.f32.mrb[0].mxu0
    %v331 = vadd.f32 %v175, %v330
    %v332 = vpop.f32.mrb[0].mxu0
    %v333 = vpop.f32.mrb[0].mxu0
    %v334 = vadd.f32 %v175, %v333
    %v335 = vpop.f32.mrb[0].mxu0
    %336 = vmatprep.mubr.bf16.mxu0 0
    %337 = vmatmul.mubr.bf16.gmra.mrb[0].mxu0 %v205
    %v338 = vpop.f32.mrb[0].mxu0
    %v339 = vadd.f32 %v175, %v338
    %v340 = vpop.f32.mrb[0].mxu0
    %v341 = vpop.f32.mrb[0].mxu0
    %v342 = vadd.f32 %v175, %v341
    %v343 = vpop.f32.mrb[0].mxu0
    %344 = vdwg.mxu0
    %345 = vst [vmem:[#allocation2] sm:$0xff] %v242
    %346 = vst [vmem:[#allocation2 + $0x8] sm:$0xff] %v244
    %347 = vst [vmem:[#allocation2 + $0x10] sm:$0xff] %v315
    %348 = vst [vmem:[#allocation2 + $0x18] sm:$0xff] %v246
    %349 = vst [vmem:[#allocation2 + $0x20] sm:$0xff] %v248
    %350 = vst [vmem:[#allocation2 + $0x28] sm:$0xff] %v318
    %351 = vst [vmem:[#allocation2 + $0x30] sm:$0xff] %v252
    %352 = vst [vmem:[#allocation2 + $0x38] sm:$0xff] %v254
    %353 = vst [vmem:[#allocation2 + $0x40] sm:$0xff] %v323
    %354 = vst [vmem:[#allocation2 + $0x48] sm:$0xff] %v256
    %355 = vst [vmem:[#allocation2 + $0x50] sm:$0xff] %v258
    %356 = vst [vmem:[#allocation2 + $0x58] sm:$0xff] %v326
    %357 = vst [vmem:[#allocation2 + $0x60] sm:$0xff] %v262
    %358 = vst [vmem:[#allocation2 + $0x68] sm:$0xff] %v264
    %359 = vst [vmem:[#allocation2 + $0x70] sm:$0xff] %v331
    %360 = vst [vmem:[#allocation2 + $0x78] sm:$0xff] %v266
    %361 = vst [vmem:[#allocation2 + $0x80] sm:$0xff] %v268
    %362 = vst [vmem:[#allocation2 + $0x88] sm:$0xff] %v334
    %363 = vst [vmem:[#allocation2 + $0x90] sm:$0xff] %v272
    %364 = vst [vmem:[#allocation2 + $0x98] sm:$0xff] %v274
    %365 = vst [vmem:[#allocation2 + $0xa0] sm:$0xff] %v339
    %366 = vst [vmem:[#allocation2 + $0xa8] sm:$0xff] %v276
    %367 = vst [vmem:[#allocation2 + $0xb0] sm:$0xff] %v278
    %368 = vst [vmem:[#allocation2 + $0xb8] sm:$0xff] %v342
    %v369 = vld [vmem:[#allocation3] sm:$0xff]
    %v370 = vld [vmem:[#allocation3 + $0x8] sm:$0xf]
    %v371 = vld [vmem:[#allocation3 + $0x24] sm:$0xff]
    %v372 = vld [vmem:[#allocation3 + $0x2c] sm:$0xf]
    %v373 = vld [vmem:[#allocation3 + $0x48] sm:$0xff]
    %v374 = vld [vmem:[#allocation3 + $0x50] sm:$0xf]
    %v375 = vld [vmem:[#allocation3 + $0x6c] sm:$0xff]
    %v376 = vld [vmem:[#allocation3 + $0x74] sm:$0xf]
    %v385 = vunpack.c.l.b16 %v369
    %v386 = vunpack.c.h.b16 %v369
    %v387 = vunpack.c.l.b16 %v370
    %v388 = vunpack.c.l.b16 %v371
    %v389 = vunpack.c.h.b16 %v371
    %v390 = vunpack.c.l.b16 %v372
    %v391 = vunpack.c.l.b16 %v373
    %v392 = vunpack.c.h.b16 %v373
    %v393 = vunpack.c.l.b16 %v374
    %v394 = vunpack.c.l.b16 %v375
    %v395 = vunpack.c.h.b16 %v375
    %v396 = vunpack.c.l.b16 %v376
    %v397 = vpack.c.b16 %v388, %v385
    %v398 = vpack.c.b16 %v389, %v386
    %v399 = vpack.c.b16 %v390, %v387
    %v400 = vpack.c.b16 %v394, %v391
    %v401 = vpack.c.b16 %v395, %v392
    %v402 = vpack.c.b16 %v396, %v393
    %vm409 = vcmask 261120
    %v411 = vsel %vm409, 0, 0
    %413 = vmatprep.subr.bf16.mxu0 %v398
    %414 = vmatpush1.bf16.msra.mxu0 %v397
    %415 = vmatprep.subr.bf16.mxu0 %v401
    %416 = vmatpush1.bf16.msra.mxu0 %v400
    %417 = vmatprep.subr.bf16.mxu0 0
    %418 = vmatpush1.bf16.msra.mxu0 0
    %419 = vmatprep.subr.bf16.mxu0 0
    %420 = vmatpush1.bf16.msra.mxu0 0
    %421 = vmatprep.subr.bf16.mxu0 0
    %422 = vmatpush1.bf16.msra.mxu0 0
    %423 = vmatprep.subr.bf16.mxu0 0
    %424 = vmatpush1.bf16.msra.mxu0 0
    %425 = vmatprep.subr.bf16.mxu0 0
    %426 = vmatpush1.bf16.msra.mxu0 0
    %427 = vmatprep.subr.bf16.mxu0 0
    %428 = vmatpush1.bf16.msra.mxu0 0
    %429 = vmatprep.subr.bf16.mxu0 0
    %430 = vmatpush1.bf16.msra.mxu0 0
    %431 = vmatprep.subr.bf16.mxu0 0
    %432 = vmatpush1.bf16.msra.mxu0 0
    %433 = vmatprep.subr.bf16.mxu0 0
    %434 = vmatpush1.bf16.msra.mxu0 0
    %435 = vmatprep.subr.bf16.mxu0 0
    %436 = vmatpush1.bf16.msra.mxu0 0
    %437 = vmatprep.subr.bf16.mxu0 0
    %438 = vmatpush1.bf16.msra.mxu0 0
    %439 = vmatprep.subr.bf16.mxu0 0
    %440 = vmatpush1.bf16.msra.mxu0 0
    %441 = vmatprep.subr.bf16.mxu0 0
    %442 = vmatpush1.bf16.msra.mxu0 0
    %443 = vmatprep.subr.bf16.mxu0 0
    %444 = vmatpush1.bf16.msra.mxu0 0
    %445 = vmatprep.mubr.bf16.mxu0 0
    %446 = vmatmul.mubr.bf16.gmra.mrb[0].mxu0 %v411
    %v447 = vpop.f32.mrb[0].mxu0
    %v448 = vadd.f32 0.0, %v447
    %v449 = vpop.f32.mrb[0].mxu0
    %v450 = vadd.f32 0.0, %v449
    %v451 = vpop.f32.mrb[0].mxu0
    %v452 = vpop.f32.mrb[0].mxu0
    %453 = vdwg.mxu0
    %454 = vmatprep.subr.bf16.mxu0 0
    %455 = vmatpush1.bf16.msra.mxu0 %v399
    %456 = vmatprep.subr.bf16.mxu0 0
    %457 = vmatpush1.bf16.msra.mxu0 %v402
    %458 = vmatprep.subr.bf16.mxu0 0
    %459 = vmatpush1.bf16.msra.mxu0 0
    %460 = vmatprep.subr.bf16.mxu0 0
    %461 = vmatpush1.bf16.msra.mxu0 0
    %462 = vmatprep.subr.bf16.mxu0 0
    %463 = vmatpush1.bf16.msra.mxu0 0
    %464 = vmatprep.subr.bf16.mxu0 0
    %465 = vmatpush1.bf16.msra.mxu0 0
    %466 = vmatprep.subr.bf16.mxu0 0
    %467 = vmatpush1.bf16.msra.mxu0 0
    %468 = vmatprep.subr.bf16.mxu0 0
    %469 = vmatpush1.bf16.msra.mxu0 0
    %470 = vmatprep.subr.bf16.mxu0 0
    %471 = vmatpush1.bf16.msra.mxu0 0
    %472 = vmatprep.subr.bf16.mxu0 0
    %473 = vmatpush1.bf16.msra.mxu0 0
    %474 = vmatprep.subr.bf16.mxu0 0
    %475 = vmatpush1.bf16.msra.mxu0 0
    %476 = vmatprep.subr.bf16.mxu0 0
    %477 = vmatpush1.bf16.msra.mxu0 0
    %478 = vmatprep.subr.bf16.mxu0 0
    %479 = vmatpush1.bf16.msra.mxu0 0
    %480 = vmatprep.subr.bf16.mxu0 0
    %481 = vmatpush1.bf16.msra.mxu0 0
    %482 = vmatprep.subr.bf16.mxu0 0
    %483 = vmatpush1.bf16.msra.mxu0 0
    %484 = vmatprep.subr.bf16.mxu0 0
    %485 = vmatpush1.bf16.msra.mxu0 0
    %486 = vmatprep.mubr.bf16.mxu0 0
    %487 = vmatmul.mubr.bf16.gmra.mrb[0].mxu0 %v411
    %v488 = vpop.f32.mrb[0].mxu0
    %v489 = vadd.f32 0.0, %v488
    %v490 = vpop.f32.mrb[0].mxu0
    %v491 = vpop.f32.mrb[0].mxu0
    %v492 = vpop.f32.mrb[0].mxu0
    %493 = vdwg.mxu0
    %v494 = vld [vmem:[#allocation3 + $0xc] sm:$0xff]
    %v495 = vld [vmem:[#allocation3 + $0x14] sm:$0xf]
    %v496 = vld [vmem:[#allocation3 + $0x30] sm:$0xff]
    %v497 = vld [vmem:[#allocation3 + $0x38] sm:$0xf]
    %v498 = vld [vmem:[#allocation3 + $0x54] sm:$0xff]
    %v499 = vld [vmem:[#allocation3 + $0x5c] sm:$0xf]
    %v500 = vld [vmem:[#allocation3 + $0x78] sm:$0xff]
    %v501 = vld [vmem:[#allocation3 + $0x80] sm:$0xf]
    %v510 = vunpack.c.l.b16 %v494
    %v511 = vunpack.c.h.b16 %v494
    %v512 = vunpack.c.l.b16 %v495
    %v513 = vunpack.c.l.b16 %v496
    %v514 = vunpack.c.h.b16 %v496
    %v515 = vunpack.c.l.b16 %v497
    %v516 = vunpack.c.l.b16 %v498
    %v517 = vunpack.c.h.b16 %v498
    %v518 = vunpack.c.l.b16 %v499
    %v519 = vunpack.c.l.b16 %v500
    %v520 = vunpack.c.h.b16 %v500
    %v521 = vunpack.c.l.b16 %v501
    %v522 = vpack.c.b16 %v513, %v510
    %v523 = vpack.c.b16 %v514, %v511
    %v524 = vpack.c.b16 %v515, %v512
    %v525 = vpack.c.b16 %v519, %v516
    %v526 = vpack.c.b16 %v520, %v517
    %v527 = vpack.c.b16 %v521, %v518
    %534 = vmatprep.subr.bf16.mxu0 %v523
    %535 = vmatpush1.bf16.msra.mxu0 %v522
    %536 = vmatprep.subr.bf16.mxu0 %v526
    %537 = vmatpush1.bf16.msra.mxu0 %v525
    %538 = vmatprep.subr.bf16.mxu0 0
    %539 = vmatpush1.bf16.msra.mxu0 0
    %540 = vmatprep.subr.bf16.mxu0 0
    %541 = vmatpush1.bf16.msra.mxu0 0
    %542 = vmatprep.subr.bf16.mxu0 0
    %543 = vmatpush1.bf16.msra.mxu0 0
    %544 = vmatprep.subr.bf16.mxu0 0
    %545 = vmatpush1.bf16.msra.mxu0 0
    %546 = vmatprep.subr.bf16.mxu0 0
    %547 = vmatpush1.bf16.msra.mxu0 0
    %548 = vmatprep.subr.bf16.mxu0 0
    %549 = vmatpush1.bf16.msra.mxu0 0
    %550 = vmatprep.subr.bf16.mxu0 0
    %551 = vmatpush1.bf16.msra.mxu0 0
    %552 = vmatprep.subr.bf16.mxu0 0
    %553 = vmatpush1.bf16.msra.mxu0 0
    %554 = vmatprep.subr.bf16.mxu0 0
    %555 = vmatpush1.bf16.msra.mxu0 0
    %556 = vmatprep.subr.bf16.mxu0 0
    %557 = vmatpush1.bf16.msra.mxu0 0
    %558 = vmatprep.subr.bf16.mxu0 0
    %559 = vmatpush1.bf16.msra.mxu0 0
    %560 = vmatprep.subr.bf16.mxu0 0
    %561 = vmatpush1.bf16.msra.mxu0 0
    %562 = vmatprep.subr.bf16.mxu0 0
    %563 = vmatpush1.bf16.msra.mxu0 0
    %564 = vmatprep.subr.bf16.mxu0 0
    %565 = vmatpush1.bf16.msra.mxu0 0
    %566 = vmatprep.mubr.bf16.mxu0 0
    %567 = vmatmul.mubr.bf16.gmra.mrb[0].mxu0 %v411
    %v568 = vpop.f32.mrb[0].mxu0
    %v569 = vadd.f32 0.0, %v568
    %v570 = vpop.f32.mrb[0].mxu0
    %v571 = vadd.f32 0.0, %v570
    %v572 = vpop.f32.mrb[0].mxu0
    %v573 = vpop.f32.mrb[0].mxu0
    %574 = vdwg.mxu0
    %575 = vmatprep.subr.bf16.mxu0 0
    %576 = vmatpush1.bf16.msra.mxu0 %v524
    %577 = vmatprep.subr.bf16.mxu0 0
    %578 = vmatpush1.bf16.msra.mxu0 %v527
    %579 = vmatprep.subr.bf16.mxu0 0
    %580 = vmatpush1.bf16.msra.mxu0 0
    %581 = vmatprep.subr.bf16.mxu0 0
    %582 = vmatpush1.bf16.msra.mxu0 0
    %583 = vmatprep.subr.bf16.mxu0 0
    %584 = vmatpush1.bf16.msra.mxu0 0
    %585 = vmatprep.subr.bf16.mxu0 0
    %586 = vmatpush1.bf16.msra.mxu0 0
    %587 = vmatprep.subr.bf16.mxu0 0
    %588 = vmatpush1.bf16.msra.mxu0 0
    %589 = vmatprep.subr.bf16.mxu0 0
    %590 = vmatpush1.bf16.msra.mxu0 0
    %591 = vmatprep.subr.bf16.mxu0 0
    %592 = vmatpush1.bf16.msra.mxu0 0
    %593 = vmatprep.subr.bf16.mxu0 0
    %594 = vmatpush1.bf16.msra.mxu0 0
    %595 = vmatprep.subr.bf16.mxu0 0
    %596 = vmatpush1.bf16.msra.mxu0 0
    %597 = vmatprep.subr.bf16.mxu0 0
    %598 = vmatpush1.bf16.msra.mxu0 0
    %599 = vmatprep.subr.bf16.mxu0 0
    %600 = vmatpush1.bf16.msra.mxu0 0
    %601 = vmatprep.subr.bf16.mxu0 0
    %602 = vmatpush1.bf16.msra.mxu0 0
    %603 = vmatprep.subr.bf16.mxu0 0
    %604 = vmatpush1.bf16.msra.mxu0 0
    %605 = vmatprep.subr.bf16.mxu0 0
    %606 = vmatpush1.bf16.msra.mxu0 0
    %607 = vmatprep.mubr.bf16.mxu0 0
    %608 = vmatmul.mubr.bf16.gmra.mrb[0].mxu0 %v411
    %v609 = vpop.f32.mrb[0].mxu0
    %v610 = vadd.f32 0.0, %v609
    %v611 = vpop.f32.mrb[0].mxu0
    %v612 = vpop.f32.mrb[0].mxu0
    %v613 = vpop.f32.mrb[0].mxu0
    %614 = vdwg.mxu0
    %v615 = vld [vmem:[#allocation3 + $0x18] sm:$0xff]
    %v616 = vld [vmem:[#allocation3 + $0x20] sm:$0xf]
    %v617 = vld [vmem:[#allocation3 + $0x3c] sm:$0xff]
    %v618 = vld [vmem:[#allocation3 + $0x44] sm:$0xf]
    %v619 = vld [vmem:[#allocation3 + $0x60] sm:$0xff]
    %v620 = vld [vmem:[#allocation3 + $0x68] sm:$0xf]
    %v621 = vld [vmem:[#allocation3 + $0x84] sm:$0xff]
    %v622 = vld [vmem:[#allocation3 + $0x8c] sm:$0xf]
    %v631 = vunpack.c.l.b16 %v615
    %v632 = vunpack.c.h.b16 %v615
    %v633 = vunpack.c.l.b16 %v616
    %v634 = vunpack.c.l.b16 %v617
    %v635 = vunpack.c.h.b16 %v617
    %v636 = vunpack.c.l.b16 %v618
    %v637 = vunpack.c.l.b16 %v619
    %v638 = vunpack.c.h.b16 %v619
    %v639 = vunpack.c.l.b16 %v620
    %v640 = vunpack.c.l.b16 %v621
    %v641 = vunpack.c.h.b16 %v621
    %v642 = vunpack.c.l.b16 %v622
    %v643 = vpack.c.b16 %v634, %v631
    %v644 = vpack.c.b16 %v635, %v632
    %v645 = vpack.c.b16 %v636, %v633
    %v646 = vpack.c.b16 %v640, %v637
    %v647 = vpack.c.b16 %v641, %v638
    %v648 = vpack.c.b16 %v642, %v639
    %655 = vmatprep.subr.bf16.mxu0 %v644
    %656 = vmatpush1.bf16.msra.mxu0 %v643
    %657 = vmatprep.subr.bf16.mxu0 %v647
    %658 = vmatpush1.bf16.msra.mxu0 %v646
    %659 = vmatprep.subr.bf16.mxu0 0
    %660 = vmatpush1.bf16.msra.mxu0 0
    %661 = vmatprep.subr.bf16.mxu0 0
    %662 = vmatpush1.bf16.msra.mxu0 0
    %663 = vmatprep.subr.bf16.mxu0 0
    %664 = vmatpush1.bf16.msra.mxu0 0
    %665 = vmatprep.subr.bf16.mxu0 0
    %666 = vmatpush1.bf16.msra.mxu0 0
    %667 = vmatprep.subr.bf16.mxu0 0
    %668 = vmatpush1.bf16.msra.mxu0 0
    %669 = vmatprep.subr.bf16.mxu0 0
    %670 = vmatpush1.bf16.msra.mxu0 0
    %671 = vmatprep.subr.bf16.mxu0 0
    %672 = vmatpush1.bf16.msra.mxu0 0
    %673 = vmatprep.subr.bf16.mxu0 0
    %674 = vmatpush1.bf16.msra.mxu0 0
    %675 = vmatprep.subr.bf16.mxu0 0
    %676 = vmatpush1.bf16.msra.mxu0 0
    %677 = vmatprep.subr.bf16.mxu0 0
    %678 = vmatpush1.bf16.msra.mxu0 0
    %679 = vmatprep.subr.bf16.mxu0 0
    %680 = vmatpush1.bf16.msra.mxu0 0
    %681 = vmatprep.subr.bf16.mxu0 0
    %682 = vmatpush1.bf16.msra.mxu0 0
    %683 = vmatprep.subr.bf16.mxu0 0
    %684 = vmatpush1.bf16.msra.mxu0 0
    %685 = vmatprep.subr.bf16.mxu0 0
    %686 = vmatpush1.bf16.msra.mxu0 0
    %687 = vmatprep.mubr.bf16.mxu0 0
    %688 = vmatmul.mubr.bf16.gmra.mrb[0].mxu0 %v411
    %v689 = vpop.f32.mrb[0].mxu0
    %v690 = vadd.f32 0.0, %v689
    %v691 = vpop.f32.mrb[0].mxu0
    %v692 = vadd.f32 0.0, %v691
    %v693 = vpop.f32.mrb[0].mxu0
    %v694 = vpop.f32.mrb[0].mxu0
    %695 = vdwg.mxu0
    %696 = vmatprep.subr.bf16.mxu0 0
    %697 = vmatpush1.bf16.msra.mxu0 %v645
    %698 = vmatprep.subr.bf16.mxu0 0
    %699 = vmatpush1.bf16.msra.mxu0 %v648
    %700 = vmatprep.subr.bf16.mxu0 0
    %701 = vmatpush1.bf16.msra.mxu0 0
    %702 = vmatprep.subr.bf16.mxu0 0
    %703 = vmatpush1.bf16.msra.mxu0 0
    %704 = vmatprep.subr.bf16.mxu0 0
    %705 = vmatpush1.bf16.msra.mxu0 0
    %706 = vmatprep.subr.bf16.mxu0 0
    %707 = vmatpush1.bf16.msra.mxu0 0
    %708 = vmatprep.subr.bf16.mxu0 0
    %709 = vmatpush1.bf16.msra.mxu0 0
    %710 = vmatprep.subr.bf16.mxu0 0
    %711 = vmatpush1.bf16.msra.mxu0 0
    %712 = vmatprep.subr.bf16.mxu0 0
    %713 = vmatpush1.bf16.msra.mxu0 0
    %714 = vmatprep.subr.bf16.mxu0 0
    %715 = vmatpush1.bf16.msra.mxu0 0
    %716 = vmatprep.subr.bf16.mxu0 0
    %717 = vmatpush1.bf16.msra.mxu0 0
    %718 = vmatprep.subr.bf16.mxu0 0
    %719 = vmatpush1.bf16.msra.mxu0 0
    %720 = vmatprep.subr.bf16.mxu0 0
    %721 = vmatpush1.bf16.msra.mxu0 0
    %722 = vmatprep.subr.bf16.mxu0 0
    %723 = vmatpush1.bf16.msra.mxu0 0
    %724 = vmatprep.subr.bf16.mxu0 0
    %725 = vmatpush1.bf16.msra.mxu0 0
    %726 = vmatprep.subr.bf16.mxu0 0
    %727 = vmatpush1.bf16.msra.mxu0 0
    %728 = vmatprep.mubr.bf16.mxu0 0
    %729 = vmatmul.mubr.bf16.gmra.mrb[0].mxu0 %v411
    %v730 = vpop.f32.mrb[0].mxu0
    %v731 = vadd.f32 0.0, %v730
    %v732 = vpop.f32.mrb[0].mxu0
    %v733 = vpop.f32.mrb[0].mxu0
    %v734 = vpop.f32.mrb[0].mxu0
    %735 = vdwg.mxu0
    %v736 = vld [vmem:[#allocation2] sm:$0xff]
    %v737 = vld [vmem:[#allocation2 + $0x8] sm:$0xff]
    %v738 = vld [vmem:[#allocation2 + $0x10] sm:$0xff]
    %v739 = vld [vmem:[#allocation6 + $0x6] ss:$0 sm:$0xff]
    %v740 = vadd.f32 %v736, %v448
    %v741 = vadd.f32 %v737, %v450
    %v742 = vmul.f32 %v740, 0.5
    %v743 = vmul.f32 %v741, 0.5
    %v744 = vtanh.pop %v742
    %v745 = vtanh.pop %v743
    %v746 = vadd.f32 %v744, 1.0
    %v747 = vadd.f32 %v745, 1.0
    %v748 = vmul.f32 %v746, 0.5
    %v749 = vmul.f32 %v747, 0.5
    %v750 = vadd.f32 %v489, %v739
    %v751 = vmul.f32 %v748, %v750
    %v752 = vadd.f32 %v738, %v751
    %v753 = vtanh.pop %v752
    %v754 = vsub.f32 1.0, %v749
    %v755 = vmul.f32 %v754, %v753
    %v756 = vmul.f32 %v749, 0.0
    %v757 = vadd.f32 %v755, %v756
    %v758 = vpack.c.bf16 %v757, %v757
    %v759 = vld [vmem:[#allocation3 + $0x12c] sm:$0xff]
    %v760 = vld [vmem:[#allocation3 + $0x134] sm:$0xf]
    %v761 = vld [vmem:[#allocation3 + $0x150] sm:$0xff]
    %v762 = vld [vmem:[#allocation3 + $0x158] sm:$0xf]
    %v763 = vld [vmem:[#allocation3 + $0x174] sm:$0xff]
    %v764 = vld [vmem:[#allocation3 + $0x17c] sm:$0xf]
    %v765 = vld [vmem:[#allocation3 + $0x198] sm:$0xff]
    %v766 = vld [vmem:[#allocation3 + $0x1a0] sm:$0xf]
    %s767 = scalar_lea.vmem [#allocation6], 1
    %v768 = vld [vmem:[%s767] ss:$8 sm:$0x7]
    %v770 = vlaneseq
    %v771 = vshrl.u32 %v770, 7
    %v772 = vsub.s32 0, %v771
    %v773 = vrot.slane %v768, %v772
    %v774 = vlaneseq
    %v775 = vshrl.u32 %v774, 7
    %v776 = vsub.s32 1, %v775
    %v777 = vrot.slane %v768, %v776
    %v778 = vlaneseq
    %v779 = vshrl.u32 %v778, 7
    %v780 = vsub.s32 2, %v779
    %v781 = vrot.slane %v768, %v780
    %v793 = vunpack.c.l.b16 %v759
    %v794 = vunpack.c.h.b16 %v759
    %v795 = vunpack.c.l.b16 %v760
    %v796 = vunpack.c.l.b16 %v761
    %v797 = vunpack.c.h.b16 %v761
    %v798 = vunpack.c.l.b16 %v762
    %v799 = vunpack.c.l.b16 %v763
    %v800 = vunpack.c.h.b16 %v763
    %v801 = vunpack.c.l.b16 %v764
    %v802 = vunpack.c.l.b16 %v765
    %v803 = vunpack.c.h.b16 %v765
    %v804 = vunpack.c.l.b16 %v766
    %v805 = vpack.c.b16 %v796, %v793
    %v806 = vpack.c.b16 %v797, %v794
    %v807 = vpack.c.b16 %v798, %v795
    %v808 = vpack.c.b16 %v802, %v799
    %v809 = vpack.c.b16 %v803, %v800
    %v810 = vpack.c.b16 %v804, %v801
    %v818 = vsel %vm409, %v758, 0
    %820 = vmatprep.subr.bf16.mxu0 %v806
    %821 = vmatpush1.bf16.msra.mxu0 %v805
    %822 = vmatprep.subr.bf16.mxu0 %v809
    %823 = vmatpush1.bf16.msra.mxu0 %v808
    %824 = vmatprep.subr.bf16.mxu0 0
    %825 = vmatpush1.bf16.msra.mxu0 0
    %826 = vmatprep.subr.bf16.mxu0 0
    %827 = vmatpush1.bf16.msra.mxu0 0
    %828 = vmatprep.subr.bf16.mxu0 0
    %829 = vmatpush1.bf16.msra.mxu0 0
    %830 = vmatprep.subr.bf16.mxu0 0
    %831 = vmatpush1.bf16.msra.mxu0 0
    %832 = vmatprep.subr.bf16.mxu0 0
    %833 = vmatpush1.bf16.msra.mxu0 0
    %834 = vmatprep.subr.bf16.mxu0 0
    %835 = vmatpush1.bf16.msra.mxu0 0
    %836 = vmatprep.subr.bf16.mxu0 0
    %837 = vmatpush1.bf16.msra.mxu0 0
    %838 = vmatprep.subr.bf16.mxu0 0
    %839 = vmatpush1.bf16.msra.mxu0 0
    %840 = vmatprep.subr.bf16.mxu0 0
    %841 = vmatpush1.bf16.msra.mxu0 0
    %842 = vmatprep.subr.bf16.mxu0 0
    %843 = vmatpush1.bf16.msra.mxu0 0
    %844 = vmatprep.subr.bf16.mxu0 0
    %845 = vmatpush1.bf16.msra.mxu0 0
    %846 = vmatprep.subr.bf16.mxu0 0
    %847 = vmatpush1.bf16.msra.mxu0 0
    %848 = vmatprep.subr.bf16.mxu0 0
    %849 = vmatpush1.bf16.msra.mxu0 0
    %850 = vmatprep.subr.bf16.mxu0 0
    %851 = vmatpush1.bf16.msra.mxu0 0
    %852 = vmatprep.mubr.bf16.mxu0 0
    %853 = vmatmul.mubr.bf16.gmra.mrb[0].mxu0 %v818
    %v854 = vpop.f32.mrb[0].mxu0
    %v855 = vadd.f32 %v773, %v854
    %v856 = vpop.f32.mrb[0].mxu0
    %v857 = vadd.f32 %v777, %v856
    %v858 = vpop.f32.mrb[0].mxu0
    %v859 = vpop.f32.mrb[0].mxu0
    %860 = vdwg.mxu0
    %861 = vmatprep.subr.bf16.mxu0 0
    %862 = vmatpush1.bf16.msra.mxu0 %v807
    %863 = vmatprep.subr.bf16.mxu0 0
    %864 = vmatpush1.bf16.msra.mxu0 %v810
    %865 = vmatprep.subr.bf16.mxu0 0
    %866 = vmatpush1.bf16.msra.mxu0 0
    %867 = vmatprep.subr.bf16.mxu0 0
    %868 = vmatpush1.bf16.msra.mxu0 0
    %869 = vmatprep.subr.bf16.mxu0 0
    %870 = vmatpush1.bf16.msra.mxu0 0
    %871 = vmatprep.subr.bf16.mxu0 0
    %872 = vmatpush1.bf16.msra.mxu0 0
    %873 = vmatprep.subr.bf16.mxu0 0
    %874 = vmatpush1.bf16.msra.mxu0 0
    %875 = vmatprep.subr.bf16.mxu0 0
    %876 = vmatpush1.bf16.msra.mxu0 0
    %877 = vmatprep.subr.bf16.mxu0 0
    %878 = vmatpush1.bf16.msra.mxu0 0
    %879 = vmatprep.subr.bf16.mxu0 0
    %880 = vmatpush1.bf16.msra.mxu0 0
    %881 = vmatprep.subr.bf16.mxu0 0
    %882 = vmatpush1.bf16.msra.mxu0 0
    %883 = vmatprep.subr.bf16.mxu0 0
    %884 = vmatpush1.bf16.msra.mxu0 0
    %885 = vmatprep.subr.bf16.mxu0 0
    %886 = vmatpush1.bf16.msra.mxu0 0
    %887 = vmatprep.subr.bf16.mxu0 0
    %888 = vmatpush1.bf16.msra.mxu0 0
    %889 = vmatprep.subr.bf16.mxu0 0
    %890 = vmatpush1.bf16.msra.mxu0 0
    %891 = vmatprep.subr.bf16.mxu0 0
    %892 = vmatpush1.bf16.msra.mxu0 0
    %893 = vmatprep.mubr.bf16.mxu0 0
    %894 = vmatmul.mubr.bf16.gmra.mrb[0].mxu0 %v818
    %v895 = vpop.f32.mrb[0].mxu0
    %v896 = vadd.f32 %v781, %v895
    %v897 = vpop.f32.mrb[0].mxu0
    %v898 = vpop.f32.mrb[0].mxu0
    %v899 = vpop.f32.mrb[0].mxu0
    %900 = vdwg.mxu0
    %v901 = vld [vmem:[#allocation6 + $0xe] ss:$0 sm:$0xff]
    %v902 = vadd.f32 %v855, %v569
    %v903 = vadd.f32 %v857, %v571
    %v904 = vmul.f32 %v902, 0.5
    %v905 = vmul.f32 %v903, 0.5
    %v906 = vtanh.pop %v904
    %v907 = vtanh.pop %v905
    %v908 = vadd.f32 %v906, 1.0
    %v909 = vadd.f32 %v907, 1.0
    %v910 = vmul.f32 %v908, 0.5
    %v911 = vmul.f32 %v909, 0.5
    %v912 = vadd.f32 %v610, %v901
    %v913 = vmul.f32 %v910, %v912
    %v914 = vadd.f32 %v896, %v913
    %v915 = vtanh.pop %v914
    %v916 = vsub.f32 1.0, %v911
    %v917 = vmul.f32 %v916, %v915
    %v918 = vmul.f32 %v911, 0.0
    %v919 = vadd.f32 %v917, %v918
    %v920 = vpack.c.bf16 %v919, %v919
    %v921 = vld [vmem:[#allocation3 + $0x138] sm:$0xff]
    %v922 = vld [vmem:[#allocation3 + $0x140] sm:$0xf]
    %v923 = vld [vmem:[#allocation3 + $0x15c] sm:$0xff]
    %v924 = vld [vmem:[#allocation3 + $0x164] sm:$0xf]
    %v925 = vld [vmem:[#allocation3 + $0x180] sm:$0xff]
    %v926 = vld [vmem:[#allocation3 + $0x188] sm:$0xf]
    %v927 = vld [vmem:[#allocation3 + $0x1a4] sm:$0xff]
    %v928 = vld [vmem:[#allocation3 + $0x1ac] sm:$0xf]
    %s929 = scalar_lea.vmem [#allocation6], 2
    %v930 = vld [vmem:[%s929] ss:$8 sm:$0x7]
    %v932 = vlaneseq
    %v933 = vshrl.u32 %v932, 7
    %v934 = vsub.s32 0, %v933
    %v935 = vrot.slane %v930, %v934
    %v936 = vlaneseq
    %v937 = vshrl.u32 %v936, 7
    %v938 = vsub.s32 1, %v937
    %v939 = vrot.slane %v930, %v938
    %v940 = vlaneseq
    %v941 = vshrl.u32 %v940, 7
    %v942 = vsub.s32 2, %v941
    %v943 = vrot.slane %v930, %v942
    %v955 = vunpack.c.l.b16 %v921
    %v956 = vunpack.c.h.b16 %v921
    %v957 = vunpack.c.l.b16 %v922
    %v958 = vunpack.c.l.b16 %v923
    %v959 = vunpack.c.h.b16 %v923
    %v960 = vunpack.c.l.b16 %v924
    %v961 = vunpack.c.l.b16 %v925
    %v962 = vunpack.c.h.b16 %v925
    %v963 = vunpack.c.l.b16 %v926
    %v964 = vunpack.c.l.b16 %v927
    %v965 = vunpack.c.h.b16 %v927
    %v966 = vunpack.c.l.b16 %v928
    %v967 = vpack.c.b16 %v958, %v955
    %v968 = vpack.c.b16 %v959, %v956
    %v969 = vpack.c.b16 %v960, %v957
    %v970 = vpack.c.b16 %v964, %v961
    %v971 = vpack.c.b16 %v965, %v962
    %v972 = vpack.c.b16 %v966, %v963
    %v980 = vsel %vm409, %v920, 0
    %982 = vmatprep.subr.bf16.mxu0 %v968
    %983 = vmatpush1.bf16.msra.mxu0 %v967
    %984 = vmatprep.subr.bf16.mxu0 %v971
    %985 = vmatpush1.bf16.msra.mxu0 %v970
    %986 = vmatprep.subr.bf16.mxu0 0
    %987 = vmatpush1.bf16.msra.mxu0 0
    %988 = vmatprep.subr.bf16.mxu0 0
    %989 = vmatpush1.bf16.msra.mxu0 0
    %990 = vmatprep.subr.bf16.mxu0 0
    %991 = vmatpush1.bf16.msra.mxu0 0
    %992 = vmatprep.subr.bf16.mxu0 0
    %993 = vmatpush1.bf16.msra.mxu0 0
    %994 = vmatprep.subr.bf16.mxu0 0
    %995 = vmatpush1.bf16.msra.mxu0 0
    %996 = vmatprep.subr.bf16.mxu0 0
    %997 = vmatpush1.bf16.msra.mxu0 0
    %998 = vmatprep.subr.bf16.mxu0 0
    %999 = vmatpush1.bf16.msra.mxu0 0
    %1000 = vmatprep.subr.bf16.mxu0 0
    %1001 = vmatpush1.bf16.msra.mxu0 0
    %1002 = vmatprep.subr.bf16.mxu0 0
    %1003 = vmatpush1.bf16.msra.mxu0 0
    %1004 = vmatprep.subr.bf16.mxu0 0
    %1005 = vmatpush1.bf16.msra.mxu0 0
    %1006 = vmatprep.subr.bf16.mxu0 0
    %1007 = vmatpush1.bf16.msra.mxu0 0
    %1008 = vmatprep.subr.bf16.mxu0 0
    %1009 = vmatpush1.bf16.msra.mxu0 0
    %1010 = vmatprep.subr.bf16.mxu0 0
    %1011 = vmatpush1.bf16.msra.mxu0 0
    %1012 = vmatprep.subr.bf16.mxu0 0
    %1013 = vmatpush1.bf16.msra.mxu0 0
    %1014 = vmatprep.mubr.bf16.mxu0 0
    %1015 = vmatmul.mubr.bf16.gmra.mrb[0].mxu0 %v980
    %v1016 = vpop.f32.mrb[0].mxu0
    %v1017 = vadd.f32 %v935, %v1016
    %v1018 = vpop.f32.mrb[0].mxu0
    %v1019 = vadd.f32 %v939, %v1018
    %v1020 = vpop.f32.mrb[0].mxu0
    %v1021 = vpop.f32.mrb[0].mxu0
    %1022 = vdwg.mxu0
    %1023 = vmatprep.subr.bf16.mxu0 0
    %1024 = vmatpush1.bf16.msra.mxu0 %v969
    %1025 = vmatprep.subr.bf16.mxu0 0
    %1026 = vmatpush1.bf16.msra.mxu0 %v972
    %1027 = vmatprep.subr.bf16.mxu0 0
    %1028 = vmatpush1.bf16.msra.mxu0 0
    %1029 = vmatprep.subr.bf16.mxu0 0
    %1030 = vmatpush1.bf16.msra.mxu0 0
    %1031 = vmatprep.subr.bf16.mxu0 0
    %1032 = vmatpush1.bf16.msra.mxu0 0
    %1033 = vmatprep.subr.bf16.mxu0 0
    %1034 = vmatpush1.bf16.msra.mxu0 0
    %1035 = vmatprep.subr.bf16.mxu0 0
    %1036 = vmatpush1.bf16.msra.mxu0 0
    %1037 = vmatprep.subr.bf16.mxu0 0
    %1038 = vmatpush1.bf16.msra.mxu0 0
    %1039 = vmatprep.subr.bf16.mxu0 0
    %1040 = vmatpush1.bf16.msra.mxu0 0
    %1041 = vmatprep.subr.bf16.mxu0 0
    %1042 = vmatpush1.bf16.msra.mxu0 0
    %1043 = vmatprep.subr.bf16.mxu0 0
    %1044 = vmatpush1.bf16.msra.mxu0 0
    %1045 = vmatprep.subr.bf16.mxu0 0
    %1046 = vmatpush1.bf16.msra.mxu0 0
    %1047 = vmatprep.subr.bf16.mxu0 0
    %1048 = vmatpush1.bf16.msra.mxu0 0
    %1049 = vmatprep.subr.bf16.mxu0 0
    %1050 = vmatpush1.bf16.msra.mxu0 0
    %1051 = vmatprep.subr.bf16.mxu0 0
    %1052 = vmatpush1.bf16.msra.mxu0 0
    %1053 = vmatprep.subr.bf16.mxu0 0
    %1054 = vmatpush1.bf16.msra.mxu0 0
    %1055 = vmatprep.mubr.bf16.mxu0 0
    %1056 = vmatmul.mubr.bf16.gmra.mrb[0].mxu0 %v980
    %v1057 = vpop.f32.mrb[0].mxu0
    %v1058 = vadd.f32 %v943, %v1057
    %v1059 = vpop.f32.mrb[0].mxu0
    %v1060 = vpop.f32.mrb[0].mxu0
    %v1061 = vpop.f32.mrb[0].mxu0
    %1062 = vdwg.mxu0
    %v1063 = vld [vmem:[#allocation6 + $0x16] ss:$0 sm:$0xff]
    %v1064 = vadd.f32 %v1017, %v690
    %v1065 = vadd.f32 %v1019, %v692
    %v1066 = vmul.f32 %v1064, 0.5
    %v1067 = vmul.f32 %v1065, 0.5
    %v1068 = vtanh.pop %v1066
    %v1069 = vtanh.pop %v1067
    %v1070 = vadd.f32 %v1068, 1.0
    %v1071 = vadd.f32 %v1069, 1.0
    %v1072 = vmul.f32 %v1070, 0.5
    %v1073 = vmul.f32 %v1071, 0.5
    %v1074 = vadd.f32 %v731, %v1063
    %v1075 = vmul.f32 %v1072, %v1074
    %v1076 = vadd.f32 %v1058, %v1075
    %v1077 = vtanh.pop %v1076
    %v1078 = vsub.f32 1.0, %v1073
    %v1079 = vmul.f32 %v1078, %v1077
    %v1080 = vmul.f32 %v1073, 0.0
    %v1081 = vadd.f32 %v1079, %v1080
    %1082 = vmatprep.subr.bf16.mxu0 %v398
    %1083 = vmatpush1.bf16.msra.mxu0 %v397
    %1084 = vmatprep.subr.bf16.mxu0 %v401
    %1085 = vmatpush1.bf16.msra.mxu0 %v400
    %1086 = vmatprep.subr.bf16.mxu0 0
    %1087 = vmatpush1.bf16.msra.mxu0 0
    %1088 = vmatprep.subr.bf16.mxu0 0
    %1089 = vmatpush1.bf16.msra.mxu0 0
    %1090 = vmatprep.subr.bf16.mxu0 0
    %1091 = vmatpush1.bf16.msra.mxu0 0
    %1092 = vmatprep.subr.bf16.mxu0 0
    %1093 = vmatpush1.bf16.msra.mxu0 0
    %1094 = vmatprep.subr.bf16.mxu0 0
    %1095 = vmatpush1.bf16.msra.mxu0 0
    %1096 = vmatprep.subr.bf16.mxu0 0
    %1097 = vmatpush1.bf16.msra.mxu0 0
    %1098 = vmatprep.subr.bf16.mxu0 0
    %1099 = vmatpush1.bf16.msra.mxu0 0
    %1100 = vmatprep.subr.bf16.mxu0 0
    %1101 = vmatpush1.bf16.msra.mxu0 0
    %1102 = vmatprep.subr.bf16.mxu0 0
    %1103 = vmatpush1.bf16.msra.mxu0 0
    %1104 = vmatprep.subr.bf16.mxu0 0
    %1105 = vmatpush1.bf16.msra.mxu0 0
    %1106 = vmatprep.subr.bf16.mxu0 0
    %1107 = vmatpush1.bf16.msra.mxu0 0
    %1108 = vmatprep.subr.bf16.mxu0 0
    %1109 = vmatpush1.bf16.msra.mxu0 0
    %1110 = vmatprep.subr.bf16.mxu0 0
    %1111 = vmatpush1.bf16.msra.mxu0 0
    %1112 = vmatprep.subr.bf16.mxu0 0
    %1113 = vmatpush1.bf16.msra.mxu0 0
    %1114 = vmatprep.mubr.bf16.mxu0 0
    %1115 = vmatmul.mubr.bf16.gmra.mrb[0].mxu0 %v818
    %v1116 = vpop.f32.mrb[0].mxu0
    %v1117 = vadd.f32 0.0, %v1116
    %v1118 = vpop.f32.mrb[0].mxu0
    %v1119 = vadd.f32 0.0, %v1118
    %v1120 = vpop.f32.mrb[0].mxu0
    %v1121 = vpop.f32.mrb[0].mxu0
    %1122 = vdwg.mxu0
    %1123 = vmatprep.subr.bf16.mxu0 0
    %1124 = vmatpush1.bf16.msra.mxu0 %v399
    %1125 = vmatprep.subr.bf16.mxu0 0
    %1126 = vmatpush1.bf16.msra.mxu0 %v402
    %1127 = vmatprep.subr.bf16.mxu0 0
    %1128 = vmatpush1.bf16.msra.mxu0 0
    %1129 = vmatprep.subr.bf16.mxu0 0
    %1130 = vmatpush1.bf16.msra.mxu0 0
    %1131 = vmatprep.subr.bf16.mxu0 0
    %1132 = vmatpush1.bf16.msra.mxu0 0
    %1133 = vmatprep.subr.bf16.mxu0 0
    %1134 = vmatpush1.bf16.msra.mxu0 0
    %1135 = vmatprep.subr.bf16.mxu0 0
    %1136 = vmatpush1.bf16.msra.mxu0 0
    %1137 = vmatprep.subr.bf16.mxu0 0
    %1138 = vmatpush1.bf16.msra.mxu0 0
    %1139 = vmatprep.subr.bf16.mxu0 0
    %1140 = vmatpush1.bf16.msra.mxu0 0
    %1141 = vmatprep.subr.bf16.mxu0 0
    %1142 = vmatpush1.bf16.msra.mxu0 0
    %1143 = vmatprep.subr.bf16.mxu0 0
    %1144 = vmatpush1.bf16.msra.mxu0 0
    %1145 = vmatprep.subr.bf16.mxu0 0
    %1146 = vmatpush1.bf16.msra.mxu0 0
    %1147 = vmatprep.subr.bf16.mxu0 0
    %1148 = vmatpush1.bf16.msra.mxu0 0
    %1149 = vmatprep.subr.bf16.mxu0 0
    %1150 = vmatpush1.bf16.msra.mxu0 0
    %1151 = vmatprep.subr.bf16.mxu0 0
    %1152 = vmatpush1.bf16.msra.mxu0 0
    %1153 = vmatprep.subr.bf16.mxu0 0
    %1154 = vmatpush1.bf16.msra.mxu0 0
    %1155 = vmatprep.mubr.bf16.mxu0 0
    %1156 = vmatmul.mubr.bf16.gmra.mrb[0].mxu0 %v818
    %v1157 = vpop.f32.mrb[0].mxu0
    %v1158 = vadd.f32 0.0, %v1157
    %v1159 = vpop.f32.mrb[0].mxu0
    %v1160 = vpop.f32.mrb[0].mxu0
    %v1161 = vpop.f32.mrb[0].mxu0
    %1162 = vdwg.mxu0
    %1163 = vmatprep.subr.bf16.mxu0 %v523
    %1164 = vmatpush1.bf16.msra.mxu0 %v522
    %1165 = vmatprep.subr.bf16.mxu0 %v526
    %1166 = vmatpush1.bf16.msra.mxu0 %v525
    %1167 = vmatprep.subr.bf16.mxu0 0
    %1168 = vmatpush1.bf16.msra.mxu0 0
    %1169 = vmatprep.subr.bf16.mxu0 0
    %1170 = vmatpush1.bf16.msra.mxu0 0
    %1171 = vmatprep.subr.bf16.mxu0 0
    %1172 = vmatpush1.bf16.msra.mxu0 0
    %1173 = vmatprep.subr.bf16.mxu0 0
    %1174 = vmatpush1.bf16.msra.mxu0 0
    %1175 = vmatprep.subr.bf16.mxu0 0
    %1176 = vmatpush1.bf16.msra.mxu0 0
    %1177 = vmatprep.subr.bf16.mxu0 0
    %1178 = vmatpush1.bf16.msra.mxu0 0
    %1179 = vmatprep.subr.bf16.mxu0 0
    %1180 = vmatpush1.bf16.msra.mxu0 0
    %1181 = vmatprep.subr.bf16.mxu0 0
    %1182 = vmatpush1.bf16.msra.mxu0 0
    %1183 = vmatprep.subr.bf16.mxu0 0
    %1184 = vmatpush1.bf16.msra.mxu0 0
    %1185 = vmatprep.subr.bf16.mxu0 0
    %1186 = vmatpush1.bf16.msra.mxu0 0
    %1187 = vmatprep.subr.bf16.mxu0 0
    %1188 = vmatpush1.bf16.msra.mxu0 0
    %1189 = vmatprep.subr.bf16.mxu0 0
    %1190 = vmatpush1.bf16.msra.mxu0 0
    %1191 = vmatprep.subr.bf16.mxu0 0
    %1192 = vmatpush1.bf16.msra.mxu0 0
    %1193 = vmatprep.subr.bf16.mxu0 0
    %1194 = vmatpush1.bf16.msra.mxu0 0
    %1195 = vmatprep.mubr.bf16.mxu0 0
    %1196 = vmatmul.mubr.bf16.gmra.mrb[0].mxu0 %v980
    %v1197 = vpop.f32.mrb[0].mxu0
    %v1198 = vadd.f32 0.0, %v1197
    %v1199 = vpop.f32.mrb[0].mxu0
    %v1200 = vadd.f32 0.0, %v1199
    %v1201 = vpop.f32.mrb[0].mxu0
    %v1202 = vpop.f32.mrb[0].mxu0
    %1203 = vdwg.mxu0
    %1204 = vmatprep.subr.bf16.mxu0 0
    %1205 = vmatpush1.bf16.msra.mxu0 %v524
    %1206 = vmatprep.subr.bf16.mxu0 0
    %1207 = vmatpush1.bf16.msra.mxu0 %v527
    %1208 = vmatprep.subr.bf16.mxu0 0
    %1209 = vmatpush1.bf16.msra.mxu0 0
    %1210 = vmatprep.subr.bf16.mxu0 0
    %1211 = vmatpush1.bf16.msra.mxu0 0
    %1212 = vmatprep.subr.bf16.mxu0 0
    %1213 = vmatpush1.bf16.msra.mxu0 0
    %1214 = vmatprep.subr.bf16.mxu0 0
    %1215 = vmatpush1.bf16.msra.mxu0 0
    %1216 = vmatprep.subr.bf16.mxu0 0
    %1217 = vmatpush1.bf16.msra.mxu0 0
    %1218 = vmatprep.subr.bf16.mxu0 0
    %1219 = vmatpush1.bf16.msra.mxu0 0
    %1220 = vmatprep.subr.bf16.mxu0 0
    %1221 = vmatpush1.bf16.msra.mxu0 0
    %1222 = vmatprep.subr.bf16.mxu0 0
    %1223 = vmatpush1.bf16.msra.mxu0 0
    %1224 = vmatprep.subr.bf16.mxu0 0
    %1225 = vmatpush1.bf16.msra.mxu0 0
    %1226 = vmatprep.subr.bf16.mxu0 0
    %1227 = vmatpush1.bf16.msra.mxu0 0
    %1228 = vmatprep.subr.bf16.mxu0 0
    %1229 = vmatpush1.bf16.msra.mxu0 0
    %1230 = vmatprep.subr.bf16.mxu0 0
    %1231 = vmatpush1.bf16.msra.mxu0 0
    %1232 = vmatprep.subr.bf16.mxu0 0
    %1233 = vmatpush1.bf16.msra.mxu0 0
    %1234 = vmatprep.subr.bf16.mxu0 0
    %1235 = vmatpush1.bf16.msra.mxu0 0
    %1236 = vmatprep.mubr.bf16.mxu0 0
    %1237 = vmatmul.mubr.bf16.gmra.mrb[0].mxu0 %v980
    %v1238 = vpop.f32.mrb[0].mxu0
    %v1239 = vadd.f32 0.0, %v1238
    %v1240 = vpop.f32.mrb[0].mxu0
    %v1241 = vpop.f32.mrb[0].mxu0
    %v1242 = vpop.f32.mrb[0].mxu0
    %1243 = vdwg.mxu0
    %v1244 = vpack.c.bf16 %v1081, %v1081
    %v1246 = vsel %vm409, %v1244, 0
    %1248 = vmatprep.subr.bf16.mxu0 %v644
    %1249 = vmatpush1.bf16.msra.mxu0 %v643
    %1250 = vmatprep.subr.bf16.mxu0 %v647
    %1251 = vmatpush1.bf16.msra.mxu0 %v646
    %1252 = vmatprep.subr.bf16.mxu0 0
    %1253 = vmatpush1.bf16.msra.mxu0 0
    %1254 = vmatprep.subr.bf16.mxu0 0
    %1255 = vmatpush1.bf16.msra.mxu0 0
    %1256 = vmatprep.subr.bf16.mxu0 0
    %1257 = vmatpush1.bf16.msra.mxu0 0
    %1258 = vmatprep.subr.bf16.mxu0 0
    %1259 = vmatpush1.bf16.msra.mxu0 0
    %1260 = vmatprep.subr.bf16.mxu0 0
    %1261 = vmatpush1.bf16.msra.mxu0 0
    %1262 = vmatprep.subr.bf16.mxu0 0
    %1263 = vmatpush1.bf16.msra.mxu0 0
    %1264 = vmatprep.subr.bf16.mxu0 0
    %1265 = vmatpush1.bf16.msra.mxu0 0
    %1266 = vmatprep.subr.bf16.mxu0 0
    %1267 = vmatpush1.bf16.msra.mxu0 0
    %1268 = vmatprep.subr.bf16.mxu0 0
    %1269 = vmatpush1.bf16.msra.mxu0 0
    %1270 = vmatprep.subr.bf16.mxu0 0
    %1271 = vmatpush1.bf16.msra.mxu0 0
    %1272 = vmatprep.subr.bf16.mxu0 0
    %1273 = vmatpush1.bf16.msra.mxu0 0
    %1274 = vmatprep.subr.bf16.mxu0 0
    %1275 = vmatpush1.bf16.msra.mxu0 0
    %1276 = vmatprep.subr.bf16.mxu0 0
    %1277 = vmatpush1.bf16.msra.mxu0 0
    %1278 = vmatprep.subr.bf16.mxu0 0
    %1279 = vmatpush1.bf16.msra.mxu0 0
    %1280 = vmatprep.mubr.bf16.mxu0 0
    %1281 = vmatmul.mubr.bf16.gmra.mrb[0].mxu0 %v1246
    %v1282 = vpop.f32.mrb[0].mxu0
    %v1283 = vadd.f32 0.0, %v1282
    %v1284 = vpop.f32.mrb[0].mxu0
    %v1285 = vadd.f32 0.0, %v1284
    %v1286 = vpop.f32.mrb[0].mxu0
    %v1287 = vpop.f32.mrb[0].mxu0
    %1288 = vdwg.mxu0
    %1289 = vmatprep.subr.bf16.mxu0 0
    %1290 = vmatpush1.bf16.msra.mxu0 %v645
    %1291 = vmatprep.subr.bf16.mxu0 0
    %1292 = vmatpush1.bf16.msra.mxu0 %v648
    %1293 = vmatprep.subr.bf16.mxu0 0
    %1294 = vmatpush1.bf16.msra.mxu0 0
    %1295 = vmatprep.subr.bf16.mxu0 0
    %1296 = vmatpush1.bf16.msra.mxu0 0
    %1297 = vmatprep.subr.bf16.mxu0 0
    %1298 = vmatpush1.bf16.msra.mxu0 0
    %1299 = vmatprep.subr.bf16.mxu0 0
    %1300 = vmatpush1.bf16.msra.mxu0 0
    %1301 = vmatprep.subr.bf16.mxu0 0
    %1302 = vmatpush1.bf16.msra.mxu0 0
    %1303 = vmatprep.subr.bf16.mxu0 0
    %1304 = vmatpush1.bf16.msra.mxu0 0
    %1305 = vmatprep.subr.bf16.mxu0 0
    %1306 = vmatpush1.bf16.msra.mxu0 0
    %1307 = vmatprep.subr.bf16.mxu0 0
    %1308 = vmatpush1.bf16.msra.mxu0 0
    %1309 = vmatprep.subr.bf16.mxu0 0
    %1310 = vmatpush1.bf16.msra.mxu0 0
    %1311 = vmatprep.subr.bf16.mxu0 0
    %1312 = vmatpush1.bf16.msra.mxu0 0
    %1313 = vmatprep.subr.bf16.mxu0 0
    %1314 = vmatpush1.bf16.msra.mxu0 0
    %1315 = vmatprep.subr.bf16.mxu0 0
    %1316 = vmatpush1.bf16.msra.mxu0 0
    %1317 = vmatprep.subr.bf16.mxu0 0
    %1318 = vmatpush1.bf16.msra.mxu0 0
    %1319 = vmatprep.subr.bf16.mxu0 0
    %1320 = vmatpush1.bf16.msra.mxu0 0
    %1321 = vmatprep.mubr.bf16.mxu0 0
    %1322 = vmatmul.mubr.bf16.gmra.mrb[0].mxu0 %v1246
    %v1323 = vpop.f32.mrb[0].mxu0
    %v1324 = vadd.f32 0.0, %v1323
    %v1325 = vpop.f32.mrb[0].mxu0
    %v1326 = vpop.f32.mrb[0].mxu0
    %v1327 = vpop.f32.mrb[0].mxu0
    %1328 = vdwg.mxu0
    %v1329 = vld [vmem:[#allocation2 + $0x18] sm:$0xff]
    %v1330 = vld [vmem:[#allocation2 + $0x20] sm:$0xff]
    %v1331 = vld [vmem:[#allocation2 + $0x28] sm:$0xff]
    %v1332 = vadd.f32 %v1329, %v1117
    %v1333 = vadd.f32 %v1330, %v1119
    %v1334 = vmul.f32 %v1332, 0.5
    %v1335 = vmul.f32 %v1333, 0.5
    %v1336 = vtanh.pop %v1334
    %v1337 = vtanh.pop %v1335
    %v1338 = vadd.f32 %v1336, 1.0
    %v1339 = vadd.f32 %v1337, 1.0
    %v1340 = vmul.f32 %v1338, 0.5
    %v1341 = vmul.f32 %v1339, 0.5
    %v1342 = vadd.f32 %v1158, %v739
    %v1343 = vmul.f32 %v1340, %v1342
    %v1344 = vadd.f32 %v1331, %v1343
    %v1345 = vtanh.pop %v1344
    %v1346 = vsub.f32 1.0, %v1341
    %v1347 = vmul.f32 %v1346, %v1345
    %v1348 = vmul.f32 %v1341, %v757
    %v1349 = vadd.f32 %v1347, %v1348
    %v1350 = vpack.c.bf16 %v1349, %v1349
    %v1352 = vsel %vm409, %v1350, 0
    %1354 = vmatprep.subr.bf16.mxu0 %v806
    %1355 = vmatpush1.bf16.msra.mxu0 %v805
    %1356 = vmatprep.subr.bf16.mxu0 %v809
    %1357 = vmatpush1.bf16.msra.mxu0 %v808
    %1358 = vmatprep.subr.bf16.mxu0 0
    %1359 = vmatpush1.bf16.msra.mxu0 0
    %1360 = vmatprep.subr.bf16.mxu0 0
    %1361 = vmatpush1.bf16.msra.mxu0 0
    %1362 = vmatprep.subr.bf16.mxu0 0
    %1363 = vmatpush1.bf16.msra.mxu0 0
    %1364 = vmatprep.subr.bf16.mxu0 0
    %1365 = vmatpush1.bf16.msra.mxu0 0
    %1366 = vmatprep.subr.bf16.mxu0 0
    %1367 = vmatpush1.bf16.msra.mxu0 0
    %1368 = vmatprep.subr.bf16.mxu0 0
    %1369 = vmatpush1.bf16.msra.mxu0 0
    %1370 = vmatprep.subr.bf16.mxu0 0
    %1371 = vmatpush1.bf16.msra.mxu0 0
    %1372 = vmatprep.subr.bf16.mxu0 0
    %1373 = vmatpush1.bf16.msra.mxu0 0
    %1374 = vmatprep.subr.bf16.mxu0 0
    %1375 = vmatpush1.bf16.msra.mxu0 0
    %1376 = vmatprep.subr.bf16.mxu0 0
    %1377 = vmatpush1.bf16.msra.mxu0 0
    %1378 = vmatprep.subr.bf16.mxu0 0
    %1379 = vmatpush1.bf16.msra.mxu0 0
    %1380 = vmatprep.subr.bf16.mxu0 0
    %1381 = vmatpush1.bf16.msra.mxu0 0
    %1382 = vmatprep.subr.bf16.mxu0 0
    %1383 = vmatpush1.bf16.msra.mxu0 0
    %1384 = vmatprep.subr.bf16.mxu0 0
    %1385 = vmatpush1.bf16.msra.mxu0 0
    %1386 = vmatprep.mubr.bf16.mxu0 0
    %1387 = vmatmul.mubr.bf16.gmra.mrb[0].mxu0 %v1352
    %v1388 = vpop.f32.mrb[0].mxu0
    %v1389 = vadd.f32 %v773, %v1388
    %v1390 = vpop.f32.mrb[0].mxu0
    %v1391 = vadd.f32 %v777, %v1390
    %v1392 = vpop.f32.mrb[0].mxu0
    %v1393 = vpop.f32.mrb[0].mxu0
    %1394 = vdwg.mxu0
    %1395 = vmatprep.subr.bf16.mxu0 0
    %1396 = vmatpush1.bf16.msra.mxu0 %v807
    %1397 = vmatprep.subr.bf16.mxu0 0
    %1398 = vmatpush1.bf16.msra.mxu0 %v810
    %1399 = vmatprep.subr.bf16.mxu0 0
    %1400 = vmatpush1.bf16.msra.mxu0 0
    %1401 = vmatprep.subr.bf16.mxu0 0
    %1402 = vmatpush1.bf16.msra.mxu0 0
    %1403 = vmatprep.subr.bf16.mxu0 0
    %1404 = vmatpush1.bf16.msra.mxu0 0
    %1405 = vmatprep.subr.bf16.mxu0 0
    %1406 = vmatpush1.bf16.msra.mxu0 0
    %1407 = vmatprep.subr.bf16.mxu0 0
    %1408 = vmatpush1.bf16.msra.mxu0 0
    %1409 = vmatprep.subr.bf16.mxu0 0
    %1410 = vmatpush1.bf16.msra.mxu0 0
    %1411 = vmatprep.subr.bf16.mxu0 0
    %1412 = vmatpush1.bf16.msra.mxu0 0
    %1413 = vmatprep.subr.bf16.mxu0 0
    %1414 = vmatpush1.bf16.msra.mxu0 0
    %1415 = vmatprep.subr.bf16.mxu0 0
    %1416 = vmatpush1.bf16.msra.mxu0 0
    %1417 = vmatprep.subr.bf16.mxu0 0
    %1418 = vmatpush1.bf16.msra.mxu0 0
    %1419 = vmatprep.subr.bf16.mxu0 0
    %1420 = vmatpush1.bf16.msra.mxu0 0
    %1421 = vmatprep.subr.bf16.mxu0 0
    %1422 = vmatpush1.bf16.msra.mxu0 0
    %1423 = vmatprep.subr.bf16.mxu0 0
    %1424 = vmatpush1.bf16.msra.mxu0 0
    %1425 = vmatprep.subr.bf16.mxu0 0
    %1426 = vmatpush1.bf16.msra.mxu0 0
    %1427 = vmatprep.mubr.bf16.mxu0 0
    %1428 = vmatmul.mubr.bf16.gmra.mrb[0].mxu0 %v1352
    %v1429 = vpop.f32.mrb[0].mxu0
    %v1430 = vadd.f32 %v781, %v1429
    %v1431 = vpop.f32.mrb[0].mxu0
    %v1432 = vpop.f32.mrb[0].mxu0
    %v1433 = vpop.f32.mrb[0].mxu0
    %1434 = vdwg.mxu0
    %v1435 = vadd.f32 %v1389, %v1198
    %v1436 = vadd.f32 %v1391, %v1200
    %v1437 = vmul.f32 %v1435, 0.5
    %v1438 = vmul.f32 %v1436, 0.5
    %v1439 = vtanh.pop %v1437
    %v1440 = vtanh.pop %v1438
    %v1441 = vadd.f32 %v1439, 1.0
    %v1442 = vadd.f32 %v1440, 1.0
    %v1443 = vmul.f32 %v1441, 0.5
    %v1444 = vmul.f32 %v1442, 0.5
    %v1445 = vadd.f32 %v1239, %v901
    %v1446 = vmul.f32 %v1443, %v1445
    %v1447 = vadd.f32 %v1430, %v1446
    %v1448 = vtanh.pop %v1447
    %v1449 = vsub.f32 1.0, %v1444
    %v1450 = vmul.f32 %v1449, %v1448
    %v1451 = vmul.f32 %v1444, %v919
    %v1452 = vadd.f32 %v1450, %v1451
    %v1453 = vpack.c.bf16 %v1452, %v1452
    %v1455 = vsel %vm409, %v1453, 0
    %1457 = vmatprep.subr.bf16.mxu0 %v968
    %1458 = vmatpush1.bf16.msra.mxu0 %v967
    %1459 = vmatprep.subr.bf16.mxu0 %v971
    %1460 = vmatpush1.bf16.msra.mxu0 %v970
    %1461 = vmatprep.subr.bf16.mxu0 0
    %1462 = vmatpush1.bf16.msra.mxu0 0
    %1463 = vmatprep.subr.bf16.mxu0 0
    %1464 = vmatpush1.bf16.msra.mxu0 0
    %1465 = vmatprep.subr.bf16.mxu0 0
    %1466 = vmatpush1.bf16.msra.mxu0 0
    %1467 = vmatprep.subr.bf16.mxu0 0
    %1468 = vmatpush1.bf16.msra.mxu0 0
    %1469 = vmatprep.subr.bf16.mxu0 0
    %1470 = vmatpush1.bf16.msra.mxu0 0
    %1471 = vmatprep.subr.bf16.mxu0 0
    %1472 = vmatpush1.bf16.msra.mxu0 0
    %1473 = vmatprep.subr.bf16.mxu0 0
    %1474 = vmatpush1.bf16.msra.mxu0 0
    %1475 = vmatprep.subr.bf16.mxu0 0
    %1476 = vmatpush1.bf16.msra.mxu0 0
    %1477 = vmatprep.subr.bf16.mxu0 0
    %1478 = vmatpush1.bf16.msra.mxu0 0
    %1479 = vmatprep.subr.bf16.mxu0 0
    %1480 = vmatpush1.bf16.msra.mxu0 0
    %1481 = vmatprep.subr.bf16.mxu0 0
    %1482 = vmatpush1.bf16.msra.mxu0 0
    %1483 = vmatprep.subr.bf16.mxu0 0
    %1484 = vmatpush1.bf16.msra.mxu0 0
    %1485 = vmatprep.subr.bf16.mxu0 0
    %1486 = vmatpush1.bf16.msra.mxu0 0
    %1487 = vmatprep.subr.bf16.mxu0 0
    %1488 = vmatpush1.bf16.msra.mxu0 0
    %1489 = vmatprep.mubr.bf16.mxu0 0
    %1490 = vmatmul.mubr.bf16.gmra.mrb[0].mxu0 %v1455
    %v1491 = vpop.f32.mrb[0].mxu0
    %v1492 = vadd.f32 %v935, %v1491
    %v1493 = vpop.f32.mrb[0].mxu0
    %v1494 = vadd.f32 %v939, %v1493
    %v1495 = vpop.f32.mrb[0].mxu0
    %v1496 = vpop.f32.mrb[0].mxu0
    %1497 = vdwg.mxu0
    %1498 = vmatprep.subr.bf16.mxu0 0
    %1499 = vmatpush1.bf16.msra.mxu0 %v969
    %1500 = vmatprep.subr.bf16.mxu0 0
    %1501 = vmatpush1.bf16.msra.mxu0 %v972
    %1502 = vmatprep.subr.bf16.mxu0 0
    %1503 = vmatpush1.bf16.msra.mxu0 0
    %1504 = vmatprep.subr.bf16.mxu0 0
    %1505 = vmatpush1.bf16.msra.mxu0 0
    %1506 = vmatprep.subr.bf16.mxu0 0
    %1507 = vmatpush1.bf16.msra.mxu0 0
    %1508 = vmatprep.subr.bf16.mxu0 0
    %1509 = vmatpush1.bf16.msra.mxu0 0
    %1510 = vmatprep.subr.bf16.mxu0 0
    %1511 = vmatpush1.bf16.msra.mxu0 0
    %1512 = vmatprep.subr.bf16.mxu0 0
    %1513 = vmatpush1.bf16.msra.mxu0 0
    %1514 = vmatprep.subr.bf16.mxu0 0
    %1515 = vmatpush1.bf16.msra.mxu0 0
    %1516 = vmatprep.subr.bf16.mxu0 0
    %1517 = vmatpush1.bf16.msra.mxu0 0
    %1518 = vmatprep.subr.bf16.mxu0 0
    %1519 = vmatpush1.bf16.msra.mxu0 0
    %1520 = vmatprep.subr.bf16.mxu0 0
    %1521 = vmatpush1.bf16.msra.mxu0 0
    %1522 = vmatprep.subr.bf16.mxu0 0
    %1523 = vmatpush1.bf16.msra.mxu0 0
    %1524 = vmatprep.subr.bf16.mxu0 0
    %1525 = vmatpush1.bf16.msra.mxu0 0
    %1526 = vmatprep.subr.bf16.mxu0 0
    %1527 = vmatpush1.bf16.msra.mxu0 0
    %1528 = vmatprep.subr.bf16.mxu0 0
    %1529 = vmatpush1.bf16.msra.mxu0 0
    %1530 = vmatprep.mubr.bf16.mxu0 0
    %1531 = vmatmul.mubr.bf16.gmra.mrb[0].mxu0 %v1455
    %v1532 = vpop.f32.mrb[0].mxu0
    %v1533 = vadd.f32 %v943, %v1532
    %v1534 = vpop.f32.mrb[0].mxu0
    %v1535 = vpop.f32.mrb[0].mxu0
    %v1536 = vpop.f32.mrb[0].mxu0
    %1537 = vdwg.mxu0
    %v1538 = vadd.f32 %v1492, %v1283
    %v1539 = vadd.f32 %v1494, %v1285
    %v1540 = vmul.f32 %v1538, 0.5
    %v1541 = vmul.f32 %v1539, 0.5
    %v1542 = vtanh.pop %v1540
    %v1543 = vtanh.pop %v1541
    %v1544 = vadd.f32 %v1542, 1.0
    %v1545 = vadd.f32 %v1543, 1.0
    %v1546 = vmul.f32 %v1544, 0.5
    %v1547 = vmul.f32 %v1545, 0.5
    %v1548 = vadd.f32 %v1324, %v1063
    %v1549 = vmul.f32 %v1546, %v1548
    %v1550 = vadd.f32 %v1533, %v1549
    %v1551 = vtanh.pop %v1550
    %v1552 = vsub.f32 1.0, %v1547
    %v1553 = vmul.f32 %v1552, %v1551
    %v1554 = vmul.f32 %v1547, %v1081
    %v1555 = vadd.f32 %v1553, %v1554
    %1556 = vmatprep.subr.bf16.mxu0 %v398
    %1557 = vmatpush1.bf16.msra.mxu0 %v397
    %1558 = vmatprep.subr.bf16.mxu0 %v401
    %1559 = vmatpush1.bf16.msra.mxu0 %v400
    %1560 = vmatprep.subr.bf16.mxu0 0
    %1561 = vmatpush1.bf16.msra.mxu0 0
    %1562 = vmatprep.subr.bf16.mxu0 0
    %1563 = vmatpush1.bf16.msra.mxu0 0
    %1564 = vmatprep.subr.bf16.mxu0 0
    %1565 = vmatpush1.bf16.msra.mxu0 0
    %1566 = vmatprep.subr.bf16.mxu0 0
    %1567 = vmatpush1.bf16.msra.mxu0 0
    %1568 = vmatprep.subr.bf16.mxu0 0
    %1569 = vmatpush1.bf16.msra.mxu0 0
    %1570 = vmatprep.subr.bf16.mxu0 0
    %1571 = vmatpush1.bf16.msra.mxu0 0
    %1572 = vmatprep.subr.bf16.mxu0 0
    %1573 = vmatpush1.bf16.msra.mxu0 0
    %1574 = vmatprep.subr.bf16.mxu0 0
    %1575 = vmatpush1.bf16.msra.mxu0 0
    %1576 = vmatprep.subr.bf16.mxu0 0
    %1577 = vmatpush1.bf16.msra.mxu0 0
    %1578 = vmatprep.subr.bf16.mxu0 0
    %1579 = vmatpush1.bf16.msra.mxu0 0
    %1580 = vmatprep.subr.bf16.mxu0 0
    %1581 = vmatpush1.bf16.msra.mxu0 0
    %1582 = vmatprep.subr.bf16.mxu0 0
    %1583 = vmatpush1.bf16.msra.mxu0 0
    %1584 = vmatprep.subr.bf16.mxu0 0
    %1585 = vmatpush1.bf16.msra.mxu0 0
    %1586 = vmatprep.subr.bf16.mxu0 0
    %1587 = vmatpush1.bf16.msra.mxu0 0
    %1588 = vmatprep.mubr.bf16.mxu0 0
    %1589 = vmatmul.mubr.bf16.gmra.mrb[0].mxu0 %v1352
    %v1590 = vpop.f32.mrb[0].mxu0
    %v1591 = vadd.f32 0.0, %v1590
    %v1592 = vpop.f32.mrb[0].mxu0
    %v1593 = vadd.f32 0.0, %v1592
    %v1594 = vpop.f32.mrb[0].mxu0
    %v1595 = vpop.f32.mrb[0].mxu0
    %1596 = vdwg.mxu0
    %1597 = vmatprep.subr.bf16.mxu0 0
    %1598 = vmatpush1.bf16.msra.mxu0 %v399
    %1599 = vmatprep.subr.bf16.mxu0 0
    %1600 = vmatpush1.bf16.msra.mxu0 %v402
    %1601 = vmatprep.subr.bf16.mxu0 0
    %1602 = vmatpush1.bf16.msra.mxu0 0
    %1603 = vmatprep.subr.bf16.mxu0 0
    %1604 = vmatpush1.bf16.msra.mxu0 0
    %1605 = vmatprep.subr.bf16.mxu0 0
    %1606 = vmatpush1.bf16.msra.mxu0 0
    %1607 = vmatprep.subr.bf16.mxu0 0
    %1608 = vmatpush1.bf16.msra.mxu0 0
    %1609 = vmatprep.subr.bf16.mxu0 0
    %1610 = vmatpush1.bf16.msra.mxu0 0
    %1611 = vmatprep.subr.bf16.mxu0 0
    %1612 = vmatpush1.bf16.msra.mxu0 0
    %1613 = vmatprep.subr.bf16.mxu0 0
    %1614 = vmatpush1.bf16.msra.mxu0 0
    %1615 = vmatprep.subr.bf16.mxu0 0
    %1616 = vmatpush1.bf16.msra.mxu0 0
    %1617 = vmatprep.subr.bf16.mxu0 0
    %1618 = vmatpush1.bf16.msra.mxu0 0
    %1619 = vmatprep.subr.bf16.mxu0 0
    %1620 = vmatpush1.bf16.msra.mxu0 0
    %1621 = vmatprep.subr.bf16.mxu0 0
    %1622 = vmatpush1.bf16.msra.mxu0 0
    %1623 = vmatprep.subr.bf16.mxu0 0
    %1624 = vmatpush1.bf16.msra.mxu0 0
    %1625 = vmatprep.subr.bf16.mxu0 0
    %1626 = vmatpush1.bf16.msra.mxu0 0
    %1627 = vmatprep.subr.bf16.mxu0 0
    %1628 = vmatpush1.bf16.msra.mxu0 0
    %1629 = vmatprep.mubr.bf16.mxu0 0
    %1630 = vmatmul.mubr.bf16.gmra.mrb[0].mxu0 %v1352
    %v1631 = vpop.f32.mrb[0].mxu0
    %v1632 = vadd.f32 0.0, %v1631
    %v1633 = vpop.f32.mrb[0].mxu0
    %v1634 = vpop.f32.mrb[0].mxu0
    %v1635 = vpop.f32.mrb[0].mxu0
    %1636 = vdwg.mxu0
    %1637 = vmatprep.subr.bf16.mxu0 %v523
    %1638 = vmatpush1.bf16.msra.mxu0 %v522
    %1639 = vmatprep.subr.bf16.mxu0 %v526
    %1640 = vmatpush1.bf16.msra.mxu0 %v525
    %1641 = vmatprep.subr.bf16.mxu0 0
    %1642 = vmatpush1.bf16.msra.mxu0 0
    %1643 = vmatprep.subr.bf16.mxu0 0
    %1644 = vmatpush1.bf16.msra.mxu0 0
    %1645 = vmatprep.subr.bf16.mxu0 0
    %1646 = vmatpush1.bf16.msra.mxu0 0
    %1647 = vmatprep.subr.bf16.mxu0 0
    %1648 = vmatpush1.bf16.msra.mxu0 0
    %1649 = vmatprep.subr.bf16.mxu0 0
    %1650 = vmatpush1.bf16.msra.mxu0 0
    %1651 = vmatprep.subr.bf16.mxu0 0
    %1652 = vmatpush1.bf16.msra.mxu0 0
    %1653 = vmatprep.subr.bf16.mxu0 0
    %1654 = vmatpush1.bf16.msra.mxu0 0
    %1655 = vmatprep.subr.bf16.mxu0 0
    %1656 = vmatpush1.bf16.msra.mxu0 0
    %1657 = vmatprep.subr.bf16.mxu0 0
    %1658 = vmatpush1.bf16.msra.mxu0 0
    %1659 = vmatprep.subr.bf16.mxu0 0
    %1660 = vmatpush1.bf16.msra.mxu0 0
    %1661 = vmatprep.subr.bf16.mxu0 0
    %1662 = vmatpush1.bf16.msra.mxu0 0
    %1663 = vmatprep.subr.bf16.mxu0 0
    %1664 = vmatpush1.bf16.msra.mxu0 0
    %1665 = vmatprep.subr.bf16.mxu0 0
    %1666 = vmatpush1.bf16.msra.mxu0 0
    %1667 = vmatprep.subr.bf16.mxu0 0
    %1668 = vmatpush1.bf16.msra.mxu0 0
    %1669 = vmatprep.mubr.bf16.mxu0 0
    %1670 = vmatmul.mubr.bf16.gmra.mrb[0].mxu0 %v1455
    %v1671 = vpop.f32.mrb[0].mxu0
    %v1672 = vadd.f32 0.0, %v1671
    %v1673 = vpop.f32.mrb[0].mxu0
    %v1674 = vadd.f32 0.0, %v1673
    %v1675 = vpop.f32.mrb[0].mxu0
    %v1676 = vpop.f32.mrb[0].mxu0
    %1677 = vdwg.mxu0
    %1678 = vmatprep.subr.bf16.mxu0 0
    %1679 = vmatpush1.bf16.msra.mxu0 %v524
    %1680 = vmatprep.subr.bf16.mxu0 0
    %1681 = vmatpush1.bf16.msra.mxu0 %v527
    %1682 = vmatprep.subr.bf16.mxu0 0
    %1683 = vmatpush1.bf16.msra.mxu0 0
    %1684 = vmatprep.subr.bf16.mxu0 0
    %1685 = vmatpush1.bf16.msra.mxu0 0
    %1686 = vmatprep.subr.bf16.mxu0 0
    %1687 = vmatpush1.bf16.msra.mxu0 0
    %1688 = vmatprep.subr.bf16.mxu0 0
    %1689 = vmatpush1.bf16.msra.mxu0 0
    %1690 = vmatprep.subr.bf16.mxu0 0
    %1691 = vmatpush1.bf16.msra.mxu0 0
    %1692 = vmatprep.subr.bf16.mxu0 0
    %1693 = vmatpush1.bf16.msra.mxu0 0
    %1694 = vmatprep.subr.bf16.mxu0 0
    %1695 = vmatpush1.bf16.msra.mxu0 0
    %1696 = vmatprep.subr.bf16.mxu0 0
    %1697 = vmatpush1.bf16.msra.mxu0 0
    %1698 = vmatprep.subr.bf16.mxu0 0
    %1699 = vmatpush1.bf16.msra.mxu0 0
    %1700 = vmatprep.subr.bf16.mxu0 0
    %1701 = vmatpush1.bf16.msra.mxu0 0
    %1702 = vmatprep.subr.bf16.mxu0 0
    %1703 = vmatpush1.bf16.msra.mxu0 0
    %1704 = vmatprep.subr.bf16.mxu0 0
    %1705 = vmatpush1.bf16.msra.mxu0 0
    %1706 = vmatprep.subr.bf16.mxu0 0
    %1707 = vmatpush1.bf16.msra.mxu0 0
    %1708 = vmatprep.subr.bf16.mxu0 0
    %1709 = vmatpush1.bf16.msra.mxu0 0
    %1710 = vmatprep.mubr.bf16.mxu0 0
    %1711 = vmatmul.mubr.bf16.gmra.mrb[0].mxu0 %v1455
    %v1712 = vpop.f32.mrb[0].mxu0
    %v1713 = vadd.f32 0.0, %v1712
    %v1714 = vpop.f32.mrb[0].mxu0
    %v1715 = vpop.f32.mrb[0].mxu0
    %v1716 = vpop.f32.mrb[0].mxu0
    %1717 = vdwg.mxu0
    %v1718 = vpack.c.bf16 %v1555, %v1555
    %v1720 = vsel %vm409, %v1718, 0
    %1722 = vmatprep.subr.bf16.mxu0 %v644
    %1723 = vmatpush1.bf16.msra.mxu0 %v643
    %1724 = vmatprep.subr.bf16.mxu0 %v647
    %1725 = vmatpush1.bf16.msra.mxu0 %v646
    %1726 = vmatprep.subr.bf16.mxu0 0
    %1727 = vmatpush1.bf16.msra.mxu0 0
    %1728 = vmatprep.subr.bf16.mxu0 0
    %1729 = vmatpush1.bf16.msra.mxu0 0
    %1730 = vmatprep.subr.bf16.mxu0 0
    %1731 = vmatpush1.bf16.msra.mxu0 0
    %1732 = vmatprep.subr.bf16.mxu0 0
    %1733 = vmatpush1.bf16.msra.mxu0 0
    %1734 = vmatprep.subr.bf16.mxu0 0
    %1735 = vmatpush1.bf16.msra.mxu0 0
    %1736 = vmatprep.subr.bf16.mxu0 0
    %1737 = vmatpush1.bf16.msra.mxu0 0
    %1738 = vmatprep.subr.bf16.mxu0 0
    %1739 = vmatpush1.bf16.msra.mxu0 0
    %1740 = vmatprep.subr.bf16.mxu0 0
    %1741 = vmatpush1.bf16.msra.mxu0 0
    %1742 = vmatprep.subr.bf16.mxu0 0
    %1743 = vmatpush1.bf16.msra.mxu0 0
    %1744 = vmatprep.subr.bf16.mxu0 0
    %1745 = vmatpush1.bf16.msra.mxu0 0
    %1746 = vmatprep.subr.bf16.mxu0 0
    %1747 = vmatpush1.bf16.msra.mxu0 0
    %1748 = vmatprep.subr.bf16.mxu0 0
    %1749 = vmatpush1.bf16.msra.mxu0 0
    %1750 = vmatprep.subr.bf16.mxu0 0
    %1751 = vmatpush1.bf16.msra.mxu0 0
    %1752 = vmatprep.subr.bf16.mxu0 0
    %1753 = vmatpush1.bf16.msra.mxu0 0
    %1754 = vmatprep.mubr.bf16.mxu0 0
    %1755 = vmatmul.mubr.bf16.gmra.mrb[0].mxu0 %v1720
    %v1756 = vpop.f32.mrb[0].mxu0
    %v1757 = vadd.f32 0.0, %v1756
    %v1758 = vpop.f32.mrb[0].mxu0
    %v1759 = vadd.f32 0.0, %v1758
    %v1760 = vpop.f32.mrb[0].mxu0
    %v1761 = vpop.f32.mrb[0].mxu0
    %1762 = vdwg.mxu0
    %1763 = vmatprep.subr.bf16.mxu0 0
    %1764 = vmatpush1.bf16.msra.mxu0 %v645
    %1765 = vmatprep.subr.bf16.mxu0 0
    %1766 = vmatpush1.bf16.msra.mxu0 %v648
    %1767 = vmatprep.subr.bf16.mxu0 0
    %1768 = vmatpush1.bf16.msra.mxu0 0
    %1769 = vmatprep.subr.bf16.mxu0 0
    %1770 = vmatpush1.bf16.msra.mxu0 0
    %1771 = vmatprep.subr.bf16.mxu0 0
    %1772 = vmatpush1.bf16.msra.mxu0 0
    %1773 = vmatprep.subr.bf16.mxu0 0
    %1774 = vmatpush1.bf16.msra.mxu0 0
    %1775 = vmatprep.subr.bf16.mxu0 0
    %1776 = vmatpush1.bf16.msra.mxu0 0
    %1777 = vmatprep.subr.bf16.mxu0 0
    %1778 = vmatpush1.bf16.msra.mxu0 0
    %1779 = vmatprep.subr.bf16.mxu0 0
    %1780 = vmatpush1.bf16.msra.mxu0 0
    %1781 = vmatprep.subr.bf16.mxu0 0
    %1782 = vmatpush1.bf16.msra.mxu0 0
    %1783 = vmatprep.subr.bf16.mxu0 0
    %1784 = vmatpush1.bf16.msra.mxu0 0
    %1785 = vmatprep.subr.bf16.mxu0 0
    %1786 = vmatpush1.bf16.msra.mxu0 0
    %1787 = vmatprep.subr.bf16.mxu0 0
    %1788 = vmatpush1.bf16.msra.mxu0 0
    %1789 = vmatprep.subr.bf16.mxu0 0
    %1790 = vmatpush1.bf16.msra.mxu0 0
    %1791 = vmatprep.subr.bf16.mxu0 0
    %1792 = vmatpush1.bf16.msra.mxu0 0
    %1793 = vmatprep.subr.bf16.mxu0 0
    %1794 = vmatpush1.bf16.msra.mxu0 0
    %1795 = vmatprep.mubr.bf16.mxu0 0
    %1796 = vmatmul.mubr.bf16.gmra.mrb[0].mxu0 %v1720
    %v1797 = vpop.f32.mrb[0].mxu0
    %v1798 = vadd.f32 0.0, %v1797
    %v1799 = vpop.f32.mrb[0].mxu0
    %v1800 = vpop.f32.mrb[0].mxu0
    %v1801 = vpop.f32.mrb[0].mxu0
    %1802 = vdwg.mxu0
    %v1803 = vld [vmem:[#allocation2 + $0x30] sm:$0xff]
    %v1804 = vld [vmem:[#allocation2 + $0x38] sm:$0xff]
    %v1805 = vld [vmem:[#allocation2 + $0x40] sm:$0xff]
    %v1806 = vadd.f32 %v1803, %v1591
    %v1807 = vadd.f32 %v1804, %v1593
    %v1808 = vmul.f32 %v1806, 0.5
    %v1809 = vmul.f32 %v1807, 0.5
    %v1810 = vtanh.pop %v1808
    %v1811 = vtanh.pop %v1809
    %v1812 = vadd.f32 %v1810, 1.0
    %v1813 = vadd.f32 %v1811, 1.0
    %v1814 = vmul.f32 %v1812, 0.5
    %v1815 = vmul.f32 %v1813, 0.5
    %v1816 = vadd.f32 %v1632, %v739
    %v1817 = vmul.f32 %v1814, %v1816
    %v1818 = vadd.f32 %v1805, %v1817
    %v1819 = vtanh.pop %v1818
    %v1820 = vsub.f32 1.0, %v1815
    %v1821 = vmul.f32 %v1820, %v1819
    %v1822 = vmul.f32 %v1815, %v1349
    %v1823 = vadd.f32 %v1821, %v1822
    %v1824 = vpack.c.bf16 %v1823, %v1823
    %v1826 = vsel %vm409, %v1824, 0
    %1828 = vmatprep.subr.bf16.mxu0 %v806
    %1829 = vmatpush1.bf16.msra.mxu0 %v805
    %1830 = vmatprep.subr.bf16.mxu0 %v809
    %1831 = vmatpush1.bf16.msra.mxu0 %v808
    %1832 = vmatprep.subr.bf16.mxu0 0
    %1833 = vmatpush1.bf16.msra.mxu0 0
    %1834 = vmatprep.subr.bf16.mxu0 0
    %1835 = vmatpush1.bf16.msra.mxu0 0
    %1836 = vmatprep.subr.bf16.mxu0 0
    %1837 = vmatpush1.bf16.msra.mxu0 0
    %1838 = vmatprep.subr.bf16.mxu0 0
    %1839 = vmatpush1.bf16.msra.mxu0 0
    %1840 = vmatprep.subr.bf16.mxu0 0
    %1841 = vmatpush1.bf16.msra.mxu0 0
    %1842 = vmatprep.subr.bf16.mxu0 0
    %1843 = vmatpush1.bf16.msra.mxu0 0
    %1844 = vmatprep.subr.bf16.mxu0 0
    %1845 = vmatpush1.bf16.msra.mxu0 0
    %1846 = vmatprep.subr.bf16.mxu0 0
    %1847 = vmatpush1.bf16.msra.mxu0 0
    %1848 = vmatprep.subr.bf16.mxu0 0
    %1849 = vmatpush1.bf16.msra.mxu0 0
    %1850 = vmatprep.subr.bf16.mxu0 0
    %1851 = vmatpush1.bf16.msra.mxu0 0
    %1852 = vmatprep.subr.bf16.mxu0 0
    %1853 = vmatpush1.bf16.msra.mxu0 0
    %1854 = vmatprep.subr.bf16.mxu0 0
    %1855 = vmatpush1.bf16.msra.mxu0 0
    %1856 = vmatprep.subr.bf16.mxu0 0
    %1857 = vmatpush1.bf16.msra.mxu0 0
    %1858 = vmatprep.subr.bf16.mxu0 0
    %1859 = vmatpush1.bf16.msra.mxu0 0
    %1860 = vmatprep.mubr.bf16.mxu0 0
    %1861 = vmatmul.mubr.bf16.gmra.mrb[0].mxu0 %v1826
    %v1862 = vpop.f32.mrb[0].mxu0
    %v1863 = vadd.f32 %v773, %v1862
    %v1864 = vpop.f32.mrb[0].mxu0
    %v1865 = vadd.f32 %v777, %v1864
    %v1866 = vpop.f32.mrb[0].mxu0
    %v1867 = vpop.f32.mrb[0].mxu0
    %1868 = vdwg.mxu0
    %1869 = vmatprep.subr.bf16.mxu0 0
    %1870 = vmatpush1.bf16.msra.mxu0 %v807
    %1871 = vmatprep.subr.bf16.mxu0 0
    %1872 = vmatpush1.bf16.msra.mxu0 %v810
    %1873 = vmatprep.subr.bf16.mxu0 0
    %1874 = vmatpush1.bf16.msra.mxu0 0
    %1875 = vmatprep.subr.bf16.mxu0 0
    %1876 = vmatpush1.bf16.msra.mxu0 0
    %1877 = vmatprep.subr.bf16.mxu0 0
    %1878 = vmatpush1.bf16.msra.mxu0 0
    %1879 = vmatprep.subr.bf16.mxu0 0
    %1880 = vmatpush1.bf16.msra.mxu0 0
    %1881 = vmatprep.subr.bf16.mxu0 0
    %1882 = vmatpush1.bf16.msra.mxu0 0
    %1883 = vmatprep.subr.bf16.mxu0 0
    %1884 = vmatpush1.bf16.msra.mxu0 0
    %1885 = vmatprep.subr.bf16.mxu0 0
    %1886 = vmatpush1.bf16.msra.mxu0 0
    %1887 = vmatprep.subr.bf16.mxu0 0
    %1888 = vmatpush1.bf16.msra.mxu0 0
    %1889 = vmatprep.subr.bf16.mxu0 0
    %1890 = vmatpush1.bf16.msra.mxu0 0
    %1891 = vmatprep.subr.bf16.mxu0 0
    %1892 = vmatpush1.bf16.msra.mxu0 0
    %1893 = vmatprep.subr.bf16.mxu0 0
    %1894 = vmatpush1.bf16.msra.mxu0 0
    %1895 = vmatprep.subr.bf16.mxu0 0
    %1896 = vmatpush1.bf16.msra.mxu0 0
    %1897 = vmatprep.subr.bf16.mxu0 0
    %1898 = vmatpush1.bf16.msra.mxu0 0
    %1899 = vmatprep.subr.bf16.mxu0 0
    %1900 = vmatpush1.bf16.msra.mxu0 0
    %1901 = vmatprep.mubr.bf16.mxu0 0
    %1902 = vmatmul.mubr.bf16.gmra.mrb[0].mxu0 %v1826
    %v1903 = vpop.f32.mrb[0].mxu0
    %v1904 = vadd.f32 %v781, %v1903
    %v1905 = vpop.f32.mrb[0].mxu0
    %v1906 = vpop.f32.mrb[0].mxu0
    %v1907 = vpop.f32.mrb[0].mxu0
    %1908 = vdwg.mxu0
    %v1909 = vadd.f32 %v1863, %v1672
    %v1910 = vadd.f32 %v1865, %v1674
    %v1911 = vmul.f32 %v1909, 0.5
    %v1912 = vmul.f32 %v1910, 0.5
    %v1913 = vtanh.pop %v1911
    %v1914 = vtanh.pop %v1912
    %v1915 = vadd.f32 %v1913, 1.0
    %v1916 = vadd.f32 %v1914, 1.0
    %v1917 = vmul.f32 %v1915, 0.5
    %v1918 = vmul.f32 %v1916, 0.5
    %v1919 = vadd.f32 %v1713, %v901
    %v1920 = vmul.f32 %v1917, %v1919
    %v1921 = vadd.f32 %v1904, %v1920
    %v1922 = vtanh.pop %v1921
    %v1923 = vsub.f32 1.0, %v1918
    %v1924 = vmul.f32 %v1923, %v1922
    %v1925 = vmul.f32 %v1918, %v1452
    %v1926 = vadd.f32 %v1924, %v1925
    %v1927 = vpack.c.bf16 %v1926, %v1926
    %v1929 = vsel %vm409, %v1927, 0
    %1931 = vmatprep.subr.bf16.mxu0 %v968
    %1932 = vmatpush1.bf16.msra.mxu0 %v967
    %1933 = vmatprep.subr.bf16.mxu0 %v971
    %1934 = vmatpush1.bf16.msra.mxu0 %v970
    %1935 = vmatprep.subr.bf16.mxu0 0
    %1936 = vmatpush1.bf16.msra.mxu0 0
    %1937 = vmatprep.subr.bf16.mxu0 0
    %1938 = vmatpush1.bf16.msra.mxu0 0
    %1939 = vmatprep.subr.bf16.mxu0 0
    %1940 = vmatpush1.bf16.msra.mxu0 0
    %1941 = vmatprep.subr.bf16.mxu0 0
    %1942 = vmatpush1.bf16.msra.mxu0 0
    %1943 = vmatprep.subr.bf16.mxu0 0
    %1944 = vmatpush1.bf16.msra.mxu0 0
    %1945 = vmatprep.subr.bf16.mxu0 0
    %1946 = vmatpush1.bf16.msra.mxu0 0
    %1947 = vmatprep.subr.bf16.mxu0 0
    %1948 = vmatpush1.bf16.msra.mxu0 0
    %1949 = vmatprep.subr.bf16.mxu0 0
    %1950 = vmatpush1.bf16.msra.mxu0 0
    %1951 = vmatprep.subr.bf16.mxu0 0
    %1952 = vmatpush1.bf16.msra.mxu0 0
    %1953 = vmatprep.subr.bf16.mxu0 0
    %1954 = vmatpush1.bf16.msra.mxu0 0
    %1955 = vmatprep.subr.bf16.mxu0 0
    %1956 = vmatpush1.bf16.msra.mxu0 0
    %1957 = vmatprep.subr.bf16.mxu0 0
    %1958 = vmatpush1.bf16.msra.mxu0 0
    %1959 = vmatprep.subr.bf16.mxu0 0
    %1960 = vmatpush1.bf16.msra.mxu0 0
    %1961 = vmatprep.subr.bf16.mxu0 0
    %1962 = vmatpush1.bf16.msra.mxu0 0
    %1963 = vmatprep.mubr.bf16.mxu0 0
    %1964 = vmatmul.mubr.bf16.gmra.mrb[0].mxu0 %v1929
    %v1965 = vpop.f32.mrb[0].mxu0
    %v1966 = vadd.f32 %v935, %v1965
    %v1967 = vpop.f32.mrb[0].mxu0
    %v1968 = vadd.f32 %v939, %v1967
    %v1969 = vpop.f32.mrb[0].mxu0
    %v1970 = vpop.f32.mrb[0].mxu0
    %1971 = vdwg.mxu0
    %1972 = vmatprep.subr.bf16.mxu0 0
    %1973 = vmatpush1.bf16.msra.mxu0 %v969
    %1974 = vmatprep.subr.bf16.mxu0 0
    %1975 = vmatpush1.bf16.msra.mxu0 %v972
    %1976 = vmatprep.subr.bf16.mxu0 0
    %1977 = vmatpush1.bf16.msra.mxu0 0
    %1978 = vmatprep.subr.bf16.mxu0 0
    %1979 = vmatpush1.bf16.msra.mxu0 0
    %1980 = vmatprep.subr.bf16.mxu0 0
    %1981 = vmatpush1.bf16.msra.mxu0 0
    %1982 = vmatprep.subr.bf16.mxu0 0
    %1983 = vmatpush1.bf16.msra.mxu0 0
    %1984 = vmatprep.subr.bf16.mxu0 0
    %1985 = vmatpush1.bf16.msra.mxu0 0
    %1986 = vmatprep.subr.bf16.mxu0 0
    %1987 = vmatpush1.bf16.msra.mxu0 0
    %1988 = vmatprep.subr.bf16.mxu0 0
    %1989 = vmatpush1.bf16.msra.mxu0 0
    %1990 = vmatprep.subr.bf16.mxu0 0
    %1991 = vmatpush1.bf16.msra.mxu0 0
    %1992 = vmatprep.subr.bf16.mxu0 0
    %1993 = vmatpush1.bf16.msra.mxu0 0
    %1994 = vmatprep.subr.bf16.mxu0 0
    %1995 = vmatpush1.bf16.msra.mxu0 0
    %1996 = vmatprep.subr.bf16.mxu0 0
    %1997 = vmatpush1.bf16.msra.mxu0 0
    %1998 = vmatprep.subr.bf16.mxu0 0
    %1999 = vmatpush1.bf16.msra.mxu0 0
    %2000 = vmatprep.subr.bf16.mxu0 0
    %2001 = vmatpush1.bf16.msra.mxu0 0
    %2002 = vmatprep.subr.bf16.mxu0 0
    %2003 = vmatpush1.bf16.msra.mxu0 0
    %2004 = vmatprep.mubr.bf16.mxu0 0
    %2005 = vmatmul.mubr.bf16.gmra.mrb[0].mxu0 %v1929
    %v2006 = vpop.f32.mrb[0].mxu0
    %v2007 = vadd.f32 %v943, %v2006
    %v2008 = vpop.f32.mrb[0].mxu0
    %v2009 = vpop.f32.mrb[0].mxu0
    %v2010 = vpop.f32.mrb[0].mxu0
    %2011 = vdwg.mxu0
    %v2012 = vadd.f32 %v1966, %v1757
    %v2013 = vadd.f32 %v1968, %v1759
    %v2014 = vmul.f32 %v2012, 0.5
    %v2015 = vmul.f32 %v2013, 0.5
    %v2016 = vtanh.pop %v2014
    %v2017 = vtanh.pop %v2015
    %v2018 = vadd.f32 %v2016, 1.0
    %v2019 = vadd.f32 %v2017, 1.0
    %v2020 = vmul.f32 %v2018, 0.5
    %v2021 = vmul.f32 %v2019, 0.5
    %v2022 = vadd.f32 %v1798, %v1063
    %v2023 = vmul.f32 %v2020, %v2022
    %v2024 = vadd.f32 %v2007, %v2023
    %v2025 = vtanh.pop %v2024
    %v2026 = vsub.f32 1.0, %v2021
    %v2027 = vmul.f32 %v2026, %v2025
    %v2028 = vmul.f32 %v2021, %v1555
    %v2029 = vadd.f32 %v2027, %v2028
    %2030 = vmatprep.subr.bf16.mxu0 %v398
    %2031 = vmatpush1.bf16.msra.mxu0 %v397
    %2032 = vmatprep.subr.bf16.mxu0 %v401
    %2033 = vmatpush1.bf16.msra.mxu0 %v400
    %2034 = vmatprep.subr.bf16.mxu0 0
    %2035 = vmatpush1.bf16.msra.mxu0 0
    %2036 = vmatprep.subr.bf16.mxu0 0
    %2037 = vmatpush1.bf16.msra.mxu0 0
    %2038 = vmatprep.subr.bf16.mxu0 0
    %2039 = vmatpush1.bf16.msra.mxu0 0
    %2040 = vmatprep.subr.bf16.mxu0 0
    %2041 = vmatpush1.bf16.msra.mxu0 0
    %2042 = vmatprep.subr.bf16.mxu0 0
    %2043 = vmatpush1.bf16.msra.mxu0 0
    %2044 = vmatprep.subr.bf16.mxu0 0
    %2045 = vmatpush1.bf16.msra.mxu0 0
    %2046 = vmatprep.subr.bf16.mxu0 0
    %2047 = vmatpush1.bf16.msra.mxu0 0
    %2048 = vmatprep.subr.bf16.mxu0 0
    %2049 = vmatpush1.bf16.msra.mxu0 0
    %2050 = vmatprep.subr.bf16.mxu0 0
    %2051 = vmatpush1.bf16.msra.mxu0 0
    %2052 = vmatprep.subr.bf16.mxu0 0
    %2053 = vmatpush1.bf16.msra.mxu0 0
    %2054 = vmatprep.subr.bf16.mxu0 0
    %2055 = vmatpush1.bf16.msra.mxu0 0
    %2056 = vmatprep.subr.bf16.mxu0 0
    %2057 = vmatpush1.bf16.msra.mxu0 0
    %2058 = vmatprep.subr.bf16.mxu0 0
    %2059 = vmatpush1.bf16.msra.mxu0 0
    %2060 = vmatprep.subr.bf16.mxu0 0
    %2061 = vmatpush1.bf16.msra.mxu0 0
    %2062 = vmatprep.mubr.bf16.mxu0 0
    %2063 = vmatmul.mubr.bf16.gmra.mrb[0].mxu0 %v1826
    %v2064 = vpop.f32.mrb[0].mxu0
    %v2065 = vadd.f32 0.0, %v2064
    %v2066 = vpop.f32.mrb[0].mxu0
    %v2067 = vadd.f32 0.0, %v2066
    %v2068 = vpop.f32.mrb[0].mxu0
    %v2069 = vpop.f32.mrb[0].mxu0
    %2070 = vdwg.mxu0
    %2071 = vmatprep.subr.bf16.mxu0 0
    %2072 = vmatpush1.bf16.msra.mxu0 %v399
    %2073 = vmatprep.subr.bf16.mxu0 0
    %2074 = vmatpush1.bf16.msra.mxu0 %v402
    %2075 = vmatprep.subr.bf16.mxu0 0
    %2076 = vmatpush1.bf16.msra.mxu0 0
    %2077 = vmatprep.subr.bf16.mxu0 0
    %2078 = vmatpush1.bf16.msra.mxu0 0
    %2079 = vmatprep.subr.bf16.mxu0 0
    %2080 = vmatpush1.bf16.msra.mxu0 0
    %2081 = vmatprep.subr.bf16.mxu0 0
    %2082 = vmatpush1.bf16.msra.mxu0 0
    %2083 = vmatprep.subr.bf16.mxu0 0
    %2084 = vmatpush1.bf16.msra.mxu0 0
    %2085 = vmatprep.subr.bf16.mxu0 0
    %2086 = vmatpush1.bf16.msra.mxu0 0
    %2087 = vmatprep.subr.bf16.mxu0 0
    %2088 = vmatpush1.bf16.msra.mxu0 0
    %2089 = vmatprep.subr.bf16.mxu0 0
    %2090 = vmatpush1.bf16.msra.mxu0 0
    %2091 = vmatprep.subr.bf16.mxu0 0
    %2092 = vmatpush1.bf16.msra.mxu0 0
    %2093 = vmatprep.subr.bf16.mxu0 0
    %2094 = vmatpush1.bf16.msra.mxu0 0
    %2095 = vmatprep.subr.bf16.mxu0 0
    %2096 = vmatpush1.bf16.msra.mxu0 0
    %2097 = vmatprep.subr.bf16.mxu0 0
    %2098 = vmatpush1.bf16.msra.mxu0 0
    %2099 = vmatprep.subr.bf16.mxu0 0
    %2100 = vmatpush1.bf16.msra.mxu0 0
    %2101 = vmatprep.subr.bf16.mxu0 0
    %2102 = vmatpush1.bf16.msra.mxu0 0
    %2103 = vmatprep.mubr.bf16.mxu0 0
    %2104 = vmatmul.mubr.bf16.gmra.mrb[0].mxu0 %v1826
    %v2105 = vpop.f32.mrb[0].mxu0
    %v2106 = vadd.f32 0.0, %v2105
    %v2107 = vpop.f32.mrb[0].mxu0
    %v2108 = vpop.f32.mrb[0].mxu0
    %v2109 = vpop.f32.mrb[0].mxu0
    %2110 = vdwg.mxu0
    %2111 = vmatprep.subr.bf16.mxu0 %v523
    %2112 = vmatpush1.bf16.msra.mxu0 %v522
    %2113 = vmatprep.subr.bf16.mxu0 %v526
    %2114 = vmatpush1.bf16.msra.mxu0 %v525
    %2115 = vmatprep.subr.bf16.mxu0 0
    %2116 = vmatpush1.bf16.msra.mxu0 0
    %2117 = vmatprep.subr.bf16.mxu0 0
    %2118 = vmatpush1.bf16.msra.mxu0 0
    %2119 = vmatprep.subr.bf16.mxu0 0
    %2120 = vmatpush1.bf16.msra.mxu0 0
    %2121 = vmatprep.subr.bf16.mxu0 0
    %2122 = vmatpush1.bf16.msra.mxu0 0
    %2123 = vmatprep.subr.bf16.mxu0 0
    %2124 = vmatpush1.bf16.msra.mxu0 0
    %2125 = vmatprep.subr.bf16.mxu0 0
    %2126 = vmatpush1.bf16.msra.mxu0 0
    %2127 = vmatprep.subr.bf16.mxu0 0
    %2128 = vmatpush1.bf16.msra.mxu0 0
    %2129 = vmatprep.subr.bf16.mxu0 0
    %2130 = vmatpush1.bf16.msra.mxu0 0
    %2131 = vmatprep.subr.bf16.mxu0 0
    %2132 = vmatpush1.bf16.msra.mxu0 0
    %2133 = vmatprep.subr.bf16.mxu0 0
    %2134 = vmatpush1.bf16.msra.mxu0 0
    %2135 = vmatprep.subr.bf16.mxu0 0
    %2136 = vmatpush1.bf16.msra.mxu0 0
    %2137 = vmatprep.subr.bf16.mxu0 0
    %2138 = vmatpush1.bf16.msra.mxu0 0
    %2139 = vmatprep.subr.bf16.mxu0 0
    %2140 = vmatpush1.bf16.msra.mxu0 0
    %2141 = vmatprep.subr.bf16.mxu0 0
    %2142 = vmatpush1.bf16.msra.mxu0 0
    %2143 = vmatprep.mubr.bf16.mxu0 0
    %2144 = vmatmul.mubr.bf16.gmra.mrb[0].mxu0 %v1929
    %v2145 = vpop.f32.mrb[0].mxu0
    %v2146 = vadd.f32 0.0, %v2145
    %v2147 = vpop.f32.mrb[0].mxu0
    %v2148 = vadd.f32 0.0, %v2147
    %v2149 = vpop.f32.mrb[0].mxu0
    %v2150 = vpop.f32.mrb[0].mxu0
    %2151 = vdwg.mxu0
    %2152 = vmatprep.subr.bf16.mxu0 0
    %2153 = vmatpush1.bf16.msra.mxu0 %v524
    %2154 = vmatprep.subr.bf16.mxu0 0
    %2155 = vmatpush1.bf16.msra.mxu0 %v527
    %2156 = vmatprep.subr.bf16.mxu0 0
    %2157 = vmatpush1.bf16.msra.mxu0 0
    %2158 = vmatprep.subr.bf16.mxu0 0
    %2159 = vmatpush1.bf16.msra.mxu0 0
    %2160 = vmatprep.subr.bf16.mxu0 0
    %2161 = vmatpush1.bf16.msra.mxu0 0
    %2162 = vmatprep.subr.bf16.mxu0 0
    %2163 = vmatpush1.bf16.msra.mxu0 0
    %2164 = vmatprep.subr.bf16.mxu0 0
    %2165 = vmatpush1.bf16.msra.mxu0 0
    %2166 = vmatprep.subr.bf16.mxu0 0
    %2167 = vmatpush1.bf16.msra.mxu0 0
    %2168 = vmatprep.subr.bf16.mxu0 0
    %2169 = vmatpush1.bf16.msra.mxu0 0
    %2170 = vmatprep.subr.bf16.mxu0 0
    %2171 = vmatpush1.bf16.msra.mxu0 0
    %2172 = vmatprep.subr.bf16.mxu0 0
    %2173 = vmatpush1.bf16.msra.mxu0 0
    %2174 = vmatprep.subr.bf16.mxu0 0
    %2175 = vmatpush1.bf16.msra.mxu0 0
    %2176 = vmatprep.subr.bf16.mxu0 0
    %2177 = vmatpush1.bf16.msra.mxu0 0
    %2178 = vmatprep.subr.bf16.mxu0 0
    %2179 = vmatpush1.bf16.msra.mxu0 0
    %2180 = vmatprep.subr.bf16.mxu0 0
    %2181 = vmatpush1.bf16.msra.mxu0 0
    %2182 = vmatprep.subr.bf16.mxu0 0
    %2183 = vmatpush1.bf16.msra.mxu0 0
    %2184 = vmatprep.mubr.bf16.mxu0 0
    %2185 = vmatmul.mubr.bf16.gmra.mrb[0].mxu0 %v1929
    %v2186 = vpop.f32.mrb[0].mxu0
    %v2187 = vadd.f32 0.0, %v2186
    %v2188 = vpop.f32.mrb[0].mxu0
    %v2189 = vpop.f32.mrb[0].mxu0
    %v2190 = vpop.f32.mrb[0].mxu0
    %2191 = vdwg.mxu0
    %v2192 = vpack.c.bf16 %v2029, %v2029
    %v2194 = vsel %vm409, %v2192, 0
    %2196 = vmatprep.subr.bf16.mxu0 %v644
    %2197 = vmatpush1.bf16.msra.mxu0 %v643
    %2198 = vmatprep.subr.bf16.mxu0 %v647
    %2199 = vmatpush1.bf16.msra.mxu0 %v646
    %2200 = vmatprep.subr.bf16.mxu0 0
    %2201 = vmatpush1.bf16.msra.mxu0 0
    %2202 = vmatprep.subr.bf16.mxu0 0
    %2203 = vmatpush1.bf16.msra.mxu0 0
    %2204 = vmatprep.subr.bf16.mxu0 0
    %2205 = vmatpush1.bf16.msra.mxu0 0
    %2206 = vmatprep.subr.bf16.mxu0 0
    %2207 = vmatpush1.bf16.msra.mxu0 0
    %2208 = vmatprep.subr.bf16.mxu0 0
    %2209 = vmatpush1.bf16.msra.mxu0 0
    %2210 = vmatprep.subr.bf16.mxu0 0
    %2211 = vmatpush1.bf16.msra.mxu0 0
    %2212 = vmatprep.subr.bf16.mxu0 0
    %2213 = vmatpush1.bf16.msra.mxu0 0
    %2214 = vmatprep.subr.bf16.mxu0 0
    %2215 = vmatpush1.bf16.msra.mxu0 0
    %2216 = vmatprep.subr.bf16.mxu0 0
    %2217 = vmatpush1.bf16.msra.mxu0 0
    %2218 = vmatprep.subr.bf16.mxu0 0
    %2219 = vmatpush1.bf16.msra.mxu0 0
    %2220 = vmatprep.subr.bf16.mxu0 0
    %2221 = vmatpush1.bf16.msra.mxu0 0
    %2222 = vmatprep.subr.bf16.mxu0 0
    %2223 = vmatpush1.bf16.msra.mxu0 0
    %2224 = vmatprep.subr.bf16.mxu0 0
    %2225 = vmatpush1.bf16.msra.mxu0 0
    %2226 = vmatprep.subr.bf16.mxu0 0
    %2227 = vmatpush1.bf16.msra.mxu0 0
    %2228 = vmatprep.mubr.bf16.mxu0 0
    %2229 = vmatmul.mubr.bf16.gmra.mrb[0].mxu0 %v2194
    %v2230 = vpop.f32.mrb[0].mxu0
    %v2231 = vadd.f32 0.0, %v2230
    %v2232 = vpop.f32.mrb[0].mxu0
    %v2233 = vadd.f32 0.0, %v2232
    %v2234 = vpop.f32.mrb[0].mxu0
    %v2235 = vpop.f32.mrb[0].mxu0
    %2236 = vdwg.mxu0
    %2237 = vmatprep.subr.bf16.mxu0 0
    %2238 = vmatpush1.bf16.msra.mxu0 %v645
    %2239 = vmatprep.subr.bf16.mxu0 0
    %2240 = vmatpush1.bf16.msra.mxu0 %v648
    %2241 = vmatprep.subr.bf16.mxu0 0
    %2242 = vmatpush1.bf16.msra.mxu0 0
    %2243 = vmatprep.subr.bf16.mxu0 0
    %2244 = vmatpush1.bf16.msra.mxu0 0
    %2245 = vmatprep.subr.bf16.mxu0 0
    %2246 = vmatpush1.bf16.msra.mxu0 0
    %2247 = vmatprep.subr.bf16.mxu0 0
    %2248 = vmatpush1.bf16.msra.mxu0 0
    %2249 = vmatprep.subr.bf16.mxu0 0
    %2250 = vmatpush1.bf16.msra.mxu0 0
    %2251 = vmatprep.subr.bf16.mxu0 0
    %2252 = vmatpush1.bf16.msra.mxu0 0
    %2253 = vmatprep.subr.bf16.mxu0 0
    %2254 = vmatpush1.bf16.msra.mxu0 0
    %2255 = vmatprep.subr.bf16.mxu0 0
    %2256 = vmatpush1.bf16.msra.mxu0 0
    %2257 = vmatprep.subr.bf16.mxu0 0
    %2258 = vmatpush1.bf16.msra.mxu0 0
    %2259 = vmatprep.subr.bf16.mxu0 0
    %2260 = vmatpush1.bf16.msra.mxu0 0
    %2261 = vmatprep.subr.bf16.mxu0 0
    %2262 = vmatpush1.bf16.msra.mxu0 0
    %2263 = vmatprep.subr.bf16.mxu0 0
    %2264 = vmatpush1.bf16.msra.mxu0 0
    %2265 = vmatprep.subr.bf16.mxu0 0
    %2266 = vmatpush1.bf16.msra.mxu0 0
    %2267 = vmatprep.subr.bf16.mxu0 0
    %2268 = vmatpush1.bf16.msra.mxu0 0
    %2269 = vmatprep.mubr.bf16.mxu0 0
    %2270 = vmatmul.mubr.bf16.gmra.mrb[0].mxu0 %v2194
    %v2271 = vpop.f32.mrb[0].mxu0
    %v2272 = vadd.f32 0.0, %v2271
    %v2273 = vpop.f32.mrb[0].mxu0
    %v2274 = vpop.f32.mrb[0].mxu0
    %v2275 = vpop.f32.mrb[0].mxu0
    %2276 = vdwg.mxu0
    %v2277 = vld [vmem:[#allocation2 + $0x48] sm:$0xff]
    %v2278 = vld [vmem:[#allocation2 + $0x50] sm:$0xff]
    %v2279 = vld [vmem:[#allocation2 + $0x58] sm:$0xff]
    %v2280 = vadd.f32 %v2277, %v2065
    %v2281 = vadd.f32 %v2278, %v2067
    %v2282 = vmul.f32 %v2280, 0.5
    %v2283 = vmul.f32 %v2281, 0.5
    %v2284 = vtanh.pop %v2282
    %v2285 = vtanh.pop %v2283
    %v2286 = vadd.f32 %v2284, 1.0
    %v2287 = vadd.f32 %v2285, 1.0
    %v2288 = vmul.f32 %v2286, 0.5
    %v2289 = vmul.f32 %v2287, 0.5
    %v2290 = vadd.f32 %v2106, %v739
    %v2291 = vmul.f32 %v2288, %v2290
    %v2292 = vadd.f32 %v2279, %v2291
    %v2293 = vtanh.pop %v2292
    %v2294 = vsub.f32 1.0, %v2289
    %v2295 = vmul.f32 %v2294, %v2293
    %v2296 = vmul.f32 %v2289, %v1823
    %v2297 = vadd.f32 %v2295, %v2296
    %v2298 = vpack.c.bf16 %v2297, %v2297
    %v2300 = vsel %vm409, %v2298, 0
    %2302 = vmatprep.subr.bf16.mxu0 %v806
    %2303 = vmatpush1.bf16.msra.mxu0 %v805
    %2304 = vmatprep.subr.bf16.mxu0 %v809
    %2305 = vmatpush1.bf16.msra.mxu0 %v808
    %2306 = vmatprep.subr.bf16.mxu0 0
    %2307 = vmatpush1.bf16.msra.mxu0 0
    %2308 = vmatprep.subr.bf16.mxu0 0
    %2309 = vmatpush1.bf16.msra.mxu0 0
    %2310 = vmatprep.subr.bf16.mxu0 0
    %2311 = vmatpush1.bf16.msra.mxu0 0
    %2312 = vmatprep.subr.bf16.mxu0 0
    %2313 = vmatpush1.bf16.msra.mxu0 0
    %2314 = vmatprep.subr.bf16.mxu0 0
    %2315 = vmatpush1.bf16.msra.mxu0 0
    %2316 = vmatprep.subr.bf16.mxu0 0
    %2317 = vmatpush1.bf16.msra.mxu0 0
    %2318 = vmatprep.subr.bf16.mxu0 0
    %2319 = vmatpush1.bf16.msra.mxu0 0
    %2320 = vmatprep.subr.bf16.mxu0 0
    %2321 = vmatpush1.bf16.msra.mxu0 0
    %2322 = vmatprep.subr.bf16.mxu0 0
    %2323 = vmatpush1.bf16.msra.mxu0 0
    %2324 = vmatprep.subr.bf16.mxu0 0
    %2325 = vmatpush1.bf16.msra.mxu0 0
    %2326 = vmatprep.subr.bf16.mxu0 0
    %2327 = vmatpush1.bf16.msra.mxu0 0
    %2328 = vmatprep.subr.bf16.mxu0 0
    %2329 = vmatpush1.bf16.msra.mxu0 0
    %2330 = vmatprep.subr.bf16.mxu0 0
    %2331 = vmatpush1.bf16.msra.mxu0 0
    %2332 = vmatprep.subr.bf16.mxu0 0
    %2333 = vmatpush1.bf16.msra.mxu0 0
    %2334 = vmatprep.mubr.bf16.mxu0 0
    %2335 = vmatmul.mubr.bf16.gmra.mrb[0].mxu0 %v2300
    %v2336 = vpop.f32.mrb[0].mxu0
    %v2337 = vadd.f32 %v773, %v2336
    %v2338 = vpop.f32.mrb[0].mxu0
    %v2339 = vadd.f32 %v777, %v2338
    %v2340 = vpop.f32.mrb[0].mxu0
    %v2341 = vpop.f32.mrb[0].mxu0
    %2342 = vdwg.mxu0
    %2343 = vmatprep.subr.bf16.mxu0 0
    %2344 = vmatpush1.bf16.msra.mxu0 %v807
    %2345 = vmatprep.subr.bf16.mxu0 0
    %2346 = vmatpush1.bf16.msra.mxu0 %v810
    %2347 = vmatprep.subr.bf16.mxu0 0
    %2348 = vmatpush1.bf16.msra.mxu0 0
    %2349 = vmatprep.subr.bf16.mxu0 0
    %2350 = vmatpush1.bf16.msra.mxu0 0
    %2351 = vmatprep.subr.bf16.mxu0 0
    %2352 = vmatpush1.bf16.msra.mxu0 0
    %2353 = vmatprep.subr.bf16.mxu0 0
    %2354 = vmatpush1.bf16.msra.mxu0 0
    %2355 = vmatprep.subr.bf16.mxu0 0
    %2356 = vmatpush1.bf16.msra.mxu0 0
    %2357 = vmatprep.subr.bf16.mxu0 0
    %2358 = vmatpush1.bf16.msra.mxu0 0
    %2359 = vmatprep.subr.bf16.mxu0 0
    %2360 = vmatpush1.bf16.msra.mxu0 0
    %2361 = vmatprep.subr.bf16.mxu0 0
    %2362 = vmatpush1.bf16.msra.mxu0 0
    %2363 = vmatprep.subr.bf16.mxu0 0
    %2364 = vmatpush1.bf16.msra.mxu0 0
    %2365 = vmatprep.subr.bf16.mxu0 0
    %2366 = vmatpush1.bf16.msra.mxu0 0
    %2367 = vmatprep.subr.bf16.mxu0 0
    %2368 = vmatpush1.bf16.msra.mxu0 0
    %2369 = vmatprep.subr.bf16.mxu0 0
    %2370 = vmatpush1.bf16.msra.mxu0 0
    %2371 = vmatprep.subr.bf16.mxu0 0
    %2372 = vmatpush1.bf16.msra.mxu0 0
    %2373 = vmatprep.subr.bf16.mxu0 0
    %2374 = vmatpush1.bf16.msra.mxu0 0
    %2375 = vmatprep.mubr.bf16.mxu0 0
    %2376 = vmatmul.mubr.bf16.gmra.mrb[0].mxu0 %v2300
    %v2377 = vpop.f32.mrb[0].mxu0
    %v2378 = vadd.f32 %v781, %v2377
    %v2379 = vpop.f32.mrb[0].mxu0
    %v2380 = vpop.f32.mrb[0].mxu0
    %v2381 = vpop.f32.mrb[0].mxu0
    %2382 = vdwg.mxu0
    %v2383 = vadd.f32 %v2337, %v2146
    %v2384 = vadd.f32 %v2339, %v2148
    %v2385 = vmul.f32 %v2383, 0.5
    %v2386 = vmul.f32 %v2384, 0.5
    %v2387 = vtanh.pop %v2385
    %v2388 = vtanh.pop %v2386
    %v2389 = vadd.f32 %v2387, 1.0
    %v2390 = vadd.f32 %v2388, 1.0
    %v2391 = vmul.f32 %v2389, 0.5
    %v2392 = vmul.f32 %v2390, 0.5
    %v2393 = vadd.f32 %v2187, %v901
    %v2394 = vmul.f32 %v2391, %v2393
    %v2395 = vadd.f32 %v2378, %v2394
    %v2396 = vtanh.pop %v2395
    %v2397 = vsub.f32 1.0, %v2392
    %v2398 = vmul.f32 %v2397, %v2396
    %v2399 = vmul.f32 %v2392, %v1926
    %v2400 = vadd.f32 %v2398, %v2399
    %v2401 = vpack.c.bf16 %v2400, %v2400
    %v2403 = vsel %vm409, %v2401, 0
    %2405 = vmatprep.subr.bf16.mxu0 %v968
    %2406 = vmatpush1.bf16.msra.mxu0 %v967
    %2407 = vmatprep.subr.bf16.mxu0 %v971
    %2408 = vmatpush1.bf16.msra.mxu0 %v970
    %2409 = vmatprep.subr.bf16.mxu0 0
    %2410 = vmatpush1.bf16.msra.mxu0 0
    %2411 = vmatprep.subr.bf16.mxu0 0
    %2412 = vmatpush1.bf16.msra.mxu0 0
    %2413 = vmatprep.subr.bf16.mxu0 0
    %2414 = vmatpush1.bf16.msra.mxu0 0
    %2415 = vmatprep.subr.bf16.mxu0 0
    %2416 = vmatpush1.bf16.msra.mxu0 0
    %2417 = vmatprep.subr.bf16.mxu0 0
    %2418 = vmatpush1.bf16.msra.mxu0 0
    %2419 = vmatprep.subr.bf16.mxu0 0
    %2420 = vmatpush1.bf16.msra.mxu0 0
    %2421 = vmatprep.subr.bf16.mxu0 0
    %2422 = vmatpush1.bf16.msra.mxu0 0
    %2423 = vmatprep.subr.bf16.mxu0 0
    %2424 = vmatpush1.bf16.msra.mxu0 0
    %2425 = vmatprep.subr.bf16.mxu0 0
    %2426 = vmatpush1.bf16.msra.mxu0 0
    %2427 = vmatprep.subr.bf16.mxu0 0
    %2428 = vmatpush1.bf16.msra.mxu0 0
    %2429 = vmatprep.subr.bf16.mxu0 0
    %2430 = vmatpush1.bf16.msra.mxu0 0
    %2431 = vmatprep.subr.bf16.mxu0 0
    %2432 = vmatpush1.bf16.msra.mxu0 0
    %2433 = vmatprep.subr.bf16.mxu0 0
    %2434 = vmatpush1.bf16.msra.mxu0 0
    %2435 = vmatprep.subr.bf16.mxu0 0
    %2436 = vmatpush1.bf16.msra.mxu0 0
    %2437 = vmatprep.mubr.bf16.mxu0 0
    %2438 = vmatmul.mubr.bf16.gmra.mrb[0].mxu0 %v2403
    %v2439 = vpop.f32.mrb[0].mxu0
    %v2440 = vadd.f32 %v935, %v2439
    %v2441 = vpop.f32.mrb[0].mxu0
    %v2442 = vadd.f32 %v939, %v2441
    %v2443 = vpop.f32.mrb[0].mxu0
    %v2444 = vpop.f32.mrb[0].mxu0
    %2445 = vdwg.mxu0
    %2446 = vmatprep.subr.bf16.mxu0 0
    %2447 = vmatpush1.bf16.msra.mxu0 %v969
    %2448 = vmatprep.subr.bf16.mxu0 0
    %2449 = vmatpush1.bf16.msra.mxu0 %v972
    %2450 = vmatprep.subr.bf16.mxu0 0
    %2451 = vmatpush1.bf16.msra.mxu0 0
    %2452 = vmatprep.subr.bf16.mxu0 0
    %2453 = vmatpush1.bf16.msra.mxu0 0
    %2454 = vmatprep.subr.bf16.mxu0 0
    %2455 = vmatpush1.bf16.msra.mxu0 0
    %2456 = vmatprep.subr.bf16.mxu0 0
    %2457 = vmatpush1.bf16.msra.mxu0 0
    %2458 = vmatprep.subr.bf16.mxu0 0
    %2459 = vmatpush1.bf16.msra.mxu0 0
    %2460 = vmatprep.subr.bf16.mxu0 0
    %2461 = vmatpush1.bf16.msra.mxu0 0
    %2462 = vmatprep.subr.bf16.mxu0 0
    %2463 = vmatpush1.bf16.msra.mxu0 0
    %2464 = vmatprep.subr.bf16.mxu0 0
    %2465 = vmatpush1.bf16.msra.mxu0 0
    %2466 = vmatprep.subr.bf16.mxu0 0
    %2467 = vmatpush1.bf16.msra.mxu0 0
    %2468 = vmatprep.subr.bf16.mxu0 0
    %2469 = vmatpush1.bf16.msra.mxu0 0
    %2470 = vmatprep.subr.bf16.mxu0 0
    %2471 = vmatpush1.bf16.msra.mxu0 0
    %2472 = vmatprep.subr.bf16.mxu0 0
    %2473 = vmatpush1.bf16.msra.mxu0 0
    %2474 = vmatprep.subr.bf16.mxu0 0
    %2475 = vmatpush1.bf16.msra.mxu0 0
    %2476 = vmatprep.subr.bf16.mxu0 0
    %2477 = vmatpush1.bf16.msra.mxu0 0
    %2478 = vmatprep.mubr.bf16.mxu0 0
    %2479 = vmatmul.mubr.bf16.gmra.mrb[0].mxu0 %v2403
    %v2480 = vpop.f32.mrb[0].mxu0
    %v2481 = vadd.f32 %v943, %v2480
    %v2482 = vpop.f32.mrb[0].mxu0
    %v2483 = vpop.f32.mrb[0].mxu0
    %v2484 = vpop.f32.mrb[0].mxu0
    %2485 = vdwg.mxu0
    %v2486 = vadd.f32 %v2440, %v2231
    %v2487 = vadd.f32 %v2442, %v2233
    %v2488 = vmul.f32 %v2486, 0.5
    %v2489 = vmul.f32 %v2487, 0.5
    %v2490 = vtanh.pop %v2488
    %v2491 = vtanh.pop %v2489
    %v2492 = vadd.f32 %v2490, 1.0
    %v2493 = vadd.f32 %v2491, 1.0
    %v2494 = vmul.f32 %v2492, 0.5
    %v2495 = vmul.f32 %v2493, 0.5
    %v2496 = vadd.f32 %v2272, %v1063
    %v2497 = vmul.f32 %v2494, %v2496
    %v2498 = vadd.f32 %v2481, %v2497
    %v2499 = vtanh.pop %v2498
    %v2500 = vsub.f32 1.0, %v2495
    %v2501 = vmul.f32 %v2500, %v2499
    %v2502 = vmul.f32 %v2495, %v2029
    %v2503 = vadd.f32 %v2501, %v2502
    %2504 = vmatprep.subr.bf16.mxu0 %v398
    %2505 = vmatpush1.bf16.msra.mxu0 %v397
    %2506 = vmatprep.subr.bf16.mxu0 %v401
    %2507 = vmatpush1.bf16.msra.mxu0 %v400
    %2508 = vmatprep.subr.bf16.mxu0 0
    %2509 = vmatpush1.bf16.msra.mxu0 0
    %2510 = vmatprep.subr.bf16.mxu0 0
    %2511 = vmatpush1.bf16.msra.mxu0 0
    %2512 = vmatprep.subr.bf16.mxu0 0
    %2513 = vmatpush1.bf16.msra.mxu0 0
    %2514 = vmatprep.subr.bf16.mxu0 0
    %2515 = vmatpush1.bf16.msra.mxu0 0
    %2516 = vmatprep.subr.bf16.mxu0 0
    %2517 = vmatpush1.bf16.msra.mxu0 0
    %2518 = vmatprep.subr.bf16.mxu0 0
    %2519 = vmatpush1.bf16.msra.mxu0 0
    %2520 = vmatprep.subr.bf16.mxu0 0
    %2521 = vmatpush1.bf16.msra.mxu0 0
    %2522 = vmatprep.subr.bf16.mxu0 0
    %2523 = vmatpush1.bf16.msra.mxu0 0
    %2524 = vmatprep.subr.bf16.mxu0 0
    %2525 = vmatpush1.bf16.msra.mxu0 0
    %2526 = vmatprep.subr.bf16.mxu0 0
    %2527 = vmatpush1.bf16.msra.mxu0 0
    %2528 = vmatprep.subr.bf16.mxu0 0
    %2529 = vmatpush1.bf16.msra.mxu0 0
    %2530 = vmatprep.subr.bf16.mxu0 0
    %2531 = vmatpush1.bf16.msra.mxu0 0
    %2532 = vmatprep.subr.bf16.mxu0 0
    %2533 = vmatpush1.bf16.msra.mxu0 0
    %2534 = vmatprep.subr.bf16.mxu0 0
    %2535 = vmatpush1.bf16.msra.mxu0 0
    %2536 = vmatprep.mubr.bf16.mxu0 0
    %2537 = vmatmul.mubr.bf16.gmra.mrb[0].mxu0 %v2300
    %v2538 = vpop.f32.mrb[0].mxu0
    %v2539 = vadd.f32 0.0, %v2538
    %v2540 = vpop.f32.mrb[0].mxu0
    %v2541 = vadd.f32 0.0, %v2540
    %v2542 = vpop.f32.mrb[0].mxu0
    %v2543 = vpop.f32.mrb[0].mxu0
    %2544 = vdwg.mxu0
    %2545 = vmatprep.subr.bf16.mxu0 0
    %2546 = vmatpush1.bf16.msra.mxu0 %v399
    %2547 = vmatprep.subr.bf16.mxu0 0
    %2548 = vmatpush1.bf16.msra.mxu0 %v402
    %2549 = vmatprep.subr.bf16.mxu0 0
    %2550 = vmatpush1.bf16.msra.mxu0 0
    %2551 = vmatprep.subr.bf16.mxu0 0
    %2552 = vmatpush1.bf16.msra.mxu0 0
    %2553 = vmatprep.subr.bf16.mxu0 0
    %2554 = vmatpush1.bf16.msra.mxu0 0
    %2555 = vmatprep.subr.bf16.mxu0 0
    %2556 = vmatpush1.bf16.msra.mxu0 0
    %2557 = vmatprep.subr.bf16.mxu0 0
    %2558 = vmatpush1.bf16.msra.mxu0 0
    %2559 = vmatprep.subr.bf16.mxu0 0
    %2560 = vmatpush1.bf16.msra.mxu0 0
    %2561 = vmatprep.subr.bf16.mxu0 0
    %2562 = vmatpush1.bf16.msra.mxu0 0
    %2563 = vmatprep.subr.bf16.mxu0 0
    %2564 = vmatpush1.bf16.msra.mxu0 0
    %2565 = vmatprep.subr.bf16.mxu0 0
    %2566 = vmatpush1.bf16.msra.mxu0 0
    %2567 = vmatprep.subr.bf16.mxu0 0
    %2568 = vmatpush1.bf16.msra.mxu0 0
    %2569 = vmatprep.subr.bf16.mxu0 0
    %2570 = vmatpush1.bf16.msra.mxu0 0
    %2571 = vmatprep.subr.bf16.mxu0 0
    %2572 = vmatpush1.bf16.msra.mxu0 0
    %2573 = vmatprep.subr.bf16.mxu0 0
    %2574 = vmatpush1.bf16.msra.mxu0 0
    %2575 = vmatprep.subr.bf16.mxu0 0
    %2576 = vmatpush1.bf16.msra.mxu0 0
    %2577 = vmatprep.mubr.bf16.mxu0 0
    %2578 = vmatmul.mubr.bf16.gmra.mrb[0].mxu0 %v2300
    %v2579 = vpop.f32.mrb[0].mxu0
    %v2580 = vadd.f32 0.0, %v2579
    %v2581 = vpop.f32.mrb[0].mxu0
    %v2582 = vpop.f32.mrb[0].mxu0
    %v2583 = vpop.f32.mrb[0].mxu0
    %2584 = vdwg.mxu0
    %2585 = vmatprep.subr.bf16.mxu0 %v523
    %2586 = vmatpush1.bf16.msra.mxu0 %v522
    %2587 = vmatprep.subr.bf16.mxu0 %v526
    %2588 = vmatpush1.bf16.msra.mxu0 %v525
    %2589 = vmatprep.subr.bf16.mxu0 0
    %2590 = vmatpush1.bf16.msra.mxu0 0
    %2591 = vmatprep.subr.bf16.mxu0 0
    %2592 = vmatpush1.bf16.msra.mxu0 0
    %2593 = vmatprep.subr.bf16.mxu0 0
    %2594 = vmatpush1.bf16.msra.mxu0 0
    %2595 = vmatprep.subr.bf16.mxu0 0
    %2596 = vmatpush1.bf16.msra.mxu0 0
    %2597 = vmatprep.subr.bf16.mxu0 0
    %2598 = vmatpush1.bf16.msra.mxu0 0
    %2599 = vmatprep.subr.bf16.mxu0 0
    %2600 = vmatpush1.bf16.msra.mxu0 0
    %2601 = vmatprep.subr.bf16.mxu0 0
    %2602 = vmatpush1.bf16.msra.mxu0 0
    %2603 = vmatprep.subr.bf16.mxu0 0
    %2604 = vmatpush1.bf16.msra.mxu0 0
    %2605 = vmatprep.subr.bf16.mxu0 0
    %2606 = vmatpush1.bf16.msra.mxu0 0
    %2607 = vmatprep.subr.bf16.mxu0 0
    %2608 = vmatpush1.bf16.msra.mxu0 0
    %2609 = vmatprep.subr.bf16.mxu0 0
    %2610 = vmatpush1.bf16.msra.mxu0 0
    %2611 = vmatprep.subr.bf16.mxu0 0
    %2612 = vmatpush1.bf16.msra.mxu0 0
    %2613 = vmatprep.subr.bf16.mxu0 0
    %2614 = vmatpush1.bf16.msra.mxu0 0
    %2615 = vmatprep.subr.bf16.mxu0 0
    %2616 = vmatpush1.bf16.msra.mxu0 0
    %2617 = vmatprep.mubr.bf16.mxu0 0
    %2618 = vmatmul.mubr.bf16.gmra.mrb[0].mxu0 %v2403
    %v2619 = vpop.f32.mrb[0].mxu0
    %v2620 = vadd.f32 0.0, %v2619
    %v2621 = vpop.f32.mrb[0].mxu0
    %v2622 = vadd.f32 0.0, %v2621
    %v2623 = vpop.f32.mrb[0].mxu0
    %v2624 = vpop.f32.mrb[0].mxu0
    %2625 = vdwg.mxu0
    %2626 = vmatprep.subr.bf16.mxu0 0
    %2627 = vmatpush1.bf16.msra.mxu0 %v524
    %2628 = vmatprep.subr.bf16.mxu0 0
    %2629 = vmatpush1.bf16.msra.mxu0 %v527
    %2630 = vmatprep.subr.bf16.mxu0 0
    %2631 = vmatpush1.bf16.msra.mxu0 0
    %2632 = vmatprep.subr.bf16.mxu0 0
    %2633 = vmatpush1.bf16.msra.mxu0 0
    %2634 = vmatprep.subr.bf16.mxu0 0
    %2635 = vmatpush1.bf16.msra.mxu0 0
    %2636 = vmatprep.subr.bf16.mxu0 0
    %2637 = vmatpush1.bf16.msra.mxu0 0
    %2638 = vmatprep.subr.bf16.mxu0 0
    %2639 = vmatpush1.bf16.msra.mxu0 0
    %2640 = vmatprep.subr.bf16.mxu0 0
    %2641 = vmatpush1.bf16.msra.mxu0 0
    %2642 = vmatprep.subr.bf16.mxu0 0
    %2643 = vmatpush1.bf16.msra.mxu0 0
    %2644 = vmatprep.subr.bf16.mxu0 0
    %2645 = vmatpush1.bf16.msra.mxu0 0
    %2646 = vmatprep.subr.bf16.mxu0 0
    %2647 = vmatpush1.bf16.msra.mxu0 0
    %2648 = vmatprep.subr.bf16.mxu0 0
    %2649 = vmatpush1.bf16.msra.mxu0 0
    %2650 = vmatprep.subr.bf16.mxu0 0
    %2651 = vmatpush1.bf16.msra.mxu0 0
    %2652 = vmatprep.subr.bf16.mxu0 0
    %2653 = vmatpush1.bf16.msra.mxu0 0
    %2654 = vmatprep.subr.bf16.mxu0 0
    %2655 = vmatpush1.bf16.msra.mxu0 0
    %2656 = vmatprep.subr.bf16.mxu0 0
    %2657 = vmatpush1.bf16.msra.mxu0 0
    %2658 = vmatprep.mubr.bf16.mxu0 0
    %2659 = vmatmul.mubr.bf16.gmra.mrb[0].mxu0 %v2403
    %v2660 = vpop.f32.mrb[0].mxu0
    %v2661 = vadd.f32 0.0, %v2660
    %v2662 = vpop.f32.mrb[0].mxu0
    %v2663 = vpop.f32.mrb[0].mxu0
    %v2664 = vpop.f32.mrb[0].mxu0
    %2665 = vdwg.mxu0
    %v2666 = vpack.c.bf16 %v2503, %v2503
    %v2668 = vsel %vm409, %v2666, 0
    %2670 = vmatprep.subr.bf16.mxu0 %v644
    %2671 = vmatpush1.bf16.msra.mxu0 %v643
    %2672 = vmatprep.subr.bf16.mxu0 %v647
    %2673 = vmatpush1.bf16.msra.mxu0 %v646
    %2674 = vmatprep.subr.bf16.mxu0 0
    %2675 = vmatpush1.bf16.msra.mxu0 0
    %2676 = vmatprep.subr.bf16.mxu0 0
    %2677 = vmatpush1.bf16.msra.mxu0 0
    %2678 = vmatprep.subr.bf16.mxu0 0
    %2679 = vmatpush1.bf16.msra.mxu0 0
    %2680 = vmatprep.subr.bf16.mxu0 0
    %2681 = vmatpush1.bf16.msra.mxu0 0
    %2682 = vmatprep.subr.bf16.mxu0 0
    %2683 = vmatpush1.bf16.msra.mxu0 0
    %2684 = vmatprep.subr.bf16.mxu0 0
    %2685 = vmatpush1.bf16.msra.mxu0 0
    %2686 = vmatprep.subr.bf16.mxu0 0
    %2687 = vmatpush1.bf16.msra.mxu0 0
    %2688 = vmatprep.subr.bf16.mxu0 0
    %2689 = vmatpush1.bf16.msra.mxu0 0
    %2690 = vmatprep.subr.bf16.mxu0 0
    %2691 = vmatpush1.bf16.msra.mxu0 0
    %2692 = vmatprep.subr.bf16.mxu0 0
    %2693 = vmatpush1.bf16.msra.mxu0 0
    %2694 = vmatprep.subr.bf16.mxu0 0
    %2695 = vmatpush1.bf16.msra.mxu0 0
    %2696 = vmatprep.subr.bf16.mxu0 0
    %2697 = vmatpush1.bf16.msra.mxu0 0
    %2698 = vmatprep.subr.bf16.mxu0 0
    %2699 = vmatpush1.bf16.msra.mxu0 0
    %2700 = vmatprep.subr.bf16.mxu0 0
    %2701 = vmatpush1.bf16.msra.mxu0 0
    %2702 = vmatprep.mubr.bf16.mxu0 0
    %2703 = vmatmul.mubr.bf16.gmra.mrb[0].mxu0 %v2668
    %v2704 = vpop.f32.mrb[0].mxu0
    %v2705 = vadd.f32 0.0, %v2704
    %v2706 = vpop.f32.mrb[0].mxu0
    %v2707 = vadd.f32 0.0, %v2706
    %v2708 = vpop.f32.mrb[0].mxu0
    %v2709 = vpop.f32.mrb[0].mxu0
    %2710 = vdwg.mxu0
    %2711 = vmatprep.subr.bf16.mxu0 0
    %2712 = vmatpush1.bf16.msra.mxu0 %v645
    %2713 = vmatprep.subr.bf16.mxu0 0
    %2714 = vmatpush1.bf16.msra.mxu0 %v648
    %2715 = vmatprep.subr.bf16.mxu0 0
    %2716 = vmatpush1.bf16.msra.mxu0 0
    %2717 = vmatprep.subr.bf16.mxu0 0
    %2718 = vmatpush1.bf16.msra.mxu0 0
    %2719 = vmatprep.subr.bf16.mxu0 0
    %2720 = vmatpush1.bf16.msra.mxu0 0
    %2721 = vmatprep.subr.bf16.mxu0 0
    %2722 = vmatpush1.bf16.msra.mxu0 0
    %2723 = vmatprep.subr.bf16.mxu0 0
    %2724 = vmatpush1.bf16.msra.mxu0 0
    %2725 = vmatprep.subr.bf16.mxu0 0
    %2726 = vmatpush1.bf16.msra.mxu0 0
    %2727 = vmatprep.subr.bf16.mxu0 0
    %2728 = vmatpush1.bf16.msra.mxu0 0
    %2729 = vmatprep.subr.bf16.mxu0 0
    %2730 = vmatpush1.bf16.msra.mxu0 0
    %2731 = vmatprep.subr.bf16.mxu0 0
    %2732 = vmatpush1.bf16.msra.mxu0 0
    %2733 = vmatprep.subr.bf16.mxu0 0
    %2734 = vmatpush1.bf16.msra.mxu0 0
    %2735 = vmatprep.subr.bf16.mxu0 0
    %2736 = vmatpush1.bf16.msra.mxu0 0
    %2737 = vmatprep.subr.bf16.mxu0 0
    %2738 = vmatpush1.bf16.msra.mxu0 0
    %2739 = vmatprep.subr.bf16.mxu0 0
    %2740 = vmatpush1.bf16.msra.mxu0 0
    %2741 = vmatprep.subr.bf16.mxu0 0
    %2742 = vmatpush1.bf16.msra.mxu0 0
    %2743 = vmatprep.mubr.bf16.mxu0 0
    %2744 = vmatmul.mubr.bf16.gmra.mrb[0].mxu0 %v2668
    %v2745 = vpop.f32.mrb[0].mxu0
    %v2746 = vadd.f32 0.0, %v2745
    %v2747 = vpop.f32.mrb[0].mxu0
    %v2748 = vpop.f32.mrb[0].mxu0
    %v2749 = vpop.f32.mrb[0].mxu0
    %2750 = vdwg.mxu0
    %v2751 = vld [vmem:[#allocation2 + $0x60] sm:$0xff]
    %v2752 = vld [vmem:[#allocation2 + $0x68] sm:$0xff]
    %v2753 = vld [vmem:[#allocation2 + $0x70] sm:$0xff]
    %v2754 = vadd.f32 %v2751, %v2539
    %v2755 = vadd.f32 %v2752, %v2541
    %v2756 = vmul.f32 %v2754, 0.5
    %v2757 = vmul.f32 %v2755, 0.5
    %v2758 = vtanh.pop %v2756
    %v2759 = vtanh.pop %v2757
    %v2760 = vadd.f32 %v2758, 1.0
    %v2761 = vadd.f32 %v2759, 1.0
    %v2762 = vmul.f32 %v2760, 0.5
    %v2763 = vmul.f32 %v2761, 0.5
    %v2764 = vadd.f32 %v2580, %v739
    %v2765 = vmul.f32 %v2762, %v2764
    %v2766 = vadd.f32 %v2753, %v2765
    %v2767 = vtanh.pop %v2766
    %v2768 = vsub.f32 1.0, %v2763
    %v2769 = vmul.f32 %v2768, %v2767
    %v2770 = vmul.f32 %v2763, %v2297
    %v2771 = vadd.f32 %v2769, %v2770
    %v2772 = vpack.c.bf16 %v2771, %v2771
    %v2774 = vsel %vm409, %v2772, 0
    %2776 = vmatprep.subr.bf16.mxu0 %v806
    %2777 = vmatpush1.bf16.msra.mxu0 %v805
    %2778 = vmatprep.subr.bf16.mxu0 %v809
    %2779 = vmatpush1.bf16.msra.mxu0 %v808
    %2780 = vmatprep.subr.bf16.mxu0 0
    %2781 = vmatpush1.bf16.msra.mxu0 0
    %2782 = vmatprep.subr.bf16.mxu0 0
    %2783 = vmatpush1.bf16.msra.mxu0 0
    %2784 = vmatprep.subr.bf16.mxu0 0
    %2785 = vmatpush1.bf16.msra.mxu0 0
    %2786 = vmatprep.subr.bf16.mxu0 0
    %2787 = vmatpush1.bf16.msra.mxu0 0
    %2788 = vmatprep.subr.bf16.mxu0 0
    %2789 = vmatpush1.bf16.msra.mxu0 0
    %2790 = vmatprep.subr.bf16.mxu0 0
    %2791 = vmatpush1.bf16.msra.mxu0 0
    %2792 = vmatprep.subr.bf16.mxu0 0
    %2793 = vmatpush1.bf16.msra.mxu0 0
    %2794 = vmatprep.subr.bf16.mxu0 0
    %2795 = vmatpush1.bf16.msra.mxu0 0
    %2796 = vmatprep.subr.bf16.mxu0 0
    %2797 = vmatpush1.bf16.msra.mxu0 0
    %2798 = vmatprep.subr.bf16.mxu0 0
    %2799 = vmatpush1.bf16.msra.mxu0 0
    %2800 = vmatprep.subr.bf16.mxu0 0
    %2801 = vmatpush1.bf16.msra.mxu0 0
    %2802 = vmatprep.subr.bf16.mxu0 0
    %2803 = vmatpush1.bf16.msra.mxu0 0
    %2804 = vmatprep.subr.bf16.mxu0 0
    %2805 = vmatpush1.bf16.msra.mxu0 0
    %2806 = vmatprep.subr.bf16.mxu0 0
    %2807 = vmatpush1.bf16.msra.mxu0 0
    %2808 = vmatprep.mubr.bf16.mxu0 0
    %2809 = vmatmul.mubr.bf16.gmra.mrb[0].mxu0 %v2774
    %v2810 = vpop.f32.mrb[0].mxu0
    %v2811 = vadd.f32 %v773, %v2810
    %v2812 = vpop.f32.mrb[0].mxu0
    %v2813 = vadd.f32 %v777, %v2812
    %v2814 = vpop.f32.mrb[0].mxu0
    %v2815 = vpop.f32.mrb[0].mxu0
    %2816 = vdwg.mxu0
    %2817 = vmatprep.subr.bf16.mxu0 0
    %2818 = vmatpush1.bf16.msra.mxu0 %v807
    %2819 = vmatprep.subr.bf16.mxu0 0
    %2820 = vmatpush1.bf16.msra.mxu0 %v810
    %2821 = vmatprep.subr.bf16.mxu0 0
    %2822 = vmatpush1.bf16.msra.mxu0 0
    %2823 = vmatprep.subr.bf16.mxu0 0
    %2824 = vmatpush1.bf16.msra.mxu0 0
    %2825 = vmatprep.subr.bf16.mxu0 0
    %2826 = vmatpush1.bf16.msra.mxu0 0
    %2827 = vmatprep.subr.bf16.mxu0 0
    %2828 = vmatpush1.bf16.msra.mxu0 0
    %2829 = vmatprep.subr.bf16.mxu0 0
    %2830 = vmatpush1.bf16.msra.mxu0 0
    %2831 = vmatprep.subr.bf16.mxu0 0
    %2832 = vmatpush1.bf16.msra.mxu0 0
    %2833 = vmatprep.subr.bf16.mxu0 0
    %2834 = vmatpush1.bf16.msra.mxu0 0
    %2835 = vmatprep.subr.bf16.mxu0 0
    %2836 = vmatpush1.bf16.msra.mxu0 0
    %2837 = vmatprep.subr.bf16.mxu0 0
    %2838 = vmatpush1.bf16.msra.mxu0 0
    %2839 = vmatprep.subr.bf16.mxu0 0
    %2840 = vmatpush1.bf16.msra.mxu0 0
    %2841 = vmatprep.subr.bf16.mxu0 0
    %2842 = vmatpush1.bf16.msra.mxu0 0
    %2843 = vmatprep.subr.bf16.mxu0 0
    %2844 = vmatpush1.bf16.msra.mxu0 0
    %2845 = vmatprep.subr.bf16.mxu0 0
    %2846 = vmatpush1.bf16.msra.mxu0 0
    %2847 = vmatprep.subr.bf16.mxu0 0
    %2848 = vmatpush1.bf16.msra.mxu0 0
    %2849 = vmatprep.mubr.bf16.mxu0 0
    %2850 = vmatmul.mubr.bf16.gmra.mrb[0].mxu0 %v2774
    %v2851 = vpop.f32.mrb[0].mxu0
    %v2852 = vadd.f32 %v781, %v2851
    %v2853 = vpop.f32.mrb[0].mxu0
    %v2854 = vpop.f32.mrb[0].mxu0
    %v2855 = vpop.f32.mrb[0].mxu0
    %2856 = vdwg.mxu0
    %v2857 = vadd.f32 %v2811, %v2620
    %v2858 = vadd.f32 %v2813, %v2622
    %v2859 = vmul.f32 %v2857, 0.5
    %v2860 = vmul.f32 %v2858, 0.5
    %v2861 = vtanh.pop %v2859
    %v2862 = vtanh.pop %v2860
    %v2863 = vadd.f32 %v2861, 1.0
    %v2864 = vadd.f32 %v2862, 1.0
    %v2865 = vmul.f32 %v2863, 0.5
    %v2866 = vmul.f32 %v2864, 0.5
    %v2867 = vadd.f32 %v2661, %v901
    %v2868 = vmul.f32 %v2865, %v2867
    %v2869 = vadd.f32 %v2852, %v2868
    %v2870 = vtanh.pop %v2869
    %v2871 = vsub.f32 1.0, %v2866
    %v2872 = vmul.f32 %v2871, %v2870
    %v2873 = vmul.f32 %v2866, %v2400
    %v2874 = vadd.f32 %v2872, %v2873
    %v2875 = vpack.c.bf16 %v2874, %v2874
    %v2877 = vsel %vm409, %v2875, 0
    %2879 = vmatprep.subr.bf16.mxu0 %v968
    %2880 = vmatpush1.bf16.msra.mxu0 %v967
    %2881 = vmatprep.subr.bf16.mxu0 %v971
    %2882 = vmatpush1.bf16.msra.mxu0 %v970
    %2883 = vmatprep.subr.bf16.mxu0 0
    %2884 = vmatpush1.bf16.msra.mxu0 0
    %2885 = vmatprep.subr.bf16.mxu0 0
    %2886 = vmatpush1.bf16.msra.mxu0 0
    %2887 = vmatprep.subr.bf16.mxu0 0
    %2888 = vmatpush1.bf16.msra.mxu0 0
    %2889 = vmatprep.subr.bf16.mxu0 0
    %2890 = vmatpush1.bf16.msra.mxu0 0
    %2891 = vmatprep.subr.bf16.mxu0 0
    %2892 = vmatpush1.bf16.msra.mxu0 0
    %2893 = vmatprep.subr.bf16.mxu0 0
    %2894 = vmatpush1.bf16.msra.mxu0 0
    %2895 = vmatprep.subr.bf16.mxu0 0
    %2896 = vmatpush1.bf16.msra.mxu0 0
    %2897 = vmatprep.subr.bf16.mxu0 0
    %2898 = vmatpush1.bf16.msra.mxu0 0
    %2899 = vmatprep.subr.bf16.mxu0 0
    %2900 = vmatpush1.bf16.msra.mxu0 0
    %2901 = vmatprep.subr.bf16.mxu0 0
    %2902 = vmatpush1.bf16.msra.mxu0 0
    %2903 = vmatprep.subr.bf16.mxu0 0
    %2904 = vmatpush1.bf16.msra.mxu0 0
    %2905 = vmatprep.subr.bf16.mxu0 0
    %2906 = vmatpush1.bf16.msra.mxu0 0
    %2907 = vmatprep.subr.bf16.mxu0 0
    %2908 = vmatpush1.bf16.msra.mxu0 0
    %2909 = vmatprep.subr.bf16.mxu0 0
    %2910 = vmatpush1.bf16.msra.mxu0 0
    %2911 = vmatprep.mubr.bf16.mxu0 0
    %2912 = vmatmul.mubr.bf16.gmra.mrb[0].mxu0 %v2877
    %v2913 = vpop.f32.mrb[0].mxu0
    %v2914 = vadd.f32 %v935, %v2913
    %v2915 = vpop.f32.mrb[0].mxu0
    %v2916 = vadd.f32 %v939, %v2915
    %v2917 = vpop.f32.mrb[0].mxu0
    %v2918 = vpop.f32.mrb[0].mxu0
    %2919 = vdwg.mxu0
    %2920 = vmatprep.subr.bf16.mxu0 0
    %2921 = vmatpush1.bf16.msra.mxu0 %v969
    %2922 = vmatprep.subr.bf16.mxu0 0
    %2923 = vmatpush1.bf16.msra.mxu0 %v972
    %2924 = vmatprep.subr.bf16.mxu0 0
    %2925 = vmatpush1.bf16.msra.mxu0 0
    %2926 = vmatprep.subr.bf16.mxu0 0
    %2927 = vmatpush1.bf16.msra.mxu0 0
    %2928 = vmatprep.subr.bf16.mxu0 0
    %2929 = vmatpush1.bf16.msra.mxu0 0
    %2930 = vmatprep.subr.bf16.mxu0 0
    %2931 = vmatpush1.bf16.msra.mxu0 0
    %2932 = vmatprep.subr.bf16.mxu0 0
    %2933 = vmatpush1.bf16.msra.mxu0 0
    %2934 = vmatprep.subr.bf16.mxu0 0
    %2935 = vmatpush1.bf16.msra.mxu0 0
    %2936 = vmatprep.subr.bf16.mxu0 0
    %2937 = vmatpush1.bf16.msra.mxu0 0
    %2938 = vmatprep.subr.bf16.mxu0 0
    %2939 = vmatpush1.bf16.msra.mxu0 0
    %2940 = vmatprep.subr.bf16.mxu0 0
    %2941 = vmatpush1.bf16.msra.mxu0 0
    %2942 = vmatprep.subr.bf16.mxu0 0
    %2943 = vmatpush1.bf16.msra.mxu0 0
    %2944 = vmatprep.subr.bf16.mxu0 0
    %2945 = vmatpush1.bf16.msra.mxu0 0
    %2946 = vmatprep.subr.bf16.mxu0 0
    %2947 = vmatpush1.bf16.msra.mxu0 0
    %2948 = vmatprep.subr.bf16.mxu0 0
    %2949 = vmatpush1.bf16.msra.mxu0 0
    %2950 = vmatprep.subr.bf16.mxu0 0
    %2951 = vmatpush1.bf16.msra.mxu0 0
    %2952 = vmatprep.mubr.bf16.mxu0 0
    %2953 = vmatmul.mubr.bf16.gmra.mrb[0].mxu0 %v2877
    %v2954 = vpop.f32.mrb[0].mxu0
    %v2955 = vadd.f32 %v943, %v2954
    %v2956 = vpop.f32.mrb[0].mxu0
    %v2957 = vpop.f32.mrb[0].mxu0
    %v2958 = vpop.f32.mrb[0].mxu0
    %2959 = vdwg.mxu0
    %v2960 = vadd.f32 %v2914, %v2705
    %v2961 = vadd.f32 %v2916, %v2707
    %v2962 = vmul.f32 %v2960, 0.5
    %v2963 = vmul.f32 %v2961, 0.5
    %v2964 = vtanh.pop %v2962
    %v2965 = vtanh.pop %v2963
    %v2966 = vadd.f32 %v2964, 1.0
    %v2967 = vadd.f32 %v2965, 1.0
    %v2968 = vmul.f32 %v2966, 0.5
    %v2969 = vmul.f32 %v2967, 0.5
    %v2970 = vadd.f32 %v2746, %v1063
    %v2971 = vmul.f32 %v2968, %v2970
    %v2972 = vadd.f32 %v2955, %v2971
    %v2973 = vtanh.pop %v2972
    %v2974 = vsub.f32 1.0, %v2969
    %v2975 = vmul.f32 %v2974, %v2973
    %v2976 = vmul.f32 %v2969, %v2503
    %v2977 = vadd.f32 %v2975, %v2976
    %2978 = vmatprep.subr.bf16.mxu0 %v398
    %2979 = vmatpush1.bf16.msra.mxu0 %v397
    %2980 = vmatprep.subr.bf16.mxu0 %v401
    %2981 = vmatpush1.bf16.msra.mxu0 %v400
    %2982 = vmatprep.subr.bf16.mxu0 0
    %2983 = vmatpush1.bf16.msra.mxu0 0
    %2984 = vmatprep.subr.bf16.mxu0 0
    %2985 = vmatpush1.bf16.msra.mxu0 0
    %2986 = vmatprep.subr.bf16.mxu0 0
    %2987 = vmatpush1.bf16.msra.mxu0 0
    %2988 = vmatprep.subr.bf16.mxu0 0
    %2989 = vmatpush1.bf16.msra.mxu0 0
    %2990 = vmatprep.subr.bf16.mxu0 0
    %2991 = vmatpush1.bf16.msra.mxu0 0
    %2992 = vmatprep.subr.bf16.mxu0 0
    %2993 = vmatpush1.bf16.msra.mxu0 0
    %2994 = vmatprep.subr.bf16.mxu0 0
    %2995 = vmatpush1.bf16.msra.mxu0 0
    %2996 = vmatprep.subr.bf16.mxu0 0
    %2997 = vmatpush1.bf16.msra.mxu0 0
    %2998 = vmatprep.subr.bf16.mxu0 0
    %2999 = vmatpush1.bf16.msra.mxu0 0
    %3000 = vmatprep.subr.bf16.mxu0 0
    %3001 = vmatpush1.bf16.msra.mxu0 0
    %3002 = vmatprep.subr.bf16.mxu0 0
    %3003 = vmatpush1.bf16.msra.mxu0 0
    %3004 = vmatprep.subr.bf16.mxu0 0
    %3005 = vmatpush1.bf16.msra.mxu0 0
    %3006 = vmatprep.subr.bf16.mxu0 0
    %3007 = vmatpush1.bf16.msra.mxu0 0
    %3008 = vmatprep.subr.bf16.mxu0 0
    %3009 = vmatpush1.bf16.msra.mxu0 0
    %3010 = vmatprep.mubr.bf16.mxu0 0
    %3011 = vmatmul.mubr.bf16.gmra.mrb[0].mxu0 %v2774
    %v3012 = vpop.f32.mrb[0].mxu0
    %v3013 = vadd.f32 0.0, %v3012
    %v3014 = vpop.f32.mrb[0].mxu0
    %v3015 = vadd.f32 0.0, %v3014
    %v3016 = vpop.f32.mrb[0].mxu0
    %v3017 = vpop.f32.mrb[0].mxu0
    %3018 = vdwg.mxu0
    %3019 = vmatprep.subr.bf16.mxu0 0
    %3020 = vmatpush1.bf16.msra.mxu0 %v399
    %3021 = vmatprep.subr.bf16.mxu0 0
    %3022 = vmatpush1.bf16.msra.mxu0 %v402
    %3023 = vmatprep.subr.bf16.mxu0 0
    %3024 = vmatpush1.bf16.msra.mxu0 0
    %3025 = vmatprep.subr.bf16.mxu0 0
    %3026 = vmatpush1.bf16.msra.mxu0 0
    %3027 = vmatprep.subr.bf16.mxu0 0
    %3028 = vmatpush1.bf16.msra.mxu0 0
    %3029 = vmatprep.subr.bf16.mxu0 0
    %3030 = vmatpush1.bf16.msra.mxu0 0
    %3031 = vmatprep.subr.bf16.mxu0 0
    %3032 = vmatpush1.bf16.msra.mxu0 0
    %3033 = vmatprep.subr.bf16.mxu0 0
    %3034 = vmatpush1.bf16.msra.mxu0 0
    %3035 = vmatprep.subr.bf16.mxu0 0
    %3036 = vmatpush1.bf16.msra.mxu0 0
    %3037 = vmatprep.subr.bf16.mxu0 0
    %3038 = vmatpush1.bf16.msra.mxu0 0
    %3039 = vmatprep.subr.bf16.mxu0 0
    %3040 = vmatpush1.bf16.msra.mxu0 0
    %3041 = vmatprep.subr.bf16.mxu0 0
    %3042 = vmatpush1.bf16.msra.mxu0 0
    %3043 = vmatprep.subr.bf16.mxu0 0
    %3044 = vmatpush1.bf16.msra.mxu0 0
    %3045 = vmatprep.subr.bf16.mxu0 0
    %3046 = vmatpush1.bf16.msra.mxu0 0
    %3047 = vmatprep.subr.bf16.mxu0 0
    %3048 = vmatpush1.bf16.msra.mxu0 0
    %3049 = vmatprep.subr.bf16.mxu0 0
    %3050 = vmatpush1.bf16.msra.mxu0 0
    %3051 = vmatprep.mubr.bf16.mxu0 0
    %3052 = vmatmul.mubr.bf16.gmra.mrb[0].mxu0 %v2774
    %v3053 = vpop.f32.mrb[0].mxu0
    %v3054 = vadd.f32 0.0, %v3053
    %v3055 = vpop.f32.mrb[0].mxu0
    %v3056 = vpop.f32.mrb[0].mxu0
    %v3057 = vpop.f32.mrb[0].mxu0
    %3058 = vdwg.mxu0
    %3059 = vmatprep.subr.bf16.mxu0 %v523
    %3060 = vmatpush1.bf16.msra.mxu0 %v522
    %3061 = vmatprep.subr.bf16.mxu0 %v526
    %3062 = vmatpush1.bf16.msra.mxu0 %v525
    %3063 = vmatprep.subr.bf16.mxu0 0
    %3064 = vmatpush1.bf16.msra.mxu0 0
    %3065 = vmatprep.subr.bf16.mxu0 0
    %3066 = vmatpush1.bf16.msra.mxu0 0
    %3067 = vmatprep.subr.bf16.mxu0 0
    %3068 = vmatpush1.bf16.msra.mxu0 0
    %3069 = vmatprep.subr.bf16.mxu0 0
    %3070 = vmatpush1.bf16.msra.mxu0 0
    %3071 = vmatprep.subr.bf16.mxu0 0
    %3072 = vmatpush1.bf16.msra.mxu0 0
    %3073 = vmatprep.subr.bf16.mxu0 0
    %3074 = vmatpush1.bf16.msra.mxu0 0
    %3075 = vmatprep.subr.bf16.mxu0 0
    %3076 = vmatpush1.bf16.msra.mxu0 0
    %3077 = vmatprep.subr.bf16.mxu0 0
    %3078 = vmatpush1.bf16.msra.mxu0 0
    %3079 = vmatprep.subr.bf16.mxu0 0
    %3080 = vmatpush1.bf16.msra.mxu0 0
    %3081 = vmatprep.subr.bf16.mxu0 0
    %3082 = vmatpush1.bf16.msra.mxu0 0
    %3083 = vmatprep.subr.bf16.mxu0 0
    %3084 = vmatpush1.bf16.msra.mxu0 0
    %3085 = vmatprep.subr.bf16.mxu0 0
    %3086 = vmatpush1.bf16.msra.mxu0 0
    %3087 = vmatprep.subr.bf16.mxu0 0
    %3088 = vmatpush1.bf16.msra.mxu0 0
    %3089 = vmatprep.subr.bf16.mxu0 0
    %3090 = vmatpush1.bf16.msra.mxu0 0
    %3091 = vmatprep.mubr.bf16.mxu0 0
    %3092 = vmatmul.mubr.bf16.gmra.mrb[0].mxu0 %v2877
    %v3093 = vpop.f32.mrb[0].mxu0
    %v3094 = vadd.f32 0.0, %v3093
    %v3095 = vpop.f32.mrb[0].mxu0
    %v3096 = vadd.f32 0.0, %v3095
    %v3097 = vpop.f32.mrb[0].mxu0
    %v3098 = vpop.f32.mrb[0].mxu0
    %3099 = vdwg.mxu0
    %3100 = vmatprep.subr.bf16.mxu0 0
    %3101 = vmatpush1.bf16.msra.mxu0 %v524
    %3102 = vmatprep.subr.bf16.mxu0 0
    %3103 = vmatpush1.bf16.msra.mxu0 %v527
    %3104 = vmatprep.subr.bf16.mxu0 0
    %3105 = vmatpush1.bf16.msra.mxu0 0
    %3106 = vmatprep.subr.bf16.mxu0 0
    %3107 = vmatpush1.bf16.msra.mxu0 0
    %3108 = vmatprep.subr.bf16.mxu0 0
    %3109 = vmatpush1.bf16.msra.mxu0 0
    %3110 = vmatprep.subr.bf16.mxu0 0
    %3111 = vmatpush1.bf16.msra.mxu0 0
    %3112 = vmatprep.subr.bf16.mxu0 0
    %3113 = vmatpush1.bf16.msra.mxu0 0
    %3114 = vmatprep.subr.bf16.mxu0 0
    %3115 = vmatpush1.bf16.msra.mxu0 0
    %3116 = vmatprep.subr.bf16.mxu0 0
    %3117 = vmatpush1.bf16.msra.mxu0 0
    %3118 = vmatprep.subr.bf16.mxu0 0
    %3119 = vmatpush1.bf16.msra.mxu0 0
    %3120 = vmatprep.subr.bf16.mxu0 0
    %3121 = vmatpush1.bf16.msra.mxu0 0
    %3122 = vmatprep.subr.bf16.mxu0 0
    %3123 = vmatpush1.bf16.msra.mxu0 0
    %3124 = vmatprep.subr.bf16.mxu0 0
    %3125 = vmatpush1.bf16.msra.mxu0 0
    %3126 = vmatprep.subr.bf16.mxu0 0
    %3127 = vmatpush1.bf16.msra.mxu0 0
    %3128 = vmatprep.subr.bf16.mxu0 0
    %3129 = vmatpush1.bf16.msra.mxu0 0
    %3130 = vmatprep.subr.bf16.mxu0 0
    %3131 = vmatpush1.bf16.msra.mxu0 0
    %3132 = vmatprep.mubr.bf16.mxu0 0
    %3133 = vmatmul.mubr.bf16.gmra.mrb[0].mxu0 %v2877
    %v3134 = vpop.f32.mrb[0].mxu0
    %v3135 = vadd.f32 0.0, %v3134
    %v3136 = vpop.f32.mrb[0].mxu0
    %v3137 = vpop.f32.mrb[0].mxu0
    %v3138 = vpop.f32.mrb[0].mxu0
    %3139 = vdwg.mxu0
    %v3140 = vpack.c.bf16 %v2977, %v2977
    %v3142 = vsel %vm409, %v3140, 0
    %3144 = vmatprep.subr.bf16.mxu0 %v644
    %3145 = vmatpush1.bf16.msra.mxu0 %v643
    %3146 = vmatprep.subr.bf16.mxu0 %v647
    %3147 = vmatpush1.bf16.msra.mxu0 %v646
    %3148 = vmatprep.subr.bf16.mxu0 0
    %3149 = vmatpush1.bf16.msra.mxu0 0
    %3150 = vmatprep.subr.bf16.mxu0 0
    %3151 = vmatpush1.bf16.msra.mxu0 0
    %3152 = vmatprep.subr.bf16.mxu0 0
    %3153 = vmatpush1.bf16.msra.mxu0 0
    %3154 = vmatprep.subr.bf16.mxu0 0
    %3155 = vmatpush1.bf16.msra.mxu0 0
    %3156 = vmatprep.subr.bf16.mxu0 0
    %3157 = vmatpush1.bf16.msra.mxu0 0
    %3158 = vmatprep.subr.bf16.mxu0 0
    %3159 = vmatpush1.bf16.msra.mxu0 0
    %3160 = vmatprep.subr.bf16.mxu0 0
    %3161 = vmatpush1.bf16.msra.mxu0 0
    %3162 = vmatprep.subr.bf16.mxu0 0
    %3163 = vmatpush1.bf16.msra.mxu0 0
    %3164 = vmatprep.subr.bf16.mxu0 0
    %3165 = vmatpush1.bf16.msra.mxu0 0
    %3166 = vmatprep.subr.bf16.mxu0 0
    %3167 = vmatpush1.bf16.msra.mxu0 0
    %3168 = vmatprep.subr.bf16.mxu0 0
    %3169 = vmatpush1.bf16.msra.mxu0 0
    %3170 = vmatprep.subr.bf16.mxu0 0
    %3171 = vmatpush1.bf16.msra.mxu0 0
    %3172 = vmatprep.subr.bf16.mxu0 0
    %3173 = vmatpush1.bf16.msra.mxu0 0
    %3174 = vmatprep.subr.bf16.mxu0 0
    %3175 = vmatpush1.bf16.msra.mxu0 0
    %3176 = vmatprep.mubr.bf16.mxu0 0
    %3177 = vmatmul.mubr.bf16.gmra.mrb[0].mxu0 %v3142
    %v3178 = vpop.f32.mrb[0].mxu0
    %v3179 = vadd.f32 0.0, %v3178
    %v3180 = vpop.f32.mrb[0].mxu0
    %v3181 = vadd.f32 0.0, %v3180
    %v3182 = vpop.f32.mrb[0].mxu0
    %v3183 = vpop.f32.mrb[0].mxu0
    %3184 = vdwg.mxu0
    %3185 = vmatprep.subr.bf16.mxu0 0
    %3186 = vmatpush1.bf16.msra.mxu0 %v645
    %3187 = vmatprep.subr.bf16.mxu0 0
    %3188 = vmatpush1.bf16.msra.mxu0 %v648
    %3189 = vmatprep.subr.bf16.mxu0 0
    %3190 = vmatpush1.bf16.msra.mxu0 0
    %3191 = vmatprep.subr.bf16.mxu0 0
    %3192 = vmatpush1.bf16.msra.mxu0 0
    %3193 = vmatprep.subr.bf16.mxu0 0
    %3194 = vmatpush1.bf16.msra.mxu0 0
    %3195 = vmatprep.subr.bf16.mxu0 0
    %3196 = vmatpush1.bf16.msra.mxu0 0
    %3197 = vmatprep.subr.bf16.mxu0 0
    %3198 = vmatpush1.bf16.msra.mxu0 0
    %3199 = vmatprep.subr.bf16.mxu0 0
    %3200 = vmatpush1.bf16.msra.mxu0 0
    %3201 = vmatprep.subr.bf16.mxu0 0
    %3202 = vmatpush1.bf16.msra.mxu0 0
    %3203 = vmatprep.subr.bf16.mxu0 0
    %3204 = vmatpush1.bf16.msra.mxu0 0
    %3205 = vmatprep.subr.bf16.mxu0 0
    %3206 = vmatpush1.bf16.msra.mxu0 0
    %3207 = vmatprep.subr.bf16.mxu0 0
    %3208 = vmatpush1.bf16.msra.mxu0 0
    %3209 = vmatprep.subr.bf16.mxu0 0
    %3210 = vmatpush1.bf16.msra.mxu0 0
    %3211 = vmatprep.subr.bf16.mxu0 0
    %3212 = vmatpush1.bf16.msra.mxu0 0
    %3213 = vmatprep.subr.bf16.mxu0 0
    %3214 = vmatpush1.bf16.msra.mxu0 0
    %3215 = vmatprep.subr.bf16.mxu0 0
    %3216 = vmatpush1.bf16.msra.mxu0 0
    %3217 = vmatprep.mubr.bf16.mxu0 0
    %3218 = vmatmul.mubr.bf16.gmra.mrb[0].mxu0 %v3142
    %v3219 = vpop.f32.mrb[0].mxu0
    %v3220 = vadd.f32 0.0, %v3219
    %v3221 = vpop.f32.mrb[0].mxu0
    %v3222 = vpop.f32.mrb[0].mxu0
    %v3223 = vpop.f32.mrb[0].mxu0
    %3224 = vdwg.mxu0
    %v3225 = vld [vmem:[#allocation2 + $0x78] sm:$0xff]
    %v3226 = vld [vmem:[#allocation2 + $0x80] sm:$0xff]
    %v3227 = vld [vmem:[#allocation2 + $0x88] sm:$0xff]
    %v3228 = vadd.f32 %v3225, %v3013
    %v3229 = vadd.f32 %v3226, %v3015
    %v3230 = vmul.f32 %v3228, 0.5
    %v3231 = vmul.f32 %v3229, 0.5
    %v3232 = vtanh.pop %v3230
    %v3233 = vtanh.pop %v3231
    %v3234 = vadd.f32 %v3232, 1.0
    %v3235 = vadd.f32 %v3233, 1.0
    %v3236 = vmul.f32 %v3234, 0.5
    %v3237 = vmul.f32 %v3235, 0.5
    %v3238 = vadd.f32 %v3054, %v739
    %v3239 = vmul.f32 %v3236, %v3238
    %v3240 = vadd.f32 %v3227, %v3239
    %v3241 = vtanh.pop %v3240
    %v3242 = vsub.f32 1.0, %v3237
    %v3243 = vmul.f32 %v3242, %v3241
    %v3244 = vmul.f32 %v3237, %v2771
    %v3245 = vadd.f32 %v3243, %v3244
    %v3246 = vpack.c.bf16 %v3245, %v3245
    %v3248 = vsel %vm409, %v3246, 0
    %3250 = vmatprep.subr.bf16.mxu0 %v806
    %3251 = vmatpush1.bf16.msra.mxu0 %v805
    %3252 = vmatprep.subr.bf16.mxu0 %v809
    %3253 = vmatpush1.bf16.msra.mxu0 %v808
    %3254 = vmatprep.subr.bf16.mxu0 0
    %3255 = vmatpush1.bf16.msra.mxu0 0
    %3256 = vmatprep.subr.bf16.mxu0 0
    %3257 = vmatpush1.bf16.msra.mxu0 0
    %3258 = vmatprep.subr.bf16.mxu0 0
    %3259 = vmatpush1.bf16.msra.mxu0 0
    %3260 = vmatprep.subr.bf16.mxu0 0
    %3261 = vmatpush1.bf16.msra.mxu0 0
    %3262 = vmatprep.subr.bf16.mxu0 0
    %3263 = vmatpush1.bf16.msra.mxu0 0
    %3264 = vmatprep.subr.bf16.mxu0 0
    %3265 = vmatpush1.bf16.msra.mxu0 0
    %3266 = vmatprep.subr.bf16.mxu0 0
    %3267 = vmatpush1.bf16.msra.mxu0 0
    %3268 = vmatprep.subr.bf16.mxu0 0
    %3269 = vmatpush1.bf16.msra.mxu0 0
    %3270 = vmatprep.subr.bf16.mxu0 0
    %3271 = vmatpush1.bf16.msra.mxu0 0
    %3272 = vmatprep.subr.bf16.mxu0 0
    %3273 = vmatpush1.bf16.msra.mxu0 0
    %3274 = vmatprep.subr.bf16.mxu0 0
    %3275 = vmatpush1.bf16.msra.mxu0 0
    %3276 = vmatprep.subr.bf16.mxu0 0
    %3277 = vmatpush1.bf16.msra.mxu0 0
    %3278 = vmatprep.subr.bf16.mxu0 0
    %3279 = vmatpush1.bf16.msra.mxu0 0
    %3280 = vmatprep.subr.bf16.mxu0 0
    %3281 = vmatpush1.bf16.msra.mxu0 0
    %3282 = vmatprep.mubr.bf16.mxu0 0
    %3283 = vmatmul.mubr.bf16.gmra.mrb[0].mxu0 %v3248
    %v3284 = vpop.f32.mrb[0].mxu0
    %v3285 = vadd.f32 %v773, %v3284
    %v3286 = vpop.f32.mrb[0].mxu0
    %v3287 = vadd.f32 %v777, %v3286
    %v3288 = vpop.f32.mrb[0].mxu0
    %v3289 = vpop.f32.mrb[0].mxu0
    %3290 = vdwg.mxu0
    %3291 = vmatprep.subr.bf16.mxu0 0
    %3292 = vmatpush1.bf16.msra.mxu0 %v807
    %3293 = vmatprep.subr.bf16.mxu0 0
    %3294 = vmatpush1.bf16.msra.mxu0 %v810
    %3295 = vmatprep.subr.bf16.mxu0 0
    %3296 = vmatpush1.bf16.msra.mxu0 0
    %3297 = vmatprep.subr.bf16.mxu0 0
    %3298 = vmatpush1.bf16.msra.mxu0 0
    %3299 = vmatprep.subr.bf16.mxu0 0
    %3300 = vmatpush1.bf16.msra.mxu0 0
    %3301 = vmatprep.subr.bf16.mxu0 0
    %3302 = vmatpush1.bf16.msra.mxu0 0
    %3303 = vmatprep.subr.bf16.mxu0 0
    %3304 = vmatpush1.bf16.msra.mxu0 0
    %3305 = vmatprep.subr.bf16.mxu0 0
    %3306 = vmatpush1.bf16.msra.mxu0 0
    %3307 = vmatprep.subr.bf16.mxu0 0
    %3308 = vmatpush1.bf16.msra.mxu0 0
    %3309 = vmatprep.subr.bf16.mxu0 0
    %3310 = vmatpush1.bf16.msra.mxu0 0
    %3311 = vmatprep.subr.bf16.mxu0 0
    %3312 = vmatpush1.bf16.msra.mxu0 0
    %3313 = vmatprep.subr.bf16.mxu0 0
    %3314 = vmatpush1.bf16.msra.mxu0 0
    %3315 = vmatprep.subr.bf16.mxu0 0
    %3316 = vmatpush1.bf16.msra.mxu0 0
    %3317 = vmatprep.subr.bf16.mxu0 0
    %3318 = vmatpush1.bf16.msra.mxu0 0
    %3319 = vmatprep.subr.bf16.mxu0 0
    %3320 = vmatpush1.bf16.msra.mxu0 0
    %3321 = vmatprep.subr.bf16.mxu0 0
    %3322 = vmatpush1.bf16.msra.mxu0 0
    %3323 = vmatprep.mubr.bf16.mxu0 0
    %3324 = vmatmul.mubr.bf16.gmra.mrb[0].mxu0 %v3248
    %v3325 = vpop.f32.mrb[0].mxu0
    %v3326 = vadd.f32 %v781, %v3325
    %v3327 = vpop.f32.mrb[0].mxu0
    %v3328 = vpop.f32.mrb[0].mxu0
    %v3329 = vpop.f32.mrb[0].mxu0
    %3330 = vdwg.mxu0
    %v3331 = vadd.f32 %v3285, %v3094
    %v3332 = vadd.f32 %v3287, %v3096
    %v3333 = vmul.f32 %v3331, 0.5
    %v3334 = vmul.f32 %v3332, 0.5
    %v3335 = vtanh.pop %v3333
    %v3336 = vtanh.pop %v3334
    %v3337 = vadd.f32 %v3335, 1.0
    %v3338 = vadd.f32 %v3336, 1.0
    %v3339 = vmul.f32 %v3337, 0.5
    %v3340 = vmul.f32 %v3338, 0.5
    %v3341 = vadd.f32 %v3135, %v901
    %v3342 = vmul.f32 %v3339, %v3341
    %v3343 = vadd.f32 %v3326, %v3342
    %v3344 = vtanh.pop %v3343
    %v3345 = vsub.f32 1.0, %v3340
    %v3346 = vmul.f32 %v3345, %v3344
    %v3347 = vmul.f32 %v3340, %v2874
    %v3348 = vadd.f32 %v3346, %v3347
    %v3349 = vpack.c.bf16 %v3348, %v3348
    %v3351 = vsel %vm409, %v3349, 0
    %3353 = vmatprep.subr.bf16.mxu0 %v968
    %3354 = vmatpush1.bf16.msra.mxu0 %v967
    %3355 = vmatprep.subr.bf16.mxu0 %v971
    %3356 = vmatpush1.bf16.msra.mxu0 %v970
    %3357 = vmatprep.subr.bf16.mxu0 0
    %3358 = vmatpush1.bf16.msra.mxu0 0
    %3359 = vmatprep.subr.bf16.mxu0 0
    %3360 = vmatpush1.bf16.msra.mxu0 0
    %3361 = vmatprep.subr.bf16.mxu0 0
    %3362 = vmatpush1.bf16.msra.mxu0 0
    %3363 = vmatprep.subr.bf16.mxu0 0
    %3364 = vmatpush1.bf16.msra.mxu0 0
    %3365 = vmatprep.subr.bf16.mxu0 0
    %3366 = vmatpush1.bf16.msra.mxu0 0
    %3367 = vmatprep.subr.bf16.mxu0 0
    %3368 = vmatpush1.bf16.msra.mxu0 0
    %3369 = vmatprep.subr.bf16.mxu0 0
    %3370 = vmatpush1.bf16.msra.mxu0 0
    %3371 = vmatprep.subr.bf16.mxu0 0
    %3372 = vmatpush1.bf16.msra.mxu0 0
    %3373 = vmatprep.subr.bf16.mxu0 0
    %3374 = vmatpush1.bf16.msra.mxu0 0
    %3375 = vmatprep.subr.bf16.mxu0 0
    %3376 = vmatpush1.bf16.msra.mxu0 0
    %3377 = vmatprep.subr.bf16.mxu0 0
    %3378 = vmatpush1.bf16.msra.mxu0 0
    %3379 = vmatprep.subr.bf16.mxu0 0
    %3380 = vmatpush1.bf16.msra.mxu0 0
    %3381 = vmatprep.subr.bf16.mxu0 0
    %3382 = vmatpush1.bf16.msra.mxu0 0
    %3383 = vmatprep.subr.bf16.mxu0 0
    %3384 = vmatpush1.bf16.msra.mxu0 0
    %3385 = vmatprep.mubr.bf16.mxu0 0
    %3386 = vmatmul.mubr.bf16.gmra.mrb[0].mxu0 %v3351
    %v3387 = vpop.f32.mrb[0].mxu0
    %v3388 = vadd.f32 %v935, %v3387
    %v3389 = vpop.f32.mrb[0].mxu0
    %v3390 = vadd.f32 %v939, %v3389
    %v3391 = vpop.f32.mrb[0].mxu0
    %v3392 = vpop.f32.mrb[0].mxu0
    %3393 = vdwg.mxu0
    %3394 = vmatprep.subr.bf16.mxu0 0
    %3395 = vmatpush1.bf16.msra.mxu0 %v969
    %3396 = vmatprep.subr.bf16.mxu0 0
    %3397 = vmatpush1.bf16.msra.mxu0 %v972
    %3398 = vmatprep.subr.bf16.mxu0 0
    %3399 = vmatpush1.bf16.msra.mxu0 0
    %3400 = vmatprep.subr.bf16.mxu0 0
    %3401 = vmatpush1.bf16.msra.mxu0 0
    %3402 = vmatprep.subr.bf16.mxu0 0
    %3403 = vmatpush1.bf16.msra.mxu0 0
    %3404 = vmatprep.subr.bf16.mxu0 0
    %3405 = vmatpush1.bf16.msra.mxu0 0
    %3406 = vmatprep.subr.bf16.mxu0 0
    %3407 = vmatpush1.bf16.msra.mxu0 0
    %3408 = vmatprep.subr.bf16.mxu0 0
    %3409 = vmatpush1.bf16.msra.mxu0 0
    %3410 = vmatprep.subr.bf16.mxu0 0
    %3411 = vmatpush1.bf16.msra.mxu0 0
    %3412 = vmatprep.subr.bf16.mxu0 0
    %3413 = vmatpush1.bf16.msra.mxu0 0
    %3414 = vmatprep.subr.bf16.mxu0 0
    %3415 = vmatpush1.bf16.msra.mxu0 0
    %3416 = vmatprep.subr.bf16.mxu0 0
    %3417 = vmatpush1.bf16.msra.mxu0 0
    %3418 = vmatprep.subr.bf16.mxu0 0
    %3419 = vmatpush1.bf16.msra.mxu0 0
    %3420 = vmatprep.subr.bf16.mxu0 0
    %3421 = vmatpush1.bf16.msra.mxu0 0
    %3422 = vmatprep.subr.bf16.mxu0 0
    %3423 = vmatpush1.bf16.msra.mxu0 0
    %3424 = vmatprep.subr.bf16.mxu0 0
    %3425 = vmatpush1.bf16.msra.mxu0 0
    %3426 = vmatprep.mubr.bf16.mxu0 0
    %3427 = vmatmul.mubr.bf16.gmra.mrb[0].mxu0 %v3351
    %v3428 = vpop.f32.mrb[0].mxu0
    %v3429 = vadd.f32 %v943, %v3428
    %v3430 = vpop.f32.mrb[0].mxu0
    %v3431 = vpop.f32.mrb[0].mxu0
    %v3432 = vpop.f32.mrb[0].mxu0
    %3433 = vdwg.mxu0
    %v3434 = vadd.f32 %v3388, %v3179
    %v3435 = vadd.f32 %v3390, %v3181
    %v3436 = vmul.f32 %v3434, 0.5
    %v3437 = vmul.f32 %v3435, 0.5
    %v3438 = vtanh.pop %v3436
    %v3439 = vtanh.pop %v3437
    %v3440 = vadd.f32 %v3438, 1.0
    %v3441 = vadd.f32 %v3439, 1.0
    %v3442 = vmul.f32 %v3440, 0.5
    %v3443 = vmul.f32 %v3441, 0.5
    %v3444 = vadd.f32 %v3220, %v1063
    %v3445 = vmul.f32 %v3442, %v3444
    %v3446 = vadd.f32 %v3429, %v3445
    %v3447 = vtanh.pop %v3446
    %v3448 = vsub.f32 1.0, %v3443
    %v3449 = vmul.f32 %v3448, %v3447
    %v3450 = vmul.f32 %v3443, %v2977
    %v3451 = vadd.f32 %v3449, %v3450
    %3452 = vmatprep.subr.bf16.mxu0 %v398
    %3453 = vmatpush1.bf16.msra.mxu0 %v397
    %3454 = vmatprep.subr.bf16.mxu0 %v401
    %3455 = vmatpush1.bf16.msra.mxu0 %v400
    %3456 = vmatprep.subr.bf16.mxu0 0
    %3457 = vmatpush1.bf16.msra.mxu0 0
    %3458 = vmatprep.subr.bf16.mxu0 0
    %3459 = vmatpush1.bf16.msra.mxu0 0
    %3460 = vmatprep.subr.bf16.mxu0 0
    %3461 = vmatpush1.bf16.msra.mxu0 0
    %3462 = vmatprep.subr.bf16.mxu0 0
    %3463 = vmatpush1.bf16.msra.mxu0 0
    %3464 = vmatprep.subr.bf16.mxu0 0
    %3465 = vmatpush1.bf16.msra.mxu0 0
    %3466 = vmatprep.subr.bf16.mxu0 0
    %3467 = vmatpush1.bf16.msra.mxu0 0
    %3468 = vmatprep.subr.bf16.mxu0 0
    %3469 = vmatpush1.bf16.msra.mxu0 0
    %3470 = vmatprep.subr.bf16.mxu0 0
    %3471 = vmatpush1.bf16.msra.mxu0 0
    %3472 = vmatprep.subr.bf16.mxu0 0
    %3473 = vmatpush1.bf16.msra.mxu0 0
    %3474 = vmatprep.subr.bf16.mxu0 0
    %3475 = vmatpush1.bf16.msra.mxu0 0
    %3476 = vmatprep.subr.bf16.mxu0 0
    %3477 = vmatpush1.bf16.msra.mxu0 0
    %3478 = vmatprep.subr.bf16.mxu0 0
    %3479 = vmatpush1.bf16.msra.mxu0 0
    %3480 = vmatprep.subr.bf16.mxu0 0
    %3481 = vmatpush1.bf16.msra.mxu0 0
    %3482 = vmatprep.subr.bf16.mxu0 0
    %3483 = vmatpush1.bf16.msra.mxu0 0
    %3484 = vmatprep.mubr.bf16.mxu0 0
    %3485 = vmatmul.mubr.bf16.gmra.mrb[0].mxu0 %v3248
    %v3486 = vpop.f32.mrb[0].mxu0
    %v3487 = vadd.f32 0.0, %v3486
    %v3488 = vpop.f32.mrb[0].mxu0
    %v3489 = vadd.f32 0.0, %v3488
    %v3490 = vpop.f32.mrb[0].mxu0
    %v3491 = vpop.f32.mrb[0].mxu0
    %3492 = vdwg.mxu0
    %3493 = vmatprep.subr.bf16.mxu0 0
    %3494 = vmatpush1.bf16.msra.mxu0 %v399
    %3495 = vmatprep.subr.bf16.mxu0 0
    %3496 = vmatpush1.bf16.msra.mxu0 %v402
    %3497 = vmatprep.subr.bf16.mxu0 0
    %3498 = vmatpush1.bf16.msra.mxu0 0
    %3499 = vmatprep.subr.bf16.mxu0 0
    %3500 = vmatpush1.bf16.msra.mxu0 0
    %3501 = vmatprep.subr.bf16.mxu0 0
    %3502 = vmatpush1.bf16.msra.mxu0 0
    %3503 = vmatprep.subr.bf16.mxu0 0
    %3504 = vmatpush1.bf16.msra.mxu0 0
    %3505 = vmatprep.subr.bf16.mxu0 0
    %3506 = vmatpush1.bf16.msra.mxu0 0
    %3507 = vmatprep.subr.bf16.mxu0 0
    %3508 = vmatpush1.bf16.msra.mxu0 0
    %3509 = vmatprep.subr.bf16.mxu0 0
    %3510 = vmatpush1.bf16.msra.mxu0 0
    %3511 = vmatprep.subr.bf16.mxu0 0
    %3512 = vmatpush1.bf16.msra.mxu0 0
    %3513 = vmatprep.subr.bf16.mxu0 0
    %3514 = vmatpush1.bf16.msra.mxu0 0
    %3515 = vmatprep.subr.bf16.mxu0 0
    %3516 = vmatpush1.bf16.msra.mxu0 0
    %3517 = vmatprep.subr.bf16.mxu0 0
    %3518 = vmatpush1.bf16.msra.mxu0 0
    %3519 = vmatprep.subr.bf16.mxu0 0
    %3520 = vmatpush1.bf16.msra.mxu0 0
    %3521 = vmatprep.subr.bf16.mxu0 0
    %3522 = vmatpush1.bf16.msra.mxu0 0
    %3523 = vmatprep.subr.bf16.mxu0 0
    %3524 = vmatpush1.bf16.msra.mxu0 0
    %3525 = vmatprep.mubr.bf16.mxu0 0
    %3526 = vmatmul.mubr.bf16.gmra.mrb[0].mxu0 %v3248
    %v3527 = vpop.f32.mrb[0].mxu0
    %v3528 = vadd.f32 0.0, %v3527
    %v3529 = vpop.f32.mrb[0].mxu0
    %v3530 = vpop.f32.mrb[0].mxu0
    %v3531 = vpop.f32.mrb[0].mxu0
    %3532 = vdwg.mxu0
    %3533 = vmatprep.subr.bf16.mxu0 %v523
    %3534 = vmatpush1.bf16.msra.mxu0 %v522
    %3535 = vmatprep.subr.bf16.mxu0 %v526
    %3536 = vmatpush1.bf16.msra.mxu0 %v525
    %3537 = vmatprep.subr.bf16.mxu0 0
    %3538 = vmatpush1.bf16.msra.mxu0 0
    %3539 = vmatprep.subr.bf16.mxu0 0
    %3540 = vmatpush1.bf16.msra.mxu0 0
    %3541 = vmatprep.subr.bf16.mxu0 0
    %3542 = vmatpush1.bf16.msra.mxu0 0
    %3543 = vmatprep.subr.bf16.mxu0 0
    %3544 = vmatpush1.bf16.msra.mxu0 0
    %3545 = vmatprep.subr.bf16.mxu0 0
    %3546 = vmatpush1.bf16.msra.mxu0 0
    %3547 = vmatprep.subr.bf16.mxu0 0
    %3548 = vmatpush1.bf16.msra.mxu0 0
    %3549 = vmatprep.subr.bf16.mxu0 0
    %3550 = vmatpush1.bf16.msra.mxu0 0
    %3551 = vmatprep.subr.bf16.mxu0 0
    %3552 = vmatpush1.bf16.msra.mxu0 0
    %3553 = vmatprep.subr.bf16.mxu0 0
    %3554 = vmatpush1.bf16.msra.mxu0 0
    %3555 = vmatprep.subr.bf16.mxu0 0
    %3556 = vmatpush1.bf16.msra.mxu0 0
    %3557 = vmatprep.subr.bf16.mxu0 0
    %3558 = vmatpush1.bf16.msra.mxu0 0
    %3559 = vmatprep.subr.bf16.mxu0 0
    %3560 = vmatpush1.bf16.msra.mxu0 0
    %3561 = vmatprep.subr.bf16.mxu0 0
    %3562 = vmatpush1.bf16.msra.mxu0 0
    %3563 = vmatprep.subr.bf16.mxu0 0
    %3564 = vmatpush1.bf16.msra.mxu0 0
    %3565 = vmatprep.mubr.bf16.mxu0 0
    %3566 = vmatmul.mubr.bf16.gmra.mrb[0].mxu0 %v3351
    %v3567 = vpop.f32.mrb[0].mxu0
    %v3568 = vadd.f32 0.0, %v3567
    %v3569 = vpop.f32.mrb[0].mxu0
    %v3570 = vadd.f32 0.0, %v3569
    %v3571 = vpop.f32.mrb[0].mxu0
    %v3572 = vpop.f32.mrb[0].mxu0
    %3573 = vdwg.mxu0
    %3574 = vmatprep.subr.bf16.mxu0 0
    %3575 = vmatpush1.bf16.msra.mxu0 %v524
    %3576 = vmatprep.subr.bf16.mxu0 0
    %3577 = vmatpush1.bf16.msra.mxu0 %v527
    %3578 = vmatprep.subr.bf16.mxu0 0
    %3579 = vmatpush1.bf16.msra.mxu0 0
    %3580 = vmatprep.subr.bf16.mxu0 0
    %3581 = vmatpush1.bf16.msra.mxu0 0
    %3582 = vmatprep.subr.bf16.mxu0 0
    %3583 = vmatpush1.bf16.msra.mxu0 0
    %3584 = vmatprep.subr.bf16.mxu0 0
    %3585 = vmatpush1.bf16.msra.mxu0 0
    %3586 = vmatprep.subr.bf16.mxu0 0
    %3587 = vmatpush1.bf16.msra.mxu0 0
    %3588 = vmatprep.subr.bf16.mxu0 0
    %3589 = vmatpush1.bf16.msra.mxu0 0
    %3590 = vmatprep.subr.bf16.mxu0 0
    %3591 = vmatpush1.bf16.msra.mxu0 0
    %3592 = vmatprep.subr.bf16.mxu0 0
    %3593 = vmatpush1.bf16.msra.mxu0 0
    %3594 = vmatprep.subr.bf16.mxu0 0
    %3595 = vmatpush1.bf16.msra.mxu0 0
    %3596 = vmatprep.subr.bf16.mxu0 0
    %3597 = vmatpush1.bf16.msra.mxu0 0
    %3598 = vmatprep.subr.bf16.mxu0 0
    %3599 = vmatpush1.bf16.msra.mxu0 0
    %3600 = vmatprep.subr.bf16.mxu0 0
    %3601 = vmatpush1.bf16.msra.mxu0 0
    %3602 = vmatprep.subr.bf16.mxu0 0
    %3603 = vmatpush1.bf16.msra.mxu0 0
    %3604 = vmatprep.subr.bf16.mxu0 0
    %3605 = vmatpush1.bf16.msra.mxu0 0
    %3606 = vmatprep.mubr.bf16.mxu0 0
    %3607 = vmatmul.mubr.bf16.gmra.mrb[0].mxu0 %v3351
    %v3608 = vpop.f32.mrb[0].mxu0
    %v3609 = vadd.f32 0.0, %v3608
    %v3610 = vpop.f32.mrb[0].mxu0
    %v3611 = vpop.f32.mrb[0].mxu0
    %v3612 = vpop.f32.mrb[0].mxu0
    %3613 = vdwg.mxu0
    %v3614 = vpack.c.bf16 %v3451, %v3451
    %v3616 = vsel %vm409, %v3614, 0
    %3618 = vmatprep.subr.bf16.mxu0 %v644
    %3619 = vmatpush1.bf16.msra.mxu0 %v643
    %3620 = vmatprep.subr.bf16.mxu0 %v647
    %3621 = vmatpush1.bf16.msra.mxu0 %v646
    %3622 = vmatprep.subr.bf16.mxu0 0
    %3623 = vmatpush1.bf16.msra.mxu0 0
    %3624 = vmatprep.subr.bf16.mxu0 0
    %3625 = vmatpush1.bf16.msra.mxu0 0
    %3626 = vmatprep.subr.bf16.mxu0 0
    %3627 = vmatpush1.bf16.msra.mxu0 0
    %3628 = vmatprep.subr.bf16.mxu0 0
    %3629 = vmatpush1.bf16.msra.mxu0 0
    %3630 = vmatprep.subr.bf16.mxu0 0
    %3631 = vmatpush1.bf16.msra.mxu0 0
    %3632 = vmatprep.subr.bf16.mxu0 0
    %3633 = vmatpush1.bf16.msra.mxu0 0
    %3634 = vmatprep.subr.bf16.mxu0 0
    %3635 = vmatpush1.bf16.msra.mxu0 0
    %3636 = vmatprep.subr.bf16.mxu0 0
    %3637 = vmatpush1.bf16.msra.mxu0 0
    %3638 = vmatprep.subr.bf16.mxu0 0
    %3639 = vmatpush1.bf16.msra.mxu0 0
    %3640 = vmatprep.subr.bf16.mxu0 0
    %3641 = vmatpush1.bf16.msra.mxu0 0
    %3642 = vmatprep.subr.bf16.mxu0 0
    %3643 = vmatpush1.bf16.msra.mxu0 0
    %3644 = vmatprep.subr.bf16.mxu0 0
    %3645 = vmatpush1.bf16.msra.mxu0 0
    %3646 = vmatprep.subr.bf16.mxu0 0
    %3647 = vmatpush1.bf16.msra.mxu0 0
    %3648 = vmatprep.subr.bf16.mxu0 0
    %3649 = vmatpush1.bf16.msra.mxu0 0
    %3650 = vmatprep.mubr.bf16.mxu0 0
    %3651 = vmatmul.mubr.bf16.gmra.mrb[0].mxu0 %v3616
    %v3652 = vpop.f32.mrb[0].mxu0
    %v3653 = vadd.f32 0.0, %v3652
    %v3654 = vpop.f32.mrb[0].mxu0
    %v3655 = vadd.f32 0.0, %v3654
    %v3656 = vpop.f32.mrb[0].mxu0
    %v3657 = vpop.f32.mrb[0].mxu0
    %3658 = vdwg.mxu0
    %3659 = vmatprep.subr.bf16.mxu0 0
    %3660 = vmatpush1.bf16.msra.mxu0 %v645
    %3661 = vmatprep.subr.bf16.mxu0 0
    %3662 = vmatpush1.bf16.msra.mxu0 %v648
    %3663 = vmatprep.subr.bf16.mxu0 0
    %3664 = vmatpush1.bf16.msra.mxu0 0
    %3665 = vmatprep.subr.bf16.mxu0 0
    %3666 = vmatpush1.bf16.msra.mxu0 0
    %3667 = vmatprep.subr.bf16.mxu0 0
    %3668 = vmatpush1.bf16.msra.mxu0 0
    %3669 = vmatprep.subr.bf16.mxu0 0
    %3670 = vmatpush1.bf16.msra.mxu0 0
    %3671 = vmatprep.subr.bf16.mxu0 0
    %3672 = vmatpush1.bf16.msra.mxu0 0
    %3673 = vmatprep.subr.bf16.mxu0 0
    %3674 = vmatpush1.bf16.msra.mxu0 0
    %3675 = vmatprep.subr.bf16.mxu0 0
    %3676 = vmatpush1.bf16.msra.mxu0 0
    %3677 = vmatprep.subr.bf16.mxu0 0
    %3678 = vmatpush1.bf16.msra.mxu0 0
    %3679 = vmatprep.subr.bf16.mxu0 0
    %3680 = vmatpush1.bf16.msra.mxu0 0
    %3681 = vmatprep.subr.bf16.mxu0 0
    %3682 = vmatpush1.bf16.msra.mxu0 0
    %3683 = vmatprep.subr.bf16.mxu0 0
    %3684 = vmatpush1.bf16.msra.mxu0 0
    %3685 = vmatprep.subr.bf16.mxu0 0
    %3686 = vmatpush1.bf16.msra.mxu0 0
    %3687 = vmatprep.subr.bf16.mxu0 0
    %3688 = vmatpush1.bf16.msra.mxu0 0
    %3689 = vmatprep.subr.bf16.mxu0 0
    %3690 = vmatpush1.bf16.msra.mxu0 0
    %3691 = vmatprep.mubr.bf16.mxu0 0
    %3692 = vmatmul.mubr.bf16.gmra.mrb[0].mxu0 %v3616
    %v3693 = vpop.f32.mrb[0].mxu0
    %v3694 = vadd.f32 0.0, %v3693
    %v3695 = vpop.f32.mrb[0].mxu0
    %v3696 = vpop.f32.mrb[0].mxu0
    %v3697 = vpop.f32.mrb[0].mxu0
    %3698 = vdwg.mxu0
    %v3699 = vld [vmem:[#allocation2 + $0x90] sm:$0xff]
    %v3700 = vld [vmem:[#allocation2 + $0x98] sm:$0xff]
    %v3701 = vld [vmem:[#allocation2 + $0xa0] sm:$0xff]
    %v3702 = vadd.f32 %v3699, %v3487
    %v3703 = vadd.f32 %v3700, %v3489
    %v3704 = vmul.f32 %v3702, 0.5
    %v3705 = vmul.f32 %v3703, 0.5
    %v3706 = vtanh.pop %v3704
    %v3707 = vtanh.pop %v3705
    %v3708 = vadd.f32 %v3706, 1.0
    %v3709 = vadd.f32 %v3707, 1.0
    %v3710 = vmul.f32 %v3708, 0.5
    %v3711 = vmul.f32 %v3709, 0.5
    %v3712 = vadd.f32 %v3528, %v739
    %v3713 = vmul.f32 %v3710, %v3712
    %v3714 = vadd.f32 %v3701, %v3713
    %v3715 = vtanh.pop %v3714
    %v3716 = vsub.f32 1.0, %v3711
    %v3717 = vmul.f32 %v3716, %v3715
    %v3718 = vmul.f32 %v3711, %v3245
    %v3719 = vadd.f32 %v3717, %v3718
    %v3720 = vpack.c.bf16 %v3719, %v3719
    %v3722 = vsel %vm409, %v3720, 0
    %3724 = vmatprep.subr.bf16.mxu0 %v806
    %3725 = vmatpush1.bf16.msra.mxu0 %v805
    %3726 = vmatprep.subr.bf16.mxu0 %v809
    %3727 = vmatpush1.bf16.msra.mxu0 %v808
    %3728 = vmatprep.subr.bf16.mxu0 0
    %3729 = vmatpush1.bf16.msra.mxu0 0
    %3730 = vmatprep.subr.bf16.mxu0 0
    %3731 = vmatpush1.bf16.msra.mxu0 0
    %3732 = vmatprep.subr.bf16.mxu0 0
    %3733 = vmatpush1.bf16.msra.mxu0 0
    %3734 = vmatprep.subr.bf16.mxu0 0
    %3735 = vmatpush1.bf16.msra.mxu0 0
    %3736 = vmatprep.subr.bf16.mxu0 0
    %3737 = vmatpush1.bf16.msra.mxu0 0
    %3738 = vmatprep.subr.bf16.mxu0 0
    %3739 = vmatpush1.bf16.msra.mxu0 0
    %3740 = vmatprep.subr.bf16.mxu0 0
    %3741 = vmatpush1.bf16.msra.mxu0 0
    %3742 = vmatprep.subr.bf16.mxu0 0
    %3743 = vmatpush1.bf16.msra.mxu0 0
    %3744 = vmatprep.subr.bf16.mxu0 0
    %3745 = vmatpush1.bf16.msra.mxu0 0
    %3746 = vmatprep.subr.bf16.mxu0 0
    %3747 = vmatpush1.bf16.msra.mxu0 0
    %3748 = vmatprep.subr.bf16.mxu0 0
    %3749 = vmatpush1.bf16.msra.mxu0 0
    %3750 = vmatprep.subr.bf16.mxu0 0
    %3751 = vmatpush1.bf16.msra.mxu0 0
    %3752 = vmatprep.subr.bf16.mxu0 0
    %3753 = vmatpush1.bf16.msra.mxu0 0
    %3754 = vmatprep.subr.bf16.mxu0 0
    %3755 = vmatpush1.bf16.msra.mxu0 0
    %3756 = vmatprep.mubr.bf16.mxu0 0
    %3757 = vmatmul.mubr.bf16.gmra.mrb[0].mxu0 %v3722
    %v3758 = vpop.f32.mrb[0].mxu0
    %v3759 = vadd.f32 %v773, %v3758
    %v3760 = vpop.f32.mrb[0].mxu0
    %v3761 = vadd.f32 %v777, %v3760
    %v3762 = vpop.f32.mrb[0].mxu0
    %v3763 = vpop.f32.mrb[0].mxu0
    %3764 = vdwg.mxu0
    %3765 = vmatprep.subr.bf16.mxu0 0
    %3766 = vmatpush1.bf16.msra.mxu0 %v807
    %3767 = vmatprep.subr.bf16.mxu0 0
    %3768 = vmatpush1.bf16.msra.mxu0 %v810
    %3769 = vmatprep.subr.bf16.mxu0 0
    %3770 = vmatpush1.bf16.msra.mxu0 0
    %3771 = vmatprep.subr.bf16.mxu0 0
    %3772 = vmatpush1.bf16.msra.mxu0 0
    %3773 = vmatprep.subr.bf16.mxu0 0
    %3774 = vmatpush1.bf16.msra.mxu0 0
    %3775 = vmatprep.subr.bf16.mxu0 0
    %3776 = vmatpush1.bf16.msra.mxu0 0
    %3777 = vmatprep.subr.bf16.mxu0 0
    %3778 = vmatpush1.bf16.msra.mxu0 0
    %3779 = vmatprep.subr.bf16.mxu0 0
    %3780 = vmatpush1.bf16.msra.mxu0 0
    %3781 = vmatprep.subr.bf16.mxu0 0
    %3782 = vmatpush1.bf16.msra.mxu0 0
    %3783 = vmatprep.subr.bf16.mxu0 0
    %3784 = vmatpush1.bf16.msra.mxu0 0
    %3785 = vmatprep.subr.bf16.mxu0 0
    %3786 = vmatpush1.bf16.msra.mxu0 0
    %3787 = vmatprep.subr.bf16.mxu0 0
    %3788 = vmatpush1.bf16.msra.mxu0 0
    %3789 = vmatprep.subr.bf16.mxu0 0
    %3790 = vmatpush1.bf16.msra.mxu0 0
    %3791 = vmatprep.subr.bf16.mxu0 0
    %3792 = vmatpush1.bf16.msra.mxu0 0
    %3793 = vmatprep.subr.bf16.mxu0 0
    %3794 = vmatpush1.bf16.msra.mxu0 0
    %3795 = vmatprep.subr.bf16.mxu0 0
    %3796 = vmatpush1.bf16.msra.mxu0 0
    %3797 = vmatprep.mubr.bf16.mxu0 0
    %3798 = vmatmul.mubr.bf16.gmra.mrb[0].mxu0 %v3722
    %v3799 = vpop.f32.mrb[0].mxu0
    %v3800 = vadd.f32 %v781, %v3799
    %v3801 = vpop.f32.mrb[0].mxu0
    %v3802 = vpop.f32.mrb[0].mxu0
    %v3803 = vpop.f32.mrb[0].mxu0
    %3804 = vdwg.mxu0
    %v3805 = vadd.f32 %v3759, %v3568
    %v3806 = vadd.f32 %v3761, %v3570
    %v3807 = vmul.f32 %v3805, 0.5
    %v3808 = vmul.f32 %v3806, 0.5
    %v3809 = vtanh.pop %v3807
    %v3810 = vtanh.pop %v3808
    %v3811 = vadd.f32 %v3809, 1.0
    %v3812 = vadd.f32 %v3810, 1.0
    %v3813 = vmul.f32 %v3811, 0.5
    %v3814 = vmul.f32 %v3812, 0.5
    %v3815 = vadd.f32 %v3609, %v901
    %v3816 = vmul.f32 %v3813, %v3815
    %v3817 = vadd.f32 %v3800, %v3816
    %v3818 = vtanh.pop %v3817
    %v3819 = vsub.f32 1.0, %v3814
    %v3820 = vmul.f32 %v3819, %v3818
    %v3821 = vmul.f32 %v3814, %v3348
    %v3822 = vadd.f32 %v3820, %v3821
    %v3823 = vpack.c.bf16 %v3822, %v3822
    %v3825 = vsel %vm409, %v3823, 0
    %3827 = vmatprep.subr.bf16.mxu0 %v968
    %3828 = vmatpush1.bf16.msra.mxu0 %v967
    %3829 = vmatprep.subr.bf16.mxu0 %v971
    %3830 = vmatpush1.bf16.msra.mxu0 %v970
    %3831 = vmatprep.subr.bf16.mxu0 0
    %3832 = vmatpush1.bf16.msra.mxu0 0
    %3833 = vmatprep.subr.bf16.mxu0 0
    %3834 = vmatpush1.bf16.msra.mxu0 0
    %3835 = vmatprep.subr.bf16.mxu0 0
    %3836 = vmatpush1.bf16.msra.mxu0 0
    %3837 = vmatprep.subr.bf16.mxu0 0
    %3838 = vmatpush1.bf16.msra.mxu0 0
    %3839 = vmatprep.subr.bf16.mxu0 0
    %3840 = vmatpush1.bf16.msra.mxu0 0
    %3841 = vmatprep.subr.bf16.mxu0 0
    %3842 = vmatpush1.bf16.msra.mxu0 0
    %3843 = vmatprep.subr.bf16.mxu0 0
    %3844 = vmatpush1.bf16.msra.mxu0 0
    %3845 = vmatprep.subr.bf16.mxu0 0
    %3846 = vmatpush1.bf16.msra.mxu0 0
    %3847 = vmatprep.subr.bf16.mxu0 0
    %3848 = vmatpush1.bf16.msra.mxu0 0
    %3849 = vmatprep.subr.bf16.mxu0 0
    %3850 = vmatpush1.bf16.msra.mxu0 0
    %3851 = vmatprep.subr.bf16.mxu0 0
    %3852 = vmatpush1.bf16.msra.mxu0 0
    %3853 = vmatprep.subr.bf16.mxu0 0
    %3854 = vmatpush1.bf16.msra.mxu0 0
    %3855 = vmatprep.subr.bf16.mxu0 0
    %3856 = vmatpush1.bf16.msra.mxu0 0
    %3857 = vmatprep.subr.bf16.mxu0 0
    %3858 = vmatpush1.bf16.msra.mxu0 0
    %3859 = vmatprep.mubr.bf16.mxu0 0
    %3860 = vmatmul.mubr.bf16.gmra.mrb[0].mxu0 %v3825
    %v3861 = vpop.f32.mrb[0].mxu0
    %v3862 = vadd.f32 %v935, %v3861
    %v3863 = vpop.f32.mrb[0].mxu0
    %v3864 = vadd.f32 %v939, %v3863
    %v3865 = vpop.f32.mrb[0].mxu0
    %v3866 = vpop.f32.mrb[0].mxu0
    %3867 = vdwg.mxu0
    %3868 = vmatprep.subr.bf16.mxu0 0
    %3869 = vmatpush1.bf16.msra.mxu0 %v969
    %3870 = vmatprep.subr.bf16.mxu0 0
    %3871 = vmatpush1.bf16.msra.mxu0 %v972
    %3872 = vmatprep.subr.bf16.mxu0 0
    %3873 = vmatpush1.bf16.msra.mxu0 0
    %3874 = vmatprep.subr.bf16.mxu0 0
    %3875 = vmatpush1.bf16.msra.mxu0 0
    %3876 = vmatprep.subr.bf16.mxu0 0
    %3877 = vmatpush1.bf16.msra.mxu0 0
    %3878 = vmatprep.subr.bf16.mxu0 0
    %3879 = vmatpush1.bf16.msra.mxu0 0
    %3880 = vmatprep.subr.bf16.mxu0 0
    %3881 = vmatpush1.bf16.msra.mxu0 0
    %3882 = vmatprep.subr.bf16.mxu0 0
    %3883 = vmatpush1.bf16.msra.mxu0 0
    %3884 = vmatprep.subr.bf16.mxu0 0
    %3885 = vmatpush1.bf16.msra.mxu0 0
    %3886 = vmatprep.subr.bf16.mxu0 0
    %3887 = vmatpush1.bf16.msra.mxu0 0
    %3888 = vmatprep.subr.bf16.mxu0 0
    %3889 = vmatpush1.bf16.msra.mxu0 0
    %3890 = vmatprep.subr.bf16.mxu0 0
    %3891 = vmatpush1.bf16.msra.mxu0 0
    %3892 = vmatprep.subr.bf16.mxu0 0
    %3893 = vmatpush1.bf16.msra.mxu0 0
    %3894 = vmatprep.subr.bf16.mxu0 0
    %3895 = vmatpush1.bf16.msra.mxu0 0
    %3896 = vmatprep.subr.bf16.mxu0 0
    %3897 = vmatpush1.bf16.msra.mxu0 0
    %3898 = vmatprep.subr.bf16.mxu0 0
    %3899 = vmatpush1.bf16.msra.mxu0 0
    %3900 = vmatprep.mubr.bf16.mxu0 0
    %3901 = vmatmul.mubr.bf16.gmra.mrb[0].mxu0 %v3825
    %v3902 = vpop.f32.mrb[0].mxu0
    %v3903 = vadd.f32 %v943, %v3902
    %v3904 = vpop.f32.mrb[0].mxu0
    %v3905 = vpop.f32.mrb[0].mxu0
    %v3906 = vpop.f32.mrb[0].mxu0
    %3907 = vdwg.mxu0
    %v3908 = vadd.f32 %v3862, %v3653
    %v3909 = vadd.f32 %v3864, %v3655
    %v3910 = vmul.f32 %v3908, 0.5
    %v3911 = vmul.f32 %v3909, 0.5
    %v3912 = vtanh.pop %v3910
    %v3913 = vtanh.pop %v3911
    %v3914 = vadd.f32 %v3912, 1.0
    %v3915 = vadd.f32 %v3913, 1.0
    %v3916 = vmul.f32 %v3914, 0.5
    %v3917 = vmul.f32 %v3915, 0.5
    %v3918 = vadd.f32 %v3694, %v1063
    %v3919 = vmul.f32 %v3916, %v3918
    %v3920 = vadd.f32 %v3903, %v3919
    %v3921 = vtanh.pop %v3920
    %v3922 = vsub.f32 1.0, %v3917
    %v3923 = vmul.f32 %v3922, %v3921
    %v3924 = vmul.f32 %v3917, %v3451
    %v3925 = vadd.f32 %v3923, %v3924
    %3926 = vmatprep.subr.bf16.mxu0 %v398
    %3927 = vmatpush1.bf16.msra.mxu0 %v397
    %3928 = vmatprep.subr.bf16.mxu0 %v401
    %3929 = vmatpush1.bf16.msra.mxu0 %v400
    %3930 = vmatprep.subr.bf16.mxu0 0
    %3931 = vmatpush1.bf16.msra.mxu0 0
    %3932 = vmatprep.subr.bf16.mxu0 0
    %3933 = vmatpush1.bf16.msra.mxu0 0
    %3934 = vmatprep.subr.bf16.mxu0 0
    %3935 = vmatpush1.bf16.msra.mxu0 0
    %3936 = vmatprep.subr.bf16.mxu0 0
    %3937 = vmatpush1.bf16.msra.mxu0 0
    %3938 = vmatprep.subr.bf16.mxu0 0
    %3939 = vmatpush1.bf16.msra.mxu0 0
    %3940 = vmatprep.subr.bf16.mxu0 0
    %3941 = vmatpush1.bf16.msra.mxu0 0
    %3942 = vmatprep.subr.bf16.mxu0 0
    %3943 = vmatpush1.bf16.msra.mxu0 0
    %3944 = vmatprep.subr.bf16.mxu0 0
    %3945 = vmatpush1.bf16.msra.mxu0 0
    %3946 = vmatprep.subr.bf16.mxu0 0
    %3947 = vmatpush1.bf16.msra.mxu0 0
    %3948 = vmatprep.subr.bf16.mxu0 0
    %3949 = vmatpush1.bf16.msra.mxu0 0
    %3950 = vmatprep.subr.bf16.mxu0 0
    %3951 = vmatpush1.bf16.msra.mxu0 0
    %3952 = vmatprep.subr.bf16.mxu0 0
    %3953 = vmatpush1.bf16.msra.mxu0 0
    %3954 = vmatprep.subr.bf16.mxu0 0
    %3955 = vmatpush1.bf16.msra.mxu0 0
    %3956 = vmatprep.subr.bf16.mxu0 0
    %3957 = vmatpush1.bf16.msra.mxu0 0
    %3958 = vmatprep.mubr.bf16.mxu0 0
    %3959 = vmatmul.mubr.bf16.gmra.mrb[0].mxu0 %v3722
    %v3960 = vpop.f32.mrb[0].mxu0
    %v3961 = vadd.f32 0.0, %v3960
    %v3962 = vpop.f32.mrb[0].mxu0
    %v3963 = vadd.f32 0.0, %v3962
    %v3964 = vpop.f32.mrb[0].mxu0
    %v3965 = vpop.f32.mrb[0].mxu0
    %3966 = vdwg.mxu0
    %3967 = vmatprep.subr.bf16.mxu0 0
    %3968 = vmatpush1.bf16.msra.mxu0 %v399
    %3969 = vmatprep.subr.bf16.mxu0 0
    %3970 = vmatpush1.bf16.msra.mxu0 %v402
    %3971 = vmatprep.subr.bf16.mxu0 0
    %3972 = vmatpush1.bf16.msra.mxu0 0
    %3973 = vmatprep.subr.bf16.mxu0 0
    %3974 = vmatpush1.bf16.msra.mxu0 0
    %3975 = vmatprep.subr.bf16.mxu0 0
    %3976 = vmatpush1.bf16.msra.mxu0 0
    %3977 = vmatprep.subr.bf16.mxu0 0
    %3978 = vmatpush1.bf16.msra.mxu0 0
    %3979 = vmatprep.subr.bf16.mxu0 0
    %3980 = vmatpush1.bf16.msra.mxu0 0
    %3981 = vmatprep.subr.bf16.mxu0 0
    %3982 = vmatpush1.bf16.msra.mxu0 0
    %3983 = vmatprep.subr.bf16.mxu0 0
    %3984 = vmatpush1.bf16.msra.mxu0 0
    %3985 = vmatprep.subr.bf16.mxu0 0
    %3986 = vmatpush1.bf16.msra.mxu0 0
    %3987 = vmatprep.subr.bf16.mxu0 0
    %3988 = vmatpush1.bf16.msra.mxu0 0
    %3989 = vmatprep.subr.bf16.mxu0 0
    %3990 = vmatpush1.bf16.msra.mxu0 0
    %3991 = vmatprep.subr.bf16.mxu0 0
    %3992 = vmatpush1.bf16.msra.mxu0 0
    %3993 = vmatprep.subr.bf16.mxu0 0
    %3994 = vmatpush1.bf16.msra.mxu0 0
    %3995 = vmatprep.subr.bf16.mxu0 0
    %3996 = vmatpush1.bf16.msra.mxu0 0
    %3997 = vmatprep.subr.bf16.mxu0 0
    %3998 = vmatpush1.bf16.msra.mxu0 0
    %3999 = vmatprep.mubr.bf16.mxu0 0
    %4000 = vmatmul.mubr.bf16.gmra.mrb[0].mxu0 %v3722
    %v4001 = vpop.f32.mrb[0].mxu0
    %v4002 = vadd.f32 0.0, %v4001
    %v4003 = vpop.f32.mrb[0].mxu0
    %v4004 = vpop.f32.mrb[0].mxu0
    %v4005 = vpop.f32.mrb[0].mxu0
    %4006 = vdwg.mxu0
    %4007 = vmatprep.subr.bf16.mxu0 %v523
    %4008 = vmatpush1.bf16.msra.mxu0 %v522
    %4009 = vmatprep.subr.bf16.mxu0 %v526
    %4010 = vmatpush1.bf16.msra.mxu0 %v525
    %4011 = vmatprep.subr.bf16.mxu0 0
    %4012 = vmatpush1.bf16.msra.mxu0 0
    %4013 = vmatprep.subr.bf16.mxu0 0
    %4014 = vmatpush1.bf16.msra.mxu0 0
    %4015 = vmatprep.subr.bf16.mxu0 0
    %4016 = vmatpush1.bf16.msra.mxu0 0
    %4017 = vmatprep.subr.bf16.mxu0 0
    %4018 = vmatpush1.bf16.msra.mxu0 0
    %4019 = vmatprep.subr.bf16.mxu0 0
    %4020 = vmatpush1.bf16.msra.mxu0 0
    %4021 = vmatprep.subr.bf16.mxu0 0
    %4022 = vmatpush1.bf16.msra.mxu0 0
    %4023 = vmatprep.subr.bf16.mxu0 0
    %4024 = vmatpush1.bf16.msra.mxu0 0
    %4025 = vmatprep.subr.bf16.mxu0 0
    %4026 = vmatpush1.bf16.msra.mxu0 0
    %4027 = vmatprep.subr.bf16.mxu0 0
    %4028 = vmatpush1.bf16.msra.mxu0 0
    %4029 = vmatprep.subr.bf16.mxu0 0
    %4030 = vmatpush1.bf16.msra.mxu0 0
    %4031 = vmatprep.subr.bf16.mxu0 0
    %4032 = vmatpush1.bf16.msra.mxu0 0
    %4033 = vmatprep.subr.bf16.mxu0 0
    %4034 = vmatpush1.bf16.msra.mxu0 0
    %4035 = vmatprep.subr.bf16.mxu0 0
    %4036 = vmatpush1.bf16.msra.mxu0 0
    %4037 = vmatprep.subr.bf16.mxu0 0
    %4038 = vmatpush1.bf16.msra.mxu0 0
    %4039 = vmatprep.mubr.bf16.mxu0 0
    %4040 = vmatmul.mubr.bf16.gmra.mrb[0].mxu0 %v3825
    %v4041 = vpop.f32.mrb[0].mxu0
    %v4042 = vadd.f32 0.0, %v4041
    %v4043 = vpop.f32.mrb[0].mxu0
    %v4044 = vadd.f32 0.0, %v4043
    %v4045 = vpop.f32.mrb[0].mxu0
    %v4046 = vpop.f32.mrb[0].mxu0
    %4047 = vdwg.mxu0
    %4048 = vmatprep.subr.bf16.mxu0 0
    %4049 = vmatpush1.bf16.msra.mxu0 %v524
    %4050 = vmatprep.subr.bf16.mxu0 0
    %4051 = vmatpush1.bf16.msra.mxu0 %v527
    %4052 = vmatprep.subr.bf16.mxu0 0
    %4053 = vmatpush1.bf16.msra.mxu0 0
    %4054 = vmatprep.subr.bf16.mxu0 0
    %4055 = vmatpush1.bf16.msra.mxu0 0
    %4056 = vmatprep.subr.bf16.mxu0 0
    %4057 = vmatpush1.bf16.msra.mxu0 0
    %4058 = vmatprep.subr.bf16.mxu0 0
    %4059 = vmatpush1.bf16.msra.mxu0 0
    %4060 = vmatprep.subr.bf16.mxu0 0
    %4061 = vmatpush1.bf16.msra.mxu0 0
    %4062 = vmatprep.subr.bf16.mxu0 0
    %4063 = vmatpush1.bf16.msra.mxu0 0
    %4064 = vmatprep.subr.bf16.mxu0 0
    %4065 = vmatpush1.bf16.msra.mxu0 0
    %4066 = vmatprep.subr.bf16.mxu0 0
    %4067 = vmatpush1.bf16.msra.mxu0 0
    %4068 = vmatprep.subr.bf16.mxu0 0
    %4069 = vmatpush1.bf16.msra.mxu0 0
    %4070 = vmatprep.subr.bf16.mxu0 0
    %4071 = vmatpush1.bf16.msra.mxu0 0
    %4072 = vmatprep.subr.bf16.mxu0 0
    %4073 = vmatpush1.bf16.msra.mxu0 0
    %4074 = vmatprep.subr.bf16.mxu0 0
    %4075 = vmatpush1.bf16.msra.mxu0 0
    %4076 = vmatprep.subr.bf16.mxu0 0
    %4077 = vmatpush1.bf16.msra.mxu0 0
    %4078 = vmatprep.subr.bf16.mxu0 0
    %4079 = vmatpush1.bf16.msra.mxu0 0
    %4080 = vmatprep.mubr.bf16.mxu0 0
    %4081 = vmatmul.mubr.bf16.gmra.mrb[0].mxu0 %v3825
    %v4082 = vpop.f32.mrb[0].mxu0
    %v4083 = vadd.f32 0.0, %v4082
    %v4084 = vpop.f32.mrb[0].mxu0
    %v4085 = vpop.f32.mrb[0].mxu0
    %v4086 = vpop.f32.mrb[0].mxu0
    %4087 = vdwg.mxu0
    %v4088 = vpack.c.bf16 %v3925, %v3925
    %v4090 = vsel %vm409, %v4088, 0
    %4092 = vmatprep.subr.bf16.mxu0 %v644
    %4093 = vmatpush1.bf16.msra.mxu0 %v643
    %4094 = vmatprep.subr.bf16.mxu0 %v647
    %4095 = vmatpush1.bf16.msra.mxu0 %v646
    %4096 = vmatprep.subr.bf16.mxu0 0
    %4097 = vmatpush1.bf16.msra.mxu0 0
    %4098 = vmatprep.subr.bf16.mxu0 0
    %4099 = vmatpush1.bf16.msra.mxu0 0
    %4100 = vmatprep.subr.bf16.mxu0 0
    %4101 = vmatpush1.bf16.msra.mxu0 0
    %4102 = vmatprep.subr.bf16.mxu0 0
    %4103 = vmatpush1.bf16.msra.mxu0 0
    %4104 = vmatprep.subr.bf16.mxu0 0
    %4105 = vmatpush1.bf16.msra.mxu0 0
    %4106 = vmatprep.subr.bf16.mxu0 0
    %4107 = vmatpush1.bf16.msra.mxu0 0
    %4108 = vmatprep.subr.bf16.mxu0 0
    %4109 = vmatpush1.bf16.msra.mxu0 0
    %4110 = vmatprep.subr.bf16.mxu0 0
    %4111 = vmatpush1.bf16.msra.mxu0 0
    %4112 = vmatprep.subr.bf16.mxu0 0
    %4113 = vmatpush1.bf16.msra.mxu0 0
    %4114 = vmatprep.subr.bf16.mxu0 0
    %4115 = vmatpush1.bf16.msra.mxu0 0
    %4116 = vmatprep.subr.bf16.mxu0 0
    %4117 = vmatpush1.bf16.msra.mxu0 0
    %4118 = vmatprep.subr.bf16.mxu0 0
    %4119 = vmatpush1.bf16.msra.mxu0 0
    %4120 = vmatprep.subr.bf16.mxu0 0
    %4121 = vmatpush1.bf16.msra.mxu0 0
    %4122 = vmatprep.subr.bf16.mxu0 0
    %4123 = vmatpush1.bf16.msra.mxu0 0
    %4124 = vmatprep.mubr.bf16.mxu0 0
    %4125 = vmatmul.mubr.bf16.gmra.mrb[0].mxu0 %v4090
    %v4126 = vpop.f32.mrb[0].mxu0
    %v4127 = vadd.f32 0.0, %v4126
    %v4128 = vpop.f32.mrb[0].mxu0
    %v4129 = vadd.f32 0.0, %v4128
    %v4130 = vpop.f32.mrb[0].mxu0
    %v4131 = vpop.f32.mrb[0].mxu0
    %4132 = vdwg.mxu0
    %4133 = vmatprep.subr.bf16.mxu0 0
    %4134 = vmatpush1.bf16.msra.mxu0 %v645
    %4135 = vmatprep.subr.bf16.mxu0 0
    %4136 = vmatpush1.bf16.msra.mxu0 %v648
    %4137 = vmatprep.subr.bf16.mxu0 0
    %4138 = vmatpush1.bf16.msra.mxu0 0
    %4139 = vmatprep.subr.bf16.mxu0 0
    %4140 = vmatpush1.bf16.msra.mxu0 0
    %4141 = vmatprep.subr.bf16.mxu0 0
    %4142 = vmatpush1.bf16.msra.mxu0 0
    %4143 = vmatprep.subr.bf16.mxu0 0
    %4144 = vmatpush1.bf16.msra.mxu0 0
    %4145 = vmatprep.subr.bf16.mxu0 0
    %4146 = vmatpush1.bf16.msra.mxu0 0
    %4147 = vmatprep.subr.bf16.mxu0 0
    %4148 = vmatpush1.bf16.msra.mxu0 0
    %4149 = vmatprep.subr.bf16.mxu0 0
    %4150 = vmatpush1.bf16.msra.mxu0 0
    %4151 = vmatprep.subr.bf16.mxu0 0
    %4152 = vmatpush1.bf16.msra.mxu0 0
    %4153 = vmatprep.subr.bf16.mxu0 0
    %4154 = vmatpush1.bf16.msra.mxu0 0
    %4155 = vmatprep.subr.bf16.mxu0 0
    %4156 = vmatpush1.bf16.msra.mxu0 0
    %4157 = vmatprep.subr.bf16.mxu0 0
    %4158 = vmatpush1.bf16.msra.mxu0 0
    %4159 = vmatprep.subr.bf16.mxu0 0
    %4160 = vmatpush1.bf16.msra.mxu0 0
    %4161 = vmatprep.subr.bf16.mxu0 0
    %4162 = vmatpush1.bf16.msra.mxu0 0
    %4163 = vmatprep.subr.bf16.mxu0 0
    %4164 = vmatpush1.bf16.msra.mxu0 0
    %4165 = vmatprep.mubr.bf16.mxu0 0
    %4166 = vmatmul.mubr.bf16.gmra.mrb[0].mxu0 %v4090
    %v4167 = vpop.f32.mrb[0].mxu0
    %v4168 = vadd.f32 0.0, %v4167
    %v4169 = vpop.f32.mrb[0].mxu0
    %v4170 = vpop.f32.mrb[0].mxu0
    %v4171 = vpop.f32.mrb[0].mxu0
    %4172 = vdwg.mxu0
    %v4173 = vld [vmem:[#allocation2 + $0xa8] sm:$0xff]
    %v4174 = vld [vmem:[#allocation2 + $0xb0] sm:$0xff]
    %v4175 = vld [vmem:[#allocation2 + $0xb8] sm:$0xff]
    %v4176 = vadd.f32 %v4173, %v3961
    %v4177 = vadd.f32 %v4174, %v3963
    %v4178 = vmul.f32 %v4176, 0.5
    %v4179 = vmul.f32 %v4177, 0.5
    %v4180 = vtanh.pop %v4178
    %v4181 = vtanh.pop %v4179
    %v4182 = vadd.f32 %v4180, 1.0
    %v4183 = vadd.f32 %v4181, 1.0
    %v4184 = vmul.f32 %v4182, 0.5
    %v4185 = vmul.f32 %v4183, 0.5
    %v4186 = vadd.f32 %v4002, %v739
    %v4187 = vmul.f32 %v4184, %v4186
    %v4188 = vadd.f32 %v4175, %v4187
    %v4189 = vtanh.pop %v4188
    %v4190 = vsub.f32 1.0, %v4185
    %v4191 = vmul.f32 %v4190, %v4189
    %v4192 = vmul.f32 %v4185, %v3719
    %v4193 = vadd.f32 %v4191, %v4192
    %v4194 = vpack.c.bf16 %v4193, %v4193
    %v4196 = vsel %vm409, %v4194, 0
    %4198 = vmatprep.subr.bf16.mxu0 %v806
    %4199 = vmatpush1.bf16.msra.mxu0 %v805
    %4200 = vmatprep.subr.bf16.mxu0 %v809
    %4201 = vmatpush1.bf16.msra.mxu0 %v808
    %4202 = vmatprep.subr.bf16.mxu0 0
    %4203 = vmatpush1.bf16.msra.mxu0 0
    %4204 = vmatprep.subr.bf16.mxu0 0
    %4205 = vmatpush1.bf16.msra.mxu0 0
    %4206 = vmatprep.subr.bf16.mxu0 0
    %4207 = vmatpush1.bf16.msra.mxu0 0
    %4208 = vmatprep.subr.bf16.mxu0 0
    %4209 = vmatpush1.bf16.msra.mxu0 0
    %4210 = vmatprep.subr.bf16.mxu0 0
    %4211 = vmatpush1.bf16.msra.mxu0 0
    %4212 = vmatprep.subr.bf16.mxu0 0
    %4213 = vmatpush1.bf16.msra.mxu0 0
    %4214 = vmatprep.subr.bf16.mxu0 0
    %4215 = vmatpush1.bf16.msra.mxu0 0
    %4216 = vmatprep.subr.bf16.mxu0 0
    %4217 = vmatpush1.bf16.msra.mxu0 0
    %4218 = vmatprep.subr.bf16.mxu0 0
    %4219 = vmatpush1.bf16.msra.mxu0 0
    %4220 = vmatprep.subr.bf16.mxu0 0
    %4221 = vmatpush1.bf16.msra.mxu0 0
    %4222 = vmatprep.subr.bf16.mxu0 0
    %4223 = vmatpush1.bf16.msra.mxu0 0
    %4224 = vmatprep.subr.bf16.mxu0 0
    %4225 = vmatpush1.bf16.msra.mxu0 0
    %4226 = vmatprep.subr.bf16.mxu0 0
    %4227 = vmatpush1.bf16.msra.mxu0 0
    %4228 = vmatprep.subr.bf16.mxu0 0
    %4229 = vmatpush1.bf16.msra.mxu0 0
    %4230 = vmatprep.mubr.bf16.mxu0 0
    %4231 = vmatmul.mubr.bf16.gmra.mrb[0].mxu0 %v4196
    %v4232 = vpop.f32.mrb[0].mxu0
    %v4233 = vadd.f32 %v773, %v4232
    %v4234 = vpop.f32.mrb[0].mxu0
    %v4235 = vadd.f32 %v777, %v4234
    %v4236 = vpop.f32.mrb[0].mxu0
    %v4237 = vpop.f32.mrb[0].mxu0
    %4238 = vdwg.mxu0
    %4239 = vmatprep.subr.bf16.mxu0 0
    %4240 = vmatpush1.bf16.msra.mxu0 %v807
    %4241 = vmatprep.subr.bf16.mxu0 0
    %4242 = vmatpush1.bf16.msra.mxu0 %v810
    %4243 = vmatprep.subr.bf16.mxu0 0
    %4244 = vmatpush1.bf16.msra.mxu0 0
    %4245 = vmatprep.subr.bf16.mxu0 0
    %4246 = vmatpush1.bf16.msra.mxu0 0
    %4247 = vmatprep.subr.bf16.mxu0 0
    %4248 = vmatpush1.bf16.msra.mxu0 0
    %4249 = vmatprep.subr.bf16.mxu0 0
    %4250 = vmatpush1.bf16.msra.mxu0 0
    %4251 = vmatprep.subr.bf16.mxu0 0
    %4252 = vmatpush1.bf16.msra.mxu0 0
    %4253 = vmatprep.subr.bf16.mxu0 0
    %4254 = vmatpush1.bf16.msra.mxu0 0
    %4255 = vmatprep.subr.bf16.mxu0 0
    %4256 = vmatpush1.bf16.msra.mxu0 0
    %4257 = vmatprep.subr.bf16.mxu0 0
    %4258 = vmatpush1.bf16.msra.mxu0 0
    %4259 = vmatprep.subr.bf16.mxu0 0
    %4260 = vmatpush1.bf16.msra.mxu0 0
    %4261 = vmatprep.subr.bf16.mxu0 0
    %4262 = vmatpush1.bf16.msra.mxu0 0
    %4263 = vmatprep.subr.bf16.mxu0 0
    %4264 = vmatpush1.bf16.msra.mxu0 0
    %4265 = vmatprep.subr.bf16.mxu0 0
    %4266 = vmatpush1.bf16.msra.mxu0 0
    %4267 = vmatprep.subr.bf16.mxu0 0
    %4268 = vmatpush1.bf16.msra.mxu0 0
    %4269 = vmatprep.subr.bf16.mxu0 0
    %4270 = vmatpush1.bf16.msra.mxu0 0
    %4271 = vmatprep.mubr.bf16.mxu0 0
    %4272 = vmatmul.mubr.bf16.gmra.mrb[0].mxu0 %v4196
    %v4273 = vpop.f32.mrb[0].mxu0
    %v4274 = vadd.f32 %v781, %v4273
    %v4275 = vpop.f32.mrb[0].mxu0
    %v4276 = vpop.f32.mrb[0].mxu0
    %v4277 = vpop.f32.mrb[0].mxu0
    %4278 = vdwg.mxu0
    %v4279 = vadd.f32 %v4233, %v4042
    %v4280 = vadd.f32 %v4235, %v4044
    %v4281 = vmul.f32 %v4279, 0.5
    %v4282 = vmul.f32 %v4280, 0.5
    %v4283 = vtanh.pop %v4281
    %v4284 = vtanh.pop %v4282
    %v4285 = vadd.f32 %v4283, 1.0
    %v4286 = vadd.f32 %v4284, 1.0
    %v4287 = vmul.f32 %v4285, 0.5
    %v4288 = vmul.f32 %v4286, 0.5
    %v4289 = vadd.f32 %v4083, %v901
    %v4290 = vmul.f32 %v4287, %v4289
    %v4291 = vadd.f32 %v4274, %v4290
    %v4292 = vtanh.pop %v4291
    %v4293 = vsub.f32 1.0, %v4288
    %v4294 = vmul.f32 %v4293, %v4292
    %v4295 = vmul.f32 %v4288, %v3822
    %v4296 = vadd.f32 %v4294, %v4295
    %v4297 = vpack.c.bf16 %v4296, %v4296
    %v4299 = vsel %vm409, %v4297, 0
    %4301 = vmatprep.subr.bf16.mxu0 %v968
    %4302 = vmatpush1.bf16.msra.mxu0 %v967
    %4303 = vmatprep.subr.bf16.mxu0 %v971
    %4304 = vmatpush1.bf16.msra.mxu0 %v970
    %4305 = vmatprep.subr.bf16.mxu0 0
    %4306 = vmatpush1.bf16.msra.mxu0 0
    %4307 = vmatprep.subr.bf16.mxu0 0
    %4308 = vmatpush1.bf16.msra.mxu0 0
    %4309 = vmatprep.subr.bf16.mxu0 0
    %4310 = vmatpush1.bf16.msra.mxu0 0
    %4311 = vmatprep.subr.bf16.mxu0 0
    %4312 = vmatpush1.bf16.msra.mxu0 0
    %4313 = vmatprep.subr.bf16.mxu0 0
    %4314 = vmatpush1.bf16.msra.mxu0 0
    %4315 = vmatprep.subr.bf16.mxu0 0
    %4316 = vmatpush1.bf16.msra.mxu0 0
    %4317 = vmatprep.subr.bf16.mxu0 0
    %4318 = vmatpush1.bf16.msra.mxu0 0
    %4319 = vmatprep.subr.bf16.mxu0 0
    %4320 = vmatpush1.bf16.msra.mxu0 0
    %4321 = vmatprep.subr.bf16.mxu0 0
    %4322 = vmatpush1.bf16.msra.mxu0 0
    %4323 = vmatprep.subr.bf16.mxu0 0
    %4324 = vmatpush1.bf16.msra.mxu0 0
    %4325 = vmatprep.subr.bf16.mxu0 0
    %4326 = vmatpush1.bf16.msra.mxu0 0
    %4327 = vmatprep.subr.bf16.mxu0 0
    %4328 = vmatpush1.bf16.msra.mxu0 0
    %4329 = vmatprep.subr.bf16.mxu0 0
    %4330 = vmatpush1.bf16.msra.mxu0 0
    %4331 = vmatprep.subr.bf16.mxu0 0
    %4332 = vmatpush1.bf16.msra.mxu0 0
    %4333 = vmatprep.mubr.bf16.mxu0 0
    %4334 = vmatmul.mubr.bf16.gmra.mrb[0].mxu0 %v4299
    %v4335 = vpop.f32.mrb[0].mxu0
    %v4336 = vadd.f32 %v935, %v4335
    %v4337 = vpop.f32.mrb[0].mxu0
    %v4338 = vadd.f32 %v939, %v4337
    %v4339 = vpop.f32.mrb[0].mxu0
    %v4340 = vpop.f32.mrb[0].mxu0
    %4341 = vdwg.mxu0
    %4342 = vmatprep.subr.bf16.mxu0 0
    %4343 = vmatpush1.bf16.msra.mxu0 %v969
    %4344 = vmatprep.subr.bf16.mxu0 0
    %4345 = vmatpush1.bf16.msra.mxu0 %v972
    %4346 = vmatprep.subr.bf16.mxu0 0
    %4347 = vmatpush1.bf16.msra.mxu0 0
    %4348 = vmatprep.subr.bf16.mxu0 0
    %4349 = vmatpush1.bf16.msra.mxu0 0
    %4350 = vmatprep.subr.bf16.mxu0 0
    %4351 = vmatpush1.bf16.msra.mxu0 0
    %4352 = vmatprep.subr.bf16.mxu0 0
    %4353 = vmatpush1.bf16.msra.mxu0 0
    %4354 = vmatprep.subr.bf16.mxu0 0
    %4355 = vmatpush1.bf16.msra.mxu0 0
    %4356 = vmatprep.subr.bf16.mxu0 0
    %4357 = vmatpush1.bf16.msra.mxu0 0
    %4358 = vmatprep.subr.bf16.mxu0 0
    %4359 = vmatpush1.bf16.msra.mxu0 0
    %4360 = vmatprep.subr.bf16.mxu0 0
    %4361 = vmatpush1.bf16.msra.mxu0 0
    %4362 = vmatprep.subr.bf16.mxu0 0
    %4363 = vmatpush1.bf16.msra.mxu0 0
    %4364 = vmatprep.subr.bf16.mxu0 0
    %4365 = vmatpush1.bf16.msra.mxu0 0
    %4366 = vmatprep.subr.bf16.mxu0 0
    %4367 = vmatpush1.bf16.msra.mxu0 0
    %4368 = vmatprep.subr.bf16.mxu0 0
    %4369 = vmatpush1.bf16.msra.mxu0 0
    %4370 = vmatprep.subr.bf16.mxu0 0
    %4371 = vmatpush1.bf16.msra.mxu0 0
    %4372 = vmatprep.subr.bf16.mxu0 0
    %4373 = vmatpush1.bf16.msra.mxu0 0
    %4374 = vmatprep.mubr.bf16.mxu0 0
    %4375 = vmatmul.mubr.bf16.gmra.mrb[0].mxu0 %v4299
    %v4376 = vpop.f32.mrb[0].mxu0
    %v4377 = vadd.f32 %v943, %v4376
    %v4378 = vpop.f32.mrb[0].mxu0
    %v4379 = vpop.f32.mrb[0].mxu0
    %v4380 = vpop.f32.mrb[0].mxu0
    %4381 = vdwg.mxu0
    %v4382 = vadd.f32 %v4336, %v4127
    %v4383 = vadd.f32 %v4338, %v4129
    %v4384 = vmul.f32 %v4382, 0.5
    %v4385 = vmul.f32 %v4383, 0.5
    %v4386 = vtanh.pop %v4384
    %v4387 = vtanh.pop %v4385
    %v4388 = vadd.f32 %v4386, 1.0
    %v4389 = vadd.f32 %v4387, 1.0
    %v4390 = vmul.f32 %v4388, 0.5
    %v4391 = vmul.f32 %v4389, 0.5
    %v4392 = vadd.f32 %v4168, %v1063
    %v4393 = vmul.f32 %v4390, %v4392
    %v4394 = vadd.f32 %v4377, %v4393
    %v4395 = vtanh.pop %v4394
    %v4396 = vsub.f32 1.0, %v4391
    %v4397 = vmul.f32 %v4396, %v4395
    %v4398 = vmul.f32 %v4391, %v3925
    %v4399 = vadd.f32 %v4397, %v4398
    %v4400 = vld [vmem:[#allocation6 + $0x20] ss:$0 sm:$0xff]
    %v4401 = vld [vmem:[#allocation3 + $0x90] sm:$0xff]
    %v4402 = vld [vmem:[#allocation3 + $0x98] sm:$0xf]
    %v4403 = vld [vmem:[#allocation3 + $0xb4] sm:$0xff]
    %v4404 = vld [vmem:[#allocation3 + $0xbc] sm:$0xf]
    %v4405 = vld [vmem:[#allocation3 + $0xd8] sm:$0xff]
    %v4406 = vld [vmem:[#allocation3 + $0xe0] sm:$0xf]
    %v4407 = vld [vmem:[#allocation3 + $0xfc] sm:$0xff]
    %v4408 = vld [vmem:[#allocation3 + $0x104] sm:$0xf]
    %v4417 = vunpack.c.l.b16 %v4401
    %v4418 = vunpack.c.h.b16 %v4401
    %v4419 = vunpack.c.l.b16 %v4402
    %v4420 = vunpack.c.l.b16 %v4403
    %v4421 = vunpack.c.h.b16 %v4403
    %v4422 = vunpack.c.l.b16 %v4404
    %v4423 = vunpack.c.l.b16 %v4405
    %v4424 = vunpack.c.h.b16 %v4405
    %v4425 = vunpack.c.l.b16 %v4406
    %v4426 = vunpack.c.l.b16 %v4407
    %v4427 = vunpack.c.h.b16 %v4407
    %v4428 = vunpack.c.l.b16 %v4408
    %v4429 = vpack.c.b16 %v4420, %v4417
    %v4430 = vpack.c.b16 %v4421, %v4418
    %v4431 = vpack.c.b16 %v4422, %v4419
    %v4432 = vpack.c.b16 %v4426, %v4423
    %v4433 = vpack.c.b16 %v4427, %v4424
    %v4434 = vpack.c.b16 %v4428, %v4425
    %4441 = vmatprep.subr.bf16.mxu0 %v4430
    %4442 = vmatpush1.bf16.msra.mxu0 %v4429
    %4443 = vmatprep.subr.bf16.mxu0 %v4433
    %4444 = vmatpush1.bf16.msra.mxu0 %v4432
    %4445 = vmatprep.subr.bf16.mxu0 0
    %4446 = vmatpush1.bf16.msra.mxu0 0
    %4447 = vmatprep.subr.bf16.mxu0 0
    %4448 = vmatpush1.bf16.msra.mxu0 0
    %4449 = vmatprep.subr.bf16.mxu0 0
    %4450 = vmatpush1.bf16.msra.mxu0 0
    %4451 = vmatprep.subr.bf16.mxu0 0
    %4452 = vmatpush1.bf16.msra.mxu0 0
    %4453 = vmatprep.subr.bf16.mxu0 0
    %4454 = vmatpush1.bf16.msra.mxu0 0
    %4455 = vmatprep.subr.bf16.mxu0 0
    %4456 = vmatpush1.bf16.msra.mxu0 0
    %4457 = vmatprep.subr.bf16.mxu0 0
    %4458 = vmatpush1.bf16.msra.mxu0 0
    %4459 = vmatprep.subr.bf16.mxu0 0
    %4460 = vmatpush1.bf16.msra.mxu0 0
    %4461 = vmatprep.subr.bf16.mxu0 0
    %4462 = vmatpush1.bf16.msra.mxu0 0
    %4463 = vmatprep.subr.bf16.mxu0 0
    %4464 = vmatpush1.bf16.msra.mxu0 0
    %4465 = vmatprep.subr.bf16.mxu0 0
    %4466 = vmatpush1.bf16.msra.mxu0 0
    %4467 = vmatprep.subr.bf16.mxu0 0
    %4468 = vmatpush1.bf16.msra.mxu0 0
    %4469 = vmatprep.subr.bf16.mxu0 0
    %4470 = vmatpush1.bf16.msra.mxu0 0
    %4471 = vmatprep.subr.bf16.mxu0 0
    %4472 = vmatpush1.bf16.msra.mxu0 0
    %4473 = vmatprep.mubr.bf16.mxu0 0
    %4474 = vmatmul.mubr.bf16.gmra.mrb[0].mxu0 %v4196
    %v4475 = vpop.f32.mrb[0].mxu0
    %v4476 = vadd.f32 0.0, %v4475
    %v4477 = vpop.f32.mrb[0].mxu0
    %v4478 = vadd.f32 0.0, %v4477
    %v4479 = vpop.f32.mrb[0].mxu0
    %v4480 = vpop.f32.mrb[0].mxu0
    %4481 = vdwg.mxu0
    %4482 = vmatprep.subr.bf16.mxu0 0
    %4483 = vmatpush1.bf16.msra.mxu0 %v4431
    %4484 = vmatprep.subr.bf16.mxu0 0
    %4485 = vmatpush1.bf16.msra.mxu0 %v4434
    %4486 = vmatprep.subr.bf16.mxu0 0
    %4487 = vmatpush1.bf16.msra.mxu0 0
    %4488 = vmatprep.subr.bf16.mxu0 0
    %4489 = vmatpush1.bf16.msra.mxu0 0
    %4490 = vmatprep.subr.bf16.mxu0 0
    %4491 = vmatpush1.bf16.msra.mxu0 0
    %4492 = vmatprep.subr.bf16.mxu0 0
    %4493 = vmatpush1.bf16.msra.mxu0 0
    %4494 = vmatprep.subr.bf16.mxu0 0
    %4495 = vmatpush1.bf16.msra.mxu0 0
    %4496 = vmatprep.subr.bf16.mxu0 0
    %4497 = vmatpush1.bf16.msra.mxu0 0
    %4498 = vmatprep.subr.bf16.mxu0 0
    %4499 = vmatpush1.bf16.msra.mxu0 0
    %4500 = vmatprep.subr.bf16.mxu0 0
    %4501 = vmatpush1.bf16.msra.mxu0 0
    %4502 = vmatprep.subr.bf16.mxu0 0
    %4503 = vmatpush1.bf16.msra.mxu0 0
    %4504 = vmatprep.subr.bf16.mxu0 0
    %4505 = vmatpush1.bf16.msra.mxu0 0
    %4506 = vmatprep.subr.bf16.mxu0 0
    %4507 = vmatpush1.bf16.msra.mxu0 0
    %4508 = vmatprep.subr.bf16.mxu0 0
    %4509 = vmatpush1.bf16.msra.mxu0 0
    %4510 = vmatprep.subr.bf16.mxu0 0
    %4511 = vmatpush1.bf16.msra.mxu0 0
    %4512 = vmatprep.subr.bf16.mxu0 0
    %4513 = vmatpush1.bf16.msra.mxu0 0
    %4514 = vmatprep.mubr.bf16.mxu0 0
    %4515 = vmatmul.mubr.bf16.gmra.mrb[0].mxu0 %v4196
    %v4516 = vpop.f32.mrb[0].mxu0
    %v4517 = vadd.f32 0.0, %v4516
    %v4518 = vpop.f32.mrb[0].mxu0
    %v4519 = vpop.f32.mrb[0].mxu0
    %v4520 = vpop.f32.mrb[0].mxu0
    %4521 = vdwg.mxu0
    %v4522 = vld [vmem:[#allocation3 + $0x9c] sm:$0xff]
    %v4523 = vld [vmem:[#allocation3 + $0xa4] sm:$0xf]
    %v4524 = vld [vmem:[#allocation3 + $0xc0] sm:$0xff]
    %v4525 = vld [vmem:[#allocation3 + $0xc8] sm:$0xf]
    %v4526 = vld [vmem:[#allocation3 + $0xe4] sm:$0xff]
    %v4527 = vld [vmem:[#allocation3 + $0xec] sm:$0xf]
    %v4528 = vld [vmem:[#allocation3 + $0x108] sm:$0xff]
    %v4529 = vld [vmem:[#allocation3 + $0x110] sm:$0xf]
    %v4538 = vunpack.c.l.b16 %v4522
    %v4539 = vunpack.c.h.b16 %v4522
    %v4540 = vunpack.c.l.b16 %v4523
    %v4541 = vunpack.c.l.b16 %v4524
    %v4542 = vunpack.c.h.b16 %v4524
    %v4543 = vunpack.c.l.b16 %v4525
    %v4544 = vunpack.c.l.b16 %v4526
    %v4545 = vunpack.c.h.b16 %v4526
    %v4546 = vunpack.c.l.b16 %v4527
    %v4547 = vunpack.c.l.b16 %v4528
    %v4548 = vunpack.c.h.b16 %v4528
    %v4549 = vunpack.c.l.b16 %v4529
    %v4550 = vpack.c.b16 %v4541, %v4538
    %v4551 = vpack.c.b16 %v4542, %v4539
    %v4552 = vpack.c.b16 %v4543, %v4540
    %v4553 = vpack.c.b16 %v4547, %v4544
    %v4554 = vpack.c.b16 %v4548, %v4545
    %v4555 = vpack.c.b16 %v4549, %v4546
    %4562 = vmatprep.subr.bf16.mxu0 %v4551
    %4563 = vmatpush1.bf16.msra.mxu0 %v4550
    %4564 = vmatprep.subr.bf16.mxu0 %v4554
    %4565 = vmatpush1.bf16.msra.mxu0 %v4553
    %4566 = vmatprep.subr.bf16.mxu0 0
    %4567 = vmatpush1.bf16.msra.mxu0 0
    %4568 = vmatprep.subr.bf16.mxu0 0
    %4569 = vmatpush1.bf16.msra.mxu0 0
    %4570 = vmatprep.subr.bf16.mxu0 0
    %4571 = vmatpush1.bf16.msra.mxu0 0
    %4572 = vmatprep.subr.bf16.mxu0 0
    %4573 = vmatpush1.bf16.msra.mxu0 0
    %4574 = vmatprep.subr.bf16.mxu0 0
    %4575 = vmatpush1.bf16.msra.mxu0 0
    %4576 = vmatprep.subr.bf16.mxu0 0
    %4577 = vmatpush1.bf16.msra.mxu0 0
    %4578 = vmatprep.subr.bf16.mxu0 0
    %4579 = vmatpush1.bf16.msra.mxu0 0
    %4580 = vmatprep.subr.bf16.mxu0 0
    %4581 = vmatpush1.bf16.msra.mxu0 0
    %4582 = vmatprep.subr.bf16.mxu0 0
    %4583 = vmatpush1.bf16.msra.mxu0 0
    %4584 = vmatprep.subr.bf16.mxu0 0
    %4585 = vmatpush1.bf16.msra.mxu0 0
    %4586 = vmatprep.subr.bf16.mxu0 0
    %4587 = vmatpush1.bf16.msra.mxu0 0
    %4588 = vmatprep.subr.bf16.mxu0 0
    %4589 = vmatpush1.bf16.msra.mxu0 0
    %4590 = vmatprep.subr.bf16.mxu0 0
    %4591 = vmatpush1.bf16.msra.mxu0 0
    %4592 = vmatprep.subr.bf16.mxu0 0
    %4593 = vmatpush1.bf16.msra.mxu0 0
    %4594 = vmatprep.mubr.bf16.mxu0 0
    %4595 = vmatmul.mubr.bf16.gmra.mrb[0].mxu0 %v4299
    %v4596 = vpop.f32.mrb[0].mxu0
    %v4597 = vadd.f32 0.0, %v4596
    %v4598 = vpop.f32.mrb[0].mxu0
    %v4599 = vadd.f32 0.0, %v4598
    %v4600 = vpop.f32.mrb[0].mxu0
    %v4601 = vpop.f32.mrb[0].mxu0
    %4602 = vdwg.mxu0
    %4603 = vmatprep.subr.bf16.mxu0 0
    %4604 = vmatpush1.bf16.msra.mxu0 %v4552
    %4605 = vmatprep.subr.bf16.mxu0 0
    %4606 = vmatpush1.bf16.msra.mxu0 %v4555
    %4607 = vmatprep.subr.bf16.mxu0 0
    %4608 = vmatpush1.bf16.msra.mxu0 0
    %4609 = vmatprep.subr.bf16.mxu0 0
    %4610 = vmatpush1.bf16.msra.mxu0 0
    %4611 = vmatprep.subr.bf16.mxu0 0
    %4612 = vmatpush1.bf16.msra.mxu0 0
    %4613 = vmatprep.subr.bf16.mxu0 0
    %4614 = vmatpush1.bf16.msra.mxu0 0
    %4615 = vmatprep.subr.bf16.mxu0 0
    %4616 = vmatpush1.bf16.msra.mxu0 0
    %4617 = vmatprep.subr.bf16.mxu0 0
    %4618 = vmatpush1.bf16.msra.mxu0 0
    %4619 = vmatprep.subr.bf16.mxu0 0
    %4620 = vmatpush1.bf16.msra.mxu0 0
    %4621 = vmatprep.subr.bf16.mxu0 0
    %4622 = vmatpush1.bf16.msra.mxu0 0
    %4623 = vmatprep.subr.bf16.mxu0 0
    %4624 = vmatpush1.bf16.msra.mxu0 0
    %4625 = vmatprep.subr.bf16.mxu0 0
    %4626 = vmatpush1.bf16.msra.mxu0 0
    %4627 = vmatprep.subr.bf16.mxu0 0
    %4628 = vmatpush1.bf16.msra.mxu0 0
    %4629 = vmatprep.subr.bf16.mxu0 0
    %4630 = vmatpush1.bf16.msra.mxu0 0
    %4631 = vmatprep.subr.bf16.mxu0 0
    %4632 = vmatpush1.bf16.msra.mxu0 0
    %4633 = vmatprep.subr.bf16.mxu0 0
    %4634 = vmatpush1.bf16.msra.mxu0 0
    %4635 = vmatprep.mubr.bf16.mxu0 0
    %4636 = vmatmul.mubr.bf16.gmra.mrb[0].mxu0 %v4299
    %v4637 = vpop.f32.mrb[0].mxu0
    %v4638 = vadd.f32 0.0, %v4637
    %v4639 = vpop.f32.mrb[0].mxu0
    %v4640 = vpop.f32.mrb[0].mxu0
    %v4641 = vpop.f32.mrb[0].mxu0
    %4642 = vdwg.mxu0
    %v4643 = vpack.c.bf16 %v4399, %v4399
    %v4644 = vld [vmem:[#allocation3 + $0xa8] sm:$0xff]
    %v4645 = vld [vmem:[#allocation3 + $0xb0] sm:$0xf]
    %v4646 = vld [vmem:[#allocation3 + $0xcc] sm:$0xff]
    %v4647 = vld [vmem:[#allocation3 + $0xd4] sm:$0xf]
    %v4648 = vld [vmem:[#allocation3 + $0xf0] sm:$0xff]
    %v4649 = vld [vmem:[#allocation3 + $0xf8] sm:$0xf]
    %v4650 = vld [vmem:[#allocation3 + $0x114] sm:$0xff]
    %v4651 = vld [vmem:[#allocation3 + $0x11c] sm:$0xf]
    %v4660 = vunpack.c.l.b16 %v4644
    %v4661 = vunpack.c.h.b16 %v4644
    %v4662 = vunpack.c.l.b16 %v4645
    %v4663 = vunpack.c.l.b16 %v4646
    %v4664 = vunpack.c.h.b16 %v4646
    %v4665 = vunpack.c.l.b16 %v4647
    %v4666 = vunpack.c.l.b16 %v4648
    %v4667 = vunpack.c.h.b16 %v4648
    %v4668 = vunpack.c.l.b16 %v4649
    %v4669 = vunpack.c.l.b16 %v4650
    %v4670 = vunpack.c.h.b16 %v4650
    %v4671 = vunpack.c.l.b16 %v4651
    %v4672 = vpack.c.b16 %v4663, %v4660
    %v4673 = vpack.c.b16 %v4664, %v4661
    %v4674 = vpack.c.b16 %v4665, %v4662
    %v4675 = vpack.c.b16 %v4669, %v4666
    %v4676 = vpack.c.b16 %v4670, %v4667
    %v4677 = vpack.c.b16 %v4671, %v4668
    %v4685 = vsel %vm409, %v4643, 0
    %4687 = vmatprep.subr.bf16.mxu0 %v4673
    %4688 = vmatpush1.bf16.msra.mxu0 %v4672
    %4689 = vmatprep.subr.bf16.mxu0 %v4676
    %4690 = vmatpush1.bf16.msra.mxu0 %v4675
    %4691 = vmatprep.subr.bf16.mxu0 0
    %4692 = vmatpush1.bf16.msra.mxu0 0
    %4693 = vmatprep.subr.bf16.mxu0 0
    %4694 = vmatpush1.bf16.msra.mxu0 0
    %4695 = vmatprep.subr.bf16.mxu0 0
    %4696 = vmatpush1.bf16.msra.mxu0 0
    %4697 = vmatprep.subr.bf16.mxu0 0
    %4698 = vmatpush1.bf16.msra.mxu0 0
    %4699 = vmatprep.subr.bf16.mxu0 0
    %4700 = vmatpush1.bf16.msra.mxu0 0
    %4701 = vmatprep.subr.bf16.mxu0 0
    %4702 = vmatpush1.bf16.msra.mxu0 0
    %4703 = vmatprep.subr.bf16.mxu0 0
    %4704 = vmatpush1.bf16.msra.mxu0 0
    %4705 = vmatprep.subr.bf16.mxu0 0
    %4706 = vmatpush1.bf16.msra.mxu0 0
    %4707 = vmatprep.subr.bf16.mxu0 0
    %4708 = vmatpush1.bf16.msra.mxu0 0
    %4709 = vmatprep.subr.bf16.mxu0 0
    %4710 = vmatpush1.bf16.msra.mxu0 0
    %4711 = vmatprep.subr.bf16.mxu0 0
    %4712 = vmatpush1.bf16.msra.mxu0 0
    %4713 = vmatprep.subr.bf16.mxu0 0
    %4714 = vmatpush1.bf16.msra.mxu0 0
    %4715 = vmatprep.subr.bf16.mxu0 0
    %4716 = vmatpush1.bf16.msra.mxu0 0
    %4717 = vmatprep.subr.bf16.mxu0 0
    %4718 = vmatpush1.bf16.msra.mxu0 0
    %4719 = vmatprep.mubr.bf16.mxu0 0
    %4720 = vmatmul.mubr.bf16.gmra.mrb[0].mxu0 %v4685
    %v4721 = vpop.f32.mrb[0].mxu0
    %v4722 = vadd.f32 0.0, %v4721
    %v4723 = vpop.f32.mrb[0].mxu0
    %v4724 = vadd.f32 0.0, %v4723
    %v4725 = vpop.f32.mrb[0].mxu0
    %v4726 = vpop.f32.mrb[0].mxu0
    %4727 = vdwg.mxu0
    %4728 = vmatprep.subr.bf16.mxu0 0
    %4729 = vmatpush1.bf16.msra.mxu0 %v4674
    %4730 = vmatprep.subr.bf16.mxu0 0
    %4731 = vmatpush1.bf16.msra.mxu0 %v4677
    %4732 = vmatprep.subr.bf16.mxu0 0
    %4733 = vmatpush1.bf16.msra.mxu0 0
    %4734 = vmatprep.subr.bf16.mxu0 0
    %4735 = vmatpush1.bf16.msra.mxu0 0
    %4736 = vmatprep.subr.bf16.mxu0 0
    %4737 = vmatpush1.bf16.msra.mxu0 0
    %4738 = vmatprep.subr.bf16.mxu0 0
    %4739 = vmatpush1.bf16.msra.mxu0 0
    %4740 = vmatprep.subr.bf16.mxu0 0
    %4741 = vmatpush1.bf16.msra.mxu0 0
    %4742 = vmatprep.subr.bf16.mxu0 0
    %4743 = vmatpush1.bf16.msra.mxu0 0
    %4744 = vmatprep.subr.bf16.mxu0 0
    %4745 = vmatpush1.bf16.msra.mxu0 0
    %4746 = vmatprep.subr.bf16.mxu0 0
    %4747 = vmatpush1.bf16.msra.mxu0 0
    %4748 = vmatprep.subr.bf16.mxu0 0
    %4749 = vmatpush1.bf16.msra.mxu0 0
    %4750 = vmatprep.subr.bf16.mxu0 0
    %4751 = vmatpush1.bf16.msra.mxu0 0
    %4752 = vmatprep.subr.bf16.mxu0 0
    %4753 = vmatpush1.bf16.msra.mxu0 0
    %4754 = vmatprep.subr.bf16.mxu0 0
    %4755 = vmatpush1.bf16.msra.mxu0 0
    %4756 = vmatprep.subr.bf16.mxu0 0
    %4757 = vmatpush1.bf16.msra.mxu0 0
    %4758 = vmatprep.subr.bf16.mxu0 0
    %4759 = vmatpush1.bf16.msra.mxu0 0
    %4760 = vmatprep.mubr.bf16.mxu0 0
    %4761 = vmatmul.mubr.bf16.gmra.mrb[0].mxu0 %v4685
    %v4762 = vpop.f32.mrb[0].mxu0
    %v4763 = vadd.f32 0.0, %v4762
    %v4764 = vpop.f32.mrb[0].mxu0
    %v4765 = vpop.f32.mrb[0].mxu0
    %v4766 = vpop.f32.mrb[0].mxu0
    %4767 = vdwg.mxu0
    %v4768 = vpack.c.bf16 %v153, %v153
    %v4769 = vld [vmem:[#allocation3 + $0x1b0] sm:$0xff]
    %v4770 = vld [vmem:[#allocation3 + $0x1b8] sm:$0xf]
    %v4771 = vld [vmem:[#allocation3 + $0x1d4] sm:$0xff]
    %v4772 = vld [vmem:[#allocation3 + $0x1dc] sm:$0xf]
    %s4773 = scalar_lea.vmem [#allocation6], 3
    %v4774 = vld [vmem:[%s4773] ss:$8 sm:$0x7]
    %v4776 = vlaneseq
    %v4777 = vshrl.u32 %v4776, 7
    %v4778 = vsub.s32 0, %v4777
    %v4779 = vrot.slane %v4774, %v4778
    %v4780 = vlaneseq
    %v4781 = vshrl.u32 %v4780, 7
    %v4782 = vsub.s32 1, %v4781
    %v4783 = vrot.slane %v4774, %v4782
    %v4784 = vlaneseq
    %v4785 = vshrl.u32 %v4784, 7
    %v4786 = vsub.s32 2, %v4785
    %v4787 = vrot.slane %v4774, %v4786
    %v4795 = vunpack.c.l.b16 %v4769
    %v4796 = vunpack.c.h.b16 %v4769
    %v4797 = vunpack.c.l.b16 %v4770
    %v4798 = vunpack.c.l.b16 %v4771
    %v4799 = vunpack.c.h.b16 %v4771
    %v4800 = vunpack.c.l.b16 %v4772
    %v4801 = vpack.c.b16 %v4798, %v4795
    %v4802 = vpack.c.b16 %v4799, %v4796
    %v4803 = vpack.c.b16 %v4800, %v4797
    %v4808 = vsel %vm68, %v4768, 0
    %4810 = vmatprep.subr.bf16.mxu0 %v4802
    %4811 = vmatpush1.bf16.msra.mxu0 %v4801
    %4812 = vmatprep.subr.bf16.mxu0 0
    %4813 = vmatpush1.bf16.msra.mxu0 0
    %4814 = vmatprep.subr.bf16.mxu0 0
    %4815 = vmatpush1.bf16.msra.mxu0 0
    %4816 = vmatprep.subr.bf16.mxu0 0
    %4817 = vmatpush1.bf16.msra.mxu0 0
    %4818 = vmatprep.subr.bf16.mxu0 0
    %4819 = vmatpush1.bf16.msra.mxu0 0
    %4820 = vmatprep.subr.bf16.mxu0 0
    %4821 = vmatpush1.bf16.msra.mxu0 0
    %4822 = vmatprep.subr.bf16.mxu0 0
    %4823 = vmatpush1.bf16.msra.mxu0 0
    %4824 = vmatprep.subr.bf16.mxu0 0
    %4825 = vmatpush1.bf16.msra.mxu0 0
    %4826 = vmatprep.subr.bf16.mxu0 0
    %4827 = vmatpush1.bf16.msra.mxu0 0
    %4828 = vmatprep.subr.bf16.mxu0 0
    %4829 = vmatpush1.bf16.msra.mxu0 0
    %4830 = vmatprep.subr.bf16.mxu0 0
    %4831 = vmatpush1.bf16.msra.mxu0 0
    %4832 = vmatprep.subr.bf16.mxu0 0
    %4833 = vmatpush1.bf16.msra.mxu0 0
    %4834 = vmatprep.subr.bf16.mxu0 0
    %4835 = vmatpush1.bf16.msra.mxu0 0
    %4836 = vmatprep.subr.bf16.mxu0 0
    %4837 = vmatpush1.bf16.msra.mxu0 0
    %4838 = vmatprep.subr.bf16.mxu0 0
    %4839 = vmatpush1.bf16.msra.mxu0 0
    %4840 = vmatprep.subr.bf16.mxu0 0
    %4841 = vmatpush1.bf16.msra.mxu0 0
    %4842 = vmatprep.mubr.bf16.mxu0 0
    %4843 = vmatmul.mubr.bf16.gmra.mrb[0].mxu0 %v4808
    %v4844 = vpop.f32.mrb[0].mxu0
    %v4845 = vadd.f32 %v4779, %v4844
    %v4846 = vpop.f32.mrb[0].mxu0
    %v4847 = vadd.f32 %v4783, %v4846
    %v4848 = vpop.f32.mrb[0].mxu0
    %v4849 = vpop.f32.mrb[0].mxu0
    %4850 = vdwg.mxu0
    %4851 = vmatprep.subr.bf16.mxu0 0
    %4852 = vmatpush1.bf16.msra.mxu0 %v4803
    %4853 = vmatprep.subr.bf16.mxu0 0
    %4854 = vmatpush1.bf16.msra.mxu0 0
    %4855 = vmatprep.subr.bf16.mxu0 0
    %4856 = vmatpush1.bf16.msra.mxu0 0
    %4857 = vmatprep.subr.bf16.mxu0 0
    %4858 = vmatpush1.bf16.msra.mxu0 0
    %4859 = vmatprep.subr.bf16.mxu0 0
    %4860 = vmatpush1.bf16.msra.mxu0 0
    %4861 = vmatprep.subr.bf16.mxu0 0
    %4862 = vmatpush1.bf16.msra.mxu0 0
    %4863 = vmatprep.subr.bf16.mxu0 0
    %4864 = vmatpush1.bf16.msra.mxu0 0
    %4865 = vmatprep.subr.bf16.mxu0 0
    %4866 = vmatpush1.bf16.msra.mxu0 0
    %4867 = vmatprep.subr.bf16.mxu0 0
    %4868 = vmatpush1.bf16.msra.mxu0 0
    %4869 = vmatprep.subr.bf16.mxu0 0
    %4870 = vmatpush1.bf16.msra.mxu0 0
    %4871 = vmatprep.subr.bf16.mxu0 0
    %4872 = vmatpush1.bf16.msra.mxu0 0
    %4873 = vmatprep.subr.bf16.mxu0 0
    %4874 = vmatpush1.bf16.msra.mxu0 0
    %4875 = vmatprep.subr.bf16.mxu0 0
    %4876 = vmatpush1.bf16.msra.mxu0 0
    %4877 = vmatprep.subr.bf16.mxu0 0
    %4878 = vmatpush1.bf16.msra.mxu0 0
    %4879 = vmatprep.subr.bf16.mxu0 0
    %4880 = vmatpush1.bf16.msra.mxu0 0
    %4881 = vmatprep.subr.bf16.mxu0 0
    %4882 = vmatpush1.bf16.msra.mxu0 0
    %4883 = vmatprep.mubr.bf16.mxu0 0
    %4884 = vmatmul.mubr.bf16.gmra.mrb[0].mxu0 %v4808
    %v4885 = vpop.f32.mrb[0].mxu0
    %v4886 = vadd.f32 %v4787, %v4885
    %v4887 = vpop.f32.mrb[0].mxu0
    %v4888 = vpop.f32.mrb[0].mxu0
    %v4889 = vpop.f32.mrb[0].mxu0
    %4890 = vdwg.mxu0
    %v4891 = vld [vmem:[#allocation6 + $0x7] ss:$0 sm:$0xff]
    %v4892 = vadd.f32 %v4845, %v4476
    %v4893 = vadd.f32 %v4847, %v4478
    %v4894 = vmul.f32 %v4892, 0.5
    %v4895 = vmul.f32 %v4893, 0.5
    %v4896 = vtanh.pop %v4894
    %v4897 = vtanh.pop %v4895
    %v4898 = vadd.f32 %v4896, 1.0
    %v4899 = vadd.f32 %v4897, 1.0
    %v4900 = vmul.f32 %v4898, 0.5
    %v4901 = vmul.f32 %v4899, 0.5
    %v4902 = vadd.f32 %v4517, %v4891
    %v4903 = vmul.f32 %v4900, %v4902
    %v4904 = vadd.f32 %v4886, %v4903
    %v4905 = vtanh.pop %v4904
    %v4906 = vsub.f32 1.0, %v4901
    %v4907 = vmul.f32 %v4906, %v4905
    %v4908 = vmul.f32 %v4901, %v4193
    %v4909 = vadd.f32 %v4907, %v4908
    %v4910 = vpack.c.bf16 %v4909, %v4909
    %v4911 = vld [vmem:[#allocation3 + $0x1bc] sm:$0xff]
    %v4912 = vld [vmem:[#allocation3 + $0x1c4] sm:$0xf]
    %v4913 = vld [vmem:[#allocation3 + $0x1e0] sm:$0xff]
    %v4914 = vld [vmem:[#allocation3 + $0x1e8] sm:$0xf]
    %v4915 = vld [vmem:[#allocation3 + $0x204] sm:$0xff]
    %v4916 = vld [vmem:[#allocation3 + $0x20c] sm:$0xf]
    %v4917 = vld [vmem:[#allocation3 + $0x228] sm:$0xff]
    %v4918 = vld [vmem:[#allocation3 + $0x230] sm:$0xf]
    %s4919 = scalar_lea.vmem [#allocation6], 4
    %v4920 = vld [vmem:[%s4919] ss:$8 sm:$0x7]
    %v4922 = vlaneseq
    %v4923 = vshrl.u32 %v4922, 7
    %v4924 = vsub.s32 0, %v4923
    %v4925 = vrot.slane %v4920, %v4924
    %v4926 = vlaneseq
    %v4927 = vshrl.u32 %v4926, 7
    %v4928 = vsub.s32 1, %v4927
    %v4929 = vrot.slane %v4920, %v4928
    %v4930 = vlaneseq
    %v4931 = vshrl.u32 %v4930, 7
    %v4932 = vsub.s32 2, %v4931
    %v4933 = vrot.slane %v4920, %v4932
    %v4945 = vunpack.c.l.b16 %v4911
    %v4946 = vunpack.c.h.b16 %v4911
    %v4947 = vunpack.c.l.b16 %v4912
    %v4948 = vunpack.c.l.b16 %v4913
    %v4949 = vunpack.c.h.b16 %v4913
    %v4950 = vunpack.c.l.b16 %v4914
    %v4951 = vunpack.c.l.b16 %v4915
    %v4952 = vunpack.c.h.b16 %v4915
    %v4953 = vunpack.c.l.b16 %v4916
    %v4954 = vunpack.c.l.b16 %v4917
    %v4955 = vunpack.c.h.b16 %v4917
    %v4956 = vunpack.c.l.b16 %v4918
    %v4957 = vpack.c.b16 %v4948, %v4945
    %v4958 = vpack.c.b16 %v4949, %v4946
    %v4959 = vpack.c.b16 %v4950, %v4947
    %v4960 = vpack.c.b16 %v4954, %v4951
    %v4961 = vpack.c.b16 %v4955, %v4952
    %v4962 = vpack.c.b16 %v4956, %v4953
    %v4970 = vsel %vm409, %v4910, 0
    %4972 = vmatprep.subr.bf16.mxu0 %v4958
    %4973 = vmatpush1.bf16.msra.mxu0 %v4957
    %4974 = vmatprep.subr.bf16.mxu0 %v4961
    %4975 = vmatpush1.bf16.msra.mxu0 %v4960
    %4976 = vmatprep.subr.bf16.mxu0 0
    %4977 = vmatpush1.bf16.msra.mxu0 0
    %4978 = vmatprep.subr.bf16.mxu0 0
    %4979 = vmatpush1.bf16.msra.mxu0 0
    %4980 = vmatprep.subr.bf16.mxu0 0
    %4981 = vmatpush1.bf16.msra.mxu0 0
    %4982 = vmatprep.subr.bf16.mxu0 0
    %4983 = vmatpush1.bf16.msra.mxu0 0
    %4984 = vmatprep.subr.bf16.mxu0 0
    %4985 = vmatpush1.bf16.msra.mxu0 0
    %4986 = vmatprep.subr.bf16.mxu0 0
    %4987 = vmatpush1.bf16.msra.mxu0 0
    %4988 = vmatprep.subr.bf16.mxu0 0
    %4989 = vmatpush1.bf16.msra.mxu0 0
    %4990 = vmatprep.subr.bf16.mxu0 0
    %4991 = vmatpush1.bf16.msra.mxu0 0
    %4992 = vmatprep.subr.bf16.mxu0 0
    %4993 = vmatpush1.bf16.msra.mxu0 0
    %4994 = vmatprep.subr.bf16.mxu0 0
    %4995 = vmatpush1.bf16.msra.mxu0 0
    %4996 = vmatprep.subr.bf16.mxu0 0
    %4997 = vmatpush1.bf16.msra.mxu0 0
    %4998 = vmatprep.subr.bf16.mxu0 0
    %4999 = vmatpush1.bf16.msra.mxu0 0
    %5000 = vmatprep.subr.bf16.mxu0 0
    %5001 = vmatpush1.bf16.msra.mxu0 0
    %5002 = vmatprep.subr.bf16.mxu0 0
    %5003 = vmatpush1.bf16.msra.mxu0 0
    %5004 = vmatprep.mubr.bf16.mxu0 0
    %5005 = vmatmul.mubr.bf16.gmra.mrb[0].mxu0 %v4970
    %v5006 = vpop.f32.mrb[0].mxu0
    %v5007 = vadd.f32 %v4925, %v5006
    %v5008 = vpop.f32.mrb[0].mxu0
    %v5009 = vadd.f32 %v4929, %v5008
    %v5010 = vpop.f32.mrb[0].mxu0
    %v5011 = vpop.f32.mrb[0].mxu0
    %5012 = vdwg.mxu0
    %5013 = vmatprep.subr.bf16.mxu0 0
    %5014 = vmatpush1.bf16.msra.mxu0 %v4959
    %5015 = vmatprep.subr.bf16.mxu0 0
    %5016 = vmatpush1.bf16.msra.mxu0 %v4962
    %5017 = vmatprep.subr.bf16.mxu0 0
    %5018 = vmatpush1.bf16.msra.mxu0 0
    %5019 = vmatprep.subr.bf16.mxu0 0
    %5020 = vmatpush1.bf16.msra.mxu0 0
    %5021 = vmatprep.subr.bf16.mxu0 0
    %5022 = vmatpush1.bf16.msra.mxu0 0
    %5023 = vmatprep.subr.bf16.mxu0 0
    %5024 = vmatpush1.bf16.msra.mxu0 0
    %5025 = vmatprep.subr.bf16.mxu0 0
    %5026 = vmatpush1.bf16.msra.mxu0 0
    %5027 = vmatprep.subr.bf16.mxu0 0
    %5028 = vmatpush1.bf16.msra.mxu0 0
    %5029 = vmatprep.subr.bf16.mxu0 0
    %5030 = vmatpush1.bf16.msra.mxu0 0
    %5031 = vmatprep.subr.bf16.mxu0 0
    %5032 = vmatpush1.bf16.msra.mxu0 0
    %5033 = vmatprep.subr.bf16.mxu0 0
    %5034 = vmatpush1.bf16.msra.mxu0 0
    %5035 = vmatprep.subr.bf16.mxu0 0
    %5036 = vmatpush1.bf16.msra.mxu0 0
    %5037 = vmatprep.subr.bf16.mxu0 0
    %5038 = vmatpush1.bf16.msra.mxu0 0
    %5039 = vmatprep.subr.bf16.mxu0 0
    %5040 = vmatpush1.bf16.msra.mxu0 0
    %5041 = vmatprep.subr.bf16.mxu0 0
    %5042 = vmatpush1.bf16.msra.mxu0 0
    %5043 = vmatprep.subr.bf16.mxu0 0
    %5044 = vmatpush1.bf16.msra.mxu0 0
    %5045 = vmatprep.mubr.bf16.mxu0 0
    %5046 = vmatmul.mubr.bf16.gmra.mrb[0].mxu0 %v4970
    %v5047 = vpop.f32.mrb[0].mxu0
    %v5048 = vadd.f32 %v4933, %v5047
    %v5049 = vpop.f32.mrb[0].mxu0
    %v5050 = vpop.f32.mrb[0].mxu0
    %v5051 = vpop.f32.mrb[0].mxu0
    %5052 = vdwg.mxu0
    %v5053 = vld [vmem:[#allocation6 + $0xf] ss:$0 sm:$0xff]
    %v5054 = vadd.f32 %v5007, %v4597
    %v5055 = vadd.f32 %v5009, %v4599
    %v5056 = vmul.f32 %v5054, 0.5
    %v5057 = vmul.f32 %v5055, 0.5
    %v5058 = vtanh.pop %v5056
    %v5059 = vtanh.pop %v5057
    %v5060 = vadd.f32 %v5058, 1.0
    %v5061 = vadd.f32 %v5059, 1.0
    %v5062 = vmul.f32 %v5060, 0.5
    %v5063 = vmul.f32 %v5061, 0.5
    %v5064 = vadd.f32 %v4638, %v5053
    %v5065 = vmul.f32 %v5062, %v5064
    %v5066 = vadd.f32 %v5048, %v5065
    %v5067 = vtanh.pop %v5066
    %v5068 = vsub.f32 1.0, %v5063
    %v5069 = vmul.f32 %v5068, %v5067
    %v5070 = vmul.f32 %v5063, %v4296
    %v5071 = vadd.f32 %v5069, %v5070
    %v5072 = vpack.c.bf16 %v5071, %v5071
    %v5073 = vld [vmem:[#allocation3 + $0x1c8] sm:$0xff]
    %v5074 = vld [vmem:[#allocation3 + $0x1d0] sm:$0xf]
    %v5075 = vld [vmem:[#allocation3 + $0x1ec] sm:$0xff]
    %v5076 = vld [vmem:[#allocation3 + $0x1f4] sm:$0xf]
    %v5077 = vld [vmem:[#allocation3 + $0x210] sm:$0xff]
    %v5078 = vld [vmem:[#allocation3 + $0x218] sm:$0xf]
    %v5079 = vld [vmem:[#allocation3 + $0x234] sm:$0xff]
    %v5080 = vld [vmem:[#allocation3 + $0x23c] sm:$0xf]
    %s5081 = scalar_lea.vmem [#allocation6], 5
    %v5082 = vld [vmem:[%s5081] ss:$8 sm:$0x7]
    %v5084 = vlaneseq
    %v5085 = vshrl.u32 %v5084, 7
    %v5086 = vsub.s32 0, %v5085
    %v5087 = vrot.slane %v5082, %v5086
    %v5088 = vlaneseq
    %v5089 = vshrl.u32 %v5088, 7
    %v5090 = vsub.s32 1, %v5089
    %v5091 = vrot.slane %v5082, %v5090
    %v5092 = vlaneseq
    %v5093 = vshrl.u32 %v5092, 7
    %v5094 = vsub.s32 2, %v5093
    %v5095 = vrot.slane %v5082, %v5094
    %v5107 = vunpack.c.l.b16 %v5073
    %v5108 = vunpack.c.h.b16 %v5073
    %v5109 = vunpack.c.l.b16 %v5074
    %v5110 = vunpack.c.l.b16 %v5075
    %v5111 = vunpack.c.h.b16 %v5075
    %v5112 = vunpack.c.l.b16 %v5076
    %v5113 = vunpack.c.l.b16 %v5077
    %v5114 = vunpack.c.h.b16 %v5077
    %v5115 = vunpack.c.l.b16 %v5078
    %v5116 = vunpack.c.l.b16 %v5079
    %v5117 = vunpack.c.h.b16 %v5079
    %v5118 = vunpack.c.l.b16 %v5080
    %v5119 = vpack.c.b16 %v5110, %v5107
    %v5120 = vpack.c.b16 %v5111, %v5108
    %v5121 = vpack.c.b16 %v5112, %v5109
    %v5122 = vpack.c.b16 %v5116, %v5113
    %v5123 = vpack.c.b16 %v5117, %v5114
    %v5124 = vpack.c.b16 %v5118, %v5115
    %v5132 = vsel %vm409, %v5072, 0
    %5134 = vmatprep.subr.bf16.mxu0 %v5120
    %5135 = vmatpush1.bf16.msra.mxu0 %v5119
    %5136 = vmatprep.subr.bf16.mxu0 %v5123
    %5137 = vmatpush1.bf16.msra.mxu0 %v5122
    %5138 = vmatprep.subr.bf16.mxu0 0
    %5139 = vmatpush1.bf16.msra.mxu0 0
    %5140 = vmatprep.subr.bf16.mxu0 0
    %5141 = vmatpush1.bf16.msra.mxu0 0
    %5142 = vmatprep.subr.bf16.mxu0 0
    %5143 = vmatpush1.bf16.msra.mxu0 0
    %5144 = vmatprep.subr.bf16.mxu0 0
    %5145 = vmatpush1.bf16.msra.mxu0 0
    %5146 = vmatprep.subr.bf16.mxu0 0
    %5147 = vmatpush1.bf16.msra.mxu0 0
    %5148 = vmatprep.subr.bf16.mxu0 0
    %5149 = vmatpush1.bf16.msra.mxu0 0
    %5150 = vmatprep.subr.bf16.mxu0 0
    %5151 = vmatpush1.bf16.msra.mxu0 0
    %5152 = vmatprep.subr.bf16.mxu0 0
    %5153 = vmatpush1.bf16.msra.mxu0 0
    %5154 = vmatprep.subr.bf16.mxu0 0
    %5155 = vmatpush1.bf16.msra.mxu0 0
    %5156 = vmatprep.subr.bf16.mxu0 0
    %5157 = vmatpush1.bf16.msra.mxu0 0
    %5158 = vmatprep.subr.bf16.mxu0 0
    %5159 = vmatpush1.bf16.msra.mxu0 0
    %5160 = vmatprep.subr.bf16.mxu0 0
    %5161 = vmatpush1.bf16.msra.mxu0 0
    %5162 = vmatprep.subr.bf16.mxu0 0
    %5163 = vmatpush1.bf16.msra.mxu0 0
    %5164 = vmatprep.subr.bf16.mxu0 0
    %5165 = vmatpush1.bf16.msra.mxu0 0
    %5166 = vmatprep.mubr.bf16.mxu0 0
    %5167 = vmatmul.mubr.bf16.gmra.mrb[0].mxu0 %v5132
    %v5168 = vpop.f32.mrb[0].mxu0
    %v5169 = vadd.f32 %v5087, %v5168
    %v5170 = vpop.f32.mrb[0].mxu0
    %v5171 = vadd.f32 %v5091, %v5170
    %v5172 = vpop.f32.mrb[0].mxu0
    %v5173 = vpop.f32.mrb[0].mxu0
    %5174 = vdwg.mxu0
    %5175 = vmatprep.subr.bf16.mxu0 0
    %5176 = vmatpush1.bf16.msra.mxu0 %v5121
    %5177 = vmatprep.subr.bf16.mxu0 0
    %5178 = vmatpush1.bf16.msra.mxu0 %v5124
    %5179 = vmatprep.subr.bf16.mxu0 0
    %5180 = vmatpush1.bf16.msra.mxu0 0
    %5181 = vmatprep.subr.bf16.mxu0 0
    %5182 = vmatpush1.bf16.msra.mxu0 0
    %5183 = vmatprep.subr.bf16.mxu0 0
    %5184 = vmatpush1.bf16.msra.mxu0 0
    %5185 = vmatprep.subr.bf16.mxu0 0
    %5186 = vmatpush1.bf16.msra.mxu0 0
    %5187 = vmatprep.subr.bf16.mxu0 0
    %5188 = vmatpush1.bf16.msra.mxu0 0
    %5189 = vmatprep.subr.bf16.mxu0 0
    %5190 = vmatpush1.bf16.msra.mxu0 0
    %5191 = vmatprep.subr.bf16.mxu0 0
    %5192 = vmatpush1.bf16.msra.mxu0 0
    %5193 = vmatprep.subr.bf16.mxu0 0
    %5194 = vmatpush1.bf16.msra.mxu0 0
    %5195 = vmatprep.subr.bf16.mxu0 0
    %5196 = vmatpush1.bf16.msra.mxu0 0
    %5197 = vmatprep.subr.bf16.mxu0 0
    %5198 = vmatpush1.bf16.msra.mxu0 0
    %5199 = vmatprep.subr.bf16.mxu0 0
    %5200 = vmatpush1.bf16.msra.mxu0 0
    %5201 = vmatprep.subr.bf16.mxu0 0
    %5202 = vmatpush1.bf16.msra.mxu0 0
    %5203 = vmatprep.subr.bf16.mxu0 0
    %5204 = vmatpush1.bf16.msra.mxu0 0
    %5205 = vmatprep.subr.bf16.mxu0 0
    %5206 = vmatpush1.bf16.msra.mxu0 0
    %5207 = vmatprep.mubr.bf16.mxu0 0
    %5208 = vmatmul.mubr.bf16.gmra.mrb[0].mxu0 %v5132
    %v5209 = vpop.f32.mrb[0].mxu0
    %v5210 = vadd.f32 %v5095, %v5209
    %v5211 = vpop.f32.mrb[0].mxu0
    %v5212 = vpop.f32.mrb[0].mxu0
    %v5213 = vpop.f32.mrb[0].mxu0
    %5214 = vdwg.mxu0
    %v5215 = vld [vmem:[#allocation6 + $0x17] ss:$0 sm:$0xff]
    %v5216 = vadd.f32 %v5169, %v4722
    %v5217 = vadd.f32 %v5171, %v4724
    %v5218 = vmul.f32 %v5216, 0.5
    %v5219 = vmul.f32 %v5217, 0.5
    %v5220 = vtanh.pop %v5218
    %v5221 = vtanh.pop %v5219
    %v5222 = vadd.f32 %v5220, 1.0
    %v5223 = vadd.f32 %v5221, 1.0
    %v5224 = vmul.f32 %v5222, 0.5
    %v5225 = vmul.f32 %v5223, 0.5
    %v5226 = vadd.f32 %v4763, %v5215
    %v5227 = vmul.f32 %v5224, %v5226
    %v5228 = vadd.f32 %v5210, %v5227
    %v5229 = vtanh.pop %v5228
    %v5230 = vsub.f32 1.0, %v5225
    %v5231 = vmul.f32 %v5230, %v5229
    %v5232 = vmul.f32 %v5225, %v4399
    %v5233 = vadd.f32 %v5231, %v5232
    %v5234 = vmax.f32 %v5233, 0.0
    %v5235 = vpack.c.bf16 %v5234, %v5234
    %v5236 = vld [vmem:[#allocation3 + $0x244] sm:$0xf]
    %v5237 = vld [vmem:[#allocation3 + $0x268] sm:$0xf]
    %v5238 = vld [vmem:[#allocation3 + $0x28c] sm:$0xf]
    %v5239 = vld [vmem:[#allocation3 + $0x2b0] sm:$0xf]
    %v5244 = vunpack.c.l.b16 %v5236
    %v5245 = vunpack.c.l.b16 %v5237
    %v5246 = vunpack.c.l.b16 %v5238
    %v5247 = vunpack.c.l.b16 %v5239
    %v5248 = vpack.c.b16 %v5245, %v5244
    %v5249 = vpack.c.b16 %v5247, %v5246
    %v5253 = vsel %vm409, %v5235, 0
    %5255 = vmatprep.subr.bf16.mxu0 0
    %5256 = vmatpush1.bf16.msra.mxu0 %v5248
    %5257 = vmatprep.subr.bf16.mxu0 0
    %5258 = vmatpush1.bf16.msra.mxu0 %v5249
    %5259 = vmatprep.subr.bf16.mxu0 0
    %5260 = vmatpush1.bf16.msra.mxu0 0
    %5261 = vmatprep.subr.bf16.mxu0 0
    %5262 = vmatpush1.bf16.msra.mxu0 0
    %5263 = vmatprep.subr.bf16.mxu0 0
    %5264 = vmatpush1.bf16.msra.mxu0 0
    %5265 = vmatprep.subr.bf16.mxu0 0
    %5266 = vmatpush1.bf16.msra.mxu0 0
    %5267 = vmatprep.subr.bf16.mxu0 0
    %5268 = vmatpush1.bf16.msra.mxu0 0
    %5269 = vmatprep.subr.bf16.mxu0 0
    %5270 = vmatpush1.bf16.msra.mxu0 0
    %5271 = vmatprep.subr.bf16.mxu0 0
    %5272 = vmatpush1.bf16.msra.mxu0 0
    %5273 = vmatprep.subr.bf16.mxu0 0
    %5274 = vmatpush1.bf16.msra.mxu0 0
    %5275 = vmatprep.subr.bf16.mxu0 0
    %5276 = vmatpush1.bf16.msra.mxu0 0
    %5277 = vmatprep.subr.bf16.mxu0 0
    %5278 = vmatpush1.bf16.msra.mxu0 0
    %5279 = vmatprep.subr.bf16.mxu0 0
    %5280 = vmatpush1.bf16.msra.mxu0 0
    %5281 = vmatprep.subr.bf16.mxu0 0
    %5282 = vmatpush1.bf16.msra.mxu0 0
    %5283 = vmatprep.subr.bf16.mxu0 0
    %5284 = vmatpush1.bf16.msra.mxu0 0
    %5285 = vmatprep.subr.bf16.mxu0 0
    %5286 = vmatpush1.bf16.msra.mxu0 0
    %5287 = vmatprep.mubr.bf16.mxu0 0
    %5288 = vmatmul.mubr.bf16.gmra.mrb[0].mxu0 %v5253
    %v5289 = vpop.f32.mrb[0].mxu0
    %v5290 = vadd.f32 %v4400, %v5289
    %v5291 = vpop.f32.mrb[0].mxu0
    %v5292 = vpop.f32.mrb[0].mxu0
    %v5293 = vpop.f32.mrb[0].mxu0
    %5294 = vdwg.mxu0
    %5295 = vmatprep.subr.bf16.mxu0 %v4430
    %5296 = vmatpush1.bf16.msra.mxu0 %v4429
    %5297 = vmatprep.subr.bf16.mxu0 %v4433
    %5298 = vmatpush1.bf16.msra.mxu0 %v4432
    %5299 = vmatprep.subr.bf16.mxu0 0
    %5300 = vmatpush1.bf16.msra.mxu0 0
    %5301 = vmatprep.subr.bf16.mxu0 0
    %5302 = vmatpush1.bf16.msra.mxu0 0
    %5303 = vmatprep.subr.bf16.mxu0 0
    %5304 = vmatpush1.bf16.msra.mxu0 0
    %5305 = vmatprep.subr.bf16.mxu0 0
    %5306 = vmatpush1.bf16.msra.mxu0 0
    %5307 = vmatprep.subr.bf16.mxu0 0
    %5308 = vmatpush1.bf16.msra.mxu0 0
    %5309 = vmatprep.subr.bf16.mxu0 0
    %5310 = vmatpush1.bf16.msra.mxu0 0
    %5311 = vmatprep.subr.bf16.mxu0 0
    %5312 = vmatpush1.bf16.msra.mxu0 0
    %5313 = vmatprep.subr.bf16.mxu0 0
    %5314 = vmatpush1.bf16.msra.mxu0 0
    %5315 = vmatprep.subr.bf16.mxu0 0
    %5316 = vmatpush1.bf16.msra.mxu0 0
    %5317 = vmatprep.subr.bf16.mxu0 0
    %5318 = vmatpush1.bf16.msra.mxu0 0
    %5319 = vmatprep.subr.bf16.mxu0 0
    %5320 = vmatpush1.bf16.msra.mxu0 0
    %5321 = vmatprep.subr.bf16.mxu0 0
    %5322 = vmatpush1.bf16.msra.mxu0 0
    %5323 = vmatprep.subr.bf16.mxu0 0
    %5324 = vmatpush1.bf16.msra.mxu0 0
    %5325 = vmatprep.subr.bf16.mxu0 0
    %5326 = vmatpush1.bf16.msra.mxu0 0
    %5327 = vmatprep.mubr.bf16.mxu0 0
    %5328 = vmatmul.mubr.bf16.gmra.mrb[0].mxu0 %v4970
    %v5329 = vpop.f32.mrb[0].mxu0
    %v5330 = vadd.f32 0.0, %v5329
    %v5331 = vpop.f32.mrb[0].mxu0
    %v5332 = vadd.f32 0.0, %v5331
    %v5333 = vpop.f32.mrb[0].mxu0
    %v5334 = vpop.f32.mrb[0].mxu0
    %5335 = vdwg.mxu0
    %5336 = vmatprep.subr.bf16.mxu0 0
    %5337 = vmatpush1.bf16.msra.mxu0 %v4431
    %5338 = vmatprep.subr.bf16.mxu0 0
    %5339 = vmatpush1.bf16.msra.mxu0 %v4434
    %5340 = vmatprep.subr.bf16.mxu0 0
    %5341 = vmatpush1.bf16.msra.mxu0 0
    %5342 = vmatprep.subr.bf16.mxu0 0
    %5343 = vmatpush1.bf16.msra.mxu0 0
    %5344 = vmatprep.subr.bf16.mxu0 0
    %5345 = vmatpush1.bf16.msra.mxu0 0
    %5346 = vmatprep.subr.bf16.mxu0 0
    %5347 = vmatpush1.bf16.msra.mxu0 0
    %5348 = vmatprep.subr.bf16.mxu0 0
    %5349 = vmatpush1.bf16.msra.mxu0 0
    %5350 = vmatprep.subr.bf16.mxu0 0
    %5351 = vmatpush1.bf16.msra.mxu0 0
    %5352 = vmatprep.subr.bf16.mxu0 0
    %5353 = vmatpush1.bf16.msra.mxu0 0
    %5354 = vmatprep.subr.bf16.mxu0 0
    %5355 = vmatpush1.bf16.msra.mxu0 0
    %5356 = vmatprep.subr.bf16.mxu0 0
    %5357 = vmatpush1.bf16.msra.mxu0 0
    %5358 = vmatprep.subr.bf16.mxu0 0
    %5359 = vmatpush1.bf16.msra.mxu0 0
    %5360 = vmatprep.subr.bf16.mxu0 0
    %5361 = vmatpush1.bf16.msra.mxu0 0
    %5362 = vmatprep.subr.bf16.mxu0 0
    %5363 = vmatpush1.bf16.msra.mxu0 0
    %5364 = vmatprep.subr.bf16.mxu0 0
    %5365 = vmatpush1.bf16.msra.mxu0 0
    %5366 = vmatprep.subr.bf16.mxu0 0
    %5367 = vmatpush1.bf16.msra.mxu0 0
    %5368 = vmatprep.mubr.bf16.mxu0 0
    %5369 = vmatmul.mubr.bf16.gmra.mrb[0].mxu0 %v4970
    %v5370 = vpop.f32.mrb[0].mxu0
    %v5371 = vadd.f32 0.0, %v5370
    %v5372 = vpop.f32.mrb[0].mxu0
    %v5373 = vpop.f32.mrb[0].mxu0
    %v5374 = vpop.f32.mrb[0].mxu0
    %5375 = vdwg.mxu0
    %5376 = vmatprep.subr.bf16.mxu0 %v4551
    %5377 = vmatpush1.bf16.msra.mxu0 %v4550
    %5378 = vmatprep.subr.bf16.mxu0 %v4554
    %5379 = vmatpush1.bf16.msra.mxu0 %v4553
    %5380 = vmatprep.subr.bf16.mxu0 0
    %5381 = vmatpush1.bf16.msra.mxu0 0
    %5382 = vmatprep.subr.bf16.mxu0 0
    %5383 = vmatpush1.bf16.msra.mxu0 0
    %5384 = vmatprep.subr.bf16.mxu0 0
    %5385 = vmatpush1.bf16.msra.mxu0 0
    %5386 = vmatprep.subr.bf16.mxu0 0
    %5387 = vmatpush1.bf16.msra.mxu0 0
    %5388 = vmatprep.subr.bf16.mxu0 0
    %5389 = vmatpush1.bf16.msra.mxu0 0
    %5390 = vmatprep.subr.bf16.mxu0 0
    %5391 = vmatpush1.bf16.msra.mxu0 0
    %5392 = vmatprep.subr.bf16.mxu0 0
    %5393 = vmatpush1.bf16.msra.mxu0 0
    %5394 = vmatprep.subr.bf16.mxu0 0
    %5395 = vmatpush1.bf16.msra.mxu0 0
    %5396 = vmatprep.subr.bf16.mxu0 0
    %5397 = vmatpush1.bf16.msra.mxu0 0
    %5398 = vmatprep.subr.bf16.mxu0 0
    %5399 = vmatpush1.bf16.msra.mxu0 0
    %5400 = vmatprep.subr.bf16.mxu0 0
    %5401 = vmatpush1.bf16.msra.mxu0 0
    %5402 = vmatprep.subr.bf16.mxu0 0
    %5403 = vmatpush1.bf16.msra.mxu0 0
    %5404 = vmatprep.subr.bf16.mxu0 0
    %5405 = vmatpush1.bf16.msra.mxu0 0
    %5406 = vmatprep.subr.bf16.mxu0 0
    %5407 = vmatpush1.bf16.msra.mxu0 0
    %5408 = vmatprep.mubr.bf16.mxu0 0
    %5409 = vmatmul.mubr.bf16.gmra.mrb[0].mxu0 %v5132
    %v5410 = vpop.f32.mrb[0].mxu0
    %v5411 = vadd.f32 0.0, %v5410
    %v5412 = vpop.f32.mrb[0].mxu0
    %v5413 = vadd.f32 0.0, %v5412
    %v5414 = vpop.f32.mrb[0].mxu0
    %v5415 = vpop.f32.mrb[0].mxu0
    %5416 = vdwg.mxu0
    %5417 = vmatprep.subr.bf16.mxu0 0
    %5418 = vmatpush1.bf16.msra.mxu0 %v4552
    %5419 = vmatprep.subr.bf16.mxu0 0
    %5420 = vmatpush1.bf16.msra.mxu0 %v4555
    %5421 = vmatprep.subr.bf16.mxu0 0
    %5422 = vmatpush1.bf16.msra.mxu0 0
    %5423 = vmatprep.subr.bf16.mxu0 0
    %5424 = vmatpush1.bf16.msra.mxu0 0
    %5425 = vmatprep.subr.bf16.mxu0 0
    %5426 = vmatpush1.bf16.msra.mxu0 0
    %5427 = vmatprep.subr.bf16.mxu0 0
    %5428 = vmatpush1.bf16.msra.mxu0 0
    %5429 = vmatprep.subr.bf16.mxu0 0
    %5430 = vmatpush1.bf16.msra.mxu0 0
    %5431 = vmatprep.subr.bf16.mxu0 0
    %5432 = vmatpush1.bf16.msra.mxu0 0
    %5433 = vmatprep.subr.bf16.mxu0 0
    %5434 = vmatpush1.bf16.msra.mxu0 0
    %5435 = vmatprep.subr.bf16.mxu0 0
    %5436 = vmatpush1.bf16.msra.mxu0 0
    %5437 = vmatprep.subr.bf16.mxu0 0
    %5438 = vmatpush1.bf16.msra.mxu0 0
    %5439 = vmatprep.subr.bf16.mxu0 0
    %5440 = vmatpush1.bf16.msra.mxu0 0
    %5441 = vmatprep.subr.bf16.mxu0 0
    %5442 = vmatpush1.bf16.msra.mxu0 0
    %5443 = vmatprep.subr.bf16.mxu0 0
    %5444 = vmatpush1.bf16.msra.mxu0 0
    %5445 = vmatprep.subr.bf16.mxu0 0
    %5446 = vmatpush1.bf16.msra.mxu0 0
    %5447 = vmatprep.subr.bf16.mxu0 0
    %5448 = vmatpush1.bf16.msra.mxu0 0
    %5449 = vmatprep.mubr.bf16.mxu0 0
    %5450 = vmatmul.mubr.bf16.gmra.mrb[0].mxu0 %v5132
    %v5451 = vpop.f32.mrb[0].mxu0
    %v5452 = vadd.f32 0.0, %v5451
    %v5453 = vpop.f32.mrb[0].mxu0
    %v5454 = vpop.f32.mrb[0].mxu0
    %v5455 = vpop.f32.mrb[0].mxu0
    %5456 = vdwg.mxu0
    %v5457 = vpack.c.bf16 %v5233, %v5233
    %v5459 = vsel %vm409, %v5457, 0
    %5461 = vmatprep.subr.bf16.mxu0 %v4673
    %5462 = vmatpush1.bf16.msra.mxu0 %v4672
    %5463 = vmatprep.subr.bf16.mxu0 %v4676
    %5464 = vmatpush1.bf16.msra.mxu0 %v4675
    %5465 = vmatprep.subr.bf16.mxu0 0
    %5466 = vmatpush1.bf16.msra.mxu0 0
    %5467 = vmatprep.subr.bf16.mxu0 0
    %5468 = vmatpush1.bf16.msra.mxu0 0
    %5469 = vmatprep.subr.bf16.mxu0 0
    %5470 = vmatpush1.bf16.msra.mxu0 0
    %5471 = vmatprep.subr.bf16.mxu0 0
    %5472 = vmatpush1.bf16.msra.mxu0 0
    %5473 = vmatprep.subr.bf16.mxu0 0
    %5474 = vmatpush1.bf16.msra.mxu0 0
    %5475 = vmatprep.subr.bf16.mxu0 0
    %5476 = vmatpush1.bf16.msra.mxu0 0
    %5477 = vmatprep.subr.bf16.mxu0 0
    %5478 = vmatpush1.bf16.msra.mxu0 0
    %5479 = vmatprep.subr.bf16.mxu0 0
    %5480 = vmatpush1.bf16.msra.mxu0 0
    %5481 = vmatprep.subr.bf16.mxu0 0
    %5482 = vmatpush1.bf16.msra.mxu0 0
    %5483 = vmatprep.subr.bf16.mxu0 0
    %5484 = vmatpush1.bf16.msra.mxu0 0
    %5485 = vmatprep.subr.bf16.mxu0 0
    %5486 = vmatpush1.bf16.msra.mxu0 0
    %5487 = vmatprep.subr.bf16.mxu0 0
    %5488 = vmatpush1.bf16.msra.mxu0 0
    %5489 = vmatprep.subr.bf16.mxu0 0
    %5490 = vmatpush1.bf16.msra.mxu0 0
    %5491 = vmatprep.subr.bf16.mxu0 0
    %5492 = vmatpush1.bf16.msra.mxu0 0
    %5493 = vmatprep.mubr.bf16.mxu0 0
    %5494 = vmatmul.mubr.bf16.gmra.mrb[0].mxu0 %v5459
    %v5495 = vpop.f32.mrb[0].mxu0
    %v5496 = vadd.f32 0.0, %v5495
    %v5497 = vpop.f32.mrb[0].mxu0
    %v5498 = vadd.f32 0.0, %v5497
    %v5499 = vpop.f32.mrb[0].mxu0
    %v5500 = vpop.f32.mrb[0].mxu0
    %5501 = vdwg.mxu0
    %5502 = vmatprep.subr.bf16.mxu0 0
    %5503 = vmatpush1.bf16.msra.mxu0 %v4674
    %5504 = vmatprep.subr.bf16.mxu0 0
    %5505 = vmatpush1.bf16.msra.mxu0 %v4677
    %5506 = vmatprep.subr.bf16.mxu0 0
    %5507 = vmatpush1.bf16.msra.mxu0 0
    %5508 = vmatprep.subr.bf16.mxu0 0
    %5509 = vmatpush1.bf16.msra.mxu0 0
    %5510 = vmatprep.subr.bf16.mxu0 0
    %5511 = vmatpush1.bf16.msra.mxu0 0
    %5512 = vmatprep.subr.bf16.mxu0 0
    %5513 = vmatpush1.bf16.msra.mxu0 0
    %5514 = vmatprep.subr.bf16.mxu0 0
    %5515 = vmatpush1.bf16.msra.mxu0 0
    %5516 = vmatprep.subr.bf16.mxu0 0
    %5517 = vmatpush1.bf16.msra.mxu0 0
    %5518 = vmatprep.subr.bf16.mxu0 0
    %5519 = vmatpush1.bf16.msra.mxu0 0
    %5520 = vmatprep.subr.bf16.mxu0 0
    %5521 = vmatpush1.bf16.msra.mxu0 0
    %5522 = vmatprep.subr.bf16.mxu0 0
    %5523 = vmatpush1.bf16.msra.mxu0 0
    %5524 = vmatprep.subr.bf16.mxu0 0
    %5525 = vmatpush1.bf16.msra.mxu0 0
    %5526 = vmatprep.subr.bf16.mxu0 0
    %5527 = vmatpush1.bf16.msra.mxu0 0
    %5528 = vmatprep.subr.bf16.mxu0 0
    %5529 = vmatpush1.bf16.msra.mxu0 0
    %5530 = vmatprep.subr.bf16.mxu0 0
    %5531 = vmatpush1.bf16.msra.mxu0 0
    %5532 = vmatprep.subr.bf16.mxu0 0
    %5533 = vmatpush1.bf16.msra.mxu0 0
    %5534 = vmatprep.mubr.bf16.mxu0 0
    %5535 = vmatmul.mubr.bf16.gmra.mrb[0].mxu0 %v5459
    %v5536 = vpop.f32.mrb[0].mxu0
    %v5537 = vadd.f32 0.0, %v5536
    %v5538 = vpop.f32.mrb[0].mxu0
    %v5539 = vpop.f32.mrb[0].mxu0
    %v5540 = vpop.f32.mrb[0].mxu0
    %5541 = vdwg.mxu0
    %v5542 = vpack.c.bf16 %v5290, %v5290
    %v5544 = vsel %vm68, %v5542, 0
    %5546 = vmatprep.subr.bf16.mxu0 %v4802
    %5547 = vmatpush1.bf16.msra.mxu0 %v4801
    %5548 = vmatprep.subr.bf16.mxu0 0
    %5549 = vmatpush1.bf16.msra.mxu0 0
    %5550 = vmatprep.subr.bf16.mxu0 0
    %5551 = vmatpush1.bf16.msra.mxu0 0
    %5552 = vmatprep.subr.bf16.mxu0 0
    %5553 = vmatpush1.bf16.msra.mxu0 0
    %5554 = vmatprep.subr.bf16.mxu0 0
    %5555 = vmatpush1.bf16.msra.mxu0 0
    %5556 = vmatprep.subr.bf16.mxu0 0
    %5557 = vmatpush1.bf16.msra.mxu0 0
    %5558 = vmatprep.subr.bf16.mxu0 0
    %5559 = vmatpush1.bf16.msra.mxu0 0
    %5560 = vmatprep.subr.bf16.mxu0 0
    %5561 = vmatpush1.bf16.msra.mxu0 0
    %5562 = vmatprep.subr.bf16.mxu0 0
    %5563 = vmatpush1.bf16.msra.mxu0 0
    %5564 = vmatprep.subr.bf16.mxu0 0
    %5565 = vmatpush1.bf16.msra.mxu0 0
    %5566 = vmatprep.subr.bf16.mxu0 0
    %5567 = vmatpush1.bf16.msra.mxu0 0
    %5568 = vmatprep.subr.bf16.mxu0 0
    %5569 = vmatpush1.bf16.msra.mxu0 0
    %5570 = vmatprep.subr.bf16.mxu0 0
    %5571 = vmatpush1.bf16.msra.mxu0 0
    %5572 = vmatprep.subr.bf16.mxu0 0
    %5573 = vmatpush1.bf16.msra.mxu0 0
    %5574 = vmatprep.subr.bf16.mxu0 0
    %5575 = vmatpush1.bf16.msra.mxu0 0
    %5576 = vmatprep.subr.bf16.mxu0 0
    %5577 = vmatpush1.bf16.msra.mxu0 0
    %5578 = vmatprep.mubr.bf16.mxu0 0
    %5579 = vmatmul.mubr.bf16.gmra.mrb[0].mxu0 %v5544
    %v5580 = vpop.f32.mrb[0].mxu0
    %v5581 = vadd.f32 %v4779, %v5580
    %v5582 = vpop.f32.mrb[0].mxu0
    %v5583 = vadd.f32 %v4783, %v5582
    %v5584 = vpop.f32.mrb[0].mxu0
    %v5585 = vpop.f32.mrb[0].mxu0
    %5586 = vdwg.mxu0
    %5587 = vmatprep.subr.bf16.mxu0 0
    %5588 = vmatpush1.bf16.msra.mxu0 %v4803
    %5589 = vmatprep.subr.bf16.mxu0 0
    %5590 = vmatpush1.bf16.msra.mxu0 0
    %5591 = vmatprep.subr.bf16.mxu0 0
    %5592 = vmatpush1.bf16.msra.mxu0 0
    %5593 = vmatprep.subr.bf16.mxu0 0
    %5594 = vmatpush1.bf16.msra.mxu0 0
    %5595 = vmatprep.subr.bf16.mxu0 0
    %5596 = vmatpush1.bf16.msra.mxu0 0
    %5597 = vmatprep.subr.bf16.mxu0 0
    %5598 = vmatpush1.bf16.msra.mxu0 0
    %5599 = vmatprep.subr.bf16.mxu0 0
    %5600 = vmatpush1.bf16.msra.mxu0 0
    %5601 = vmatprep.subr.bf16.mxu0 0
    %5602 = vmatpush1.bf16.msra.mxu0 0
    %5603 = vmatprep.subr.bf16.mxu0 0
    %5604 = vmatpush1.bf16.msra.mxu0 0
    %5605 = vmatprep.subr.bf16.mxu0 0
    %5606 = vmatpush1.bf16.msra.mxu0 0
    %5607 = vmatprep.subr.bf16.mxu0 0
    %5608 = vmatpush1.bf16.msra.mxu0 0
    %5609 = vmatprep.subr.bf16.mxu0 0
    %5610 = vmatpush1.bf16.msra.mxu0 0
    %5611 = vmatprep.subr.bf16.mxu0 0
    %5612 = vmatpush1.bf16.msra.mxu0 0
    %5613 = vmatprep.subr.bf16.mxu0 0
    %5614 = vmatpush1.bf16.msra.mxu0 0
    %5615 = vmatprep.subr.bf16.mxu0 0
    %5616 = vmatpush1.bf16.msra.mxu0 0
    %5617 = vmatprep.subr.bf16.mxu0 0
    %5618 = vmatpush1.bf16.msra.mxu0 0
    %5619 = vmatprep.mubr.bf16.mxu0 0
    %5620 = vmatmul.mubr.bf16.gmra.mrb[0].mxu0 %v5544
    %v5621 = vpop.f32.mrb[0].mxu0
    %v5622 = vadd.f32 %v4787, %v5621
    %v5623 = vpop.f32.mrb[0].mxu0
    %v5624 = vpop.f32.mrb[0].mxu0
    %v5625 = vpop.f32.mrb[0].mxu0
    %5626 = vdwg.mxu0
    %v5627 = vadd.f32 %v5581, %v5330
    %v5628 = vadd.f32 %v5583, %v5332
    %v5629 = vmul.f32 %v5627, 0.5
    %v5630 = vmul.f32 %v5628, 0.5
    %v5631 = vtanh.pop %v5629
    %v5632 = vtanh.pop %v5630
    %v5633 = vadd.f32 %v5631, 1.0
    %v5634 = vadd.f32 %v5632, 1.0
    %v5635 = vmul.f32 %v5633, 0.5
    %v5636 = vmul.f32 %v5634, 0.5
    %v5637 = vadd.f32 %v5371, %v4891
    %v5638 = vmul.f32 %v5635, %v5637
    %v5639 = vadd.f32 %v5622, %v5638
    %v5640 = vtanh.pop %v5639
    %v5641 = vsub.f32 1.0, %v5636
    %v5642 = vmul.f32 %v5641, %v5640
    %v5643 = vmul.f32 %v5636, %v4909
    %v5644 = vadd.f32 %v5642, %v5643
    %v5645 = vpack.c.bf16 %v5644, %v5644
    %v5647 = vsel %vm409, %v5645, 0
    %5649 = vmatprep.subr.bf16.mxu0 %v4958
    %5650 = vmatpush1.bf16.msra.mxu0 %v4957
    %5651 = vmatprep.subr.bf16.mxu0 %v4961
    %5652 = vmatpush1.bf16.msra.mxu0 %v4960
    %5653 = vmatprep.subr.bf16.mxu0 0
    %5654 = vmatpush1.bf16.msra.mxu0 0
    %5655 = vmatprep.subr.bf16.mxu0 0
    %5656 = vmatpush1.bf16.msra.mxu0 0
    %5657 = vmatprep.subr.bf16.mxu0 0
    %5658 = vmatpush1.bf16.msra.mxu0 0
    %5659 = vmatprep.subr.bf16.mxu0 0
    %5660 = vmatpush1.bf16.msra.mxu0 0
    %5661 = vmatprep.subr.bf16.mxu0 0
    %5662 = vmatpush1.bf16.msra.mxu0 0
    %5663 = vmatprep.subr.bf16.mxu0 0
    %5664 = vmatpush1.bf16.msra.mxu0 0
    %5665 = vmatprep.subr.bf16.mxu0 0
    %5666 = vmatpush1.bf16.msra.mxu0 0
    %5667 = vmatprep.subr.bf16.mxu0 0
    %5668 = vmatpush1.bf16.msra.mxu0 0
    %5669 = vmatprep.subr.bf16.mxu0 0
    %5670 = vmatpush1.bf16.msra.mxu0 0
    %5671 = vmatprep.subr.bf16.mxu0 0
    %5672 = vmatpush1.bf16.msra.mxu0 0
    %5673 = vmatprep.subr.bf16.mxu0 0
    %5674 = vmatpush1.bf16.msra.mxu0 0
    %5675 = vmatprep.subr.bf16.mxu0 0
    %5676 = vmatpush1.bf16.msra.mxu0 0
    %5677 = vmatprep.subr.bf16.mxu0 0
    %5678 = vmatpush1.bf16.msra.mxu0 0
    %5679 = vmatprep.subr.bf16.mxu0 0
    %5680 = vmatpush1.bf16.msra.mxu0 0
    %5681 = vmatprep.mubr.bf16.mxu0 0
    %5682 = vmatmul.mubr.bf16.gmra.mrb[0].mxu0 %v5647
    %v5683 = vpop.f32.mrb[0].mxu0
    %v5684 = vadd.f32 %v4925, %v5683
    %v5685 = vpop.f32.mrb[0].mxu0
    %v5686 = vadd.f32 %v4929, %v5685
    %v5687 = vpop.f32.mrb[0].mxu0
    %v5688 = vpop.f32.mrb[0].mxu0
    %5689 = vdwg.mxu0
    %5690 = vmatprep.subr.bf16.mxu0 0
    %5691 = vmatpush1.bf16.msra.mxu0 %v4959
    %5692 = vmatprep.subr.bf16.mxu0 0
    %5693 = vmatpush1.bf16.msra.mxu0 %v4962
    %5694 = vmatprep.subr.bf16.mxu0 0
    %5695 = vmatpush1.bf16.msra.mxu0 0
    %5696 = vmatprep.subr.bf16.mxu0 0
    %5697 = vmatpush1.bf16.msra.mxu0 0
    %5698 = vmatprep.subr.bf16.mxu0 0
    %5699 = vmatpush1.bf16.msra.mxu0 0
    %5700 = vmatprep.subr.bf16.mxu0 0
    %5701 = vmatpush1.bf16.msra.mxu0 0
    %5702 = vmatprep.subr.bf16.mxu0 0
    %5703 = vmatpush1.bf16.msra.mxu0 0
    %5704 = vmatprep.subr.bf16.mxu0 0
    %5705 = vmatpush1.bf16.msra.mxu0 0
    %5706 = vmatprep.subr.bf16.mxu0 0
    %5707 = vmatpush1.bf16.msra.mxu0 0
    %5708 = vmatprep.subr.bf16.mxu0 0
    %5709 = vmatpush1.bf16.msra.mxu0 0
    %5710 = vmatprep.subr.bf16.mxu0 0
    %5711 = vmatpush1.bf16.msra.mxu0 0
    %5712 = vmatprep.subr.bf16.mxu0 0
    %5713 = vmatpush1.bf16.msra.mxu0 0
    %5714 = vmatprep.subr.bf16.mxu0 0
    %5715 = vmatpush1.bf16.msra.mxu0 0
    %5716 = vmatprep.subr.bf16.mxu0 0
    %5717 = vmatpush1.bf16.msra.mxu0 0
    %5718 = vmatprep.subr.bf16.mxu0 0
    %5719 = vmatpush1.bf16.msra.mxu0 0
    %5720 = vmatprep.subr.bf16.mxu0 0
    %5721 = vmatpush1.bf16.msra.mxu0 0
    %5722 = vmatprep.mubr.bf16.mxu0 0
    %5723 = vmatmul.mubr.bf16.gmra.mrb[0].mxu0 %v5647
    %v5724 = vpop.f32.mrb[0].mxu0
    %v5725 = vadd.f32 %v4933, %v5724
    %v5726 = vpop.f32.mrb[0].mxu0
    %v5727 = vpop.f32.mrb[0].mxu0
    %v5728 = vpop.f32.mrb[0].mxu0
    %5729 = vdwg.mxu0
    %v5730 = vadd.f32 %v5684, %v5411
    %v5731 = vadd.f32 %v5686, %v5413
    %v5732 = vmul.f32 %v5730, 0.5
    %v5733 = vmul.f32 %v5731, 0.5
    %v5734 = vtanh.pop %v5732
    %v5735 = vtanh.pop %v5733
    %v5736 = vadd.f32 %v5734, 1.0
    %v5737 = vadd.f32 %v5735, 1.0
    %v5738 = vmul.f32 %v5736, 0.5
    %v5739 = vmul.f32 %v5737, 0.5
    %v5740 = vadd.f32 %v5452, %v5053
    %v5741 = vmul.f32 %v5738, %v5740
    %v5742 = vadd.f32 %v5725, %v5741
    %v5743 = vtanh.pop %v5742
    %v5744 = vsub.f32 1.0, %v5739
    %v5745 = vmul.f32 %v5744, %v5743
    %v5746 = vmul.f32 %v5739, %v5071
    %v5747 = vadd.f32 %v5745, %v5746
    %v5748 = vpack.c.bf16 %v5747, %v5747
    %v5750 = vsel %vm409, %v5748, 0
    %5752 = vmatprep.subr.bf16.mxu0 %v5120
    %5753 = vmatpush1.bf16.msra.mxu0 %v5119
    %5754 = vmatprep.subr.bf16.mxu0 %v5123
    %5755 = vmatpush1.bf16.msra.mxu0 %v5122
    %5756 = vmatprep.subr.bf16.mxu0 0
    %5757 = vmatpush1.bf16.msra.mxu0 0
    %5758 = vmatprep.subr.bf16.mxu0 0
    %5759 = vmatpush1.bf16.msra.mxu0 0
    %5760 = vmatprep.subr.bf16.mxu0 0
    %5761 = vmatpush1.bf16.msra.mxu0 0
    %5762 = vmatprep.subr.bf16.mxu0 0
    %5763 = vmatpush1.bf16.msra.mxu0 0
    %5764 = vmatprep.subr.bf16.mxu0 0
    %5765 = vmatpush1.bf16.msra.mxu0 0
    %5766 = vmatprep.subr.bf16.mxu0 0
    %5767 = vmatpush1.bf16.msra.mxu0 0
    %5768 = vmatprep.subr.bf16.mxu0 0
    %5769 = vmatpush1.bf16.msra.mxu0 0
    %5770 = vmatprep.subr.bf16.mxu0 0
    %5771 = vmatpush1.bf16.msra.mxu0 0
    %5772 = vmatprep.subr.bf16.mxu0 0
    %5773 = vmatpush1.bf16.msra.mxu0 0
    %5774 = vmatprep.subr.bf16.mxu0 0
    %5775 = vmatpush1.bf16.msra.mxu0 0
    %5776 = vmatprep.subr.bf16.mxu0 0
    %5777 = vmatpush1.bf16.msra.mxu0 0
    %5778 = vmatprep.subr.bf16.mxu0 0
    %5779 = vmatpush1.bf16.msra.mxu0 0
    %5780 = vmatprep.subr.bf16.mxu0 0
    %5781 = vmatpush1.bf16.msra.mxu0 0
    %5782 = vmatprep.subr.bf16.mxu0 0
    %5783 = vmatpush1.bf16.msra.mxu0 0
    %5784 = vmatprep.mubr.bf16.mxu0 0
    %5785 = vmatmul.mubr.bf16.gmra.mrb[0].mxu0 %v5750
    %v5786 = vpop.f32.mrb[0].mxu0
    %v5787 = vadd.f32 %v5087, %v5786
    %v5788 = vpop.f32.mrb[0].mxu0
    %v5789 = vadd.f32 %v5091, %v5788
    %v5790 = vpop.f32.mrb[0].mxu0
    %v5791 = vpop.f32.mrb[0].mxu0
    %5792 = vdwg.mxu0
    %5793 = vmatprep.subr.bf16.mxu0 0
    %5794 = vmatpush1.bf16.msra.mxu0 %v5121
    %5795 = vmatprep.subr.bf16.mxu0 0
    %5796 = vmatpush1.bf16.msra.mxu0 %v5124
    %5797 = vmatprep.subr.bf16.mxu0 0
    %5798 = vmatpush1.bf16.msra.mxu0 0
    %5799 = vmatprep.subr.bf16.mxu0 0
    %5800 = vmatpush1.bf16.msra.mxu0 0
    %5801 = vmatprep.subr.bf16.mxu0 0
    %5802 = vmatpush1.bf16.msra.mxu0 0
    %5803 = vmatprep.subr.bf16.mxu0 0
    %5804 = vmatpush1.bf16.msra.mxu0 0
    %5805 = vmatprep.subr.bf16.mxu0 0
    %5806 = vmatpush1.bf16.msra.mxu0 0
    %5807 = vmatprep.subr.bf16.mxu0 0
    %5808 = vmatpush1.bf16.msra.mxu0 0
    %5809 = vmatprep.subr.bf16.mxu0 0
    %5810 = vmatpush1.bf16.msra.mxu0 0
    %5811 = vmatprep.subr.bf16.mxu0 0
    %5812 = vmatpush1.bf16.msra.mxu0 0
    %5813 = vmatprep.subr.bf16.mxu0 0
    %5814 = vmatpush1.bf16.msra.mxu0 0
    %5815 = vmatprep.subr.bf16.mxu0 0
    %5816 = vmatpush1.bf16.msra.mxu0 0
    %5817 = vmatprep.subr.bf16.mxu0 0
    %5818 = vmatpush1.bf16.msra.mxu0 0
    %5819 = vmatprep.subr.bf16.mxu0 0
    %5820 = vmatpush1.bf16.msra.mxu0 0
    %5821 = vmatprep.subr.bf16.mxu0 0
    %5822 = vmatpush1.bf16.msra.mxu0 0
    %5823 = vmatprep.subr.bf16.mxu0 0
    %5824 = vmatpush1.bf16.msra.mxu0 0
    %5825 = vmatprep.mubr.bf16.mxu0 0
    %5826 = vmatmul.mubr.bf16.gmra.mrb[0].mxu0 %v5750
    %v5827 = vpop.f32.mrb[0].mxu0
    %v5828 = vadd.f32 %v5095, %v5827
    %v5829 = vpop.f32.mrb[0].mxu0
    %v5830 = vpop.f32.mrb[0].mxu0
    %v5831 = vpop.f32.mrb[0].mxu0
    %5832 = vdwg.mxu0
    %v5833 = vadd.f32 %v5787, %v5496
    %v5834 = vadd.f32 %v5789, %v5498
    %v5835 = vmul.f32 %v5833, 0.5
    %v5836 = vmul.f32 %v5834, 0.5
    %v5837 = vtanh.pop %v5835
    %v5838 = vtanh.pop %v5836
    %v5839 = vadd.f32 %v5837, 1.0
    %v5840 = vadd.f32 %v5838, 1.0
    %v5841 = vmul.f32 %v5839, 0.5
    %v5842 = vmul.f32 %v5840, 0.5
    %v5843 = vadd.f32 %v5537, %v5215
    %v5844 = vmul.f32 %v5841, %v5843
    %v5845 = vadd.f32 %v5828, %v5844
    %v5846 = vtanh.pop %v5845
    %v5847 = vsub.f32 1.0, %v5842
    %v5848 = vmul.f32 %v5847, %v5846
    %v5849 = vmul.f32 %v5842, %v5233
    %v5850 = vadd.f32 %v5848, %v5849
    %v5851 = vmax.f32 %v5850, 0.0
    %v5852 = vpack.c.bf16 %v5851, %v5851
    %v5854 = vsel %vm409, %v5852, 0
    %5856 = vmatprep.subr.bf16.mxu0 0
    %5857 = vmatpush1.bf16.msra.mxu0 %v5248
    %5858 = vmatprep.subr.bf16.mxu0 0
    %5859 = vmatpush1.bf16.msra.mxu0 %v5249
    %5860 = vmatprep.subr.bf16.mxu0 0
    %5861 = vmatpush1.bf16.msra.mxu0 0
    %5862 = vmatprep.subr.bf16.mxu0 0
    %5863 = vmatpush1.bf16.msra.mxu0 0
    %5864 = vmatprep.subr.bf16.mxu0 0
    %5865 = vmatpush1.bf16.msra.mxu0 0
    %5866 = vmatprep.subr.bf16.mxu0 0
    %5867 = vmatpush1.bf16.msra.mxu0 0
    %5868 = vmatprep.subr.bf16.mxu0 0
    %5869 = vmatpush1.bf16.msra.mxu0 0
    %5870 = vmatprep.subr.bf16.mxu0 0
    %5871 = vmatpush1.bf16.msra.mxu0 0
    %5872 = vmatprep.subr.bf16.mxu0 0
    %5873 = vmatpush1.bf16.msra.mxu0 0
    %5874 = vmatprep.subr.bf16.mxu0 0
    %5875 = vmatpush1.bf16.msra.mxu0 0
    %5876 = vmatprep.subr.bf16.mxu0 0
    %5877 = vmatpush1.bf16.msra.mxu0 0
    %5878 = vmatprep.subr.bf16.mxu0 0
    %5879 = vmatpush1.bf16.msra.mxu0 0
    %5880 = vmatprep.subr.bf16.mxu0 0
    %5881 = vmatpush1.bf16.msra.mxu0 0
    %5882 = vmatprep.subr.bf16.mxu0 0
    %5883 = vmatpush1.bf16.msra.mxu0 0
    %5884 = vmatprep.subr.bf16.mxu0 0
    %5885 = vmatpush1.bf16.msra.mxu0 0
    %5886 = vmatprep.subr.bf16.mxu0 0
    %5887 = vmatpush1.bf16.msra.mxu0 0
    %5888 = vmatprep.mubr.bf16.mxu0 0
    %5889 = vmatmul.mubr.bf16.gmra.mrb[0].mxu0 %v5854
    %v5890 = vpop.f32.mrb[0].mxu0
    %v5891 = vadd.f32 %v4400, %v5890
    %v5892 = vpop.f32.mrb[0].mxu0
    %v5893 = vpop.f32.mrb[0].mxu0
    %v5894 = vpop.f32.mrb[0].mxu0
    %5895 = vdwg.mxu0
    %5896 = vmatprep.subr.bf16.mxu0 %v4430
    %5897 = vmatpush1.bf16.msra.mxu0 %v4429
    %5898 = vmatprep.subr.bf16.mxu0 %v4433
    %5899 = vmatpush1.bf16.msra.mxu0 %v4432
    %5900 = vmatprep.subr.bf16.mxu0 0
    %5901 = vmatpush1.bf16.msra.mxu0 0
    %5902 = vmatprep.subr.bf16.mxu0 0
    %5903 = vmatpush1.bf16.msra.mxu0 0
    %5904 = vmatprep.subr.bf16.mxu0 0
    %5905 = vmatpush1.bf16.msra.mxu0 0
    %5906 = vmatprep.subr.bf16.mxu0 0
    %5907 = vmatpush1.bf16.msra.mxu0 0
    %5908 = vmatprep.subr.bf16.mxu0 0
    %5909 = vmatpush1.bf16.msra.mxu0 0
    %5910 = vmatprep.subr.bf16.mxu0 0
    %5911 = vmatpush1.bf16.msra.mxu0 0
    %5912 = vmatprep.subr.bf16.mxu0 0
    %5913 = vmatpush1.bf16.msra.mxu0 0
    %5914 = vmatprep.subr.bf16.mxu0 0
    %5915 = vmatpush1.bf16.msra.mxu0 0
    %5916 = vmatprep.subr.bf16.mxu0 0
    %5917 = vmatpush1.bf16.msra.mxu0 0
    %5918 = vmatprep.subr.bf16.mxu0 0
    %5919 = vmatpush1.bf16.msra.mxu0 0
    %5920 = vmatprep.subr.bf16.mxu0 0
    %5921 = vmatpush1.bf16.msra.mxu0 0
    %5922 = vmatprep.subr.bf16.mxu0 0
    %5923 = vmatpush1.bf16.msra.mxu0 0
    %5924 = vmatprep.subr.bf16.mxu0 0
    %5925 = vmatpush1.bf16.msra.mxu0 0
    %5926 = vmatprep.subr.bf16.mxu0 0
    %5927 = vmatpush1.bf16.msra.mxu0 0
    %5928 = vmatprep.mubr.bf16.mxu0 0
    %5929 = vmatmul.mubr.bf16.gmra.mrb[0].mxu0 %v5647
    %v5930 = vpop.f32.mrb[0].mxu0
    %v5931 = vadd.f32 0.0, %v5930
    %v5932 = vpop.f32.mrb[0].mxu0
    %v5933 = vadd.f32 0.0, %v5932
    %v5934 = vpop.f32.mrb[0].mxu0
    %v5935 = vpop.f32.mrb[0].mxu0
    %5936 = vdwg.mxu0
    %5937 = vmatprep.subr.bf16.mxu0 0
    %5938 = vmatpush1.bf16.msra.mxu0 %v4431
    %5939 = vmatprep.subr.bf16.mxu0 0
    %5940 = vmatpush1.bf16.msra.mxu0 %v4434
    %5941 = vmatprep.subr.bf16.mxu0 0
    %5942 = vmatpush1.bf16.msra.mxu0 0
    %5943 = vmatprep.subr.bf16.mxu0 0
    %5944 = vmatpush1.bf16.msra.mxu0 0
    %5945 = vmatprep.subr.bf16.mxu0 0
    %5946 = vmatpush1.bf16.msra.mxu0 0
    %5947 = vmatprep.subr.bf16.mxu0 0
    %5948 = vmatpush1.bf16.msra.mxu0 0
    %5949 = vmatprep.subr.bf16.mxu0 0
    %5950 = vmatpush1.bf16.msra.mxu0 0
    %5951 = vmatprep.subr.bf16.mxu0 0
    %5952 = vmatpush1.bf16.msra.mxu0 0
    %5953 = vmatprep.subr.bf16.mxu0 0
    %5954 = vmatpush1.bf16.msra.mxu0 0
    %5955 = vmatprep.subr.bf16.mxu0 0
    %5956 = vmatpush1.bf16.msra.mxu0 0
    %5957 = vmatprep.subr.bf16.mxu0 0
    %5958 = vmatpush1.bf16.msra.mxu0 0
    %5959 = vmatprep.subr.bf16.mxu0 0
    %5960 = vmatpush1.bf16.msra.mxu0 0
    %5961 = vmatprep.subr.bf16.mxu0 0
    %5962 = vmatpush1.bf16.msra.mxu0 0
    %5963 = vmatprep.subr.bf16.mxu0 0
    %5964 = vmatpush1.bf16.msra.mxu0 0
    %5965 = vmatprep.subr.bf16.mxu0 0
    %5966 = vmatpush1.bf16.msra.mxu0 0
    %5967 = vmatprep.subr.bf16.mxu0 0
    %5968 = vmatpush1.bf16.msra.mxu0 0
    %5969 = vmatprep.mubr.bf16.mxu0 0
    %5970 = vmatmul.mubr.bf16.gmra.mrb[0].mxu0 %v5647
    %v5971 = vpop.f32.mrb[0].mxu0
    %v5972 = vadd.f32 0.0, %v5971
    %v5973 = vpop.f32.mrb[0].mxu0
    %v5974 = vpop.f32.mrb[0].mxu0
    %v5975 = vpop.f32.mrb[0].mxu0
    %5976 = vdwg.mxu0
    %5977 = vmatprep.subr.bf16.mxu0 %v4551
    %5978 = vmatpush1.bf16.msra.mxu0 %v4550
    %5979 = vmatprep.subr.bf16.mxu0 %v4554
    %5980 = vmatpush1.bf16.msra.mxu0 %v4553
    %5981 = vmatprep.subr.bf16.mxu0 0
    %5982 = vmatpush1.bf16.msra.mxu0 0
    %5983 = vmatprep.subr.bf16.mxu0 0
    %5984 = vmatpush1.bf16.msra.mxu0 0
    %5985 = vmatprep.subr.bf16.mxu0 0
    %5986 = vmatpush1.bf16.msra.mxu0 0
    %5987 = vmatprep.subr.bf16.mxu0 0
    %5988 = vmatpush1.bf16.msra.mxu0 0
    %5989 = vmatprep.subr.bf16.mxu0 0
    %5990 = vmatpush1.bf16.msra.mxu0 0
    %5991 = vmatprep.subr.bf16.mxu0 0
    %5992 = vmatpush1.bf16.msra.mxu0 0
    %5993 = vmatprep.subr.bf16.mxu0 0
    %5994 = vmatpush1.bf16.msra.mxu0 0
    %5995 = vmatprep.subr.bf16.mxu0 0
    %5996 = vmatpush1.bf16.msra.mxu0 0
    %5997 = vmatprep.subr.bf16.mxu0 0
    %5998 = vmatpush1.bf16.msra.mxu0 0
    %5999 = vmatprep.subr.bf16.mxu0 0
    %6000 = vmatpush1.bf16.msra.mxu0 0
    %6001 = vmatprep.subr.bf16.mxu0 0
    %6002 = vmatpush1.bf16.msra.mxu0 0
    %6003 = vmatprep.subr.bf16.mxu0 0
    %6004 = vmatpush1.bf16.msra.mxu0 0
    %6005 = vmatprep.subr.bf16.mxu0 0
    %6006 = vmatpush1.bf16.msra.mxu0 0
    %6007 = vmatprep.subr.bf16.mxu0 0
    %6008 = vmatpush1.bf16.msra.mxu0 0
    %6009 = vmatprep.mubr.bf16.mxu0 0
    %6010 = vmatmul.mubr.bf16.gmra.mrb[0].mxu0 %v5750
    %v6011 = vpop.f32.mrb[0].mxu0
    %v6012 = vadd.f32 0.0, %v6011
    %v6013 = vpop.f32.mrb[0].mxu0
    %v6014 = vadd.f32 0.0, %v6013
    %v6015 = vpop.f32.mrb[0].mxu0
    %v6016 = vpop.f32.mrb[0].mxu0
    %6017 = vdwg.mxu0
    %6018 = vmatprep.subr.bf16.mxu0 0
    %6019 = vmatpush1.bf16.msra.mxu0 %v4552
    %6020 = vmatprep.subr.bf16.mxu0 0
    %6021 = vmatpush1.bf16.msra.mxu0 %v4555
    %6022 = vmatprep.subr.bf16.mxu0 0
    %6023 = vmatpush1.bf16.msra.mxu0 0
    %6024 = vmatprep.subr.bf16.mxu0 0
    %6025 = vmatpush1.bf16.msra.mxu0 0
    %6026 = vmatprep.subr.bf16.mxu0 0
    %6027 = vmatpush1.bf16.msra.mxu0 0
    %6028 = vmatprep.subr.bf16.mxu0 0
    %6029 = vmatpush1.bf16.msra.mxu0 0
    %6030 = vmatprep.subr.bf16.mxu0 0
    %6031 = vmatpush1.bf16.msra.mxu0 0
    %6032 = vmatprep.subr.bf16.mxu0 0
    %6033 = vmatpush1.bf16.msra.mxu0 0
    %6034 = vmatprep.subr.bf16.mxu0 0
    %6035 = vmatpush1.bf16.msra.mxu0 0
    %6036 = vmatprep.subr.bf16.mxu0 0
    %6037 = vmatpush1.bf16.msra.mxu0 0
    %6038 = vmatprep.subr.bf16.mxu0 0
    %6039 = vmatpush1.bf16.msra.mxu0 0
    %6040 = vmatprep.subr.bf16.mxu0 0
    %6041 = vmatpush1.bf16.msra.mxu0 0
    %6042 = vmatprep.subr.bf16.mxu0 0
    %6043 = vmatpush1.bf16.msra.mxu0 0
    %6044 = vmatprep.subr.bf16.mxu0 0
    %6045 = vmatpush1.bf16.msra.mxu0 0
    %6046 = vmatprep.subr.bf16.mxu0 0
    %6047 = vmatpush1.bf16.msra.mxu0 0
    %6048 = vmatprep.subr.bf16.mxu0 0
    %6049 = vmatpush1.bf16.msra.mxu0 0
    %6050 = vmatprep.mubr.bf16.mxu0 0
    %6051 = vmatmul.mubr.bf16.gmra.mrb[0].mxu0 %v5750
    %v6052 = vpop.f32.mrb[0].mxu0
    %v6053 = vadd.f32 0.0, %v6052
    %v6054 = vpop.f32.mrb[0].mxu0
    %v6055 = vpop.f32.mrb[0].mxu0
    %v6056 = vpop.f32.mrb[0].mxu0
    %6057 = vdwg.mxu0
    %v6058 = vpack.c.bf16 %v5850, %v5850
    %v6060 = vsel %vm409, %v6058, 0
    %6062 = vmatprep.subr.bf16.mxu0 %v4673
    %6063 = vmatpush1.bf16.msra.mxu0 %v4672
    %6064 = vmatprep.subr.bf16.mxu0 %v4676
    %6065 = vmatpush1.bf16.msra.mxu0 %v4675
    %6066 = vmatprep.subr.bf16.mxu0 0
    %6067 = vmatpush1.bf16.msra.mxu0 0
    %6068 = vmatprep.subr.bf16.mxu0 0
    %6069 = vmatpush1.bf16.msra.mxu0 0
    %6070 = vmatprep.subr.bf16.mxu0 0
    %6071 = vmatpush1.bf16.msra.mxu0 0
    %6072 = vmatprep.subr.bf16.mxu0 0
    %6073 = vmatpush1.bf16.msra.mxu0 0
    %6074 = vmatprep.subr.bf16.mxu0 0
    %6075 = vmatpush1.bf16.msra.mxu0 0
    %6076 = vmatprep.subr.bf16.mxu0 0
    %6077 = vmatpush1.bf16.msra.mxu0 0
    %6078 = vmatprep.subr.bf16.mxu0 0
    %6079 = vmatpush1.bf16.msra.mxu0 0
    %6080 = vmatprep.subr.bf16.mxu0 0
    %6081 = vmatpush1.bf16.msra.mxu0 0
    %6082 = vmatprep.subr.bf16.mxu0 0
    %6083 = vmatpush1.bf16.msra.mxu0 0
    %6084 = vmatprep.subr.bf16.mxu0 0
    %6085 = vmatpush1.bf16.msra.mxu0 0
    %6086 = vmatprep.subr.bf16.mxu0 0
    %6087 = vmatpush1.bf16.msra.mxu0 0
    %6088 = vmatprep.subr.bf16.mxu0 0
    %6089 = vmatpush1.bf16.msra.mxu0 0
    %6090 = vmatprep.subr.bf16.mxu0 0
    %6091 = vmatpush1.bf16.msra.mxu0 0
    %6092 = vmatprep.subr.bf16.mxu0 0
    %6093 = vmatpush1.bf16.msra.mxu0 0
    %6094 = vmatprep.mubr.bf16.mxu0 0
    %6095 = vmatmul.mubr.bf16.gmra.mrb[0].mxu0 %v6060
    %v6096 = vpop.f32.mrb[0].mxu0
    %v6097 = vadd.f32 0.0, %v6096
    %v6098 = vpop.f32.mrb[0].mxu0
    %v6099 = vadd.f32 0.0, %v6098
    %v6100 = vpop.f32.mrb[0].mxu0
    %v6101 = vpop.f32.mrb[0].mxu0
    %6102 = vdwg.mxu0
    %6103 = vmatprep.subr.bf16.mxu0 0
    %6104 = vmatpush1.bf16.msra.mxu0 %v4674
    %6105 = vmatprep.subr.bf16.mxu0 0
    %6106 = vmatpush1.bf16.msra.mxu0 %v4677
    %6107 = vmatprep.subr.bf16.mxu0 0
    %6108 = vmatpush1.bf16.msra.mxu0 0
    %6109 = vmatprep.subr.bf16.mxu0 0
    %6110 = vmatpush1.bf16.msra.mxu0 0
    %6111 = vmatprep.subr.bf16.mxu0 0
    %6112 = vmatpush1.bf16.msra.mxu0 0
    %6113 = vmatprep.subr.bf16.mxu0 0
    %6114 = vmatpush1.bf16.msra.mxu0 0
    %6115 = vmatprep.subr.bf16.mxu0 0
    %6116 = vmatpush1.bf16.msra.mxu0 0
    %6117 = vmatprep.subr.bf16.mxu0 0
    %6118 = vmatpush1.bf16.msra.mxu0 0
    %6119 = vmatprep.subr.bf16.mxu0 0
    %6120 = vmatpush1.bf16.msra.mxu0 0
    %6121 = vmatprep.subr.bf16.mxu0 0
    %6122 = vmatpush1.bf16.msra.mxu0 0
    %6123 = vmatprep.subr.bf16.mxu0 0
    %6124 = vmatpush1.bf16.msra.mxu0 0
    %6125 = vmatprep.subr.bf16.mxu0 0
    %6126 = vmatpush1.bf16.msra.mxu0 0
    %6127 = vmatprep.subr.bf16.mxu0 0
    %6128 = vmatpush1.bf16.msra.mxu0 0
    %6129 = vmatprep.subr.bf16.mxu0 0
    %6130 = vmatpush1.bf16.msra.mxu0 0
    %6131 = vmatprep.subr.bf16.mxu0 0
    %6132 = vmatpush1.bf16.msra.mxu0 0
    %6133 = vmatprep.subr.bf16.mxu0 0
    %6134 = vmatpush1.bf16.msra.mxu0 0
    %6135 = vmatprep.mubr.bf16.mxu0 0
    %6136 = vmatmul.mubr.bf16.gmra.mrb[0].mxu0 %v6060
    %v6137 = vpop.f32.mrb[0].mxu0
    %v6138 = vadd.f32 0.0, %v6137
    %v6139 = vpop.f32.mrb[0].mxu0
    %v6140 = vpop.f32.mrb[0].mxu0
    %v6141 = vpop.f32.mrb[0].mxu0
    %6142 = vdwg.mxu0
    %v6143 = vpack.c.bf16 %v5891, %v5891
    %v6145 = vsel %vm68, %v6143, 0
    %6147 = vmatprep.subr.bf16.mxu0 %v4802
    %6148 = vmatpush1.bf16.msra.mxu0 %v4801
    %6149 = vmatprep.subr.bf16.mxu0 0
    %6150 = vmatpush1.bf16.msra.mxu0 0
    %6151 = vmatprep.subr.bf16.mxu0 0
    %6152 = vmatpush1.bf16.msra.mxu0 0
    %6153 = vmatprep.subr.bf16.mxu0 0
    %6154 = vmatpush1.bf16.msra.mxu0 0
    %6155 = vmatprep.subr.bf16.mxu0 0
    %6156 = vmatpush1.bf16.msra.mxu0 0
    %6157 = vmatprep.subr.bf16.mxu0 0
    %6158 = vmatpush1.bf16.msra.mxu0 0
    %6159 = vmatprep.subr.bf16.mxu0 0
    %6160 = vmatpush1.bf16.msra.mxu0 0
    %6161 = vmatprep.subr.bf16.mxu0 0
    %6162 = vmatpush1.bf16.msra.mxu0 0
    %6163 = vmatprep.subr.bf16.mxu0 0
    %6164 = vmatpush1.bf16.msra.mxu0 0
    %6165 = vmatprep.subr.bf16.mxu0 0
    %6166 = vmatpush1.bf16.msra.mxu0 0
    %6167 = vmatprep.subr.bf16.mxu0 0
    %6168 = vmatpush1.bf16.msra.mxu0 0
    %6169 = vmatprep.subr.bf16.mxu0 0
    %6170 = vmatpush1.bf16.msra.mxu0 0
    %6171 = vmatprep.subr.bf16.mxu0 0
    %6172 = vmatpush1.bf16.msra.mxu0 0
    %6173 = vmatprep.subr.bf16.mxu0 0
    %6174 = vmatpush1.bf16.msra.mxu0 0
    %6175 = vmatprep.subr.bf16.mxu0 0
    %6176 = vmatpush1.bf16.msra.mxu0 0
    %6177 = vmatprep.subr.bf16.mxu0 0
    %6178 = vmatpush1.bf16.msra.mxu0 0
    %6179 = vmatprep.mubr.bf16.mxu0 0
    %6180 = vmatmul.mubr.bf16.gmra.mrb[0].mxu0 %v6145
    %v6181 = vpop.f32.mrb[0].mxu0
    %v6182 = vadd.f32 %v4779, %v6181
    %v6183 = vpop.f32.mrb[0].mxu0
    %v6184 = vadd.f32 %v4783, %v6183
    %v6185 = vpop.f32.mrb[0].mxu0
    %v6186 = vpop.f32.mrb[0].mxu0
    %6187 = vdwg.mxu0
    %6188 = vmatprep.subr.bf16.mxu0 0
    %6189 = vmatpush1.bf16.msra.mxu0 %v4803
    %6190 = vmatprep.subr.bf16.mxu0 0
    %6191 = vmatpush1.bf16.msra.mxu0 0
    %6192 = vmatprep.subr.bf16.mxu0 0
    %6193 = vmatpush1.bf16.msra.mxu0 0
    %6194 = vmatprep.subr.bf16.mxu0 0
    %6195 = vmatpush1.bf16.msra.mxu0 0
    %6196 = vmatprep.subr.bf16.mxu0 0
    %6197 = vmatpush1.bf16.msra.mxu0 0
    %6198 = vmatprep.subr.bf16.mxu0 0
    %6199 = vmatpush1.bf16.msra.mxu0 0
    %6200 = vmatprep.subr.bf16.mxu0 0
    %6201 = vmatpush1.bf16.msra.mxu0 0
    %6202 = vmatprep.subr.bf16.mxu0 0
    %6203 = vmatpush1.bf16.msra.mxu0 0
    %6204 = vmatprep.subr.bf16.mxu0 0
    %6205 = vmatpush1.bf16.msra.mxu0 0
    %6206 = vmatprep.subr.bf16.mxu0 0
    %6207 = vmatpush1.bf16.msra.mxu0 0
    %6208 = vmatprep.subr.bf16.mxu0 0
    %6209 = vmatpush1.bf16.msra.mxu0 0
    %6210 = vmatprep.subr.bf16.mxu0 0
    %6211 = vmatpush1.bf16.msra.mxu0 0
    %6212 = vmatprep.subr.bf16.mxu0 0
    %6213 = vmatpush1.bf16.msra.mxu0 0
    %6214 = vmatprep.subr.bf16.mxu0 0
    %6215 = vmatpush1.bf16.msra.mxu0 0
    %6216 = vmatprep.subr.bf16.mxu0 0
    %6217 = vmatpush1.bf16.msra.mxu0 0
    %6218 = vmatprep.subr.bf16.mxu0 0
    %6219 = vmatpush1.bf16.msra.mxu0 0
    %6220 = vmatprep.mubr.bf16.mxu0 0
    %6221 = vmatmul.mubr.bf16.gmra.mrb[0].mxu0 %v6145
    %v6222 = vpop.f32.mrb[0].mxu0
    %v6223 = vadd.f32 %v4787, %v6222
    %v6224 = vpop.f32.mrb[0].mxu0
    %v6225 = vpop.f32.mrb[0].mxu0
    %v6226 = vpop.f32.mrb[0].mxu0
    %6227 = vdwg.mxu0
    %v6228 = vadd.f32 %v6182, %v5931
    %v6229 = vadd.f32 %v6184, %v5933
    %v6230 = vmul.f32 %v6228, 0.5
    %v6231 = vmul.f32 %v6229, 0.5
    %v6232 = vtanh.pop %v6230
    %v6233 = vtanh.pop %v6231
    %v6234 = vadd.f32 %v6232, 1.0
    %v6235 = vadd.f32 %v6233, 1.0
    %v6236 = vmul.f32 %v6234, 0.5
    %v6237 = vmul.f32 %v6235, 0.5
    %v6238 = vadd.f32 %v5972, %v4891
    %v6239 = vmul.f32 %v6236, %v6238
    %v6240 = vadd.f32 %v6223, %v6239
    %v6241 = vtanh.pop %v6240
    %v6242 = vsub.f32 1.0, %v6237
    %v6243 = vmul.f32 %v6242, %v6241
    %v6244 = vmul.f32 %v6237, %v5644
    %v6245 = vadd.f32 %v6243, %v6244
    %v6246 = vpack.c.bf16 %v6245, %v6245
    %v6248 = vsel %vm409, %v6246, 0
    %6250 = vmatprep.subr.bf16.mxu0 %v4958
    %6251 = vmatpush1.bf16.msra.mxu0 %v4957
    %6252 = vmatprep.subr.bf16.mxu0 %v4961
    %6253 = vmatpush1.bf16.msra.mxu0 %v4960
    %6254 = vmatprep.subr.bf16.mxu0 0
    %6255 = vmatpush1.bf16.msra.mxu0 0
    %6256 = vmatprep.subr.bf16.mxu0 0
    %6257 = vmatpush1.bf16.msra.mxu0 0
    %6258 = vmatprep.subr.bf16.mxu0 0
    %6259 = vmatpush1.bf16.msra.mxu0 0
    %6260 = vmatprep.subr.bf16.mxu0 0
    %6261 = vmatpush1.bf16.msra.mxu0 0
    %6262 = vmatprep.subr.bf16.mxu0 0
    %6263 = vmatpush1.bf16.msra.mxu0 0
    %6264 = vmatprep.subr.bf16.mxu0 0
    %6265 = vmatpush1.bf16.msra.mxu0 0
    %6266 = vmatprep.subr.bf16.mxu0 0
    %6267 = vmatpush1.bf16.msra.mxu0 0
    %6268 = vmatprep.subr.bf16.mxu0 0
    %6269 = vmatpush1.bf16.msra.mxu0 0
    %6270 = vmatprep.subr.bf16.mxu0 0
    %6271 = vmatpush1.bf16.msra.mxu0 0
    %6272 = vmatprep.subr.bf16.mxu0 0
    %6273 = vmatpush1.bf16.msra.mxu0 0
    %6274 = vmatprep.subr.bf16.mxu0 0
    %6275 = vmatpush1.bf16.msra.mxu0 0
    %6276 = vmatprep.subr.bf16.mxu0 0
    %6277 = vmatpush1.bf16.msra.mxu0 0
    %6278 = vmatprep.subr.bf16.mxu0 0
    %6279 = vmatpush1.bf16.msra.mxu0 0
    %6280 = vmatprep.subr.bf16.mxu0 0
    %6281 = vmatpush1.bf16.msra.mxu0 0
    %6282 = vmatprep.mubr.bf16.mxu0 0
    %6283 = vmatmul.mubr.bf16.gmra.mrb[0].mxu0 %v6248
    %v6284 = vpop.f32.mrb[0].mxu0
    %v6285 = vadd.f32 %v4925, %v6284
    %v6286 = vpop.f32.mrb[0].mxu0
    %v6287 = vadd.f32 %v4929, %v6286
    %v6288 = vpop.f32.mrb[0].mxu0
    %v6289 = vpop.f32.mrb[0].mxu0
    %6290 = vdwg.mxu0
    %6291 = vmatprep.subr.bf16.mxu0 0
    %6292 = vmatpush1.bf16.msra.mxu0 %v4959
    %6293 = vmatprep.subr.bf16.mxu0 0
    %6294 = vmatpush1.bf16.msra.mxu0 %v4962
    %6295 = vmatprep.subr.bf16.mxu0 0
    %6296 = vmatpush1.bf16.msra.mxu0 0
    %6297 = vmatprep.subr.bf16.mxu0 0
    %6298 = vmatpush1.bf16.msra.mxu0 0
    %6299 = vmatprep.subr.bf16.mxu0 0
    %6300 = vmatpush1.bf16.msra.mxu0 0
    %6301 = vmatprep.subr.bf16.mxu0 0
    %6302 = vmatpush1.bf16.msra.mxu0 0
    %6303 = vmatprep.subr.bf16.mxu0 0
    %6304 = vmatpush1.bf16.msra.mxu0 0
    %6305 = vmatprep.subr.bf16.mxu0 0
    %6306 = vmatpush1.bf16.msra.mxu0 0
    %6307 = vmatprep.subr.bf16.mxu0 0
    %6308 = vmatpush1.bf16.msra.mxu0 0
    %6309 = vmatprep.subr.bf16.mxu0 0
    %6310 = vmatpush1.bf16.msra.mxu0 0
    %6311 = vmatprep.subr.bf16.mxu0 0
    %6312 = vmatpush1.bf16.msra.mxu0 0
    %6313 = vmatprep.subr.bf16.mxu0 0
    %6314 = vmatpush1.bf16.msra.mxu0 0
    %6315 = vmatprep.subr.bf16.mxu0 0
    %6316 = vmatpush1.bf16.msra.mxu0 0
    %6317 = vmatprep.subr.bf16.mxu0 0
    %6318 = vmatpush1.bf16.msra.mxu0 0
    %6319 = vmatprep.subr.bf16.mxu0 0
    %6320 = vmatpush1.bf16.msra.mxu0 0
    %6321 = vmatprep.subr.bf16.mxu0 0
    %6322 = vmatpush1.bf16.msra.mxu0 0
    %6323 = vmatprep.mubr.bf16.mxu0 0
    %6324 = vmatmul.mubr.bf16.gmra.mrb[0].mxu0 %v6248
    %v6325 = vpop.f32.mrb[0].mxu0
    %v6326 = vadd.f32 %v4933, %v6325
    %v6327 = vpop.f32.mrb[0].mxu0
    %v6328 = vpop.f32.mrb[0].mxu0
    %v6329 = vpop.f32.mrb[0].mxu0
    %6330 = vdwg.mxu0
    %v6331 = vadd.f32 %v6285, %v6012
    %v6332 = vadd.f32 %v6287, %v6014
    %v6333 = vmul.f32 %v6331, 0.5
    %v6334 = vmul.f32 %v6332, 0.5
    %v6335 = vtanh.pop %v6333
    %v6336 = vtanh.pop %v6334
    %v6337 = vadd.f32 %v6335, 1.0
    %v6338 = vadd.f32 %v6336, 1.0
    %v6339 = vmul.f32 %v6337, 0.5
    %v6340 = vmul.f32 %v6338, 0.5
    %v6341 = vadd.f32 %v6053, %v5053
    %v6342 = vmul.f32 %v6339, %v6341
    %v6343 = vadd.f32 %v6326, %v6342
    %v6344 = vtanh.pop %v6343
    %v6345 = vsub.f32 1.0, %v6340
    %v6346 = vmul.f32 %v6345, %v6344
    %v6347 = vmul.f32 %v6340, %v5747
    %v6348 = vadd.f32 %v6346, %v6347
    %v6349 = vpack.c.bf16 %v6348, %v6348
    %v6351 = vsel %vm409, %v6349, 0
    %6353 = vmatprep.subr.bf16.mxu0 %v5120
    %6354 = vmatpush1.bf16.msra.mxu0 %v5119
    %6355 = vmatprep.subr.bf16.mxu0 %v5123
    %6356 = vmatpush1.bf16.msra.mxu0 %v5122
    %6357 = vmatprep.subr.bf16.mxu0 0
    %6358 = vmatpush1.bf16.msra.mxu0 0
    %6359 = vmatprep.subr.bf16.mxu0 0
    %6360 = vmatpush1.bf16.msra.mxu0 0
    %6361 = vmatprep.subr.bf16.mxu0 0
    %6362 = vmatpush1.bf16.msra.mxu0 0
    %6363 = vmatprep.subr.bf16.mxu0 0
    %6364 = vmatpush1.bf16.msra.mxu0 0
    %6365 = vmatprep.subr.bf16.mxu0 0
    %6366 = vmatpush1.bf16.msra.mxu0 0
    %6367 = vmatprep.subr.bf16.mxu0 0
    %6368 = vmatpush1.bf16.msra.mxu0 0
    %6369 = vmatprep.subr.bf16.mxu0 0
    %6370 = vmatpush1.bf16.msra.mxu0 0
    %6371 = vmatprep.subr.bf16.mxu0 0
    %6372 = vmatpush1.bf16.msra.mxu0 0
    %6373 = vmatprep.subr.bf16.mxu0 0
    %6374 = vmatpush1.bf16.msra.mxu0 0
    %6375 = vmatprep.subr.bf16.mxu0 0
    %6376 = vmatpush1.bf16.msra.mxu0 0
    %6377 = vmatprep.subr.bf16.mxu0 0
    %6378 = vmatpush1.bf16.msra.mxu0 0
    %6379 = vmatprep.subr.bf16.mxu0 0
    %6380 = vmatpush1.bf16.msra.mxu0 0
    %6381 = vmatprep.subr.bf16.mxu0 0
    %6382 = vmatpush1.bf16.msra.mxu0 0
    %6383 = vmatprep.subr.bf16.mxu0 0
    %6384 = vmatpush1.bf16.msra.mxu0 0
    %6385 = vmatprep.mubr.bf16.mxu0 0
    %6386 = vmatmul.mubr.bf16.gmra.mrb[0].mxu0 %v6351
    %v6387 = vpop.f32.mrb[0].mxu0
    %v6388 = vadd.f32 %v5087, %v6387
    %v6389 = vpop.f32.mrb[0].mxu0
    %v6390 = vadd.f32 %v5091, %v6389
    %v6391 = vpop.f32.mrb[0].mxu0
    %v6392 = vpop.f32.mrb[0].mxu0
    %6393 = vdwg.mxu0
    %6394 = vmatprep.subr.bf16.mxu0 0
    %6395 = vmatpush1.bf16.msra.mxu0 %v5121
    %6396 = vmatprep.subr.bf16.mxu0 0
    %6397 = vmatpush1.bf16.msra.mxu0 %v5124
    %6398 = vmatprep.subr.bf16.mxu0 0
    %6399 = vmatpush1.bf16.msra.mxu0 0
    %6400 = vmatprep.subr.bf16.mxu0 0
    %6401 = vmatpush1.bf16.msra.mxu0 0
    %6402 = vmatprep.subr.bf16.mxu0 0
    %6403 = vmatpush1.bf16.msra.mxu0 0
    %6404 = vmatprep.subr.bf16.mxu0 0
    %6405 = vmatpush1.bf16.msra.mxu0 0
    %6406 = vmatprep.subr.bf16.mxu0 0
    %6407 = vmatpush1.bf16.msra.mxu0 0
    %6408 = vmatprep.subr.bf16.mxu0 0
    %6409 = vmatpush1.bf16.msra.mxu0 0
    %6410 = vmatprep.subr.bf16.mxu0 0
    %6411 = vmatpush1.bf16.msra.mxu0 0
    %6412 = vmatprep.subr.bf16.mxu0 0
    %6413 = vmatpush1.bf16.msra.mxu0 0
    %6414 = vmatprep.subr.bf16.mxu0 0
    %6415 = vmatpush1.bf16.msra.mxu0 0
    %6416 = vmatprep.subr.bf16.mxu0 0
    %6417 = vmatpush1.bf16.msra.mxu0 0
    %6418 = vmatprep.subr.bf16.mxu0 0
    %6419 = vmatpush1.bf16.msra.mxu0 0
    %6420 = vmatprep.subr.bf16.mxu0 0
    %6421 = vmatpush1.bf16.msra.mxu0 0
    %6422 = vmatprep.subr.bf16.mxu0 0
    %6423 = vmatpush1.bf16.msra.mxu0 0
    %6424 = vmatprep.subr.bf16.mxu0 0
    %6425 = vmatpush1.bf16.msra.mxu0 0
    %6426 = vmatprep.mubr.bf16.mxu0 0
    %6427 = vmatmul.mubr.bf16.gmra.mrb[0].mxu0 %v6351
    %v6428 = vpop.f32.mrb[0].mxu0
    %v6429 = vadd.f32 %v5095, %v6428
    %v6430 = vpop.f32.mrb[0].mxu0
    %v6431 = vpop.f32.mrb[0].mxu0
    %v6432 = vpop.f32.mrb[0].mxu0
    %6433 = vdwg.mxu0
    %v6434 = vadd.f32 %v6388, %v6097
    %v6435 = vadd.f32 %v6390, %v6099
    %v6436 = vmul.f32 %v6434, 0.5
    %v6437 = vmul.f32 %v6435, 0.5
    %v6438 = vtanh.pop %v6436
    %v6439 = vtanh.pop %v6437
    %v6440 = vadd.f32 %v6438, 1.0
    %v6441 = vadd.f32 %v6439, 1.0
    %v6442 = vmul.f32 %v6440, 0.5
    %v6443 = vmul.f32 %v6441, 0.5
    %v6444 = vadd.f32 %v6138, %v5215
    %v6445 = vmul.f32 %v6442, %v6444
    %v6446 = vadd.f32 %v6429, %v6445
    %v6447 = vtanh.pop %v6446
    %v6448 = vsub.f32 1.0, %v6443
    %v6449 = vmul.f32 %v6448, %v6447
    %v6450 = vmul.f32 %v6443, %v5850
    %v6451 = vadd.f32 %v6449, %v6450
    %v6452 = vmax.f32 %v6451, 0.0
    %v6453 = vpack.c.bf16 %v6452, %v6452
    %v6455 = vsel %vm409, %v6453, 0
    %6457 = vmatprep.subr.bf16.mxu0 0
    %6458 = vmatpush1.bf16.msra.mxu0 %v5248
    %6459 = vmatprep.subr.bf16.mxu0 0
    %6460 = vmatpush1.bf16.msra.mxu0 %v5249
    %6461 = vmatprep.subr.bf16.mxu0 0
    %6462 = vmatpush1.bf16.msra.mxu0 0
    %6463 = vmatprep.subr.bf16.mxu0 0
    %6464 = vmatpush1.bf16.msra.mxu0 0
    %6465 = vmatprep.subr.bf16.mxu0 0
    %6466 = vmatpush1.bf16.msra.mxu0 0
    %6467 = vmatprep.subr.bf16.mxu0 0
    %6468 = vmatpush1.bf16.msra.mxu0 0
    %6469 = vmatprep.subr.bf16.mxu0 0
    %6470 = vmatpush1.bf16.msra.mxu0 0
    %6471 = vmatprep.subr.bf16.mxu0 0
    %6472 = vmatpush1.bf16.msra.mxu0 0
    %6473 = vmatprep.subr.bf16.mxu0 0
    %6474 = vmatpush1.bf16.msra.mxu0 0
    %6475 = vmatprep.subr.bf16.mxu0 0
    %6476 = vmatpush1.bf16.msra.mxu0 0
    %6477 = vmatprep.subr.bf16.mxu0 0
    %6478 = vmatpush1.bf16.msra.mxu0 0
    %6479 = vmatprep.subr.bf16.mxu0 0
    %6480 = vmatpush1.bf16.msra.mxu0 0
    %6481 = vmatprep.subr.bf16.mxu0 0
    %6482 = vmatpush1.bf16.msra.mxu0 0
    %6483 = vmatprep.subr.bf16.mxu0 0
    %6484 = vmatpush1.bf16.msra.mxu0 0
    %6485 = vmatprep.subr.bf16.mxu0 0
    %6486 = vmatpush1.bf16.msra.mxu0 0
    %6487 = vmatprep.subr.bf16.mxu0 0
    %6488 = vmatpush1.bf16.msra.mxu0 0
    %6489 = vmatprep.mubr.bf16.mxu0 0
    %6490 = vmatmul.mubr.bf16.gmra.mrb[0].mxu0 %v6455
    %v6491 = vpop.f32.mrb[0].mxu0
    %v6492 = vadd.f32 %v4400, %v6491
    %v6493 = vpop.f32.mrb[0].mxu0
    %v6494 = vpop.f32.mrb[0].mxu0
    %v6495 = vpop.f32.mrb[0].mxu0
    %6496 = vdwg.mxu0
    %6497 = vmatprep.subr.bf16.mxu0 %v4430
    %6498 = vmatpush1.bf16.msra.mxu0 %v4429
    %6499 = vmatprep.subr.bf16.mxu0 %v4433
    %6500 = vmatpush1.bf16.msra.mxu0 %v4432
    %6501 = vmatprep.subr.bf16.mxu0 0
    %6502 = vmatpush1.bf16.msra.mxu0 0
    %6503 = vmatprep.subr.bf16.mxu0 0
    %6504 = vmatpush1.bf16.msra.mxu0 0
    %6505 = vmatprep.subr.bf16.mxu0 0
    %6506 = vmatpush1.bf16.msra.mxu0 0
    %6507 = vmatprep.subr.bf16.mxu0 0
    %6508 = vmatpush1.bf16.msra.mxu0 0
    %6509 = vmatprep.subr.bf16.mxu0 0
    %6510 = vmatpush1.bf16.msra.mxu0 0
    %6511 = vmatprep.subr.bf16.mxu0 0
    %6512 = vmatpush1.bf16.msra.mxu0 0
    %6513 = vmatprep.subr.bf16.mxu0 0
    %6514 = vmatpush1.bf16.msra.mxu0 0
    %6515 = vmatprep.subr.bf16.mxu0 0
    %6516 = vmatpush1.bf16.msra.mxu0 0
    %6517 = vmatprep.subr.bf16.mxu0 0
    %6518 = vmatpush1.bf16.msra.mxu0 0
    %6519 = vmatprep.subr.bf16.mxu0 0
    %6520 = vmatpush1.bf16.msra.mxu0 0
    %6521 = vmatprep.subr.bf16.mxu0 0
    %6522 = vmatpush1.bf16.msra.mxu0 0
    %6523 = vmatprep.subr.bf16.mxu0 0
    %6524 = vmatpush1.bf16.msra.mxu0 0
    %6525 = vmatprep.subr.bf16.mxu0 0
    %6526 = vmatpush1.bf16.msra.mxu0 0
    %6527 = vmatprep.subr.bf16.mxu0 0
    %6528 = vmatpush1.bf16.msra.mxu0 0
    %6529 = vmatprep.mubr.bf16.mxu0 0
    %6530 = vmatmul.mubr.bf16.gmra.mrb[0].mxu0 %v6248
    %v6531 = vpop.f32.mrb[0].mxu0
    %v6532 = vadd.f32 0.0, %v6531
    %v6533 = vpop.f32.mrb[0].mxu0
    %v6534 = vadd.f32 0.0, %v6533
    %v6535 = vpop.f32.mrb[0].mxu0
    %v6536 = vpop.f32.mrb[0].mxu0
    %6537 = vdwg.mxu0
    %6538 = vmatprep.subr.bf16.mxu0 0
    %6539 = vmatpush1.bf16.msra.mxu0 %v4431
    %6540 = vmatprep.subr.bf16.mxu0 0
    %6541 = vmatpush1.bf16.msra.mxu0 %v4434
    %6542 = vmatprep.subr.bf16.mxu0 0
    %6543 = vmatpush1.bf16.msra.mxu0 0
    %6544 = vmatprep.subr.bf16.mxu0 0
    %6545 = vmatpush1.bf16.msra.mxu0 0
    %6546 = vmatprep.subr.bf16.mxu0 0
    %6547 = vmatpush1.bf16.msra.mxu0 0
    %6548 = vmatprep.subr.bf16.mxu0 0
    %6549 = vmatpush1.bf16.msra.mxu0 0
    %6550 = vmatprep.subr.bf16.mxu0 0
    %6551 = vmatpush1.bf16.msra.mxu0 0
    %6552 = vmatprep.subr.bf16.mxu0 0
    %6553 = vmatpush1.bf16.msra.mxu0 0
    %6554 = vmatprep.subr.bf16.mxu0 0
    %6555 = vmatpush1.bf16.msra.mxu0 0
    %6556 = vmatprep.subr.bf16.mxu0 0
    %6557 = vmatpush1.bf16.msra.mxu0 0
    %6558 = vmatprep.subr.bf16.mxu0 0
    %6559 = vmatpush1.bf16.msra.mxu0 0
    %6560 = vmatprep.subr.bf16.mxu0 0
    %6561 = vmatpush1.bf16.msra.mxu0 0
    %6562 = vmatprep.subr.bf16.mxu0 0
    %6563 = vmatpush1.bf16.msra.mxu0 0
    %6564 = vmatprep.subr.bf16.mxu0 0
    %6565 = vmatpush1.bf16.msra.mxu0 0
    %6566 = vmatprep.subr.bf16.mxu0 0
    %6567 = vmatpush1.bf16.msra.mxu0 0
    %6568 = vmatprep.subr.bf16.mxu0 0
    %6569 = vmatpush1.bf16.msra.mxu0 0
    %6570 = vmatprep.mubr.bf16.mxu0 0
    %6571 = vmatmul.mubr.bf16.gmra.mrb[0].mxu0 %v6248
    %v6572 = vpop.f32.mrb[0].mxu0
    %v6573 = vadd.f32 0.0, %v6572
    %v6574 = vpop.f32.mrb[0].mxu0
    %v6575 = vpop.f32.mrb[0].mxu0
    %v6576 = vpop.f32.mrb[0].mxu0
    %6577 = vdwg.mxu0
    %6578 = vmatprep.subr.bf16.mxu0 %v4551
    %6579 = vmatpush1.bf16.msra.mxu0 %v4550
    %6580 = vmatprep.subr.bf16.mxu0 %v4554
    %6581 = vmatpush1.bf16.msra.mxu0 %v4553
    %6582 = vmatprep.subr.bf16.mxu0 0
    %6583 = vmatpush1.bf16.msra.mxu0 0
    %6584 = vmatprep.subr.bf16.mxu0 0
    %6585 = vmatpush1.bf16.msra.mxu0 0
    %6586 = vmatprep.subr.bf16.mxu0 0
    %6587 = vmatpush1.bf16.msra.mxu0 0
    %6588 = vmatprep.subr.bf16.mxu0 0
    %6589 = vmatpush1.bf16.msra.mxu0 0
    %6590 = vmatprep.subr.bf16.mxu0 0
    %6591 = vmatpush1.bf16.msra.mxu0 0
    %6592 = vmatprep.subr.bf16.mxu0 0
    %6593 = vmatpush1.bf16.msra.mxu0 0
    %6594 = vmatprep.subr.bf16.mxu0 0
    %6595 = vmatpush1.bf16.msra.mxu0 0
    %6596 = vmatprep.subr.bf16.mxu0 0
    %6597 = vmatpush1.bf16.msra.mxu0 0
    %6598 = vmatprep.subr.bf16.mxu0 0
    %6599 = vmatpush1.bf16.msra.mxu0 0
    %6600 = vmatprep.subr.bf16.mxu0 0
    %6601 = vmatpush1.bf16.msra.mxu0 0
    %6602 = vmatprep.subr.bf16.mxu0 0
    %6603 = vmatpush1.bf16.msra.mxu0 0
    %6604 = vmatprep.subr.bf16.mxu0 0
    %6605 = vmatpush1.bf16.msra.mxu0 0
    %6606 = vmatprep.subr.bf16.mxu0 0
    %6607 = vmatpush1.bf16.msra.mxu0 0
    %6608 = vmatprep.subr.bf16.mxu0 0
    %6609 = vmatpush1.bf16.msra.mxu0 0
    %6610 = vmatprep.mubr.bf16.mxu0 0
    %6611 = vmatmul.mubr.bf16.gmra.mrb[0].mxu0 %v6351
    %v6612 = vpop.f32.mrb[0].mxu0
    %v6613 = vadd.f32 0.0, %v6612
    %v6614 = vpop.f32.mrb[0].mxu0
    %v6615 = vadd.f32 0.0, %v6614
    %v6616 = vpop.f32.mrb[0].mxu0
    %v6617 = vpop.f32.mrb[0].mxu0
    %6618 = vdwg.mxu0
    %6619 = vmatprep.subr.bf16.mxu0 0
    %6620 = vmatpush1.bf16.msra.mxu0 %v4552
    %6621 = vmatprep.subr.bf16.mxu0 0
    %6622 = vmatpush1.bf16.msra.mxu0 %v4555
    %6623 = vmatprep.subr.bf16.mxu0 0
    %6624 = vmatpush1.bf16.msra.mxu0 0
    %6625 = vmatprep.subr.bf16.mxu0 0
    %6626 = vmatpush1.bf16.msra.mxu0 0
    %6627 = vmatprep.subr.bf16.mxu0 0
    %6628 = vmatpush1.bf16.msra.mxu0 0
    %6629 = vmatprep.subr.bf16.mxu0 0
    %6630 = vmatpush1.bf16.msra.mxu0 0
    %6631 = vmatprep.subr.bf16.mxu0 0
    %6632 = vmatpush1.bf16.msra.mxu0 0
    %6633 = vmatprep.subr.bf16.mxu0 0
    %6634 = vmatpush1.bf16.msra.mxu0 0
    %6635 = vmatprep.subr.bf16.mxu0 0
    %6636 = vmatpush1.bf16.msra.mxu0 0
    %6637 = vmatprep.subr.bf16.mxu0 0
    %6638 = vmatpush1.bf16.msra.mxu0 0
    %6639 = vmatprep.subr.bf16.mxu0 0
    %6640 = vmatpush1.bf16.msra.mxu0 0
    %6641 = vmatprep.subr.bf16.mxu0 0
    %6642 = vmatpush1.bf16.msra.mxu0 0
    %6643 = vmatprep.subr.bf16.mxu0 0
    %6644 = vmatpush1.bf16.msra.mxu0 0
    %6645 = vmatprep.subr.bf16.mxu0 0
    %6646 = vmatpush1.bf16.msra.mxu0 0
    %6647 = vmatprep.subr.bf16.mxu0 0
    %6648 = vmatpush1.bf16.msra.mxu0 0
    %6649 = vmatprep.subr.bf16.mxu0 0
    %6650 = vmatpush1.bf16.msra.mxu0 0
    %6651 = vmatprep.mubr.bf16.mxu0 0
    %6652 = vmatmul.mubr.bf16.gmra.mrb[0].mxu0 %v6351
    %v6653 = vpop.f32.mrb[0].mxu0
    %v6654 = vadd.f32 0.0, %v6653
    %v6655 = vpop.f32.mrb[0].mxu0
    %v6656 = vpop.f32.mrb[0].mxu0
    %v6657 = vpop.f32.mrb[0].mxu0
    %6658 = vdwg.mxu0
    %v6659 = vpack.c.bf16 %v6451, %v6451
    %v6661 = vsel %vm409, %v6659, 0
    %6663 = vmatprep.subr.bf16.mxu0 %v4673
    %6664 = vmatpush1.bf16.msra.mxu0 %v4672
    %6665 = vmatprep.subr.bf16.mxu0 %v4676
    %6666 = vmatpush1.bf16.msra.mxu0 %v4675
    %6667 = vmatprep.subr.bf16.mxu0 0
    %6668 = vmatpush1.bf16.msra.mxu0 0
    %6669 = vmatprep.subr.bf16.mxu0 0
    %6670 = vmatpush1.bf16.msra.mxu0 0
    %6671 = vmatprep.subr.bf16.mxu0 0
    %6672 = vmatpush1.bf16.msra.mxu0 0
    %6673 = vmatprep.subr.bf16.mxu0 0
    %6674 = vmatpush1.bf16.msra.mxu0 0
    %6675 = vmatprep.subr.bf16.mxu0 0
    %6676 = vmatpush1.bf16.msra.mxu0 0
    %6677 = vmatprep.subr.bf16.mxu0 0
    %6678 = vmatpush1.bf16.msra.mxu0 0
    %6679 = vmatprep.subr.bf16.mxu0 0
    %6680 = vmatpush1.bf16.msra.mxu0 0
    %6681 = vmatprep.subr.bf16.mxu0 0
    %6682 = vmatpush1.bf16.msra.mxu0 0
    %6683 = vmatprep.subr.bf16.mxu0 0
    %6684 = vmatpush1.bf16.msra.mxu0 0
    %6685 = vmatprep.subr.bf16.mxu0 0
    %6686 = vmatpush1.bf16.msra.mxu0 0
    %6687 = vmatprep.subr.bf16.mxu0 0
    %6688 = vmatpush1.bf16.msra.mxu0 0
    %6689 = vmatprep.subr.bf16.mxu0 0
    %6690 = vmatpush1.bf16.msra.mxu0 0
    %6691 = vmatprep.subr.bf16.mxu0 0
    %6692 = vmatpush1.bf16.msra.mxu0 0
    %6693 = vmatprep.subr.bf16.mxu0 0
    %6694 = vmatpush1.bf16.msra.mxu0 0
    %6695 = vmatprep.mubr.bf16.mxu0 0
    %6696 = vmatmul.mubr.bf16.gmra.mrb[0].mxu0 %v6661
    %v6697 = vpop.f32.mrb[0].mxu0
    %v6698 = vadd.f32 0.0, %v6697
    %v6699 = vpop.f32.mrb[0].mxu0
    %v6700 = vadd.f32 0.0, %v6699
    %v6701 = vpop.f32.mrb[0].mxu0
    %v6702 = vpop.f32.mrb[0].mxu0
    %6703 = vdwg.mxu0
    %6704 = vmatprep.subr.bf16.mxu0 0
    %6705 = vmatpush1.bf16.msra.mxu0 %v4674
    %6706 = vmatprep.subr.bf16.mxu0 0
    %6707 = vmatpush1.bf16.msra.mxu0 %v4677
    %6708 = vmatprep.subr.bf16.mxu0 0
    %6709 = vmatpush1.bf16.msra.mxu0 0
    %6710 = vmatprep.subr.bf16.mxu0 0
    %6711 = vmatpush1.bf16.msra.mxu0 0
    %6712 = vmatprep.subr.bf16.mxu0 0
    %6713 = vmatpush1.bf16.msra.mxu0 0
    %6714 = vmatprep.subr.bf16.mxu0 0
    %6715 = vmatpush1.bf16.msra.mxu0 0
    %6716 = vmatprep.subr.bf16.mxu0 0
    %6717 = vmatpush1.bf16.msra.mxu0 0
    %6718 = vmatprep.subr.bf16.mxu0 0
    %6719 = vmatpush1.bf16.msra.mxu0 0
    %6720 = vmatprep.subr.bf16.mxu0 0
    %6721 = vmatpush1.bf16.msra.mxu0 0
    %6722 = vmatprep.subr.bf16.mxu0 0
    %6723 = vmatpush1.bf16.msra.mxu0 0
    %6724 = vmatprep.subr.bf16.mxu0 0
    %6725 = vmatpush1.bf16.msra.mxu0 0
    %6726 = vmatprep.subr.bf16.mxu0 0
    %6727 = vmatpush1.bf16.msra.mxu0 0
    %6728 = vmatprep.subr.bf16.mxu0 0
    %6729 = vmatpush1.bf16.msra.mxu0 0
    %6730 = vmatprep.subr.bf16.mxu0 0
    %6731 = vmatpush1.bf16.msra.mxu0 0
    %6732 = vmatprep.subr.bf16.mxu0 0
    %6733 = vmatpush1.bf16.msra.mxu0 0
    %6734 = vmatprep.subr.bf16.mxu0 0
    %6735 = vmatpush1.bf16.msra.mxu0 0
    %6736 = vmatprep.mubr.bf16.mxu0 0
    %6737 = vmatmul.mubr.bf16.gmra.mrb[0].mxu0 %v6661
    %v6738 = vpop.f32.mrb[0].mxu0
    %v6739 = vadd.f32 0.0, %v6738
    %v6740 = vpop.f32.mrb[0].mxu0
    %v6741 = vpop.f32.mrb[0].mxu0
    %v6742 = vpop.f32.mrb[0].mxu0
    %6743 = vdwg.mxu0
    %v6744 = vpack.c.bf16 %v6492, %v6492
    %v6746 = vsel %vm68, %v6744, 0
    %6748 = vmatprep.subr.bf16.mxu0 %v4802
    %6749 = vmatpush1.bf16.msra.mxu0 %v4801
    %6750 = vmatprep.subr.bf16.mxu0 0
    %6751 = vmatpush1.bf16.msra.mxu0 0
    %6752 = vmatprep.subr.bf16.mxu0 0
    %6753 = vmatpush1.bf16.msra.mxu0 0
    %6754 = vmatprep.subr.bf16.mxu0 0
    %6755 = vmatpush1.bf16.msra.mxu0 0
    %6756 = vmatprep.subr.bf16.mxu0 0
    %6757 = vmatpush1.bf16.msra.mxu0 0
    %6758 = vmatprep.subr.bf16.mxu0 0
    %6759 = vmatpush1.bf16.msra.mxu0 0
    %6760 = vmatprep.subr.bf16.mxu0 0
    %6761 = vmatpush1.bf16.msra.mxu0 0
    %6762 = vmatprep.subr.bf16.mxu0 0
    %6763 = vmatpush1.bf16.msra.mxu0 0
    %6764 = vmatprep.subr.bf16.mxu0 0
    %6765 = vmatpush1.bf16.msra.mxu0 0
    %6766 = vmatprep.subr.bf16.mxu0 0
    %6767 = vmatpush1.bf16.msra.mxu0 0
    %6768 = vmatprep.subr.bf16.mxu0 0
    %6769 = vmatpush1.bf16.msra.mxu0 0
    %6770 = vmatprep.subr.bf16.mxu0 0
    %6771 = vmatpush1.bf16.msra.mxu0 0
    %6772 = vmatprep.subr.bf16.mxu0 0
    %6773 = vmatpush1.bf16.msra.mxu0 0
    %6774 = vmatprep.subr.bf16.mxu0 0
    %6775 = vmatpush1.bf16.msra.mxu0 0
    %6776 = vmatprep.subr.bf16.mxu0 0
    %6777 = vmatpush1.bf16.msra.mxu0 0
    %6778 = vmatprep.subr.bf16.mxu0 0
    %6779 = vmatpush1.bf16.msra.mxu0 0
    %6780 = vmatprep.mubr.bf16.mxu0 0
    %6781 = vmatmul.mubr.bf16.gmra.mrb[0].mxu0 %v6746
    %v6782 = vpop.f32.mrb[0].mxu0
    %v6783 = vadd.f32 %v4779, %v6782
    %v6784 = vpop.f32.mrb[0].mxu0
    %v6785 = vadd.f32 %v4783, %v6784
    %v6786 = vpop.f32.mrb[0].mxu0
    %v6787 = vpop.f32.mrb[0].mxu0
    %6788 = vdwg.mxu0
    %6789 = vmatprep.subr.bf16.mxu0 0
    %6790 = vmatpush1.bf16.msra.mxu0 %v4803
    %6791 = vmatprep.subr.bf16.mxu0 0
    %6792 = vmatpush1.bf16.msra.mxu0 0
    %6793 = vmatprep.subr.bf16.mxu0 0
    %6794 = vmatpush1.bf16.msra.mxu0 0
    %6795 = vmatprep.subr.bf16.mxu0 0
    %6796 = vmatpush1.bf16.msra.mxu0 0
    %6797 = vmatprep.subr.bf16.mxu0 0
    %6798 = vmatpush1.bf16.msra.mxu0 0
    %6799 = vmatprep.subr.bf16.mxu0 0
    %6800 = vmatpush1.bf16.msra.mxu0 0
    %6801 = vmatprep.subr.bf16.mxu0 0
    %6802 = vmatpush1.bf16.msra.mxu0 0
    %6803 = vmatprep.subr.bf16.mxu0 0
    %6804 = vmatpush1.bf16.msra.mxu0 0
    %6805 = vmatprep.subr.bf16.mxu0 0
    %6806 = vmatpush1.bf16.msra.mxu0 0
    %6807 = vmatprep.subr.bf16.mxu0 0
    %6808 = vmatpush1.bf16.msra.mxu0 0
    %6809 = vmatprep.subr.bf16.mxu0 0
    %6810 = vmatpush1.bf16.msra.mxu0 0
    %6811 = vmatprep.subr.bf16.mxu0 0
    %6812 = vmatpush1.bf16.msra.mxu0 0
    %6813 = vmatprep.subr.bf16.mxu0 0
    %6814 = vmatpush1.bf16.msra.mxu0 0
    %6815 = vmatprep.subr.bf16.mxu0 0
    %6816 = vmatpush1.bf16.msra.mxu0 0
    %6817 = vmatprep.subr.bf16.mxu0 0
    %6818 = vmatpush1.bf16.msra.mxu0 0
    %6819 = vmatprep.subr.bf16.mxu0 0
    %6820 = vmatpush1.bf16.msra.mxu0 0
    %6821 = vmatprep.mubr.bf16.mxu0 0
    %6822 = vmatmul.mubr.bf16.gmra.mrb[0].mxu0 %v6746
    %v6823 = vpop.f32.mrb[0].mxu0
    %v6824 = vadd.f32 %v4787, %v6823
    %v6825 = vpop.f32.mrb[0].mxu0
    %v6826 = vpop.f32.mrb[0].mxu0
    %v6827 = vpop.f32.mrb[0].mxu0
    %6828 = vdwg.mxu0
    %v6829 = vadd.f32 %v6783, %v6532
    %v6830 = vadd.f32 %v6785, %v6534
    %v6831 = vmul.f32 %v6829, 0.5
    %v6832 = vmul.f32 %v6830, 0.5
    %v6833 = vtanh.pop %v6831
    %v6834 = vtanh.pop %v6832
    %v6835 = vadd.f32 %v6833, 1.0
    %v6836 = vadd.f32 %v6834, 1.0
    %v6837 = vmul.f32 %v6835, 0.5
    %v6838 = vmul.f32 %v6836, 0.5
    %v6839 = vadd.f32 %v6573, %v4891
    %v6840 = vmul.f32 %v6837, %v6839
    %v6841 = vadd.f32 %v6824, %v6840
    %v6842 = vtanh.pop %v6841
    %v6843 = vsub.f32 1.0, %v6838
    %v6844 = vmul.f32 %v6843, %v6842
    %v6845 = vmul.f32 %v6838, %v6245
    %v6846 = vadd.f32 %v6844, %v6845
    %v6847 = vpack.c.bf16 %v6846, %v6846
    %v6849 = vsel %vm409, %v6847, 0
    %6851 = vmatprep.subr.bf16.mxu0 %v4958
    %6852 = vmatpush1.bf16.msra.mxu0 %v4957
    %6853 = vmatprep.subr.bf16.mxu0 %v4961
    %6854 = vmatpush1.bf16.msra.mxu0 %v4960
    %6855 = vmatprep.subr.bf16.mxu0 0
    %6856 = vmatpush1.bf16.msra.mxu0 0
    %6857 = vmatprep.subr.bf16.mxu0 0
    %6858 = vmatpush1.bf16.msra.mxu0 0
    %6859 = vmatprep.subr.bf16.mxu0 0
    %6860 = vmatpush1.bf16.msra.mxu0 0
    %6861 = vmatprep.subr.bf16.mxu0 0
    %6862 = vmatpush1.bf16.msra.mxu0 0
    %6863 = vmatprep.subr.bf16.mxu0 0
    %6864 = vmatpush1.bf16.msra.mxu0 0
    %6865 = vmatprep.subr.bf16.mxu0 0
    %6866 = vmatpush1.bf16.msra.mxu0 0
    %6867 = vmatprep.subr.bf16.mxu0 0
    %6868 = vmatpush1.bf16.msra.mxu0 0
    %6869 = vmatprep.subr.bf16.mxu0 0
    %6870 = vmatpush1.bf16.msra.mxu0 0
    %6871 = vmatprep.subr.bf16.mxu0 0
    %6872 = vmatpush1.bf16.msra.mxu0 0
    %6873 = vmatprep.subr.bf16.mxu0 0
    %6874 = vmatpush1.bf16.msra.mxu0 0
    %6875 = vmatprep.subr.bf16.mxu0 0
    %6876 = vmatpush1.bf16.msra.mxu0 0
    %6877 = vmatprep.subr.bf16.mxu0 0
    %6878 = vmatpush1.bf16.msra.mxu0 0
    %6879 = vmatprep.subr.bf16.mxu0 0
    %6880 = vmatpush1.bf16.msra.mxu0 0
    %6881 = vmatprep.subr.bf16.mxu0 0
    %6882 = vmatpush1.bf16.msra.mxu0 0
    %6883 = vmatprep.mubr.bf16.mxu0 0
    %6884 = vmatmul.mubr.bf16.gmra.mrb[0].mxu0 %v6849
    %v6885 = vpop.f32.mrb[0].mxu0
    %v6886 = vadd.f32 %v4925, %v6885
    %v6887 = vpop.f32.mrb[0].mxu0
    %v6888 = vadd.f32 %v4929, %v6887
    %v6889 = vpop.f32.mrb[0].mxu0
    %v6890 = vpop.f32.mrb[0].mxu0
    %6891 = vdwg.mxu0
    %6892 = vmatprep.subr.bf16.mxu0 0
    %6893 = vmatpush1.bf16.msra.mxu0 %v4959
    %6894 = vmatprep.subr.bf16.mxu0 0
    %6895 = vmatpush1.bf16.msra.mxu0 %v4962
    %6896 = vmatprep.subr.bf16.mxu0 0
    %6897 = vmatpush1.bf16.msra.mxu0 0
    %6898 = vmatprep.subr.bf16.mxu0 0
    %6899 = vmatpush1.bf16.msra.mxu0 0
    %6900 = vmatprep.subr.bf16.mxu0 0
    %6901 = vmatpush1.bf16.msra.mxu0 0
    %6902 = vmatprep.subr.bf16.mxu0 0
    %6903 = vmatpush1.bf16.msra.mxu0 0
    %6904 = vmatprep.subr.bf16.mxu0 0
    %6905 = vmatpush1.bf16.msra.mxu0 0
    %6906 = vmatprep.subr.bf16.mxu0 0
    %6907 = vmatpush1.bf16.msra.mxu0 0
    %6908 = vmatprep.subr.bf16.mxu0 0
    %6909 = vmatpush1.bf16.msra.mxu0 0
    %6910 = vmatprep.subr.bf16.mxu0 0
    %6911 = vmatpush1.bf16.msra.mxu0 0
    %6912 = vmatprep.subr.bf16.mxu0 0
    %6913 = vmatpush1.bf16.msra.mxu0 0
    %6914 = vmatprep.subr.bf16.mxu0 0
    %6915 = vmatpush1.bf16.msra.mxu0 0
    %6916 = vmatprep.subr.bf16.mxu0 0
    %6917 = vmatpush1.bf16.msra.mxu0 0
    %6918 = vmatprep.subr.bf16.mxu0 0
    %6919 = vmatpush1.bf16.msra.mxu0 0
    %6920 = vmatprep.subr.bf16.mxu0 0
    %6921 = vmatpush1.bf16.msra.mxu0 0
    %6922 = vmatprep.subr.bf16.mxu0 0
    %6923 = vmatpush1.bf16.msra.mxu0 0
    %6924 = vmatprep.mubr.bf16.mxu0 0
    %6925 = vmatmul.mubr.bf16.gmra.mrb[0].mxu0 %v6849
    %v6926 = vpop.f32.mrb[0].mxu0
    %v6927 = vadd.f32 %v4933, %v6926
    %v6928 = vpop.f32.mrb[0].mxu0
    %v6929 = vpop.f32.mrb[0].mxu0
    %v6930 = vpop.f32.mrb[0].mxu0
    %6931 = vdwg.mxu0
    %v6932 = vadd.f32 %v6886, %v6613
    %v6933 = vadd.f32 %v6888, %v6615
    %v6934 = vmul.f32 %v6932, 0.5
    %v6935 = vmul.f32 %v6933, 0.5
    %v6936 = vtanh.pop %v6934
    %v6937 = vtanh.pop %v6935
    %v6938 = vadd.f32 %v6936, 1.0
    %v6939 = vadd.f32 %v6937, 1.0
    %v6940 = vmul.f32 %v6938, 0.5
    %v6941 = vmul.f32 %v6939, 0.5
    %v6942 = vadd.f32 %v6654, %v5053
    %v6943 = vmul.f32 %v6940, %v6942
    %v6944 = vadd.f32 %v6927, %v6943
    %v6945 = vtanh.pop %v6944
    %v6946 = vsub.f32 1.0, %v6941
    %v6947 = vmul.f32 %v6946, %v6945
    %v6948 = vmul.f32 %v6941, %v6348
    %v6949 = vadd.f32 %v6947, %v6948
    %v6950 = vpack.c.bf16 %v6949, %v6949
    %v6952 = vsel %vm409, %v6950, 0
    %6954 = vmatprep.subr.bf16.mxu0 %v5120
    %6955 = vmatpush1.bf16.msra.mxu0 %v5119
    %6956 = vmatprep.subr.bf16.mxu0 %v5123
    %6957 = vmatpush1.bf16.msra.mxu0 %v5122
    %6958 = vmatprep.subr.bf16.mxu0 0
    %6959 = vmatpush1.bf16.msra.mxu0 0
    %6960 = vmatprep.subr.bf16.mxu0 0
    %6961 = vmatpush1.bf16.msra.mxu0 0
    %6962 = vmatprep.subr.bf16.mxu0 0
    %6963 = vmatpush1.bf16.msra.mxu0 0
    %6964 = vmatprep.subr.bf16.mxu0 0
    %6965 = vmatpush1.bf16.msra.mxu0 0
    %6966 = vmatprep.subr.bf16.mxu0 0
    %6967 = vmatpush1.bf16.msra.mxu0 0
    %6968 = vmatprep.subr.bf16.mxu0 0
    %6969 = vmatpush1.bf16.msra.mxu0 0
    %6970 = vmatprep.subr.bf16.mxu0 0
    %6971 = vmatpush1.bf16.msra.mxu0 0
    %6972 = vmatprep.subr.bf16.mxu0 0
    %6973 = vmatpush1.bf16.msra.mxu0 0
    %6974 = vmatprep.subr.bf16.mxu0 0
    %6975 = vmatpush1.bf16.msra.mxu0 0
    %6976 = vmatprep.subr.bf16.mxu0 0
    %6977 = vmatpush1.bf16.msra.mxu0 0
    %6978 = vmatprep.subr.bf16.mxu0 0
    %6979 = vmatpush1.bf16.msra.mxu0 0
    %6980 = vmatprep.subr.bf16.mxu0 0
    %6981 = vmatpush1.bf16.msra.mxu0 0
    %6982 = vmatprep.subr.bf16.mxu0 0
    %6983 = vmatpush1.bf16.msra.mxu0 0
    %6984 = vmatprep.subr.bf16.mxu0 0
    %6985 = vmatpush1.bf16.msra.mxu0 0
    %6986 = vmatprep.mubr.bf16.mxu0 0
    %6987 = vmatmul.mubr.bf16.gmra.mrb[0].mxu0 %v6952
    %v6988 = vpop.f32.mrb[0].mxu0
    %v6989 = vadd.f32 %v5087, %v6988
    %v6990 = vpop.f32.mrb[0].mxu0
    %v6991 = vadd.f32 %v5091, %v6990
    %v6992 = vpop.f32.mrb[0].mxu0
    %v6993 = vpop.f32.mrb[0].mxu0
    %6994 = vdwg.mxu0
    %6995 = vmatprep.subr.bf16.mxu0 0
    %6996 = vmatpush1.bf16.msra.mxu0 %v5121
    %6997 = vmatprep.subr.bf16.mxu0 0
    %6998 = vmatpush1.bf16.msra.mxu0 %v5124
    %6999 = vmatprep.subr.bf16.mxu0 0
    %7000 = vmatpush1.bf16.msra.mxu0 0
    %7001 = vmatprep.subr.bf16.mxu0 0
    %7002 = vmatpush1.bf16.msra.mxu0 0
    %7003 = vmatprep.subr.bf16.mxu0 0
    %7004 = vmatpush1.bf16.msra.mxu0 0
    %7005 = vmatprep.subr.bf16.mxu0 0
    %7006 = vmatpush1.bf16.msra.mxu0 0
    %7007 = vmatprep.subr.bf16.mxu0 0
    %7008 = vmatpush1.bf16.msra.mxu0 0
    %7009 = vmatprep.subr.bf16.mxu0 0
    %7010 = vmatpush1.bf16.msra.mxu0 0
    %7011 = vmatprep.subr.bf16.mxu0 0
    %7012 = vmatpush1.bf16.msra.mxu0 0
    %7013 = vmatprep.subr.bf16.mxu0 0
    %7014 = vmatpush1.bf16.msra.mxu0 0
    %7015 = vmatprep.subr.bf16.mxu0 0
    %7016 = vmatpush1.bf16.msra.mxu0 0
    %7017 = vmatprep.subr.bf16.mxu0 0
    %7018 = vmatpush1.bf16.msra.mxu0 0
    %7019 = vmatprep.subr.bf16.mxu0 0
    %7020 = vmatpush1.bf16.msra.mxu0 0
    %7021 = vmatprep.subr.bf16.mxu0 0
    %7022 = vmatpush1.bf16.msra.mxu0 0
    %7023 = vmatprep.subr.bf16.mxu0 0
    %7024 = vmatpush1.bf16.msra.mxu0 0
    %7025 = vmatprep.subr.bf16.mxu0 0
    %7026 = vmatpush1.bf16.msra.mxu0 0
    %7027 = vmatprep.mubr.bf16.mxu0 0
    %7028 = vmatmul.mubr.bf16.gmra.mrb[0].mxu0 %v6952
    %v7029 = vpop.f32.mrb[0].mxu0
    %v7030 = vadd.f32 %v5095, %v7029
    %v7031 = vpop.f32.mrb[0].mxu0
    %v7032 = vpop.f32.mrb[0].mxu0
    %v7033 = vpop.f32.mrb[0].mxu0
    %7034 = vdwg.mxu0
    %v7035 = vadd.f32 %v6989, %v6698
    %v7036 = vadd.f32 %v6991, %v6700
    %v7037 = vmul.f32 %v7035, 0.5
    %v7038 = vmul.f32 %v7036, 0.5
    %v7039 = vtanh.pop %v7037
    %v7040 = vtanh.pop %v7038
    %v7041 = vadd.f32 %v7039, 1.0
    %v7042 = vadd.f32 %v7040, 1.0
    %v7043 = vmul.f32 %v7041, 0.5
    %v7044 = vmul.f32 %v7042, 0.5
    %v7045 = vadd.f32 %v6739, %v5215
    %v7046 = vmul.f32 %v7043, %v7045
    %v7047 = vadd.f32 %v7030, %v7046
    %v7048 = vtanh.pop %v7047
    %v7049 = vsub.f32 1.0, %v7044
    %v7050 = vmul.f32 %v7049, %v7048
    %v7051 = vmul.f32 %v7044, %v6451
    %v7052 = vadd.f32 %v7050, %v7051
    %v7053 = vmax.f32 %v7052, 0.0
    %v7054 = vpack.c.bf16 %v7053, %v7053
    %v7056 = vsel %vm409, %v7054, 0
    %7058 = vmatprep.subr.bf16.mxu0 0
    %7059 = vmatpush1.bf16.msra.mxu0 %v5248
    %7060 = vmatprep.subr.bf16.mxu0 0
    %7061 = vmatpush1.bf16.msra.mxu0 %v5249
    %7062 = vmatprep.subr.bf16.mxu0 0
    %7063 = vmatpush1.bf16.msra.mxu0 0
    %7064 = vmatprep.subr.bf16.mxu0 0
    %7065 = vmatpush1.bf16.msra.mxu0 0
    %7066 = vmatprep.subr.bf16.mxu0 0
    %7067 = vmatpush1.bf16.msra.mxu0 0
    %7068 = vmatprep.subr.bf16.mxu0 0
    %7069 = vmatpush1.bf16.msra.mxu0 0
    %7070 = vmatprep.subr.bf16.mxu0 0
    %7071 = vmatpush1.bf16.msra.mxu0 0
    %7072 = vmatprep.subr.bf16.mxu0 0
    %7073 = vmatpush1.bf16.msra.mxu0 0
    %7074 = vmatprep.subr.bf16.mxu0 0
    %7075 = vmatpush1.bf16.msra.mxu0 0
    %7076 = vmatprep.subr.bf16.mxu0 0
    %7077 = vmatpush1.bf16.msra.mxu0 0
    %7078 = vmatprep.subr.bf16.mxu0 0
    %7079 = vmatpush1.bf16.msra.mxu0 0
    %7080 = vmatprep.subr.bf16.mxu0 0
    %7081 = vmatpush1.bf16.msra.mxu0 0
    %7082 = vmatprep.subr.bf16.mxu0 0
    %7083 = vmatpush1.bf16.msra.mxu0 0
    %7084 = vmatprep.subr.bf16.mxu0 0
    %7085 = vmatpush1.bf16.msra.mxu0 0
    %7086 = vmatprep.subr.bf16.mxu0 0
    %7087 = vmatpush1.bf16.msra.mxu0 0
    %7088 = vmatprep.subr.bf16.mxu0 0
    %7089 = vmatpush1.bf16.msra.mxu0 0
    %7090 = vmatprep.mubr.bf16.mxu0 0
    %7091 = vmatmul.mubr.bf16.gmra.mrb[0].mxu0 %v7056
    %v7092 = vpop.f32.mrb[0].mxu0
    %v7093 = vadd.f32 %v4400, %v7092
    %v7094 = vpop.f32.mrb[0].mxu0
    %v7095 = vpop.f32.mrb[0].mxu0
    %v7096 = vpop.f32.mrb[0].mxu0
    %7097 = vdwg.mxu0
    %7099 = vrot.lane.b32.xlu0 %v4296, 32
    %v7100 = vpop.permute.xlu0 %7099
    %7103 = vrot.lane.b32.xlu0 %v4399, 64
    %v7104 = vpop.permute.xlu0 %7103
    %7107 = vrot.lane.b32.xlu0 %v5290, 96
    %v7108 = vpop.permute.xlu0 %7107
    %7111 = vrot.lane.b32.xlu0 %v5891, 112
    %v7112 = vpop.permute.xlu0 %7111
    %7115 = vrot.lane.b32.xlu0 %v7093, 16
    %v7116 = vpop.permute.xlu0 %7115
    %v7118 = vsel %vm409, %v4193, %v7100
    %vm7119 = vcmask 523264
    %v7120 = vsel %vm7119, %v7118, %v7104
    %vm7121 = vcmask 785408
    %v7122 = vsel %vm7121, %v7120, %v7108
    %vm7123 = vcmask 916480
    %v7124 = vsel %vm7123, %v7122, %v7112
    %v7125 = vsel %vm68, %v6492, %v7116
    %v7126 = vpack.c.bf16 %v7124, %v7124
    %v7127 = vpack.c.bf16 %v7125, %v7125
    %v7128 = vld [vmem:[%s2] sm:$0xf]
    %v7129 = vld [vmem:[%s2 + $0x4] sm:$0xf]
    %v7130 = vld [vmem:[%s2 + $0x8] sm:$0xf]
    %v7131 = vld [vmem:[%s2 + $0xc] sm:$0xf]
    %v7132 = vld [vmem:[%s2 + $0x10] sm:$0xf]
    %v7133 = vld [vmem:[%s2 + $0x14] sm:$0xf]
    %v7134 = vld [vmem:[%s2 + $0x18] sm:$0xf]
    %v7135 = vld [vmem:[%s2 + $0x1c] sm:$0xf]
    %v7136 = vld [vmem:[%s2 + $0x20] sm:$0xf]
    %v7137 = vld [vmem:[%s2 + $0x24] sm:$0xf]
    %v7138 = vld [vmem:[%s2 + $0x28] sm:$0xf]
    %v7139 = vld [vmem:[%s2 + $0x2c] sm:$0xf]
    %v7140 = vld [vmem:[%s2 + $0x30] sm:$0xf]
    %v7141 = vld [vmem:[%s2 + $0x34] sm:$0xf]
    %v7142 = vld [vmem:[%s2 + $0x38] sm:$0xf]
    %v7143 = vld [vmem:[%s2 + $0x3c] sm:$0xf]
    %v7144 = vld [vmem:[%s2 + $0x40] sm:$0xf]
    %v7145 = vld [vmem:[%s2 + $0x44] sm:$0xf]
    %v7146 = vld [vmem:[%s2 + $0x48] sm:$0xf]
    %v7147 = vld [vmem:[%s2 + $0x4c] sm:$0xf]
    %v7148 = vld [vmem:[#allocation6 + $0x19] ss:$0 sm:$0xff]
    %v7169 = vunpack.c.l.b16 %v7128
    %v7170 = vunpack.c.l.b16 %v7129
    %v7171 = vunpack.c.l.b16 %v7130
    %v7172 = vunpack.c.l.b16 %v7131
    %v7173 = vunpack.c.l.b16 %v7132
    %v7174 = vunpack.c.l.b16 %v7133
    %v7175 = vunpack.c.l.b16 %v7134
    %v7176 = vunpack.c.l.b16 %v7135
    %v7177 = vunpack.c.l.b16 %v7136
    %v7178 = vunpack.c.l.b16 %v7137
    %v7179 = vunpack.c.l.b16 %v7138
    %v7180 = vunpack.c.l.b16 %v7139
    %v7181 = vunpack.c.l.b16 %v7140
    %v7182 = vunpack.c.l.b16 %v7141
    %v7183 = vunpack.c.l.b16 %v7142
    %v7184 = vunpack.c.l.b16 %v7143
    %v7185 = vunpack.c.l.b16 %v7144
    %v7186 = vunpack.c.l.b16 %v7145
    %v7187 = vunpack.c.l.b16 %v7146
    %v7188 = vunpack.c.l.b16 %v7147
    %v7189 = vpack.c.b16 %v7170, %v7169
    %v7190 = vpack.c.b16 %v7172, %v7171
    %v7191 = vpack.c.b16 %v7174, %v7173
    %v7192 = vpack.c.b16 %v7176, %v7175
    %v7193 = vpack.c.b16 %v7178, %v7177
    %v7194 = vpack.c.b16 %v7180, %v7179
    %v7195 = vpack.c.b16 %v7182, %v7181
    %v7196 = vpack.c.b16 %v7184, %v7183
    %v7197 = vpack.c.b16 %v7186, %v7185
    %v7198 = vpack.c.b16 %v7188, %v7187
    %v7210 = vsel %vm409, %v7127, 0
    %7212 = vmatprep.subr.bf16.mxu0 0
    %7213 = vmatpush1.bf16.msra.mxu0 %v7189
    %7214 = vmatprep.subr.bf16.mxu0 0
    %7215 = vmatpush1.bf16.msra.mxu0 %v7190
    %7216 = vmatprep.subr.bf16.mxu0 0
    %7217 = vmatpush1.bf16.msra.mxu0 %v7191
    %7218 = vmatprep.subr.bf16.mxu0 0
    %7219 = vmatpush1.bf16.msra.mxu0 %v7192
    %7220 = vmatprep.subr.bf16.mxu0 0
    %7221 = vmatpush1.bf16.msra.mxu0 %v7193
    %7222 = vmatprep.subr.bf16.mxu0 0
    %7223 = vmatpush1.bf16.msra.mxu0 %v7194
    %7224 = vmatprep.subr.bf16.mxu0 0
    %7225 = vmatpush1.bf16.msra.mxu0 %v7195
    %7226 = vmatprep.subr.bf16.mxu0 0
    %7227 = vmatpush1.bf16.msra.mxu0 %v7196
    %7228 = vmatprep.subr.bf16.mxu0 0
    %7229 = vmatpush1.bf16.msra.mxu0 %v7197
    %7230 = vmatprep.subr.bf16.mxu0 0
    %7231 = vmatpush1.bf16.msra.mxu0 %v7198
    %7232 = vmatprep.subr.bf16.mxu0 0
    %7233 = vmatpush1.bf16.msra.mxu0 0
    %7234 = vmatprep.subr.bf16.mxu0 0
    %7235 = vmatpush1.bf16.msra.mxu0 0
    %7236 = vmatprep.subr.bf16.mxu0 0
    %7237 = vmatpush1.bf16.msra.mxu0 0
    %7238 = vmatprep.subr.bf16.mxu0 0
    %7239 = vmatpush1.bf16.msra.mxu0 0
    %7240 = vmatprep.subr.bf16.mxu0 0
    %7241 = vmatpush1.bf16.msra.mxu0 0
    %7242 = vmatprep.subr.bf16.mxu0 0
    %7243 = vmatpush1.bf16.msra.mxu0 0
    %7244 = vmatprep.mubr.bf16.mxu0 %v7210
    %7245 = vmatmul.mubr.bf16.gmra.mrb[0].mxu0 %v7126
    %v7246 = vpop.f32.mrb[0].mxu0
    %v7247 = vadd.f32 %v7148, %v7246
    %v7248 = vpop.f32.mrb[0].mxu0
    %v7249 = vpop.f32.mrb[0].mxu0
    %v7250 = vpop.f32.mrb[0].mxu0
    %7251 = vdwg.mxu0
    %7252 = vst [vmem:[#allocation8] sm:$0xff] %v7247
    // Predicated region
    $region26: #{tpu_custom_call.1} parent=1 // pred_check
      _
    $region27: #{tpu_custom_call.1} parent=1 // pred_check_branch
      %7254 = sbr.rel (0) target = $region29
    $region28: #{tpu_custom_call.1} parent=1 // pred_region
      %s7256 = ssub.s32 128, 128
      %7257 = vsyncadd [#allocation5], %s7256
      %s7259 = sshll.u32 [#allocation8], 4
      %s7260 = int_to_ptr.vmem [resolvable:$true] %s7259
      %7262 = dma.vmem_to_hbm [thread:$0]  %s7260, 128, %s4, [#allocation5]
    $region29: #{tpu_custom_call.1} parent=1 // pred_fallthru
      _
    // Predicated region
    $region30: #{tpu_custom_call.1} parent=1 // pred_check
      _
    $region31: #{tpu_custom_call.1} parent=1 // pred_check_branch
      %7264 = sbr.rel (0) target = $region33
    $region32: #{tpu_custom_call.1} parent=1 // pred_region
      %7265 = dma.done [#allocation5], 128
    $region33: #{tpu_custom_call.1} parent=1 // pred_fallthru
      _
    %7266 = vsyncpa [#allocation4], 1
    %7267 = vsyncpa [#allocation7], 1
    %7268 = vsyncpa [#allocation5], 1

</llo_original>
